<compile_context>
chip_gen: v7x
topology: tpu7x:2x2x1
jax: 0.10.0
libtpu: 0.0.40
codegen_flags: <defaults>
</compile_context>

<pallas_src>
import functools

import jax
import jax.numpy as jnp
from jax.experimental import pallas as pl
from jax.experimental.pallas import tpu as pltpu

_COL0 = 8  # sublane-aligned column offset of the valid region in the padded scratch


def _residual_block_kernel(x_ref, w1_ref, w2_ref, o_ref,
                           xp_ref, hp_ref, patch_ref, *, H, W, C):
    """Fused ResidualBlock for a single batch element.

    x_ref    : (1, H, W, C)        f32   input (NHWC)
    w1_ref   : (9*C, C)            bf16  conv1 weight, rows ordered (ky, kx, cin)
    w2_ref   : (9*C, C)            bf16  conv2 weight
    o_ref    : (1, H, W, C)        f32   output
    xp_ref   : (H+2, W+2*COL0, C)  bf16  scratch: zero-padded conv1 input
    hp_ref   : (H+2, W+2*COL0, C)  bf16  scratch: zero-padded conv2 input
    patch_ref: (H*W, 9*C)          bf16  scratch: im2col patch matrix (reused)
    """
    HW = H * W

    def build_patch(p_ref):
        # 9 shifted windows -> lane-aligned column blocks of the patch matrix.
        for ky in range(3):
            for kx in range(3):
                i = ky * 3 + kx
                win = p_ref[ky:ky + H, _COL0 - 1 + kx:_COL0 - 1 + kx + W, :]
                patch_ref[:, i * C:(i + 1) * C] = win.reshape(HW, C)

    x = x_ref[0]                                             # (H, W, C) f32

    # ---- conv1 + ReLU ------------------------------------------------------
    xp_ref[...] = jnp.zeros_like(xp_ref)
    xp_ref[1:H + 1, _COL0:_COL0 + W, :] = x.astype(xp_ref.dtype)
    build_patch(xp_ref)
    h = jnp.dot(patch_ref[...], w1_ref[...],
                preferred_element_type=jnp.float32)          # (H*W, C) f32
    h = jnp.maximum(h, 0.0)

    # ---- conv2 ---------------------------------------------------------------
    hp_ref[...] = jnp.zeros_like(hp_ref)
    hp_ref[1:H + 1, _COL0:_COL0 + W, :] = h.reshape(H, W, C).astype(hp_ref.dtype)
    build_patch(hp_ref)
    out = jnp.dot(patch_ref[...], w2_ref[...],
                  preferred_element_type=jnp.float32)        # (H*W, C) f32

    # ---- scale + residual add (f32) -----------------------------------------
    o_ref[...] = (out.reshape(1, H, W, C) * 0.1
                  + x_ref[...].astype(jnp.float32)).astype(o_ref.dtype)


def residual_block_nhwc(x, w1, w2):
    """x: (N, H, W, C) f32;  w1/w2: (3, 3, C, C) (HWIO, no bias)."""
    N, H, W, C = x.shape
    Wp = W + 2 * _COL0  # padded scratch width (valid cols at [COL0, COL0+W))

    # (ky, kx, cin, cout) -> (9*C, C); bf16 inputs for the MXU (f32 accumulate).
    w1r = w1.reshape(9 * C, C).astype(jnp.bfloat16)
    w2r = w2.reshape(9 * C, C).astype(jnp.bfloat16)

    kernel = functools.partial(_residual_block_kernel, H=H, W=W, C=C)
    return pl.pallas_call(
        kernel,
        out_shape=jax.ShapeDtypeStruct((N, H, W, C), x.dtype),
        grid_spec=pltpu.PrefetchScalarGridSpec(
            num_scalar_prefetch=0,
            grid=(N,),
            in_specs=[
                pl.BlockSpec((1, H, W, C), lambda n: (n, 0, 0, 0)),
                pl.BlockSpec((9 * C, C), lambda n: (0, 0)),
                pl.BlockSpec((9 * C, C), lambda n: (0, 0)),
            ],
            out_specs=pl.BlockSpec((1, H, W, C), lambda n: (n, 0, 0, 0)),
            scratch_shapes=[
                pltpu.VMEM((H + 2, Wp, C), jnp.bfloat16),   # padded conv1 input
                pltpu.VMEM((H + 2, Wp, C), jnp.bfloat16),   # padded conv2 input
                pltpu.VMEM((H * W, 9 * C), jnp.bfloat16),   # im2col patch (reused)
            ],
        ),
        compiler_params=pltpu.CompilerParams(
            dimension_semantics=("parallel",),
        ),
    )(x, w1r, w2r)


def residual_block_forward(params, x_nchw):
    """Mirrors ResidualBlock.forward; NCHW in / NCHW out like PyTorch."""
    x = jnp.transpose(x_nchw, (0, 2, 3, 1))            # NCHW -> NHWC
    y = residual_block_nhwc(x, params["w1"], params["w2"])
    return jnp.transpose(y, (0, 3, 1, 2))               # NHWC -> NCHW


# ----------------------------------------------------------------------------
if __name__ == "__main__":
    # Small demo shapes. num_channels is a multiple of 128 so channel loads /
    # stores are lane-dense (module default is 256; 128 keeps the demo small).
    num_channels = 128
    N, H, W = 2, 16, 16

    key = jax.random.PRNGKey(0)
    kx, k1, k2 = jax.random.split(key, 3)
    x = jax.random.normal(kx, (N, num_channels, H, W), jnp.float32)  # NCHW
    params = {
        "w1": 0.05 * jax.random.normal(
            k1, (3, 3, num_channels, num_channels), jnp.float32),    # HWIO
        "w2": 0.05 * jax.random.normal(
            k2, (3, 3, num_channels, num_channels), jnp.float32),    # HWIO
    }

    fwd = jax.jit(residual_block_forward)
    y = fwd(params, x)
    jax.block_until_ready(y)

    assert y.shape == (N, num_channels, H, W), y.shape
    print("KERNEL_OK")
</pallas_src>

<mosaic_0001>
module attributes {stable_mosaic.version = 11 : i64} {
  func.func @_residual_block_kernel(%arg0: i32, %arg1: memref<1x16x16x128xf32, #tpu.memory_space<vmem>>, %arg2: memref<1152x128xbf16, #tpu.memory_space<vmem>>, %arg3: memref<1152x128xbf16, #tpu.memory_space<vmem>>, %arg4: memref<1x16x16x128xf32, #tpu.memory_space<vmem>>, %arg5: memref<18x32x128xbf16, #tpu.memory_space<vmem>>, %arg6: memref<18x32x128xbf16, #tpu.memory_space<vmem>>, %arg7: memref<256x1152xbf16, #tpu.memory_space<vmem>>) attributes {dimension_semantics = [#tpu.dimension_semantics<parallel>], iteration_bounds = array<i64: 2>, scalar_prefetch = 0 : i64, scratch_operands = 3 : i64, tpu.core_type = #tpu.core_type<tc>, window_params = [{transform_indices = @transform_0, window_bounds = array<i64: 1, 16, 16, 128>}, {pipeline_mode = #tpu.pipeline_mode<synchronous>, transform_indices = @transform_1, window_bounds = array<i64: 1152, 128>}, {pipeline_mode = #tpu.pipeline_mode<synchronous>, transform_indices = @transform_2, window_bounds = array<i64: 1152, 128>}, {transform_indices = @transform_3, window_bounds = array<i64: 1, 16, 16, 128>}]} {
    %c0 = arith.constant 0 : index
    %c0_0 = arith.constant 0 : index
    %c0_1 = arith.constant 0 : index
    %c0_2 = arith.constant 0 : index
    %0 = vector.load %arg1[%c0, %c0_0, %c0_1, %c0_2] : memref<1x16x16x128xf32, #tpu.memory_space<vmem>>, vector<1x16x16x128xf32>
    %1 = vector.shape_cast %0 : vector<1x16x16x128xf32> to vector<16x16x128xf32>
    %cst = arith.constant 0.000000e+00 : bf16
    %2 = vector.broadcast %cst : bf16 to vector<18x32x128xbf16>
    %c0_3 = arith.constant 0 : index
    %c0_4 = arith.constant 0 : index
    %c0_5 = arith.constant 0 : index
    %3 = vector.load %arg5[%c0_3, %c0_4, %c0_5] : memref<18x32x128xbf16, #tpu.memory_space<vmem>>, vector<18x32x128xbf16>
    tpu.vector_store %arg5[%c0_3, %c0_4, %c0_5], %2 {strides = array<i32>} : memref<18x32x128xbf16, #tpu.memory_space<vmem>>, vector<18x32x128xbf16>,
    %4 = arith.truncf %1 : vector<16x16x128xf32> to vector<16x16x128xbf16>
    %c1 = arith.constant 1 : index
    %c8 = arith.constant 8 : index
    %c0_6 = arith.constant 0 : index
    %5 = vector.load %arg5[%c1, %c8, %c0_6] : memref<18x32x128xbf16, #tpu.memory_space<vmem>>, vector<16x16x128xbf16>
    tpu.vector_store %arg5[%c1, %c8, %c0_6], %4 {strides = array<i32>} : memref<18x32x128xbf16, #tpu.memory_space<vmem>>, vector<16x16x128xbf16>,
    %c0_7 = arith.constant 0 : index
    %c7 = arith.constant 7 : index
    %c0_8 = arith.constant 0 : index
    %6 = vector.load %arg5[%c0_7, %c7, %c0_8] : memref<18x32x128xbf16, #tpu.memory_space<vmem>>, vector<16x16x128xbf16>
    %7 = vector.shape_cast %6 : vector<16x16x128xbf16> to vector<256x128xbf16>
    %c0_9 = arith.constant 0 : index
    %c0_10 = arith.constant 0 : index
    %8 = vector.load %arg7[%c0_9, %c0_10] : memref<256x1152xbf16, #tpu.memory_space<vmem>>, vector<256x128xbf16>
    tpu.vector_store %arg7[%c0_9, %c0_10], %7 {strides = array<i32>} : memref<256x1152xbf16, #tpu.memory_space<vmem>>, vector<256x128xbf16>,
    %c0_11 = arith.constant 0 : index
    %c8_12 = arith.constant 8 : index
    %c0_13 = arith.constant 0 : index
    %9 = vector.load %arg5[%c0_11, %c8_12, %c0_13] : memref<18x32x128xbf16, #tpu.memory_space<vmem>>, vector<16x16x128xbf16>
    %10 = vector.shape_cast %9 : vector<16x16x128xbf16> to vector<256x128xbf16>
    %c0_14 = arith.constant 0 : index
    %c128 = arith.constant 128 : index
    %11 = vector.load %arg7[%c0_14, %c128] : memref<256x1152xbf16, #tpu.memory_space<vmem>>, vector<256x128xbf16>
    tpu.vector_store %arg7[%c0_14, %c128], %10 {strides = array<i32>} : memref<256x1152xbf16, #tpu.memory_space<vmem>>, vector<256x128xbf16>,
    %c0_15 = arith.constant 0 : index
    %c9 = arith.constant 9 : index
    %c0_16 = arith.constant 0 : index
    %12 = vector.load %arg5[%c0_15, %c9, %c0_16] : memref<18x32x128xbf16, #tpu.memory_space<vmem>>, vector<16x16x128xbf16>
    %13 = vector.shape_cast %12 : vector<16x16x128xbf16> to vector<256x128xbf16>
    %c0_17 = arith.constant 0 : index
    %c256 = arith.constant 256 : index
    %14 = vector.load %arg7[%c0_17, %c256] : memref<256x1152xbf16, #tpu.memory_space<vmem>>, vector<256x128xbf16>
    tpu.vector_store %arg7[%c0_17, %c256], %13 {strides = array<i32>} : memref<256x1152xbf16, #tpu.memory_space<vmem>>, vector<256x128xbf16>,
    %c1_18 = arith.constant 1 : index
    %c7_19 = arith.constant 7 : index
    %c0_20 = arith.constant 0 : index
    %15 = vector.load %arg5[%c1_18, %c7_19, %c0_20] : memref<18x32x128xbf16, #tpu.memory_space<vmem>>, vector<16x16x128xbf16>
    %16 = vector.shape_cast %15 : vector<16x16x128xbf16> to vector<256x128xbf16>
    %c0_21 = arith.constant 0 : index
    %c384 = arith.constant 384 : index
    %17 = vector.load %arg7[%c0_21, %c384] : memref<256x1152xbf16, #tpu.memory_space<vmem>>, vector<256x128xbf16>
    tpu.vector_store %arg7[%c0_21, %c384], %16 {strides = array<i32>} : memref<256x1152xbf16, #tpu.memory_space<vmem>>, vector<256x128xbf16>,
    %c1_22 = arith.constant 1 : index
    %c8_23 = arith.constant 8 : index
    %c0_24 = arith.constant 0 : index
    %18 = vector.load %arg5[%c1_22, %c8_23, %c0_24] : memref<18x32x128xbf16, #tpu.memory_space<vmem>>, vector<16x16x128xbf16>
    %19 = vector.shape_cast %18 : vector<16x16x128xbf16> to vector<256x128xbf16>
    %c0_25 = arith.constant 0 : index
    %c512 = arith.constant 512 : index
    %20 = vector.load %arg7[%c0_25, %c512] : memref<256x1152xbf16, #tpu.memory_space<vmem>>, vector<256x128xbf16>
    tpu.vector_store %arg7[%c0_25, %c512], %19 {strides = array<i32>} : memref<256x1152xbf16, #tpu.memory_space<vmem>>, vector<256x128xbf16>,
    %c1_26 = arith.constant 1 : index
    %c9_27 = arith.constant 9 : index
    %c0_28 = arith.constant 0 : index
    %21 = vector.load %arg5[%c1_26, %c9_27, %c0_28] : memref<18x32x128xbf16, #tpu.memory_space<vmem>>, vector<16x16x128xbf16>
    %22 = vector.shape_cast %21 : vector<16x16x128xbf16> to vector<256x128xbf16>
    %c0_29 = arith.constant 0 : index
    %c640 = arith.constant 640 : index
    %23 = vector.load %arg7[%c0_29, %c640] : memref<256x1152xbf16, #tpu.memory_space<vmem>>, vector<256x128xbf16>
    tpu.vector_store %arg7[%c0_29, %c640], %22 {strides = array<i32>} : memref<256x1152xbf16, #tpu.memory_space<vmem>>, vector<256x128xbf16>,
    %c2 = arith.constant 2 : index
    %c7_30 = arith.constant 7 : index
    %c0_31 = arith.constant 0 : index
    %24 = vector.load %arg5[%c2, %c7_30, %c0_31] : memref<18x32x128xbf16, #tpu.memory_space<vmem>>, vector<16x16x128xbf16>
    %25 = vector.shape_cast %24 : vector<16x16x128xbf16> to vector<256x128xbf16>
    %c0_32 = arith.constant 0 : index
    %c768 = arith.constant 768 : index
    %26 = vector.load %arg7[%c0_32, %c768] : memref<256x1152xbf16, #tpu.memory_space<vmem>>, vector<256x128xbf16>
    tpu.vector_store %arg7[%c0_32, %c768], %25 {strides = array<i32>} : memref<256x1152xbf16, #tpu.memory_space<vmem>>, vector<256x128xbf16>,
    %c2_33 = arith.constant 2 : index
    %c8_34 = arith.constant 8 : index
    %c0_35 = arith.constant 0 : index
    %27 = vector.load %arg5[%c2_33, %c8_34, %c0_35] : memref<18x32x128xbf16, #tpu.memory_space<vmem>>, vector<16x16x128xbf16>
    %28 = vector.shape_cast %27 : vector<16x16x128xbf16> to vector<256x128xbf16>
    %c0_36 = arith.constant 0 : index
    %c896 = arith.constant 896 : index
    %29 = vector.load %arg7[%c0_36, %c896] : memref<256x1152xbf16, #tpu.memory_space<vmem>>, vector<256x128xbf16>
    tpu.vector_store %arg7[%c0_36, %c896], %28 {strides = array<i32>} : memref<256x1152xbf16, #tpu.memory_space<vmem>>, vector<256x128xbf16>,
    %c2_37 = arith.constant 2 : index
    %c9_38 = arith.constant 9 : index
    %c0_39 = arith.constant 0 : index
    %30 = vector.load %arg5[%c2_37, %c9_38, %c0_39] : memref<18x32x128xbf16, #tpu.memory_space<vmem>>, vector<16x16x128xbf16>
    %31 = vector.shape_cast %30 : vector<16x16x128xbf16> to vector<256x128xbf16>
    %c0_40 = arith.constant 0 : index
    %c1024 = arith.constant 1024 : index
    %32 = vector.load %arg7[%c0_40, %c1024] : memref<256x1152xbf16, #tpu.memory_space<vmem>>, vector<256x128xbf16>
    tpu.vector_store %arg7[%c0_40, %c1024], %31 {strides = array<i32>} : memref<256x1152xbf16, #tpu.memory_space<vmem>>, vector<256x128xbf16>,
    %c0_41 = arith.constant 0 : index
    %c0_42 = arith.constant 0 : index
    %33 = vector.load %arg7[%c0_41, %c0_42] : memref<256x1152xbf16, #tpu.memory_space<vmem>>, vector<256x1152xbf16>
    %c0_43 = arith.constant 0 : index
    %c0_44 = arith.constant 0 : index
    %34 = vector.load %arg2[%c0_43, %c0_44] : memref<1152x128xbf16, #tpu.memory_space<vmem>>, vector<1152x128xbf16>
    %cst_45 = arith.constant dense<0.000000e+00> : vector<256x128xf32>
    %35 = tpu.matmul %33, %34, %cst_45 {dimension_numbers = #tpu.dot_dimension_numbers<[1], [0], [0], [1], [0, 0, 1, 1], [], []>} : vector<256x1152xbf16>, vector<1152x128xbf16>, vector<256x128xf32> -> vector<256x128xf32>
    %cst_46 = arith.constant 0.000000e+00 : f32
    %36 = vector.broadcast %cst_46 : f32 to vector<256x128xf32>
    %37 = arith.maximumf %35, %36 : vector<256x128xf32>
    %cst_47 = arith.constant 0.000000e+00 : bf16
    %38 = vector.broadcast %cst_47 : bf16 to vector<18x32x128xbf16>
    %c0_48 = arith.constant 0 : index
    %c0_49 = arith.constant 0 : index
    %c0_50 = arith.constant 0 : index
    %39 = vector.load %arg6[%c0_48, %c0_49, %c0_50] : memref<18x32x128xbf16, #tpu.memory_space<vmem>>, vector<18x32x128xbf16>
    tpu.vector_store %arg6[%c0_48, %c0_49, %c0_50], %38 {strides = array<i32>} : memref<18x32x128xbf16, #tpu.memory_space<vmem>>, vector<18x32x128xbf16>,
    %40 = vector.shape_cast %37 : vector<256x128xf32> to vector<16x16x128xf32>
    %41 = arith.truncf %40 : vector<16x16x128xf32> to vector<16x16x128xbf16>
    %c1_51 = arith.constant 1 : index
    %c8_52 = arith.constant 8 : index
    %c0_53 = arith.constant 0 : index
    %42 = vector.load %arg6[%c1_51, %c8_52, %c0_53] : memref<18x32x128xbf16, #tpu.memory_space<vmem>>, vector<16x16x128xbf16>
    tpu.vector_store %arg6[%c1_51, %c8_52, %c0_53], %41 {strides = array<i32>} : memref<18x32x128xbf16, #tpu.memory_space<vmem>>, vector<16x16x128xbf16>,
    %c0_54 = arith.constant 0 : index
    %c7_55 = arith.constant 7 : index
    %c0_56 = arith.constant 0 : index
    %43 = vector.load %arg6[%c0_54, %c7_55, %c0_56] : memref<18x32x128xbf16, #tpu.memory_space<vmem>>, vector<16x16x128xbf16>
    %44 = vector.shape_cast %43 : vector<16x16x128xbf16> to vector<256x128xbf16>
    %c0_57 = arith.constant 0 : index
    %c0_58 = arith.constant 0 : index
    %45 = vector.load %arg7[%c0_57, %c0_58] : memref<256x1152xbf16, #tpu.memory_space<vmem>>, vector<256x128xbf16>
    tpu.vector_store %arg7[%c0_57, %c0_58], %44 {strides = array<i32>} : memref<256x1152xbf16, #tpu.memory_space<vmem>>, vector<256x128xbf16>,
    %c0_59 = arith.constant 0 : index
    %c8_60 = arith.constant 8 : index
    %c0_61 = arith.constant 0 : index
    %46 = vector.load %arg6[%c0_59, %c8_60, %c0_61] : memref<18x32x128xbf16, #tpu.memory_space<vmem>>, vector<16x16x128xbf16>
    %47 = vector.shape_cast %46 : vector<16x16x128xbf16> to vector<256x128xbf16>
    %c0_62 = arith.constant 0 : index
    %c128_63 = arith.constant 128 : index
    %48 = vector.load %arg7[%c0_62, %c128_63] : memref<256x1152xbf16, #tpu.memory_space<vmem>>, vector<256x128xbf16>
    tpu.vector_store %arg7[%c0_62, %c128_63], %47 {strides = array<i32>} : memref<256x1152xbf16, #tpu.memory_space<vmem>>, vector<256x128xbf16>,
    %c0_64 = arith.constant 0 : index
    %c9_65 = arith.constant 9 : index
    %c0_66 = arith.constant 0 : index
    %49 = vector.load %arg6[%c0_64, %c9_65, %c0_66] : memref<18x32x128xbf16, #tpu.memory_space<vmem>>, vector<16x16x128xbf16>
    %50 = vector.shape_cast %49 : vector<16x16x128xbf16> to vector<256x128xbf16>
    %c0_67 = arith.constant 0 : index
    %c256_68 = arith.constant 256 : index
    %51 = vector.load %arg7[%c0_67, %c256_68] : memref<256x1152xbf16, #tpu.memory_space<vmem>>, vector<256x128xbf16>
    tpu.vector_store %arg7[%c0_67, %c256_68], %50 {strides = array<i32>} : memref<256x1152xbf16, #tpu.memory_space<vmem>>, vector<256x128xbf16>,
    %c1_69 = arith.constant 1 : index
    %c7_70 = arith.constant 7 : index
    %c0_71 = arith.constant 0 : index
    %52 = vector.load %arg6[%c1_69, %c7_70, %c0_71] : memref<18x32x128xbf16, #tpu.memory_space<vmem>>, vector<16x16x128xbf16>
    %53 = vector.shape_cast %52 : vector<16x16x128xbf16> to vector<256x128xbf16>
    %c0_72 = arith.constant 0 : index
    %c384_73 = arith.constant 384 : index
    %54 = vector.load %arg7[%c0_72, %c384_73] : memref<256x1152xbf16, #tpu.memory_space<vmem>>, vector<256x128xbf16>
    tpu.vector_store %arg7[%c0_72, %c384_73], %53 {strides = array<i32>} : memref<256x1152xbf16, #tpu.memory_space<vmem>>, vector<256x128xbf16>,
    %c1_74 = arith.constant 1 : index
    %c8_75 = arith.constant 8 : index
    %c0_76 = arith.constant 0 : index
    %55 = vector.load %arg6[%c1_74, %c8_75, %c0_76] : memref<18x32x128xbf16, #tpu.memory_space<vmem>>, vector<16x16x128xbf16>
    %56 = vector.shape_cast %55 : vector<16x16x128xbf16> to vector<256x128xbf16>
    %c0_77 = arith.constant 0 : index
    %c512_78 = arith.constant 512 : index
    %57 = vector.load %arg7[%c0_77, %c512_78] : memref<256x1152xbf16, #tpu.memory_space<vmem>>, vector<256x128xbf16>
    tpu.vector_store %arg7[%c0_77, %c512_78], %56 {strides = array<i32>} : memref<256x1152xbf16, #tpu.memory_space<vmem>>, vector<256x128xbf16>,
    %c1_79 = arith.constant 1 : index
    %c9_80 = arith.constant 9 : index
    %c0_81 = arith.constant 0 : index
    %58 = vector.load %arg6[%c1_79, %c9_80, %c0_81] : memref<18x32x128xbf16, #tpu.memory_space<vmem>>, vector<16x16x128xbf16>
    %59 = vector.shape_cast %58 : vector<16x16x128xbf16> to vector<256x128xbf16>
    %c0_82 = arith.constant 0 : index
    %c640_83 = arith.constant 640 : index
    %60 = vector.load %arg7[%c0_82, %c640_83] : memref<256x1152xbf16, #tpu.memory_space<vmem>>, vector<256x128xbf16>
    tpu.vector_store %arg7[%c0_82, %c640_83], %59 {strides = array<i32>} : memref<256x1152xbf16, #tpu.memory_space<vmem>>, vector<256x128xbf16>,
    %c2_84 = arith.constant 2 : index
    %c7_85 = arith.constant 7 : index
    %c0_86 = arith.constant 0 : index
    %61 = vector.load %arg6[%c2_84, %c7_85, %c0_86] : memref<18x32x128xbf16, #tpu.memory_space<vmem>>, vector<16x16x128xbf16>
    %62 = vector.shape_cast %61 : vector<16x16x128xbf16> to vector<256x128xbf16>
    %c0_87 = arith.constant 0 : index
    %c768_88 = arith.constant 768 : index
    %63 = vector.load %arg7[%c0_87, %c768_88] : memref<256x1152xbf16, #tpu.memory_space<vmem>>, vector<256x128xbf16>
    tpu.vector_store %arg7[%c0_87, %c768_88], %62 {strides = array<i32>} : memref<256x1152xbf16, #tpu.memory_space<vmem>>, vector<256x128xbf16>,
    %c2_89 = arith.constant 2 : index
    %c8_90 = arith.constant 8 : index
    %c0_91 = arith.constant 0 : index
    %64 = vector.load %arg6[%c2_89, %c8_90, %c0_91] : memref<18x32x128xbf16, #tpu.memory_space<vmem>>, vector<16x16x128xbf16>
    %65 = vector.shape_cast %64 : vector<16x16x128xbf16> to vector<256x128xbf16>
    %c0_92 = arith.constant 0 : index
    %c896_93 = arith.constant 896 : index
    %66 = vector.load %arg7[%c0_92, %c896_93] : memref<256x1152xbf16, #tpu.memory_space<vmem>>, vector<256x128xbf16>
    tpu.vector_store %arg7[%c0_92, %c896_93], %65 {strides = array<i32>} : memref<256x1152xbf16, #tpu.memory_space<vmem>>, vector<256x128xbf16>,
    %c2_94 = arith.constant 2 : index
    %c9_95 = arith.constant 9 : index
    %c0_96 = arith.constant 0 : index
    %67 = vector.load %arg6[%c2_94, %c9_95, %c0_96] : memref<18x32x128xbf16, #tpu.memory_space<vmem>>, vector<16x16x128xbf16>
    %68 = vector.shape_cast %67 : vector<16x16x128xbf16> to vector<256x128xbf16>
    %c0_97 = arith.constant 0 : index
    %c1024_98 = arith.constant 1024 : index
    %69 = vector.load %arg7[%c0_97, %c1024_98] : memref<256x1152xbf16, #tpu.memory_space<vmem>>, vector<256x128xbf16>
    tpu.vector_store %arg7[%c0_97, %c1024_98], %68 {strides = array<i32>} : memref<256x1152xbf16, #tpu.memory_space<vmem>>, vector<256x128xbf16>,
    %c0_99 = arith.constant 0 : index
    %c0_100 = arith.constant 0 : index
    %70 = vector.load %arg7[%c0_99, %c0_100] : memref<256x1152xbf16, #tpu.memory_space<vmem>>, vector<256x1152xbf16>
    %c0_101 = arith.constant 0 : index
    %c0_102 = arith.constant 0 : index
    %71 = vector.load %arg3[%c0_101, %c0_102] : memref<1152x128xbf16, #tpu.memory_space<vmem>>, vector<1152x128xbf16>
    %cst_103 = arith.constant dense<0.000000e+00> : vector<256x128xf32>
    %72 = tpu.matmul %70, %71, %cst_103 {dimension_numbers = #tpu.dot_dimension_numbers<[1], [0], [0], [1], [0, 0, 1, 1], [], []>} : vector<256x1152xbf16>, vector<1152x128xbf16>, vector<256x128xf32> -> vector<256x128xf32>
    %73 = vector.shape_cast %72 : vector<256x128xf32> to vector<1x16x16x128xf32>
    %cst_104 = arith.constant 1.000000e-01 : f32
    %74 = vector.broadcast %cst_104 : f32 to vector<1x16x16x128xf32>
    %75 = arith.mulf %73, %74 : vector<1x16x16x128xf32>
    %c0_105 = arith.constant 0 : index
    %c0_106 = arith.constant 0 : index
    %c0_107 = arith.constant 0 : index
    %c0_108 = arith.constant 0 : index
    %76 = vector.load %arg1[%c0_105, %c0_106, %c0_107, %c0_108] : memref<1x16x16x128xf32, #tpu.memory_space<vmem>>, vector<1x16x16x128xf32>
    %77 = arith.addf %75, %76 : vector<1x16x16x128xf32>
    %c0_109 = arith.constant 0 : index
    %c0_110 = arith.constant 0 : index
    %c0_111 = arith.constant 0 : index
    %c0_112 = arith.constant 0 : index
    %78 = vector.load %arg4[%c0_109, %c0_110, %c0_111, %c0_112] : memref<1x16x16x128xf32, #tpu.memory_space<vmem>>, vector<1x16x16x128xf32>
    tpu.vector_store %arg4[%c0_109, %c0_110, %c0_111, %c0_112], %77 {strides = array<i32>} : memref<1x16x16x128xf32, #tpu.memory_space<vmem>>, vector<1x16x16x128xf32>,
    return
  }
  func.func @transform_0(%arg0: i32) -> (i32, i32, i32, i32) {
    %c0_i32 = arith.constant 0 : i32
    %c0_i32_0 = arith.constant 0 : i32
    %c0_i32_1 = arith.constant 0 : i32
    %c0_i32_2 = arith.constant 0 : i32
    return %arg0, %c0_i32, %c0_i32_0, %c0_i32_1 : i32, i32, i32, i32
  }
  func.func @transform_1(%arg0: i32) -> (i32, i32) {
    %c0_i32 = arith.constant 0 : i32
    %c0_i32_0 = arith.constant 0 : i32
    %c0_i32_1 = arith.constant 0 : i32
    return %c0_i32, %c0_i32_0 : i32, i32
  }
  func.func @transform_2(%arg0: i32) -> (i32, i32) {
    %c0_i32 = arith.constant 0 : i32
    %c0_i32_0 = arith.constant 0 : i32
    %c0_i32_1 = arith.constant 0 : i32
    return %c0_i32, %c0_i32_0 : i32, i32
  }
  func.func @transform_3(%arg0: i32) -> (i32, i32, i32, i32) {
    %c0_i32 = arith.constant 0 : i32
    %c0_i32_0 = arith.constant 0 : i32
    %c0_i32_1 = arith.constant 0 : i32
    %c0_i32_2 = arith.constant 0 : i32
    return %arg0, %c0_i32, %c0_i32_0, %c0_i32_1 : i32, i32, i32, i32
  }
}

</mosaic_0001>

<llo_original>
// kernel: residual_block_forward.1
$region0: #{residual_block_forward.1}
  #allocation0 [shape = 'u32[]', space=smem, size = 0x4, offset = 0x4, fixed_abs, tag = 'smem constant byte address 0x4 - core index']
  #allocation1 [shape = 'u32[144,128]{1,0:T(1,128)}', space=vmem, size = 0x12000, scoped, tag = 'internal scratch']
  #allocation2 [shape = 'bf16[18,32,128]{2,1,0:T(16,128)(2,1)}', space=vmem, size = 0x24000, scoped, tag = 'scratch operand']
  #allocation3 [shape = 'bf16[18,32,128]{2,1,0:T(16,128)(2,1)}', space=vmem, size = 0x24000, scoped, tag = 'scratch operand']
  #allocation4 [shape = 'bf16[256,1152]{1,0:T(16,128)(2,1)}', space=vmem, size = 0x90000, scoped, tag = 'scratch operand']
  %s0 = inlined_call_operand.vmem [shape: f32[2,16,16,128], index: 0, kind: input, shape index: {}]
  %s1 = inlined_call_operand.vmem [shape: bf16[1152,128], index: 1, kind: input, shape index: {}]
  %s2 = inlined_call_operand.vmem [shape: bf16[1152,128], index: 2, kind: input, shape index: {}]
  %s3 = inlined_call_operand.hbm [shape: f32[2,16,16,128], index: 3, kind: output, shape index: {}]
  %s4 = sld [smem:[#allocation0]]
  $region45: #{residual_block_forward.1} parent=0
    _
  %s6 = ssub.s32 1, %s4
  %s7 = scalar_select 0, %s6, %s4
  $region1: #{residual_block_forward.1} parent=0
    #allocation5 [shape = 'u8[262144]{0}', space=vmem, size = 0x40000, scoped, tag = 'output window, operand 0']
    #allocation6 [shape = 's32[2]{0}', space=sflag, size = 0x8, scoped, tag = 'scoped memory for residual_block_forward.1']
    %8 = vsyncpa [#allocation6], 0
    %s9 = scalar_lea.sflag [#allocation6], 1
    %10 = vsyncpa %s9, 0
    loop: start=0, step=1, limit=4
    $region2: #{residual_block_forward.1} parent=1 // loop_pre_header
      _
    $region3: #{residual_block_forward.1} parent=1 // loop_header
      %s12 = sphi 0, %s16
      %p13 = scmp.ge.s32.totalorder %s12, 4
      %s22 = sphi 0, %s24
      %s25 = sphi 0, %s22
      %s26 = sphi 0, %s25
      %s42 = sphi 0, %s26
      %s46 = sphi 0, %s46
      %s48 = sphi 0, %s46
      %s49 = sphi 0, %s48
      %s63 = sphi 0, %s49
      %s67 = sphi 0, %s67
      %s69 = sphi 0, %s67
      %s70 = sphi 0, %s69
      %s84 = sphi 0, %s70
      %s90 = sphi 0, %s92
      %s93 = sphi 0, %s90
      %s94 = sphi 0, %s93
      %s110 = sphi 0, %s94
    $region4: #{residual_block_forward.1} parent=1 // loop_header_branch
      %15 = sbr.rel (%p13) target = $region8
    $region5: #{residual_block_forward.1} parent=1 // loop_body
      %s17 = ssub.s32 %s12, 1
      %s18 = ssub.s32 %s12, 2
      %s19 = sadd.s32 %s12, 1
      %s20 = ssub.s32 %s12, %s19
      %p21 = scmp.eq.s32.totalorder %s20, 0
      %s23 = sadd.s32 %s22, 1
      %s24 = scalar_select %p21, %s22, %s23
      %p27 = pneg %p21
      %p28 = scmp.eq.s32.totalorder %s12, 1
      %p29 = por %p27, %p28
      %p30 = scmp.ne.s32.totalorder %s22, %s25
      %p31 = scmp.eq.s32.totalorder %s12, 0
      %p32 = por %p30, %p31
      %p33 = scmp.ne.s32.totalorder %s22, %s25
      %p34 = scmp.eq.s32.totalorder %s17, 1
      %p35 = por %p33, %p34
      %p36 = scmp.ne.s32.totalorder %s25, %s26
      %p37 = scmp.eq.s32.totalorder %s17, 0
      %p38 = por %p36, %p37
      %p39 = scmp.ne.s32.totalorder %s25, %s26
      %p40 = scmp.eq.s32.totalorder %s18, 1
      %p41 = por %p39, %p40
      %p43 = scmp.ne.s32.totalorder %s26, %s42
      %p44 = scmp.eq.s32.totalorder %s18, 0
      %p45 = por %p43, %p44
      %s47 = sadd.s32 %s46, 1
      %p50 = scmp.eq.s32.totalorder %s12, 1
      %p51 = scmp.ne.s32.totalorder %s46, %s48
      %p52 = scmp.eq.s32.totalorder %s12, 0
      %p53 = por %p51, %p52
      %p54 = scmp.ne.s32.totalorder %s46, %s48
      %p55 = scmp.eq.s32.totalorder %s17, 1
      %p56 = por %p54, %p55
      %p57 = scmp.ne.s32.totalorder %s48, %s49
      %p58 = scmp.eq.s32.totalorder %s17, 0
      %p59 = por %p57, %p58
      %p60 = scmp.ne.s32.totalorder %s48, %s49
      %p61 = scmp.eq.s32.totalorder %s18, 1
      %p62 = por %p60, %p61
      %p64 = scmp.ne.s32.totalorder %s49, %s63
      %p65 = scmp.eq.s32.totalorder %s18, 0
      %p66 = por %p64, %p65
      %s68 = sadd.s32 %s67, 1
      %p71 = scmp.eq.s32.totalorder %s12, 1
      %p72 = scmp.ne.s32.totalorder %s67, %s69
      %p73 = scmp.eq.s32.totalorder %s12, 0
      %p74 = por %p72, %p73
      %p75 = scmp.ne.s32.totalorder %s67, %s69
      %p76 = scmp.eq.s32.totalorder %s17, 1
      %p77 = por %p75, %p76
      %p78 = scmp.ne.s32.totalorder %s69, %s70
      %p79 = scmp.eq.s32.totalorder %s17, 0
      %p80 = por %p78, %p79
      %p81 = scmp.ne.s32.totalorder %s69, %s70
      %p82 = scmp.eq.s32.totalorder %s18, 1
      %p83 = por %p81, %p82
      %p85 = scmp.ne.s32.totalorder %s70, %s84
      %p86 = scmp.eq.s32.totalorder %s18, 0
      %p87 = por %p85, %p86
      %s88 = ssub.s32 %s12, %s19
      %p89 = scmp.eq.s32.totalorder %s88, 0
      %s91 = sadd.s32 %s90, 1
      %s92 = scalar_select %p89, %s90, %s91
      %p95 = pneg %p89
      %p96 = scmp.eq.s32.totalorder %s12, 1
      %p97 = por %p95, %p96
      %p98 = scmp.ne.s32.totalorder %s90, %s93
      %p99 = scmp.eq.s32.totalorder %s12, 0
      %p100 = por %p98, %p99
      %p101 = scmp.ne.s32.totalorder %s90, %s93
      %p102 = scmp.eq.s32.totalorder %s17, 1
      %p103 = por %p101, %p102
      %p104 = scmp.ne.s32.totalorder %s93, %s94
      %p105 = scmp.eq.s32.totalorder %s17, 0
      %p106 = por %p104, %p105
      %p107 = scmp.ne.s32.totalorder %s93, %s94
      %p108 = scmp.eq.s32.totalorder %s18, 1
      %p109 = por %p107, %p108
      %p111 = scmp.ne.s32.totalorder %s94, %s110
      %p112 = scmp.eq.s32.totalorder %s18, 0
      %p113 = por %p111, %p112
      %p114 = scmp.le.s32.totalorder 1, %s12
      %p115 = scmp.lt.s32.totalorder %s12, 3
      %p116 = pnand %p114, %p115
      %p117 = pneg %p116
      // Predicated region
      $region9: #{residual_block_forward.1} parent=5 // pred_check
        _
      $region10: #{residual_block_forward.1} parent=5 // pred_check_branch
        %119 = sbr.rel (%p116) target = $region12
      $region11: #{residual_block_forward.1} parent=5 // pred_region
        %s120 = ssub.s32 %s12, 1
        // Predicated region
        $region13: #{residual_block_forward.1} parent=11 // pred_check
          %p121 = pneg %p59
        $region14: #{residual_block_forward.1} parent=11 // pred_check_branch
          %123 = sbr.rel (%p121) target = $region16
        $region15: #{residual_block_forward.1} parent=11 // pred_region
          _
        $region16: #{residual_block_forward.1} parent=11 // pred_fallthru
          _
        // Predicated region
        $region17: #{residual_block_forward.1} parent=11 // pred_check
          %p124 = pneg %p80
        $region18: #{residual_block_forward.1} parent=11 // pred_check_branch
          %126 = sbr.rel (%p124) target = $region20
        $region19: #{residual_block_forward.1} parent=11 // pred_region
          _
        $region20: #{residual_block_forward.1} parent=11 // pred_fallthru
          _
      $region12: #{residual_block_forward.1} parent=5 // pred_fallthru
        _
      %p127 = scmp.lt.s32.totalorder %s12, 2
      // Predicated region
      $region21: #{residual_block_forward.1} parent=5 // pred_check
        %p128 = pneg %p127
      $region22: #{residual_block_forward.1} parent=5 // pred_check_branch
        %130 = sbr.rel (%p128) target = $region24
      $region23: #{residual_block_forward.1} parent=5 // pred_region
        // Predicated region
        $region25: #{residual_block_forward.1} parent=23 // pred_check
          %p131 = pneg %p32
        $region26: #{residual_block_forward.1} parent=23 // pred_check_branch
          %133 = sbr.rel (%p131) target = $region28
        $region27: #{residual_block_forward.1} parent=23 // pred_region
          %p134 = scmp.lt.s32.totalorder %s12, 1
          %s135 = scalar_select %p134, %s12, 1
          %s136 = smul.addr %s135, 32
          %s137 = smul.addr %s136, 8
          %s138 = scalar_lea.vmem %s0, %s137
        $region28: #{residual_block_forward.1} parent=23 // pred_fallthru
          _
      $region24: #{residual_block_forward.1} parent=5 // pred_fallthru
        _
      %p139 = scmp.le.s32.totalorder 1, %s12
      %p140 = scmp.lt.s32.totalorder %s12, 3
      %p141 = pnand %p139, %p140
      %p142 = pneg %p141
      // Predicated region
      $region29: #{residual_block_forward.1} parent=5 // pred_check
        _
      $region30: #{residual_block_forward.1} parent=5 // pred_check_branch
        %144 = sbr.rel (%p141) target = $region32
      $region31: #{residual_block_forward.1} parent=5 // pred_region
        %s145 = ssub.s32 %s12, 1
        %p146 = scmp.lt.s32.totalorder %s17, 1
        %s147 = scalar_select %p146, %s17, 1
        %s148 = smul.addr %s147, 32
        %s149 = smul.addr %s148, 8
        %s150 = scalar_lea.vmem %s0, %s149
        %p151 = pneg %p38
        %p152 = pneg %p35
        %p153 = pneg %p59
        %p154 = pneg %p56
        %p155 = pneg %p80
        %p156 = pneg %p77
        %p157 = pneg %p106
        %p158 = pneg %p103
        %s159 = sand.u32 %s93, 1
        %s160 = scalar_lea.sflag [#allocation6], %s159
        %s161 = sand.u32 %s93, 1
        %s162 = smul.addr %s161, 256
        %s163 = scalar_lea.vmem [#allocation5], %s162
        %p164 = scmp.lt.s32.totalorder %s17, 1
        %s165 = scalar_select %p164, %s17, 1
        %s166 = smul.addr %s165, 32
        %s167 = smul.addr %s166, 8
        %s168 = scalar_lea.vmem %s0, %s167
        %v170 = vld [vmem:[%s168] sm:$0xff]
        %v171 = vld [vmem:[%s168 + $0x8] sm:$0xff]
        %v172 = vld [vmem:[%s168 + $0x10] sm:$0xff]
        %v173 = vld [vmem:[%s168 + $0x18] sm:$0xff]
        %v174 = vld [vmem:[%s168 + $0x20] sm:$0xff]
        %v175 = vld [vmem:[%s168 + $0x28] sm:$0xff]
        %v176 = vld [vmem:[%s168 + $0x30] sm:$0xff]
        %v177 = vld [vmem:[%s168 + $0x38] sm:$0xff]
        %v178 = vld [vmem:[%s168 + $0x40] sm:$0xff]
        %v179 = vld [vmem:[%s168 + $0x48] sm:$0xff]
        %v180 = vld [vmem:[%s168 + $0x50] sm:$0xff]
        %v181 = vld [vmem:[%s168 + $0x58] sm:$0xff]
        %v182 = vld [vmem:[%s168 + $0x60] sm:$0xff]
        %v183 = vld [vmem:[%s168 + $0x68] sm:$0xff]
        %v184 = vld [vmem:[%s168 + $0x70] sm:$0xff]
        %v185 = vld [vmem:[%s168 + $0x78] sm:$0xff]
        %v186 = vld [vmem:[%s168 + $0x80] sm:$0xff]
        %v187 = vld [vmem:[%s168 + $0x88] sm:$0xff]
        %v188 = vld [vmem:[%s168 + $0x90] sm:$0xff]
        %v189 = vld [vmem:[%s168 + $0x98] sm:$0xff]
        %v190 = vld [vmem:[%s168 + $0xa0] sm:$0xff]
        %v191 = vld [vmem:[%s168 + $0xa8] sm:$0xff]
        %v192 = vld [vmem:[%s168 + $0xb0] sm:$0xff]
        %v193 = vld [vmem:[%s168 + $0xb8] sm:$0xff]
        %v194 = vld [vmem:[%s168 + $0xc0] sm:$0xff]
        %v195 = vld [vmem:[%s168 + $0xc8] sm:$0xff]
        %v196 = vld [vmem:[%s168 + $0xd0] sm:$0xff]
        %v197 = vld [vmem:[%s168 + $0xd8] sm:$0xff]
        %v198 = vld [vmem:[%s168 + $0xe0] sm:$0xff]
        %v199 = vld [vmem:[%s168 + $0xe8] sm:$0xff]
        %v200 = vld [vmem:[%s168 + $0xf0] sm:$0xff]
        %v201 = vld [vmem:[%s168 + $0xf8] sm:$0xff]
        %202 = vst [vmem:[#allocation2] sm:$0xff] 0
        %203 = vst [vmem:[#allocation2 + $0x8] sm:$0xff] 0
        %204 = vst [vmem:[#allocation2 + $0x10] sm:$0xff] 0
        %205 = vst [vmem:[#allocation2 + $0x18] sm:$0xff] 0
        %206 = vst [vmem:[#allocation2 + $0x20] sm:$0xff] 0
        %207 = vst [vmem:[#allocation2 + $0x28] sm:$0xff] 0
        %208 = vst [vmem:[#allocation2 + $0x30] sm:$0xff] 0
        %209 = vst [vmem:[#allocation2 + $0x38] sm:$0xff] 0
        %210 = vst [vmem:[#allocation2 + $0x40] sm:$0xff] 0
        %211 = vst [vmem:[#allocation2 + $0x48] sm:$0xff] 0
        %212 = vst [vmem:[#allocation2 + $0x50] sm:$0xff] 0
        %213 = vst [vmem:[#allocation2 + $0x58] sm:$0xff] 0
        %214 = vst [vmem:[#allocation2 + $0x60] sm:$0xff] 0
        %215 = vst [vmem:[#allocation2 + $0x68] sm:$0xff] 0
        %216 = vst [vmem:[#allocation2 + $0x70] sm:$0xff] 0
        %217 = vst [vmem:[#allocation2 + $0x78] sm:$0xff] 0
        %218 = vst [vmem:[#allocation2 + $0x80] sm:$0xff] 0
        %219 = vst [vmem:[#allocation2 + $0x88] sm:$0xff] 0
        %220 = vst [vmem:[#allocation2 + $0x90] sm:$0xff] 0
        %221 = vst [vmem:[#allocation2 + $0x98] sm:$0xff] 0
        %222 = vst [vmem:[#allocation2 + $0xa0] sm:$0xff] 0
        %223 = vst [vmem:[#allocation2 + $0xa8] sm:$0xff] 0
        %224 = vst [vmem:[#allocation2 + $0xb0] sm:$0xff] 0
        %225 = vst [vmem:[#allocation2 + $0xb8] sm:$0xff] 0
        %226 = vst [vmem:[#allocation2 + $0xc0] sm:$0xff] 0
        %227 = vst [vmem:[#allocation2 + $0xc8] sm:$0xff] 0
        %228 = vst [vmem:[#allocation2 + $0xd0] sm:$0xff] 0
        %229 = vst [vmem:[#allocation2 + $0xd8] sm:$0xff] 0
        %230 = vst [vmem:[#allocation2 + $0xe0] sm:$0xff] 0
        %231 = vst [vmem:[#allocation2 + $0xe8] sm:$0xff] 0
        %232 = vst [vmem:[#allocation2 + $0xf0] sm:$0xff] 0
        %233 = vst [vmem:[#allocation2 + $0xf8] sm:$0xff] 0
        %234 = vst [vmem:[#allocation2 + $0x100] sm:$0xff] 0
        %235 = vst [vmem:[#allocation2 + $0x108] sm:$0xff] 0
        %236 = vst [vmem:[#allocation2 + $0x110] sm:$0xff] 0
        %237 = vst [vmem:[#allocation2 + $0x118] sm:$0xff] 0
        %v238 = vpack.c.bf16 %v171, %v170
        %v239 = vpack.c.bf16 %v173, %v172
        %v240 = vpack.c.bf16 %v175, %v174
        %v241 = vpack.c.bf16 %v177, %v176
        %v242 = vpack.c.bf16 %v179, %v178
        %v243 = vpack.c.bf16 %v181, %v180
        %v244 = vpack.c.bf16 %v183, %v182
        %v245 = vpack.c.bf16 %v185, %v184
        %v246 = vpack.c.bf16 %v187, %v186
        %v247 = vpack.c.bf16 %v189, %v188
        %v248 = vpack.c.bf16 %v191, %v190
        %v249 = vpack.c.bf16 %v193, %v192
        %v250 = vpack.c.bf16 %v195, %v194
        %v251 = vpack.c.bf16 %v197, %v196
        %v252 = vpack.c.bf16 %v199, %v198
        %v253 = vpack.c.bf16 %v201, %v200
        %v270 = vrot.slane %v238, 4
        %v271 = vrot.slane %v239, 4
        %v272 = vrot.slane %v240, 4
        %v273 = vrot.slane %v241, 4
        %v274 = vrot.slane %v242, 4
        %v275 = vrot.slane %v243, 4
        %v276 = vrot.slane %v244, 4
        %v277 = vrot.slane %v245, 4
        %v278 = vrot.slane %v246, 4
        %v279 = vrot.slane %v247, 4
        %v280 = vrot.slane %v248, 4
        %v281 = vrot.slane %v249, 4
        %v282 = vrot.slane %v250, 4
        %v283 = vrot.slane %v251, 4
        %v284 = vrot.slane %v252, 4
        %v285 = vrot.slane %v253, 4
        %s302 = scalar_lea.vmem [#allocation2], 16
        %303 = vst [vmem:[%s302] sm:$0xf0] %v270
        %304 = vst [vmem:[%s302 + $0x8] sm:$0xf] %v270
        %305 = vst [vmem:[%s302 + $0x10] sm:$0xf0] %v271
        %306 = vst [vmem:[%s302 + $0x18] sm:$0xf] %v271
        %307 = vst [vmem:[%s302 + $0x20] sm:$0xf0] %v272
        %308 = vst [vmem:[%s302 + $0x28] sm:$0xf] %v272
        %309 = vst [vmem:[%s302 + $0x30] sm:$0xf0] %v273
        %310 = vst [vmem:[%s302 + $0x38] sm:$0xf] %v273
        %311 = vst [vmem:[%s302 + $0x40] sm:$0xf0] %v274
        %312 = vst [vmem:[%s302 + $0x48] sm:$0xf] %v274
        %313 = vst [vmem:[%s302 + $0x50] sm:$0xf0] %v275
        %314 = vst [vmem:[%s302 + $0x58] sm:$0xf] %v275
        %315 = vst [vmem:[%s302 + $0x60] sm:$0xf0] %v276
        %316 = vst [vmem:[%s302 + $0x68] sm:$0xf] %v276
        %317 = vst [vmem:[%s302 + $0x70] sm:$0xf0] %v277
        %318 = vst [vmem:[%s302 + $0x78] sm:$0xf] %v277
        %319 = vst [vmem:[%s302 + $0x80] sm:$0xf0] %v278
        %320 = vst [vmem:[%s302 + $0x88] sm:$0xf] %v278
        %321 = vst [vmem:[%s302 + $0x90] sm:$0xf0] %v279
        %322 = vst [vmem:[%s302 + $0x98] sm:$0xf] %v279
        %323 = vst [vmem:[%s302 + $0xa0] sm:$0xf0] %v280
        %324 = vst [vmem:[%s302 + $0xa8] sm:$0xf] %v280
        %325 = vst [vmem:[%s302 + $0xb0] sm:$0xf0] %v281
        %326 = vst [vmem:[%s302 + $0xb8] sm:$0xf] %v281
        %327 = vst [vmem:[%s302 + $0xc0] sm:$0xf0] %v282
        %328 = vst [vmem:[%s302 + $0xc8] sm:$0xf] %v282
        %329 = vst [vmem:[%s302 + $0xd0] sm:$0xf0] %v283
        %330 = vst [vmem:[%s302 + $0xd8] sm:$0xf] %v283
        %331 = vst [vmem:[%s302 + $0xe0] sm:$0xf0] %v284
        %332 = vst [vmem:[%s302 + $0xe8] sm:$0xf] %v284
        %333 = vst [vmem:[%s302 + $0xf0] sm:$0xf0] %v285
        %334 = vst [vmem:[%s302 + $0xf8] sm:$0xf] %v285
        %v335 = vld [vmem:[#allocation2] sm:$0xf8]
        %v336 = vld [vmem:[#allocation2 + $0x8] sm:$0xf]
        %v337 = vld [vmem:[#allocation2 + $0x10] sm:$0xf8]
        %v338 = vld [vmem:[#allocation2 + $0x18] sm:$0xf]
        %v339 = vld [vmem:[#allocation2 + $0x20] sm:$0xf8]
        %v340 = vld [vmem:[#allocation2 + $0x28] sm:$0xf]
        %v341 = vld [vmem:[#allocation2 + $0x30] sm:$0xf8]
        %v342 = vld [vmem:[#allocation2 + $0x38] sm:$0xf]
        %v343 = vld [vmem:[#allocation2 + $0x40] sm:$0xf8]
        %v344 = vld [vmem:[#allocation2 + $0x48] sm:$0xf]
        %v345 = vld [vmem:[#allocation2 + $0x50] sm:$0xf8]
        %v346 = vld [vmem:[#allocation2 + $0x58] sm:$0xf]
        %v347 = vld [vmem:[#allocation2 + $0x60] sm:$0xf8]
        %v348 = vld [vmem:[#allocation2 + $0x68] sm:$0xf]
        %v349 = vld [vmem:[#allocation2 + $0x70] sm:$0xf8]
        %v350 = vld [vmem:[#allocation2 + $0x78] sm:$0xf]
        %v351 = vld [vmem:[#allocation2 + $0x80] sm:$0xf8]
        %v352 = vld [vmem:[#allocation2 + $0x88] sm:$0xf]
        %v353 = vld [vmem:[#allocation2 + $0x90] sm:$0xf8]
        %v354 = vld [vmem:[#allocation2 + $0x98] sm:$0xf]
        %v355 = vld [vmem:[#allocation2 + $0xa0] sm:$0xf8]
        %v356 = vld [vmem:[#allocation2 + $0xa8] sm:$0xf]
        %v357 = vld [vmem:[#allocation2 + $0xb0] sm:$0xf8]
        %v358 = vld [vmem:[#allocation2 + $0xb8] sm:$0xf]
        %v359 = vld [vmem:[#allocation2 + $0xc0] sm:$0xf8]
        %v360 = vld [vmem:[#allocation2 + $0xc8] sm:$0xf]
        %v361 = vld [vmem:[#allocation2 + $0xd0] sm:$0xf8]
        %v362 = vld [vmem:[#allocation2 + $0xd8] sm:$0xf]
        %v363 = vld [vmem:[#allocation2 + $0xe0] sm:$0xf8]
        %v364 = vld [vmem:[#allocation2 + $0xe8] sm:$0xf]
        %v365 = vld [vmem:[#allocation2 + $0xf0] sm:$0xf8]
        %v366 = vld [vmem:[#allocation2 + $0xf8] sm:$0xf]
        %vm367 = vsmask.f32 4352
        %v369 = vshrl.u32 %v335, 16
        %v371 = vrot.slane %v369, 3
        %v372 = vshll.u32 %v335, 16
        %v374 = vrot.slane %v372, 4
        %v375 = vor.u32 %v371, %v374
        %v377 = vshrl.u32 %v336, 16
        %v379 = vrot.slane %v377, 3
        %v380 = vshll.u32 %v336, 16
        %v382 = vrot.slane %v380, 4
        %v383 = vor.u32 %v379, %v382
        %v384 = vsel %vm367, %v375, %v383
        %v386 = vshrl.u32 %v337, 16
        %v388 = vrot.slane %v386, 3
        %v389 = vshll.u32 %v337, 16
        %v391 = vrot.slane %v389, 4
        %v392 = vor.u32 %v388, %v391
        %v394 = vshrl.u32 %v338, 16
        %v396 = vrot.slane %v394, 3
        %v397 = vshll.u32 %v338, 16
        %v399 = vrot.slane %v397, 4
        %v400 = vor.u32 %v396, %v399
        %v401 = vsel %vm367, %v392, %v400
        %v403 = vshrl.u32 %v339, 16
        %v405 = vrot.slane %v403, 3
        %v406 = vshll.u32 %v339, 16
        %v408 = vrot.slane %v406, 4
        %v409 = vor.u32 %v405, %v408
        %v411 = vshrl.u32 %v340, 16
        %v413 = vrot.slane %v411, 3
        %v414 = vshll.u32 %v340, 16
        %v416 = vrot.slane %v414, 4
        %v417 = vor.u32 %v413, %v416
        %v418 = vsel %vm367, %v409, %v417
        %v420 = vshrl.u32 %v341, 16
        %v422 = vrot.slane %v420, 3
        %v423 = vshll.u32 %v341, 16
        %v425 = vrot.slane %v423, 4
        %v426 = vor.u32 %v422, %v425
        %v428 = vshrl.u32 %v342, 16
        %v430 = vrot.slane %v428, 3
        %v431 = vshll.u32 %v342, 16
        %v433 = vrot.slane %v431, 4
        %v434 = vor.u32 %v430, %v433
        %v435 = vsel %vm367, %v426, %v434
        %v437 = vshrl.u32 %v343, 16
        %v439 = vrot.slane %v437, 3
        %v440 = vshll.u32 %v343, 16
        %v442 = vrot.slane %v440, 4
        %v443 = vor.u32 %v439, %v442
        %v445 = vshrl.u32 %v344, 16
        %v447 = vrot.slane %v445, 3
        %v448 = vshll.u32 %v344, 16
        %v450 = vrot.slane %v448, 4
        %v451 = vor.u32 %v447, %v450
        %v452 = vsel %vm367, %v443, %v451
        %v454 = vshrl.u32 %v345, 16
        %v456 = vrot.slane %v454, 3
        %v457 = vshll.u32 %v345, 16
        %v459 = vrot.slane %v457, 4
        %v460 = vor.u32 %v456, %v459
        %v462 = vshrl.u32 %v346, 16
        %v464 = vrot.slane %v462, 3
        %v465 = vshll.u32 %v346, 16
        %v467 = vrot.slane %v465, 4
        %v468 = vor.u32 %v464, %v467
        %v469 = vsel %vm367, %v460, %v468
        %v471 = vshrl.u32 %v347, 16
        %v473 = vrot.slane %v471, 3
        %v474 = vshll.u32 %v347, 16
        %v476 = vrot.slane %v474, 4
        %v477 = vor.u32 %v473, %v476
        %v479 = vshrl.u32 %v348, 16
        %v481 = vrot.slane %v479, 3
        %v482 = vshll.u32 %v348, 16
        %v484 = vrot.slane %v482, 4
        %v485 = vor.u32 %v481, %v484
        %v486 = vsel %vm367, %v477, %v485
        %v488 = vshrl.u32 %v349, 16
        %v490 = vrot.slane %v488, 3
        %v491 = vshll.u32 %v349, 16
        %v493 = vrot.slane %v491, 4
        %v494 = vor.u32 %v490, %v493
        %v496 = vshrl.u32 %v350, 16
        %v498 = vrot.slane %v496, 3
        %v499 = vshll.u32 %v350, 16
        %v501 = vrot.slane %v499, 4
        %v502 = vor.u32 %v498, %v501
        %v503 = vsel %vm367, %v494, %v502
        %v505 = vshrl.u32 %v351, 16
        %v507 = vrot.slane %v505, 3
        %v508 = vshll.u32 %v351, 16
        %v510 = vrot.slane %v508, 4
        %v511 = vor.u32 %v507, %v510
        %v513 = vshrl.u32 %v352, 16
        %v515 = vrot.slane %v513, 3
        %v516 = vshll.u32 %v352, 16
        %v518 = vrot.slane %v516, 4
        %v519 = vor.u32 %v515, %v518
        %v520 = vsel %vm367, %v511, %v519
        %v522 = vshrl.u32 %v353, 16
        %v524 = vrot.slane %v522, 3
        %v525 = vshll.u32 %v353, 16
        %v527 = vrot.slane %v525, 4
        %v528 = vor.u32 %v524, %v527
        %v530 = vshrl.u32 %v354, 16
        %v532 = vrot.slane %v530, 3
        %v533 = vshll.u32 %v354, 16
        %v535 = vrot.slane %v533, 4
        %v536 = vor.u32 %v532, %v535
        %v537 = vsel %vm367, %v528, %v536
        %v539 = vshrl.u32 %v355, 16
        %v541 = vrot.slane %v539, 3
        %v542 = vshll.u32 %v355, 16
        %v544 = vrot.slane %v542, 4
        %v545 = vor.u32 %v541, %v544
        %v547 = vshrl.u32 %v356, 16
        %v549 = vrot.slane %v547, 3
        %v550 = vshll.u32 %v356, 16
        %v552 = vrot.slane %v550, 4
        %v553 = vor.u32 %v549, %v552
        %v554 = vsel %vm367, %v545, %v553
        %v556 = vshrl.u32 %v357, 16
        %v558 = vrot.slane %v556, 3
        %v559 = vshll.u32 %v357, 16
        %v561 = vrot.slane %v559, 4
        %v562 = vor.u32 %v558, %v561
        %v564 = vshrl.u32 %v358, 16
        %v566 = vrot.slane %v564, 3
        %v567 = vshll.u32 %v358, 16
        %v569 = vrot.slane %v567, 4
        %v570 = vor.u32 %v566, %v569
        %v571 = vsel %vm367, %v562, %v570
        %v573 = vshrl.u32 %v359, 16
        %v575 = vrot.slane %v573, 3
        %v576 = vshll.u32 %v359, 16
        %v578 = vrot.slane %v576, 4
        %v579 = vor.u32 %v575, %v578
        %v581 = vshrl.u32 %v360, 16
        %v583 = vrot.slane %v581, 3
        %v584 = vshll.u32 %v360, 16
        %v586 = vrot.slane %v584, 4
        %v587 = vor.u32 %v583, %v586
        %v588 = vsel %vm367, %v579, %v587
        %v590 = vshrl.u32 %v361, 16
        %v592 = vrot.slane %v590, 3
        %v593 = vshll.u32 %v361, 16
        %v595 = vrot.slane %v593, 4
        %v596 = vor.u32 %v592, %v595
        %v598 = vshrl.u32 %v362, 16
        %v600 = vrot.slane %v598, 3
        %v601 = vshll.u32 %v362, 16
        %v603 = vrot.slane %v601, 4
        %v604 = vor.u32 %v600, %v603
        %v605 = vsel %vm367, %v596, %v604
        %v607 = vshrl.u32 %v363, 16
        %v609 = vrot.slane %v607, 3
        %v610 = vshll.u32 %v363, 16
        %v612 = vrot.slane %v610, 4
        %v613 = vor.u32 %v609, %v612
        %v615 = vshrl.u32 %v364, 16
        %v617 = vrot.slane %v615, 3
        %v618 = vshll.u32 %v364, 16
        %v620 = vrot.slane %v618, 4
        %v621 = vor.u32 %v617, %v620
        %v622 = vsel %vm367, %v613, %v621
        %v624 = vshrl.u32 %v365, 16
        %v626 = vrot.slane %v624, 3
        %v627 = vshll.u32 %v365, 16
        %v629 = vrot.slane %v627, 4
        %v630 = vor.u32 %v626, %v629
        %v632 = vshrl.u32 %v366, 16
        %v634 = vrot.slane %v632, 3
        %v635 = vshll.u32 %v366, 16
        %v637 = vrot.slane %v635, 4
        %v638 = vor.u32 %v634, %v637
        %v639 = vsel %vm367, %v630, %v638
        %656 = vst [vmem:[#allocation4] sm:$0xff] %v384
        %657 = vst [vmem:[#allocation4 + $0x48] sm:$0xff] %v401
        %658 = vst [vmem:[#allocation4 + $0x90] sm:$0xff] %v418
        %659 = vst [vmem:[#allocation4 + $0xd8] sm:$0xff] %v435
        %660 = vst [vmem:[#allocation4 + $0x120] sm:$0xff] %v452
        %661 = vst [vmem:[#allocation4 + $0x168] sm:$0xff] %v469
        %662 = vst [vmem:[#allocation4 + $0x1b0] sm:$0xff] %v486
        %663 = vst [vmem:[#allocation4 + $0x1f8] sm:$0xff] %v503
        %664 = vst [vmem:[#allocation4 + $0x240] sm:$0xff] %v520
        %665 = vst [vmem:[#allocation4 + $0x288] sm:$0xff] %v537
        %666 = vst [vmem:[#allocation4 + $0x2d0] sm:$0xff] %v554
        %667 = vst [vmem:[#allocation4 + $0x318] sm:$0xff] %v571
        %668 = vst [vmem:[#allocation4 + $0x360] sm:$0xff] %v588
        %669 = vst [vmem:[#allocation4 + $0x3a8] sm:$0xff] %v605
        %670 = vst [vmem:[#allocation4 + $0x3f0] sm:$0xff] %v622
        %671 = vst [vmem:[#allocation4 + $0x438] sm:$0xff] %v639
        %v672 = vld [vmem:[#allocation2] sm:$0xf0]
        %v673 = vld [vmem:[#allocation2 + $0x8] sm:$0xf]
        %v674 = vld [vmem:[#allocation2 + $0x10] sm:$0xf0]
        %v675 = vld [vmem:[#allocation2 + $0x18] sm:$0xf]
        %v676 = vld [vmem:[#allocation2 + $0x20] sm:$0xf0]
        %v677 = vld [vmem:[#allocation2 + $0x28] sm:$0xf]
        %v678 = vld [vmem:[#allocation2 + $0x30] sm:$0xf0]
        %v679 = vld [vmem:[#allocation2 + $0x38] sm:$0xf]
        %v680 = vld [vmem:[#allocation2 + $0x40] sm:$0xf0]
        %v681 = vld [vmem:[#allocation2 + $0x48] sm:$0xf]
        %v682 = vld [vmem:[#allocation2 + $0x50] sm:$0xf0]
        %v683 = vld [vmem:[#allocation2 + $0x58] sm:$0xf]
        %v684 = vld [vmem:[#allocation2 + $0x60] sm:$0xf0]
        %v685 = vld [vmem:[#allocation2 + $0x68] sm:$0xf]
        %v686 = vld [vmem:[#allocation2 + $0x70] sm:$0xf0]
        %v687 = vld [vmem:[#allocation2 + $0x78] sm:$0xf]
        %v688 = vld [vmem:[#allocation2 + $0x80] sm:$0xf0]
        %v689 = vld [vmem:[#allocation2 + $0x88] sm:$0xf]
        %v690 = vld [vmem:[#allocation2 + $0x90] sm:$0xf0]
        %v691 = vld [vmem:[#allocation2 + $0x98] sm:$0xf]
        %v692 = vld [vmem:[#allocation2 + $0xa0] sm:$0xf0]
        %v693 = vld [vmem:[#allocation2 + $0xa8] sm:$0xf]
        %v694 = vld [vmem:[#allocation2 + $0xb0] sm:$0xf0]
        %v695 = vld [vmem:[#allocation2 + $0xb8] sm:$0xf]
        %v696 = vld [vmem:[#allocation2 + $0xc0] sm:$0xf0]
        %v697 = vld [vmem:[#allocation2 + $0xc8] sm:$0xf]
        %v698 = vld [vmem:[#allocation2 + $0xd0] sm:$0xf0]
        %v699 = vld [vmem:[#allocation2 + $0xd8] sm:$0xf]
        %v700 = vld [vmem:[#allocation2 + $0xe0] sm:$0xf0]
        %v701 = vld [vmem:[#allocation2 + $0xe8] sm:$0xf]
        %v702 = vld [vmem:[#allocation2 + $0xf0] sm:$0xf0]
        %v703 = vld [vmem:[#allocation2 + $0xf8] sm:$0xf]
        %vm736 = vcmask 1043456
        %v737 = vrot.slane %v672, 4
        %v738 = vrot.slane %v673, 4
        %v739 = vsel %vm736, %v737, %v738
        %v740 = vrot.slane %v674, 4
        %v741 = vrot.slane %v675, 4
        %v742 = vsel %vm736, %v740, %v741
        %v743 = vrot.slane %v676, 4
        %v744 = vrot.slane %v677, 4
        %v745 = vsel %vm736, %v743, %v744
        %v746 = vrot.slane %v678, 4
        %v747 = vrot.slane %v679, 4
        %v748 = vsel %vm736, %v746, %v747
        %v749 = vrot.slane %v680, 4
        %v750 = vrot.slane %v681, 4
        %v751 = vsel %vm736, %v749, %v750
        %v752 = vrot.slane %v682, 4
        %v753 = vrot.slane %v683, 4
        %v754 = vsel %vm736, %v752, %v753
        %v755 = vrot.slane %v684, 4
        %v756 = vrot.slane %v685, 4
        %v757 = vsel %vm736, %v755, %v756
        %v758 = vrot.slane %v686, 4
        %v759 = vrot.slane %v687, 4
        %v760 = vsel %vm736, %v758, %v759
        %v761 = vrot.slane %v688, 4
        %v762 = vrot.slane %v689, 4
        %v763 = vsel %vm736, %v761, %v762
        %v764 = vrot.slane %v690, 4
        %v765 = vrot.slane %v691, 4
        %v766 = vsel %vm736, %v764, %v765
        %v767 = vrot.slane %v692, 4
        %v768 = vrot.slane %v693, 4
        %v769 = vsel %vm736, %v767, %v768
        %v770 = vrot.slane %v694, 4
        %v771 = vrot.slane %v695, 4
        %v772 = vsel %vm736, %v770, %v771
        %v773 = vrot.slane %v696, 4
        %v774 = vrot.slane %v697, 4
        %v775 = vsel %vm736, %v773, %v774
        %v776 = vrot.slane %v698, 4
        %v777 = vrot.slane %v699, 4
        %v778 = vsel %vm736, %v776, %v777
        %v779 = vrot.slane %v700, 4
        %v780 = vrot.slane %v701, 4
        %v781 = vsel %vm736, %v779, %v780
        %v782 = vrot.slane %v702, 4
        %v783 = vrot.slane %v703, 4
        %v784 = vsel %vm736, %v782, %v783
        %801 = vst [vmem:[#allocation4 + $0x8] sm:$0xff] %v739
        %802 = vst [vmem:[#allocation4 + $0x50] sm:$0xff] %v742
        %803 = vst [vmem:[#allocation4 + $0x98] sm:$0xff] %v745
        %804 = vst [vmem:[#allocation4 + $0xe0] sm:$0xff] %v748
        %805 = vst [vmem:[#allocation4 + $0x128] sm:$0xff] %v751
        %806 = vst [vmem:[#allocation4 + $0x170] sm:$0xff] %v754
        %807 = vst [vmem:[#allocation4 + $0x1b8] sm:$0xff] %v757
        %808 = vst [vmem:[#allocation4 + $0x200] sm:$0xff] %v760
        %809 = vst [vmem:[#allocation4 + $0x248] sm:$0xff] %v763
        %810 = vst [vmem:[#allocation4 + $0x290] sm:$0xff] %v766
        %811 = vst [vmem:[#allocation4 + $0x2d8] sm:$0xff] %v769
        %812 = vst [vmem:[#allocation4 + $0x320] sm:$0xff] %v772
        %813 = vst [vmem:[#allocation4 + $0x368] sm:$0xff] %v775
        %814 = vst [vmem:[#allocation4 + $0x3b0] sm:$0xff] %v778
        %815 = vst [vmem:[#allocation4 + $0x3f8] sm:$0xff] %v781
        %816 = vst [vmem:[#allocation4 + $0x440] sm:$0xff] %v784
        %v817 = vld [vmem:[#allocation2] sm:$0xf0]
        %v818 = vld [vmem:[#allocation2 + $0x8] sm:$0x1f]
        %v819 = vld [vmem:[#allocation2 + $0x10] sm:$0xf0]
        %v820 = vld [vmem:[#allocation2 + $0x18] sm:$0x1f]
        %v821 = vld [vmem:[#allocation2 + $0x20] sm:$0xf0]
        %v822 = vld [vmem:[#allocation2 + $0x28] sm:$0x1f]
        %v823 = vld [vmem:[#allocation2 + $0x30] sm:$0xf0]
        %v824 = vld [vmem:[#allocation2 + $0x38] sm:$0x1f]
        %v825 = vld [vmem:[#allocation2 + $0x40] sm:$0xf0]
        %v826 = vld [vmem:[#allocation2 + $0x48] sm:$0x1f]
        %v827 = vld [vmem:[#allocation2 + $0x50] sm:$0xf0]
        %v828 = vld [vmem:[#allocation2 + $0x58] sm:$0x1f]
        %v829 = vld [vmem:[#allocation2 + $0x60] sm:$0xf0]
        %v830 = vld [vmem:[#allocation2 + $0x68] sm:$0x1f]
        %v831 = vld [vmem:[#allocation2 + $0x70] sm:$0xf0]
        %v832 = vld [vmem:[#allocation2 + $0x78] sm:$0x1f]
        %v833 = vld [vmem:[#allocation2 + $0x80] sm:$0xf0]
        %v834 = vld [vmem:[#allocation2 + $0x88] sm:$0x1f]
        %v835 = vld [vmem:[#allocation2 + $0x90] sm:$0xf0]
        %v836 = vld [vmem:[#allocation2 + $0x98] sm:$0x1f]
        %v837 = vld [vmem:[#allocation2 + $0xa0] sm:$0xf0]
        %v838 = vld [vmem:[#allocation2 + $0xa8] sm:$0x1f]
        %v839 = vld [vmem:[#allocation2 + $0xb0] sm:$0xf0]
        %v840 = vld [vmem:[#allocation2 + $0xb8] sm:$0x1f]
        %v841 = vld [vmem:[#allocation2 + $0xc0] sm:$0xf0]
        %v842 = vld [vmem:[#allocation2 + $0xc8] sm:$0x1f]
        %v843 = vld [vmem:[#allocation2 + $0xd0] sm:$0xf0]
        %v844 = vld [vmem:[#allocation2 + $0xd8] sm:$0x1f]
        %v845 = vld [vmem:[#allocation2 + $0xe0] sm:$0xf0]
        %v846 = vld [vmem:[#allocation2 + $0xe8] sm:$0x1f]
        %v847 = vld [vmem:[#allocation2 + $0xf0] sm:$0xf0]
        %v848 = vld [vmem:[#allocation2 + $0xf8] sm:$0x1f]
        %vm849 = vsmask.f32 3328
        %v851 = vshrl.u32 %v817, 16
        %v853 = vrot.slane %v851, 4
        %v854 = vshll.u32 %v817, 16
        %v856 = vrot.slane %v854, 5
        %v857 = vor.u32 %v853, %v856
        %v859 = vshrl.u32 %v818, 16
        %v861 = vrot.slane %v859, 4
        %v862 = vshll.u32 %v818, 16
        %v864 = vrot.slane %v862, 5
        %v865 = vor.u32 %v861, %v864
        %v866 = vsel %vm849, %v857, %v865
        %v868 = vshrl.u32 %v819, 16
        %v870 = vrot.slane %v868, 4
        %v871 = vshll.u32 %v819, 16
        %v873 = vrot.slane %v871, 5
        %v874 = vor.u32 %v870, %v873
        %v876 = vshrl.u32 %v820, 16
        %v878 = vrot.slane %v876, 4
        %v879 = vshll.u32 %v820, 16
        %v881 = vrot.slane %v879, 5
        %v882 = vor.u32 %v878, %v881
        %v883 = vsel %vm849, %v874, %v882
        %v885 = vshrl.u32 %v821, 16
        %v887 = vrot.slane %v885, 4
        %v888 = vshll.u32 %v821, 16
        %v890 = vrot.slane %v888, 5
        %v891 = vor.u32 %v887, %v890
        %v893 = vshrl.u32 %v822, 16
        %v895 = vrot.slane %v893, 4
        %v896 = vshll.u32 %v822, 16
        %v898 = vrot.slane %v896, 5
        %v899 = vor.u32 %v895, %v898
        %v900 = vsel %vm849, %v891, %v899
        %v902 = vshrl.u32 %v823, 16
        %v904 = vrot.slane %v902, 4
        %v905 = vshll.u32 %v823, 16
        %v907 = vrot.slane %v905, 5
        %v908 = vor.u32 %v904, %v907
        %v910 = vshrl.u32 %v824, 16
        %v912 = vrot.slane %v910, 4
        %v913 = vshll.u32 %v824, 16
        %v915 = vrot.slane %v913, 5
        %v916 = vor.u32 %v912, %v915
        %v917 = vsel %vm849, %v908, %v916
        %v919 = vshrl.u32 %v825, 16
        %v921 = vrot.slane %v919, 4
        %v922 = vshll.u32 %v825, 16
        %v924 = vrot.slane %v922, 5
        %v925 = vor.u32 %v921, %v924
        %v927 = vshrl.u32 %v826, 16
        %v929 = vrot.slane %v927, 4
        %v930 = vshll.u32 %v826, 16
        %v932 = vrot.slane %v930, 5
        %v933 = vor.u32 %v929, %v932
        %v934 = vsel %vm849, %v925, %v933
        %v936 = vshrl.u32 %v827, 16
        %v938 = vrot.slane %v936, 4
        %v939 = vshll.u32 %v827, 16
        %v941 = vrot.slane %v939, 5
        %v942 = vor.u32 %v938, %v941
        %v944 = vshrl.u32 %v828, 16
        %v946 = vrot.slane %v944, 4
        %v947 = vshll.u32 %v828, 16
        %v949 = vrot.slane %v947, 5
        %v950 = vor.u32 %v946, %v949
        %v951 = vsel %vm849, %v942, %v950
        %v953 = vshrl.u32 %v829, 16
        %v955 = vrot.slane %v953, 4
        %v956 = vshll.u32 %v829, 16
        %v958 = vrot.slane %v956, 5
        %v959 = vor.u32 %v955, %v958
        %v961 = vshrl.u32 %v830, 16
        %v963 = vrot.slane %v961, 4
        %v964 = vshll.u32 %v830, 16
        %v966 = vrot.slane %v964, 5
        %v967 = vor.u32 %v963, %v966
        %v968 = vsel %vm849, %v959, %v967
        %v970 = vshrl.u32 %v831, 16
        %v972 = vrot.slane %v970, 4
        %v973 = vshll.u32 %v831, 16
        %v975 = vrot.slane %v973, 5
        %v976 = vor.u32 %v972, %v975
        %v978 = vshrl.u32 %v832, 16
        %v980 = vrot.slane %v978, 4
        %v981 = vshll.u32 %v832, 16
        %v983 = vrot.slane %v981, 5
        %v984 = vor.u32 %v980, %v983
        %v985 = vsel %vm849, %v976, %v984
        %v987 = vshrl.u32 %v833, 16
        %v989 = vrot.slane %v987, 4
        %v990 = vshll.u32 %v833, 16
        %v992 = vrot.slane %v990, 5
        %v993 = vor.u32 %v989, %v992
        %v995 = vshrl.u32 %v834, 16
        %v997 = vrot.slane %v995, 4
        %v998 = vshll.u32 %v834, 16
        %v1000 = vrot.slane %v998, 5
        %v1001 = vor.u32 %v997, %v1000
        %v1002 = vsel %vm849, %v993, %v1001
        %v1004 = vshrl.u32 %v835, 16
        %v1006 = vrot.slane %v1004, 4
        %v1007 = vshll.u32 %v835, 16
        %v1009 = vrot.slane %v1007, 5
        %v1010 = vor.u32 %v1006, %v1009
        %v1012 = vshrl.u32 %v836, 16
        %v1014 = vrot.slane %v1012, 4
        %v1015 = vshll.u32 %v836, 16
        %v1017 = vrot.slane %v1015, 5
        %v1018 = vor.u32 %v1014, %v1017
        %v1019 = vsel %vm849, %v1010, %v1018
        %v1021 = vshrl.u32 %v837, 16
        %v1023 = vrot.slane %v1021, 4
        %v1024 = vshll.u32 %v837, 16
        %v1026 = vrot.slane %v1024, 5
        %v1027 = vor.u32 %v1023, %v1026
        %v1029 = vshrl.u32 %v838, 16
        %v1031 = vrot.slane %v1029, 4
        %v1032 = vshll.u32 %v838, 16
        %v1034 = vrot.slane %v1032, 5
        %v1035 = vor.u32 %v1031, %v1034
        %v1036 = vsel %vm849, %v1027, %v1035
        %v1038 = vshrl.u32 %v839, 16
        %v1040 = vrot.slane %v1038, 4
        %v1041 = vshll.u32 %v839, 16
        %v1043 = vrot.slane %v1041, 5
        %v1044 = vor.u32 %v1040, %v1043
        %v1046 = vshrl.u32 %v840, 16
        %v1048 = vrot.slane %v1046, 4
        %v1049 = vshll.u32 %v840, 16
        %v1051 = vrot.slane %v1049, 5
        %v1052 = vor.u32 %v1048, %v1051
        %v1053 = vsel %vm849, %v1044, %v1052
        %v1055 = vshrl.u32 %v841, 16
        %v1057 = vrot.slane %v1055, 4
        %v1058 = vshll.u32 %v841, 16
        %v1060 = vrot.slane %v1058, 5
        %v1061 = vor.u32 %v1057, %v1060
        %v1063 = vshrl.u32 %v842, 16
        %v1065 = vrot.slane %v1063, 4
        %v1066 = vshll.u32 %v842, 16
        %v1068 = vrot.slane %v1066, 5
        %v1069 = vor.u32 %v1065, %v1068
        %v1070 = vsel %vm849, %v1061, %v1069
        %v1072 = vshrl.u32 %v843, 16
        %v1074 = vrot.slane %v1072, 4
        %v1075 = vshll.u32 %v843, 16
        %v1077 = vrot.slane %v1075, 5
        %v1078 = vor.u32 %v1074, %v1077
        %v1080 = vshrl.u32 %v844, 16
        %v1082 = vrot.slane %v1080, 4
        %v1083 = vshll.u32 %v844, 16
        %v1085 = vrot.slane %v1083, 5
        %v1086 = vor.u32 %v1082, %v1085
        %v1087 = vsel %vm849, %v1078, %v1086
        %v1089 = vshrl.u32 %v845, 16
        %v1091 = vrot.slane %v1089, 4
        %v1092 = vshll.u32 %v845, 16
        %v1094 = vrot.slane %v1092, 5
        %v1095 = vor.u32 %v1091, %v1094
        %v1097 = vshrl.u32 %v846, 16
        %v1099 = vrot.slane %v1097, 4
        %v1100 = vshll.u32 %v846, 16
        %v1102 = vrot.slane %v1100, 5
        %v1103 = vor.u32 %v1099, %v1102
        %v1104 = vsel %vm849, %v1095, %v1103
        %v1106 = vshrl.u32 %v847, 16
        %v1108 = vrot.slane %v1106, 4
        %v1109 = vshll.u32 %v847, 16
        %v1111 = vrot.slane %v1109, 5
        %v1112 = vor.u32 %v1108, %v1111
        %v1114 = vshrl.u32 %v848, 16
        %v1116 = vrot.slane %v1114, 4
        %v1117 = vshll.u32 %v848, 16
        %v1119 = vrot.slane %v1117, 5
        %v1120 = vor.u32 %v1116, %v1119
        %v1121 = vsel %vm849, %v1112, %v1120
        %1138 = vst [vmem:[#allocation4 + $0x10] sm:$0xff] %v866
        %1139 = vst [vmem:[#allocation4 + $0x58] sm:$0xff] %v883
        %1140 = vst [vmem:[#allocation4 + $0xa0] sm:$0xff] %v900
        %1141 = vst [vmem:[#allocation4 + $0xe8] sm:$0xff] %v917
        %1142 = vst [vmem:[#allocation4 + $0x130] sm:$0xff] %v934
        %1143 = vst [vmem:[#allocation4 + $0x178] sm:$0xff] %v951
        %1144 = vst [vmem:[#allocation4 + $0x1c0] sm:$0xff] %v968
        %1145 = vst [vmem:[#allocation4 + $0x208] sm:$0xff] %v985
        %1146 = vst [vmem:[#allocation4 + $0x250] sm:$0xff] %v1002
        %1147 = vst [vmem:[#allocation4 + $0x298] sm:$0xff] %v1019
        %1148 = vst [vmem:[#allocation4 + $0x2e0] sm:$0xff] %v1036
        %1149 = vst [vmem:[#allocation4 + $0x328] sm:$0xff] %v1053
        %1150 = vst [vmem:[#allocation4 + $0x370] sm:$0xff] %v1070
        %1151 = vst [vmem:[#allocation4 + $0x3b8] sm:$0xff] %v1087
        %1152 = vst [vmem:[#allocation4 + $0x400] sm:$0xff] %v1104
        %1153 = vst [vmem:[#allocation4 + $0x448] sm:$0xff] %v1121
        %v1154 = vld [vmem:[%s302] sm:$0xf8]
        %v1155 = vld [vmem:[%s302 + $0x8] sm:$0xf]
        %v1156 = vld [vmem:[%s302 + $0x10] sm:$0xf8]
        %v1157 = vld [vmem:[%s302 + $0x18] sm:$0xf]
        %v1158 = vld [vmem:[%s302 + $0x20] sm:$0xf8]
        %v1159 = vld [vmem:[%s302 + $0x28] sm:$0xf]
        %v1160 = vld [vmem:[%s302 + $0x30] sm:$0xf8]
        %v1161 = vld [vmem:[%s302 + $0x38] sm:$0xf]
        %v1162 = vld [vmem:[%s302 + $0x40] sm:$0xf8]
        %v1163 = vld [vmem:[%s302 + $0x48] sm:$0xf]
        %v1164 = vld [vmem:[%s302 + $0x50] sm:$0xf8]
        %v1165 = vld [vmem:[%s302 + $0x58] sm:$0xf]
        %v1166 = vld [vmem:[%s302 + $0x60] sm:$0xf8]
        %v1167 = vld [vmem:[%s302 + $0x68] sm:$0xf]
        %v1168 = vld [vmem:[%s302 + $0x70] sm:$0xf8]
        %v1169 = vld [vmem:[%s302 + $0x78] sm:$0xf]
        %v1170 = vld [vmem:[%s302 + $0x80] sm:$0xf8]
        %v1171 = vld [vmem:[%s302 + $0x88] sm:$0xf]
        %v1172 = vld [vmem:[%s302 + $0x90] sm:$0xf8]
        %v1173 = vld [vmem:[%s302 + $0x98] sm:$0xf]
        %v1174 = vld [vmem:[%s302 + $0xa0] sm:$0xf8]
        %v1175 = vld [vmem:[%s302 + $0xa8] sm:$0xf]
        %v1176 = vld [vmem:[%s302 + $0xb0] sm:$0xf8]
        %v1177 = vld [vmem:[%s302 + $0xb8] sm:$0xf]
        %v1178 = vld [vmem:[%s302 + $0xc0] sm:$0xf8]
        %v1179 = vld [vmem:[%s302 + $0xc8] sm:$0xf]
        %v1180 = vld [vmem:[%s302 + $0xd0] sm:$0xf8]
        %v1181 = vld [vmem:[%s302 + $0xd8] sm:$0xf]
        %v1182 = vld [vmem:[%s302 + $0xe0] sm:$0xf8]
        %v1183 = vld [vmem:[%s302 + $0xe8] sm:$0xf]
        %v1184 = vld [vmem:[%s302 + $0xf0] sm:$0xf8]
        %v1185 = vld [vmem:[%s302 + $0xf8] sm:$0xf]
        %v1187 = vshrl.u32 %v1154, 16
        %v1189 = vrot.slane %v1187, 3
        %v1190 = vshll.u32 %v1154, 16
        %v1192 = vrot.slane %v1190, 4
        %v1193 = vor.u32 %v1189, %v1192
        %v1195 = vshrl.u32 %v1155, 16
        %v1197 = vrot.slane %v1195, 3
        %v1198 = vshll.u32 %v1155, 16
        %v1200 = vrot.slane %v1198, 4
        %v1201 = vor.u32 %v1197, %v1200
        %v1202 = vsel %vm367, %v1193, %v1201
        %v1204 = vshrl.u32 %v1156, 16
        %v1206 = vrot.slane %v1204, 3
        %v1207 = vshll.u32 %v1156, 16
        %v1209 = vrot.slane %v1207, 4
        %v1210 = vor.u32 %v1206, %v1209
        %v1212 = vshrl.u32 %v1157, 16
        %v1214 = vrot.slane %v1212, 3
        %v1215 = vshll.u32 %v1157, 16
        %v1217 = vrot.slane %v1215, 4
        %v1218 = vor.u32 %v1214, %v1217
        %v1219 = vsel %vm367, %v1210, %v1218
        %v1221 = vshrl.u32 %v1158, 16
        %v1223 = vrot.slane %v1221, 3
        %v1224 = vshll.u32 %v1158, 16
        %v1226 = vrot.slane %v1224, 4
        %v1227 = vor.u32 %v1223, %v1226
        %v1229 = vshrl.u32 %v1159, 16
        %v1231 = vrot.slane %v1229, 3
        %v1232 = vshll.u32 %v1159, 16
        %v1234 = vrot.slane %v1232, 4
        %v1235 = vor.u32 %v1231, %v1234
        %v1236 = vsel %vm367, %v1227, %v1235
        %v1238 = vshrl.u32 %v1160, 16
        %v1240 = vrot.slane %v1238, 3
        %v1241 = vshll.u32 %v1160, 16
        %v1243 = vrot.slane %v1241, 4
        %v1244 = vor.u32 %v1240, %v1243
        %v1246 = vshrl.u32 %v1161, 16
        %v1248 = vrot.slane %v1246, 3
        %v1249 = vshll.u32 %v1161, 16
        %v1251 = vrot.slane %v1249, 4
        %v1252 = vor.u32 %v1248, %v1251
        %v1253 = vsel %vm367, %v1244, %v1252
        %v1255 = vshrl.u32 %v1162, 16
        %v1257 = vrot.slane %v1255, 3
        %v1258 = vshll.u32 %v1162, 16
        %v1260 = vrot.slane %v1258, 4
        %v1261 = vor.u32 %v1257, %v1260
        %v1263 = vshrl.u32 %v1163, 16
        %v1265 = vrot.slane %v1263, 3
        %v1266 = vshll.u32 %v1163, 16
        %v1268 = vrot.slane %v1266, 4
        %v1269 = vor.u32 %v1265, %v1268
        %v1270 = vsel %vm367, %v1261, %v1269
        %v1272 = vshrl.u32 %v1164, 16
        %v1274 = vrot.slane %v1272, 3
        %v1275 = vshll.u32 %v1164, 16
        %v1277 = vrot.slane %v1275, 4
        %v1278 = vor.u32 %v1274, %v1277
        %v1280 = vshrl.u32 %v1165, 16
        %v1282 = vrot.slane %v1280, 3
        %v1283 = vshll.u32 %v1165, 16
        %v1285 = vrot.slane %v1283, 4
        %v1286 = vor.u32 %v1282, %v1285
        %v1287 = vsel %vm367, %v1278, %v1286
        %v1289 = vshrl.u32 %v1166, 16
        %v1291 = vrot.slane %v1289, 3
        %v1292 = vshll.u32 %v1166, 16
        %v1294 = vrot.slane %v1292, 4
        %v1295 = vor.u32 %v1291, %v1294
        %v1297 = vshrl.u32 %v1167, 16
        %v1299 = vrot.slane %v1297, 3
        %v1300 = vshll.u32 %v1167, 16
        %v1302 = vrot.slane %v1300, 4
        %v1303 = vor.u32 %v1299, %v1302
        %v1304 = vsel %vm367, %v1295, %v1303
        %v1306 = vshrl.u32 %v1168, 16
        %v1308 = vrot.slane %v1306, 3
        %v1309 = vshll.u32 %v1168, 16
        %v1311 = vrot.slane %v1309, 4
        %v1312 = vor.u32 %v1308, %v1311
        %v1314 = vshrl.u32 %v1169, 16
        %v1316 = vrot.slane %v1314, 3
        %v1317 = vshll.u32 %v1169, 16
        %v1319 = vrot.slane %v1317, 4
        %v1320 = vor.u32 %v1316, %v1319
        %v1321 = vsel %vm367, %v1312, %v1320
        %v1323 = vshrl.u32 %v1170, 16
        %v1325 = vrot.slane %v1323, 3
        %v1326 = vshll.u32 %v1170, 16
        %v1328 = vrot.slane %v1326, 4
        %v1329 = vor.u32 %v1325, %v1328
        %v1331 = vshrl.u32 %v1171, 16
        %v1333 = vrot.slane %v1331, 3
        %v1334 = vshll.u32 %v1171, 16
        %v1336 = vrot.slane %v1334, 4
        %v1337 = vor.u32 %v1333, %v1336
        %v1338 = vsel %vm367, %v1329, %v1337
        %v1340 = vshrl.u32 %v1172, 16
        %v1342 = vrot.slane %v1340, 3
        %v1343 = vshll.u32 %v1172, 16
        %v1345 = vrot.slane %v1343, 4
        %v1346 = vor.u32 %v1342, %v1345
        %v1348 = vshrl.u32 %v1173, 16
        %v1350 = vrot.slane %v1348, 3
        %v1351 = vshll.u32 %v1173, 16
        %v1353 = vrot.slane %v1351, 4
        %v1354 = vor.u32 %v1350, %v1353
        %v1355 = vsel %vm367, %v1346, %v1354
        %v1357 = vshrl.u32 %v1174, 16
        %v1359 = vrot.slane %v1357, 3
        %v1360 = vshll.u32 %v1174, 16
        %v1362 = vrot.slane %v1360, 4
        %v1363 = vor.u32 %v1359, %v1362
        %v1365 = vshrl.u32 %v1175, 16
        %v1367 = vrot.slane %v1365, 3
        %v1368 = vshll.u32 %v1175, 16
        %v1370 = vrot.slane %v1368, 4
        %v1371 = vor.u32 %v1367, %v1370
        %v1372 = vsel %vm367, %v1363, %v1371
        %v1374 = vshrl.u32 %v1176, 16
        %v1376 = vrot.slane %v1374, 3
        %v1377 = vshll.u32 %v1176, 16
        %v1379 = vrot.slane %v1377, 4
        %v1380 = vor.u32 %v1376, %v1379
        %v1382 = vshrl.u32 %v1177, 16
        %v1384 = vrot.slane %v1382, 3
        %v1385 = vshll.u32 %v1177, 16
        %v1387 = vrot.slane %v1385, 4
        %v1388 = vor.u32 %v1384, %v1387
        %v1389 = vsel %vm367, %v1380, %v1388
        %v1391 = vshrl.u32 %v1178, 16
        %v1393 = vrot.slane %v1391, 3
        %v1394 = vshll.u32 %v1178, 16
        %v1396 = vrot.slane %v1394, 4
        %v1397 = vor.u32 %v1393, %v1396
        %v1399 = vshrl.u32 %v1179, 16
        %v1401 = vrot.slane %v1399, 3
        %v1402 = vshll.u32 %v1179, 16
        %v1404 = vrot.slane %v1402, 4
        %v1405 = vor.u32 %v1401, %v1404
        %v1406 = vsel %vm367, %v1397, %v1405
        %v1408 = vshrl.u32 %v1180, 16
        %v1410 = vrot.slane %v1408, 3
        %v1411 = vshll.u32 %v1180, 16
        %v1413 = vrot.slane %v1411, 4
        %v1414 = vor.u32 %v1410, %v1413
        %v1416 = vshrl.u32 %v1181, 16
        %v1418 = vrot.slane %v1416, 3
        %v1419 = vshll.u32 %v1181, 16
        %v1421 = vrot.slane %v1419, 4
        %v1422 = vor.u32 %v1418, %v1421
        %v1423 = vsel %vm367, %v1414, %v1422
        %v1425 = vshrl.u32 %v1182, 16
        %v1427 = vrot.slane %v1425, 3
        %v1428 = vshll.u32 %v1182, 16
        %v1430 = vrot.slane %v1428, 4
        %v1431 = vor.u32 %v1427, %v1430
        %v1433 = vshrl.u32 %v1183, 16
        %v1435 = vrot.slane %v1433, 3
        %v1436 = vshll.u32 %v1183, 16
        %v1438 = vrot.slane %v1436, 4
        %v1439 = vor.u32 %v1435, %v1438
        %v1440 = vsel %vm367, %v1431, %v1439
        %v1442 = vshrl.u32 %v1184, 16
        %v1444 = vrot.slane %v1442, 3
        %v1445 = vshll.u32 %v1184, 16
        %v1447 = vrot.slane %v1445, 4
        %v1448 = vor.u32 %v1444, %v1447
        %v1450 = vshrl.u32 %v1185, 16
        %v1452 = vrot.slane %v1450, 3
        %v1453 = vshll.u32 %v1185, 16
        %v1455 = vrot.slane %v1453, 4
        %v1456 = vor.u32 %v1452, %v1455
        %v1457 = vsel %vm367, %v1448, %v1456
        %1474 = vst [vmem:[#allocation4 + $0x18] sm:$0xff] %v1202
        %1475 = vst [vmem:[#allocation4 + $0x60] sm:$0xff] %v1219
        %1476 = vst [vmem:[#allocation4 + $0xa8] sm:$0xff] %v1236
        %1477 = vst [vmem:[#allocation4 + $0xf0] sm:$0xff] %v1253
        %1478 = vst [vmem:[#allocation4 + $0x138] sm:$0xff] %v1270
        %1479 = vst [vmem:[#allocation4 + $0x180] sm:$0xff] %v1287
        %1480 = vst [vmem:[#allocation4 + $0x1c8] sm:$0xff] %v1304
        %1481 = vst [vmem:[#allocation4 + $0x210] sm:$0xff] %v1321
        %1482 = vst [vmem:[#allocation4 + $0x258] sm:$0xff] %v1338
        %1483 = vst [vmem:[#allocation4 + $0x2a0] sm:$0xff] %v1355
        %1484 = vst [vmem:[#allocation4 + $0x2e8] sm:$0xff] %v1372
        %1485 = vst [vmem:[#allocation4 + $0x330] sm:$0xff] %v1389
        %1486 = vst [vmem:[#allocation4 + $0x378] sm:$0xff] %v1406
        %1487 = vst [vmem:[#allocation4 + $0x3c0] sm:$0xff] %v1423
        %1488 = vst [vmem:[#allocation4 + $0x408] sm:$0xff] %v1440
        %1489 = vst [vmem:[#allocation4 + $0x450] sm:$0xff] %v1457
        %v1490 = vld [vmem:[%s302] sm:$0xf0]
        %v1491 = vld [vmem:[%s302 + $0x8] sm:$0xf]
        %v1492 = vld [vmem:[%s302 + $0x10] sm:$0xf0]
        %v1493 = vld [vmem:[%s302 + $0x18] sm:$0xf]
        %v1494 = vld [vmem:[%s302 + $0x20] sm:$0xf0]
        %v1495 = vld [vmem:[%s302 + $0x28] sm:$0xf]
        %v1496 = vld [vmem:[%s302 + $0x30] sm:$0xf0]
        %v1497 = vld [vmem:[%s302 + $0x38] sm:$0xf]
        %v1498 = vld [vmem:[%s302 + $0x40] sm:$0xf0]
        %v1499 = vld [vmem:[%s302 + $0x48] sm:$0xf]
        %v1500 = vld [vmem:[%s302 + $0x50] sm:$0xf0]
        %v1501 = vld [vmem:[%s302 + $0x58] sm:$0xf]
        %v1502 = vld [vmem:[%s302 + $0x60] sm:$0xf0]
        %v1503 = vld [vmem:[%s302 + $0x68] sm:$0xf]
        %v1504 = vld [vmem:[%s302 + $0x70] sm:$0xf0]
        %v1505 = vld [vmem:[%s302 + $0x78] sm:$0xf]
        %v1506 = vld [vmem:[%s302 + $0x80] sm:$0xf0]
        %v1507 = vld [vmem:[%s302 + $0x88] sm:$0xf]
        %v1508 = vld [vmem:[%s302 + $0x90] sm:$0xf0]
        %v1509 = vld [vmem:[%s302 + $0x98] sm:$0xf]
        %v1510 = vld [vmem:[%s302 + $0xa0] sm:$0xf0]
        %v1511 = vld [vmem:[%s302 + $0xa8] sm:$0xf]
        %v1512 = vld [vmem:[%s302 + $0xb0] sm:$0xf0]
        %v1513 = vld [vmem:[%s302 + $0xb8] sm:$0xf]
        %v1514 = vld [vmem:[%s302 + $0xc0] sm:$0xf0]
        %v1515 = vld [vmem:[%s302 + $0xc8] sm:$0xf]
        %v1516 = vld [vmem:[%s302 + $0xd0] sm:$0xf0]
        %v1517 = vld [vmem:[%s302 + $0xd8] sm:$0xf]
        %v1518 = vld [vmem:[%s302 + $0xe0] sm:$0xf0]
        %v1519 = vld [vmem:[%s302 + $0xe8] sm:$0xf]
        %v1520 = vld [vmem:[%s302 + $0xf0] sm:$0xf0]
        %v1521 = vld [vmem:[%s302 + $0xf8] sm:$0xf]
        %v1554 = vrot.slane %v1490, 4
        %v1555 = vrot.slane %v1491, 4
        %v1556 = vsel %vm736, %v1554, %v1555
        %v1557 = vrot.slane %v1492, 4
        %v1558 = vrot.slane %v1493, 4
        %v1559 = vsel %vm736, %v1557, %v1558
        %v1560 = vrot.slane %v1494, 4
        %v1561 = vrot.slane %v1495, 4
        %v1562 = vsel %vm736, %v1560, %v1561
        %v1563 = vrot.slane %v1496, 4
        %v1564 = vrot.slane %v1497, 4
        %v1565 = vsel %vm736, %v1563, %v1564
        %v1566 = vrot.slane %v1498, 4
        %v1567 = vrot.slane %v1499, 4
        %v1568 = vsel %vm736, %v1566, %v1567
        %v1569 = vrot.slane %v1500, 4
        %v1570 = vrot.slane %v1501, 4
        %v1571 = vsel %vm736, %v1569, %v1570
        %v1572 = vrot.slane %v1502, 4
        %v1573 = vrot.slane %v1503, 4
        %v1574 = vsel %vm736, %v1572, %v1573
        %v1575 = vrot.slane %v1504, 4
        %v1576 = vrot.slane %v1505, 4
        %v1577 = vsel %vm736, %v1575, %v1576
        %v1578 = vrot.slane %v1506, 4
        %v1579 = vrot.slane %v1507, 4
        %v1580 = vsel %vm736, %v1578, %v1579
        %v1581 = vrot.slane %v1508, 4
        %v1582 = vrot.slane %v1509, 4
        %v1583 = vsel %vm736, %v1581, %v1582
        %v1584 = vrot.slane %v1510, 4
        %v1585 = vrot.slane %v1511, 4
        %v1586 = vsel %vm736, %v1584, %v1585
        %v1587 = vrot.slane %v1512, 4
        %v1588 = vrot.slane %v1513, 4
        %v1589 = vsel %vm736, %v1587, %v1588
        %v1590 = vrot.slane %v1514, 4
        %v1591 = vrot.slane %v1515, 4
        %v1592 = vsel %vm736, %v1590, %v1591
        %v1593 = vrot.slane %v1516, 4
        %v1594 = vrot.slane %v1517, 4
        %v1595 = vsel %vm736, %v1593, %v1594
        %v1596 = vrot.slane %v1518, 4
        %v1597 = vrot.slane %v1519, 4
        %v1598 = vsel %vm736, %v1596, %v1597
        %v1599 = vrot.slane %v1520, 4
        %v1600 = vrot.slane %v1521, 4
        %v1601 = vsel %vm736, %v1599, %v1600
        %1618 = vst [vmem:[#allocation4 + $0x20] sm:$0xff] %v1556
        %1619 = vst [vmem:[#allocation4 + $0x68] sm:$0xff] %v1559
        %1620 = vst [vmem:[#allocation4 + $0xb0] sm:$0xff] %v1562
        %1621 = vst [vmem:[#allocation4 + $0xf8] sm:$0xff] %v1565
        %1622 = vst [vmem:[#allocation4 + $0x140] sm:$0xff] %v1568
        %1623 = vst [vmem:[#allocation4 + $0x188] sm:$0xff] %v1571
        %1624 = vst [vmem:[#allocation4 + $0x1d0] sm:$0xff] %v1574
        %1625 = vst [vmem:[#allocation4 + $0x218] sm:$0xff] %v1577
        %1626 = vst [vmem:[#allocation4 + $0x260] sm:$0xff] %v1580
        %1627 = vst [vmem:[#allocation4 + $0x2a8] sm:$0xff] %v1583
        %1628 = vst [vmem:[#allocation4 + $0x2f0] sm:$0xff] %v1586
        %1629 = vst [vmem:[#allocation4 + $0x338] sm:$0xff] %v1589
        %1630 = vst [vmem:[#allocation4 + $0x380] sm:$0xff] %v1592
        %1631 = vst [vmem:[#allocation4 + $0x3c8] sm:$0xff] %v1595
        %1632 = vst [vmem:[#allocation4 + $0x410] sm:$0xff] %v1598
        %1633 = vst [vmem:[#allocation4 + $0x458] sm:$0xff] %v1601
        %v1634 = vld [vmem:[%s302] sm:$0xf0]
        %v1635 = vld [vmem:[%s302 + $0x8] sm:$0x1f]
        %v1636 = vld [vmem:[%s302 + $0x10] sm:$0xf0]
        %v1637 = vld [vmem:[%s302 + $0x18] sm:$0x1f]
        %v1638 = vld [vmem:[%s302 + $0x20] sm:$0xf0]
        %v1639 = vld [vmem:[%s302 + $0x28] sm:$0x1f]
        %v1640 = vld [vmem:[%s302 + $0x30] sm:$0xf0]
        %v1641 = vld [vmem:[%s302 + $0x38] sm:$0x1f]
        %v1642 = vld [vmem:[%s302 + $0x40] sm:$0xf0]
        %v1643 = vld [vmem:[%s302 + $0x48] sm:$0x1f]
        %v1644 = vld [vmem:[%s302 + $0x50] sm:$0xf0]
        %v1645 = vld [vmem:[%s302 + $0x58] sm:$0x1f]
        %v1646 = vld [vmem:[%s302 + $0x60] sm:$0xf0]
        %v1647 = vld [vmem:[%s302 + $0x68] sm:$0x1f]
        %v1648 = vld [vmem:[%s302 + $0x70] sm:$0xf0]
        %v1649 = vld [vmem:[%s302 + $0x78] sm:$0x1f]
        %v1650 = vld [vmem:[%s302 + $0x80] sm:$0xf0]
        %v1651 = vld [vmem:[%s302 + $0x88] sm:$0x1f]
        %v1652 = vld [vmem:[%s302 + $0x90] sm:$0xf0]
        %v1653 = vld [vmem:[%s302 + $0x98] sm:$0x1f]
        %v1654 = vld [vmem:[%s302 + $0xa0] sm:$0xf0]
        %v1655 = vld [vmem:[%s302 + $0xa8] sm:$0x1f]
        %v1656 = vld [vmem:[%s302 + $0xb0] sm:$0xf0]
        %v1657 = vld [vmem:[%s302 + $0xb8] sm:$0x1f]
        %v1658 = vld [vmem:[%s302 + $0xc0] sm:$0xf0]
        %v1659 = vld [vmem:[%s302 + $0xc8] sm:$0x1f]
        %v1660 = vld [vmem:[%s302 + $0xd0] sm:$0xf0]
        %v1661 = vld [vmem:[%s302 + $0xd8] sm:$0x1f]
        %v1662 = vld [vmem:[%s302 + $0xe0] sm:$0xf0]
        %v1663 = vld [vmem:[%s302 + $0xe8] sm:$0x1f]
        %v1664 = vld [vmem:[%s302 + $0xf0] sm:$0xf0]
        %v1665 = vld [vmem:[%s302 + $0xf8] sm:$0x1f]
        %v1667 = vshrl.u32 %v1634, 16
        %v1669 = vrot.slane %v1667, 4
        %v1670 = vshll.u32 %v1634, 16
        %v1672 = vrot.slane %v1670, 5
        %v1673 = vor.u32 %v1669, %v1672
        %v1675 = vshrl.u32 %v1635, 16
        %v1677 = vrot.slane %v1675, 4
        %v1678 = vshll.u32 %v1635, 16
        %v1680 = vrot.slane %v1678, 5
        %v1681 = vor.u32 %v1677, %v1680
        %v1682 = vsel %vm849, %v1673, %v1681
        %v1684 = vshrl.u32 %v1636, 16
        %v1686 = vrot.slane %v1684, 4
        %v1687 = vshll.u32 %v1636, 16
        %v1689 = vrot.slane %v1687, 5
        %v1690 = vor.u32 %v1686, %v1689
        %v1692 = vshrl.u32 %v1637, 16
        %v1694 = vrot.slane %v1692, 4
        %v1695 = vshll.u32 %v1637, 16
        %v1697 = vrot.slane %v1695, 5
        %v1698 = vor.u32 %v1694, %v1697
        %v1699 = vsel %vm849, %v1690, %v1698
        %v1701 = vshrl.u32 %v1638, 16
        %v1703 = vrot.slane %v1701, 4
        %v1704 = vshll.u32 %v1638, 16
        %v1706 = vrot.slane %v1704, 5
        %v1707 = vor.u32 %v1703, %v1706
        %v1709 = vshrl.u32 %v1639, 16
        %v1711 = vrot.slane %v1709, 4
        %v1712 = vshll.u32 %v1639, 16
        %v1714 = vrot.slane %v1712, 5
        %v1715 = vor.u32 %v1711, %v1714
        %v1716 = vsel %vm849, %v1707, %v1715
        %v1718 = vshrl.u32 %v1640, 16
        %v1720 = vrot.slane %v1718, 4
        %v1721 = vshll.u32 %v1640, 16
        %v1723 = vrot.slane %v1721, 5
        %v1724 = vor.u32 %v1720, %v1723
        %v1726 = vshrl.u32 %v1641, 16
        %v1728 = vrot.slane %v1726, 4
        %v1729 = vshll.u32 %v1641, 16
        %v1731 = vrot.slane %v1729, 5
        %v1732 = vor.u32 %v1728, %v1731
        %v1733 = vsel %vm849, %v1724, %v1732
        %v1735 = vshrl.u32 %v1642, 16
        %v1737 = vrot.slane %v1735, 4
        %v1738 = vshll.u32 %v1642, 16
        %v1740 = vrot.slane %v1738, 5
        %v1741 = vor.u32 %v1737, %v1740
        %v1743 = vshrl.u32 %v1643, 16
        %v1745 = vrot.slane %v1743, 4
        %v1746 = vshll.u32 %v1643, 16
        %v1748 = vrot.slane %v1746, 5
        %v1749 = vor.u32 %v1745, %v1748
        %v1750 = vsel %vm849, %v1741, %v1749
        %v1752 = vshrl.u32 %v1644, 16
        %v1754 = vrot.slane %v1752, 4
        %v1755 = vshll.u32 %v1644, 16
        %v1757 = vrot.slane %v1755, 5
        %v1758 = vor.u32 %v1754, %v1757
        %v1760 = vshrl.u32 %v1645, 16
        %v1762 = vrot.slane %v1760, 4
        %v1763 = vshll.u32 %v1645, 16
        %v1765 = vrot.slane %v1763, 5
        %v1766 = vor.u32 %v1762, %v1765
        %v1767 = vsel %vm849, %v1758, %v1766
        %v1769 = vshrl.u32 %v1646, 16
        %v1771 = vrot.slane %v1769, 4
        %v1772 = vshll.u32 %v1646, 16
        %v1774 = vrot.slane %v1772, 5
        %v1775 = vor.u32 %v1771, %v1774
        %v1777 = vshrl.u32 %v1647, 16
        %v1779 = vrot.slane %v1777, 4
        %v1780 = vshll.u32 %v1647, 16
        %v1782 = vrot.slane %v1780, 5
        %v1783 = vor.u32 %v1779, %v1782
        %v1784 = vsel %vm849, %v1775, %v1783
        %v1786 = vshrl.u32 %v1648, 16
        %v1788 = vrot.slane %v1786, 4
        %v1789 = vshll.u32 %v1648, 16
        %v1791 = vrot.slane %v1789, 5
        %v1792 = vor.u32 %v1788, %v1791
        %v1794 = vshrl.u32 %v1649, 16
        %v1796 = vrot.slane %v1794, 4
        %v1797 = vshll.u32 %v1649, 16
        %v1799 = vrot.slane %v1797, 5
        %v1800 = vor.u32 %v1796, %v1799
        %v1801 = vsel %vm849, %v1792, %v1800
        %v1803 = vshrl.u32 %v1650, 16
        %v1805 = vrot.slane %v1803, 4
        %v1806 = vshll.u32 %v1650, 16
        %v1808 = vrot.slane %v1806, 5
        %v1809 = vor.u32 %v1805, %v1808
        %v1811 = vshrl.u32 %v1651, 16
        %v1813 = vrot.slane %v1811, 4
        %v1814 = vshll.u32 %v1651, 16
        %v1816 = vrot.slane %v1814, 5
        %v1817 = vor.u32 %v1813, %v1816
        %v1818 = vsel %vm849, %v1809, %v1817
        %v1820 = vshrl.u32 %v1652, 16
        %v1822 = vrot.slane %v1820, 4
        %v1823 = vshll.u32 %v1652, 16
        %v1825 = vrot.slane %v1823, 5
        %v1826 = vor.u32 %v1822, %v1825
        %v1828 = vshrl.u32 %v1653, 16
        %v1830 = vrot.slane %v1828, 4
        %v1831 = vshll.u32 %v1653, 16
        %v1833 = vrot.slane %v1831, 5
        %v1834 = vor.u32 %v1830, %v1833
        %v1835 = vsel %vm849, %v1826, %v1834
        %v1837 = vshrl.u32 %v1654, 16
        %v1839 = vrot.slane %v1837, 4
        %v1840 = vshll.u32 %v1654, 16
        %v1842 = vrot.slane %v1840, 5
        %v1843 = vor.u32 %v1839, %v1842
        %v1845 = vshrl.u32 %v1655, 16
        %v1847 = vrot.slane %v1845, 4
        %v1848 = vshll.u32 %v1655, 16
        %v1850 = vrot.slane %v1848, 5
        %v1851 = vor.u32 %v1847, %v1850
        %v1852 = vsel %vm849, %v1843, %v1851
        %v1854 = vshrl.u32 %v1656, 16
        %v1856 = vrot.slane %v1854, 4
        %v1857 = vshll.u32 %v1656, 16
        %v1859 = vrot.slane %v1857, 5
        %v1860 = vor.u32 %v1856, %v1859
        %v1862 = vshrl.u32 %v1657, 16
        %v1864 = vrot.slane %v1862, 4
        %v1865 = vshll.u32 %v1657, 16
        %v1867 = vrot.slane %v1865, 5
        %v1868 = vor.u32 %v1864, %v1867
        %v1869 = vsel %vm849, %v1860, %v1868
        %v1871 = vshrl.u32 %v1658, 16
        %v1873 = vrot.slane %v1871, 4
        %v1874 = vshll.u32 %v1658, 16
        %v1876 = vrot.slane %v1874, 5
        %v1877 = vor.u32 %v1873, %v1876
        %v1879 = vshrl.u32 %v1659, 16
        %v1881 = vrot.slane %v1879, 4
        %v1882 = vshll.u32 %v1659, 16
        %v1884 = vrot.slane %v1882, 5
        %v1885 = vor.u32 %v1881, %v1884
        %v1886 = vsel %vm849, %v1877, %v1885
        %v1888 = vshrl.u32 %v1660, 16
        %v1890 = vrot.slane %v1888, 4
        %v1891 = vshll.u32 %v1660, 16
        %v1893 = vrot.slane %v1891, 5
        %v1894 = vor.u32 %v1890, %v1893
        %v1896 = vshrl.u32 %v1661, 16
        %v1898 = vrot.slane %v1896, 4
        %v1899 = vshll.u32 %v1661, 16
        %v1901 = vrot.slane %v1899, 5
        %v1902 = vor.u32 %v1898, %v1901
        %v1903 = vsel %vm849, %v1894, %v1902
        %v1905 = vshrl.u32 %v1662, 16
        %v1907 = vrot.slane %v1905, 4
        %v1908 = vshll.u32 %v1662, 16
        %v1910 = vrot.slane %v1908, 5
        %v1911 = vor.u32 %v1907, %v1910
        %v1913 = vshrl.u32 %v1663, 16
        %v1915 = vrot.slane %v1913, 4
        %v1916 = vshll.u32 %v1663, 16
        %v1918 = vrot.slane %v1916, 5
        %v1919 = vor.u32 %v1915, %v1918
        %v1920 = vsel %vm849, %v1911, %v1919
        %v1922 = vshrl.u32 %v1664, 16
        %v1924 = vrot.slane %v1922, 4
        %v1925 = vshll.u32 %v1664, 16
        %v1927 = vrot.slane %v1925, 5
        %v1928 = vor.u32 %v1924, %v1927
        %v1930 = vshrl.u32 %v1665, 16
        %v1932 = vrot.slane %v1930, 4
        %v1933 = vshll.u32 %v1665, 16
        %v1935 = vrot.slane %v1933, 5
        %v1936 = vor.u32 %v1932, %v1935
        %v1937 = vsel %vm849, %v1928, %v1936
        %1954 = vst [vmem:[#allocation4 + $0x28] sm:$0xff] %v1682
        %1955 = vst [vmem:[#allocation4 + $0x70] sm:$0xff] %v1699
        %1956 = vst [vmem:[#allocation4 + $0xb8] sm:$0xff] %v1716
        %1957 = vst [vmem:[#allocation4 + $0x100] sm:$0xff] %v1733
        %1958 = vst [vmem:[#allocation4 + $0x148] sm:$0xff] %v1750
        %1959 = vst [vmem:[#allocation4 + $0x190] sm:$0xff] %v1767
        %1960 = vst [vmem:[#allocation4 + $0x1d8] sm:$0xff] %v1784
        %1961 = vst [vmem:[#allocation4 + $0x220] sm:$0xff] %v1801
        %1962 = vst [vmem:[#allocation4 + $0x268] sm:$0xff] %v1818
        %1963 = vst [vmem:[#allocation4 + $0x2b0] sm:$0xff] %v1835
        %1964 = vst [vmem:[#allocation4 + $0x2f8] sm:$0xff] %v1852
        %1965 = vst [vmem:[#allocation4 + $0x340] sm:$0xff] %v1869
        %1966 = vst [vmem:[#allocation4 + $0x388] sm:$0xff] %v1886
        %1967 = vst [vmem:[#allocation4 + $0x3d0] sm:$0xff] %v1903
        %1968 = vst [vmem:[#allocation4 + $0x418] sm:$0xff] %v1920
        %1969 = vst [vmem:[#allocation4 + $0x460] sm:$0xff] %v1937
        %s1970 = scalar_lea.vmem [#allocation2], 32
        %v1971 = vld [vmem:[%s1970] sm:$0xf8]
        %v1972 = vld [vmem:[%s1970 + $0x8] sm:$0xf]
        %v1973 = vld [vmem:[%s1970 + $0x10] sm:$0xf8]
        %v1974 = vld [vmem:[%s1970 + $0x18] sm:$0xf]
        %v1975 = vld [vmem:[%s1970 + $0x20] sm:$0xf8]
        %v1976 = vld [vmem:[%s1970 + $0x28] sm:$0xf]
        %v1977 = vld [vmem:[%s1970 + $0x30] sm:$0xf8]
        %v1978 = vld [vmem:[%s1970 + $0x38] sm:$0xf]
        %v1979 = vld [vmem:[%s1970 + $0x40] sm:$0xf8]
        %v1980 = vld [vmem:[%s1970 + $0x48] sm:$0xf]
        %v1981 = vld [vmem:[%s1970 + $0x50] sm:$0xf8]
        %v1982 = vld [vmem:[%s1970 + $0x58] sm:$0xf]
        %v1983 = vld [vmem:[%s1970 + $0x60] sm:$0xf8]
        %v1984 = vld [vmem:[%s1970 + $0x68] sm:$0xf]
        %v1985 = vld [vmem:[%s1970 + $0x70] sm:$0xf8]
        %v1986 = vld [vmem:[%s1970 + $0x78] sm:$0xf]
        %v1987 = vld [vmem:[%s1970 + $0x80] sm:$0xf8]
        %v1988 = vld [vmem:[%s1970 + $0x88] sm:$0xf]
        %v1989 = vld [vmem:[%s1970 + $0x90] sm:$0xf8]
        %v1990 = vld [vmem:[%s1970 + $0x98] sm:$0xf]
        %v1991 = vld [vmem:[%s1970 + $0xa0] sm:$0xf8]
        %v1992 = vld [vmem:[%s1970 + $0xa8] sm:$0xf]
        %v1993 = vld [vmem:[%s1970 + $0xb0] sm:$0xf8]
        %v1994 = vld [vmem:[%s1970 + $0xb8] sm:$0xf]
        %v1995 = vld [vmem:[%s1970 + $0xc0] sm:$0xf8]
        %v1996 = vld [vmem:[%s1970 + $0xc8] sm:$0xf]
        %v1997 = vld [vmem:[%s1970 + $0xd0] sm:$0xf8]
        %v1998 = vld [vmem:[%s1970 + $0xd8] sm:$0xf]
        %v1999 = vld [vmem:[%s1970 + $0xe0] sm:$0xf8]
        %v2000 = vld [vmem:[%s1970 + $0xe8] sm:$0xf]
        %v2001 = vld [vmem:[%s1970 + $0xf0] sm:$0xf8]
        %v2002 = vld [vmem:[%s1970 + $0xf8] sm:$0xf]
        %v2004 = vshrl.u32 %v1971, 16
        %v2006 = vrot.slane %v2004, 3
        %v2007 = vshll.u32 %v1971, 16
        %v2009 = vrot.slane %v2007, 4
        %v2010 = vor.u32 %v2006, %v2009
        %v2012 = vshrl.u32 %v1972, 16
        %v2014 = vrot.slane %v2012, 3
        %v2015 = vshll.u32 %v1972, 16
        %v2017 = vrot.slane %v2015, 4
        %v2018 = vor.u32 %v2014, %v2017
        %v2019 = vsel %vm367, %v2010, %v2018
        %v2021 = vshrl.u32 %v1973, 16
        %v2023 = vrot.slane %v2021, 3
        %v2024 = vshll.u32 %v1973, 16
        %v2026 = vrot.slane %v2024, 4
        %v2027 = vor.u32 %v2023, %v2026
        %v2029 = vshrl.u32 %v1974, 16
        %v2031 = vrot.slane %v2029, 3
        %v2032 = vshll.u32 %v1974, 16
        %v2034 = vrot.slane %v2032, 4
        %v2035 = vor.u32 %v2031, %v2034
        %v2036 = vsel %vm367, %v2027, %v2035
        %v2038 = vshrl.u32 %v1975, 16
        %v2040 = vrot.slane %v2038, 3
        %v2041 = vshll.u32 %v1975, 16
        %v2043 = vrot.slane %v2041, 4
        %v2044 = vor.u32 %v2040, %v2043
        %v2046 = vshrl.u32 %v1976, 16
        %v2048 = vrot.slane %v2046, 3
        %v2049 = vshll.u32 %v1976, 16
        %v2051 = vrot.slane %v2049, 4
        %v2052 = vor.u32 %v2048, %v2051
        %v2053 = vsel %vm367, %v2044, %v2052
        %v2055 = vshrl.u32 %v1977, 16
        %v2057 = vrot.slane %v2055, 3
        %v2058 = vshll.u32 %v1977, 16
        %v2060 = vrot.slane %v2058, 4
        %v2061 = vor.u32 %v2057, %v2060
        %v2063 = vshrl.u32 %v1978, 16
        %v2065 = vrot.slane %v2063, 3
        %v2066 = vshll.u32 %v1978, 16
        %v2068 = vrot.slane %v2066, 4
        %v2069 = vor.u32 %v2065, %v2068
        %v2070 = vsel %vm367, %v2061, %v2069
        %v2072 = vshrl.u32 %v1979, 16
        %v2074 = vrot.slane %v2072, 3
        %v2075 = vshll.u32 %v1979, 16
        %v2077 = vrot.slane %v2075, 4
        %v2078 = vor.u32 %v2074, %v2077
        %v2080 = vshrl.u32 %v1980, 16
        %v2082 = vrot.slane %v2080, 3
        %v2083 = vshll.u32 %v1980, 16
        %v2085 = vrot.slane %v2083, 4
        %v2086 = vor.u32 %v2082, %v2085
        %v2087 = vsel %vm367, %v2078, %v2086
        %v2089 = vshrl.u32 %v1981, 16
        %v2091 = vrot.slane %v2089, 3
        %v2092 = vshll.u32 %v1981, 16
        %v2094 = vrot.slane %v2092, 4
        %v2095 = vor.u32 %v2091, %v2094
        %v2097 = vshrl.u32 %v1982, 16
        %v2099 = vrot.slane %v2097, 3
        %v2100 = vshll.u32 %v1982, 16
        %v2102 = vrot.slane %v2100, 4
        %v2103 = vor.u32 %v2099, %v2102
        %v2104 = vsel %vm367, %v2095, %v2103
        %v2106 = vshrl.u32 %v1983, 16
        %v2108 = vrot.slane %v2106, 3
        %v2109 = vshll.u32 %v1983, 16
        %v2111 = vrot.slane %v2109, 4
        %v2112 = vor.u32 %v2108, %v2111
        %v2114 = vshrl.u32 %v1984, 16
        %v2116 = vrot.slane %v2114, 3
        %v2117 = vshll.u32 %v1984, 16
        %v2119 = vrot.slane %v2117, 4
        %v2120 = vor.u32 %v2116, %v2119
        %v2121 = vsel %vm367, %v2112, %v2120
        %v2123 = vshrl.u32 %v1985, 16
        %v2125 = vrot.slane %v2123, 3
        %v2126 = vshll.u32 %v1985, 16
        %v2128 = vrot.slane %v2126, 4
        %v2129 = vor.u32 %v2125, %v2128
        %v2131 = vshrl.u32 %v1986, 16
        %v2133 = vrot.slane %v2131, 3
        %v2134 = vshll.u32 %v1986, 16
        %v2136 = vrot.slane %v2134, 4
        %v2137 = vor.u32 %v2133, %v2136
        %v2138 = vsel %vm367, %v2129, %v2137
        %v2140 = vshrl.u32 %v1987, 16
        %v2142 = vrot.slane %v2140, 3
        %v2143 = vshll.u32 %v1987, 16
        %v2145 = vrot.slane %v2143, 4
        %v2146 = vor.u32 %v2142, %v2145
        %v2148 = vshrl.u32 %v1988, 16
        %v2150 = vrot.slane %v2148, 3
        %v2151 = vshll.u32 %v1988, 16
        %v2153 = vrot.slane %v2151, 4
        %v2154 = vor.u32 %v2150, %v2153
        %v2155 = vsel %vm367, %v2146, %v2154
        %v2157 = vshrl.u32 %v1989, 16
        %v2159 = vrot.slane %v2157, 3
        %v2160 = vshll.u32 %v1989, 16
        %v2162 = vrot.slane %v2160, 4
        %v2163 = vor.u32 %v2159, %v2162
        %v2165 = vshrl.u32 %v1990, 16
        %v2167 = vrot.slane %v2165, 3
        %v2168 = vshll.u32 %v1990, 16
        %v2170 = vrot.slane %v2168, 4
        %v2171 = vor.u32 %v2167, %v2170
        %v2172 = vsel %vm367, %v2163, %v2171
        %v2174 = vshrl.u32 %v1991, 16
        %v2176 = vrot.slane %v2174, 3
        %v2177 = vshll.u32 %v1991, 16
        %v2179 = vrot.slane %v2177, 4
        %v2180 = vor.u32 %v2176, %v2179
        %v2182 = vshrl.u32 %v1992, 16
        %v2184 = vrot.slane %v2182, 3
        %v2185 = vshll.u32 %v1992, 16
        %v2187 = vrot.slane %v2185, 4
        %v2188 = vor.u32 %v2184, %v2187
        %v2189 = vsel %vm367, %v2180, %v2188
        %v2191 = vshrl.u32 %v1993, 16
        %v2193 = vrot.slane %v2191, 3
        %v2194 = vshll.u32 %v1993, 16
        %v2196 = vrot.slane %v2194, 4
        %v2197 = vor.u32 %v2193, %v2196
        %v2199 = vshrl.u32 %v1994, 16
        %v2201 = vrot.slane %v2199, 3
        %v2202 = vshll.u32 %v1994, 16
        %v2204 = vrot.slane %v2202, 4
        %v2205 = vor.u32 %v2201, %v2204
        %v2206 = vsel %vm367, %v2197, %v2205
        %v2208 = vshrl.u32 %v1995, 16
        %v2210 = vrot.slane %v2208, 3
        %v2211 = vshll.u32 %v1995, 16
        %v2213 = vrot.slane %v2211, 4
        %v2214 = vor.u32 %v2210, %v2213
        %v2216 = vshrl.u32 %v1996, 16
        %v2218 = vrot.slane %v2216, 3
        %v2219 = vshll.u32 %v1996, 16
        %v2221 = vrot.slane %v2219, 4
        %v2222 = vor.u32 %v2218, %v2221
        %v2223 = vsel %vm367, %v2214, %v2222
        %v2225 = vshrl.u32 %v1997, 16
        %v2227 = vrot.slane %v2225, 3
        %v2228 = vshll.u32 %v1997, 16
        %v2230 = vrot.slane %v2228, 4
        %v2231 = vor.u32 %v2227, %v2230
        %v2233 = vshrl.u32 %v1998, 16
        %v2235 = vrot.slane %v2233, 3
        %v2236 = vshll.u32 %v1998, 16
        %v2238 = vrot.slane %v2236, 4
        %v2239 = vor.u32 %v2235, %v2238
        %v2240 = vsel %vm367, %v2231, %v2239
        %v2242 = vshrl.u32 %v1999, 16
        %v2244 = vrot.slane %v2242, 3
        %v2245 = vshll.u32 %v1999, 16
        %v2247 = vrot.slane %v2245, 4
        %v2248 = vor.u32 %v2244, %v2247
        %v2250 = vshrl.u32 %v2000, 16
        %v2252 = vrot.slane %v2250, 3
        %v2253 = vshll.u32 %v2000, 16
        %v2255 = vrot.slane %v2253, 4
        %v2256 = vor.u32 %v2252, %v2255
        %v2257 = vsel %vm367, %v2248, %v2256
        %v2259 = vshrl.u32 %v2001, 16
        %v2261 = vrot.slane %v2259, 3
        %v2262 = vshll.u32 %v2001, 16
        %v2264 = vrot.slane %v2262, 4
        %v2265 = vor.u32 %v2261, %v2264
        %v2267 = vshrl.u32 %v2002, 16
        %v2269 = vrot.slane %v2267, 3
        %v2270 = vshll.u32 %v2002, 16
        %v2272 = vrot.slane %v2270, 4
        %v2273 = vor.u32 %v2269, %v2272
        %v2274 = vsel %vm367, %v2265, %v2273
        %2291 = vst [vmem:[#allocation4 + $0x30] sm:$0xff] %v2019
        %2292 = vst [vmem:[#allocation4 + $0x78] sm:$0xff] %v2036
        %2293 = vst [vmem:[#allocation4 + $0xc0] sm:$0xff] %v2053
        %2294 = vst [vmem:[#allocation4 + $0x108] sm:$0xff] %v2070
        %2295 = vst [vmem:[#allocation4 + $0x150] sm:$0xff] %v2087
        %2296 = vst [vmem:[#allocation4 + $0x198] sm:$0xff] %v2104
        %2297 = vst [vmem:[#allocation4 + $0x1e0] sm:$0xff] %v2121
        %2298 = vst [vmem:[#allocation4 + $0x228] sm:$0xff] %v2138
        %2299 = vst [vmem:[#allocation4 + $0x270] sm:$0xff] %v2155
        %2300 = vst [vmem:[#allocation4 + $0x2b8] sm:$0xff] %v2172
        %2301 = vst [vmem:[#allocation4 + $0x300] sm:$0xff] %v2189
        %2302 = vst [vmem:[#allocation4 + $0x348] sm:$0xff] %v2206
        %2303 = vst [vmem:[#allocation4 + $0x390] sm:$0xff] %v2223
        %2304 = vst [vmem:[#allocation4 + $0x3d8] sm:$0xff] %v2240
        %2305 = vst [vmem:[#allocation4 + $0x420] sm:$0xff] %v2257
        %2306 = vst [vmem:[#allocation4 + $0x468] sm:$0xff] %v2274
        %v2307 = vld [vmem:[%s1970] sm:$0xf0]
        %v2308 = vld [vmem:[%s1970 + $0x8] sm:$0xf]
        %v2309 = vld [vmem:[%s1970 + $0x10] sm:$0xf0]
        %v2310 = vld [vmem:[%s1970 + $0x18] sm:$0xf]
        %v2311 = vld [vmem:[%s1970 + $0x20] sm:$0xf0]
        %v2312 = vld [vmem:[%s1970 + $0x28] sm:$0xf]
        %v2313 = vld [vmem:[%s1970 + $0x30] sm:$0xf0]
        %v2314 = vld [vmem:[%s1970 + $0x38] sm:$0xf]
        %v2315 = vld [vmem:[%s1970 + $0x40] sm:$0xf0]
        %v2316 = vld [vmem:[%s1970 + $0x48] sm:$0xf]
        %v2317 = vld [vmem:[%s1970 + $0x50] sm:$0xf0]
        %v2318 = vld [vmem:[%s1970 + $0x58] sm:$0xf]
        %v2319 = vld [vmem:[%s1970 + $0x60] sm:$0xf0]
        %v2320 = vld [vmem:[%s1970 + $0x68] sm:$0xf]
        %v2321 = vld [vmem:[%s1970 + $0x70] sm:$0xf0]
        %v2322 = vld [vmem:[%s1970 + $0x78] sm:$0xf]
        %v2323 = vld [vmem:[%s1970 + $0x80] sm:$0xf0]
        %v2324 = vld [vmem:[%s1970 + $0x88] sm:$0xf]
        %v2325 = vld [vmem:[%s1970 + $0x90] sm:$0xf0]
        %v2326 = vld [vmem:[%s1970 + $0x98] sm:$0xf]
        %v2327 = vld [vmem:[%s1970 + $0xa0] sm:$0xf0]
        %v2328 = vld [vmem:[%s1970 + $0xa8] sm:$0xf]
        %v2329 = vld [vmem:[%s1970 + $0xb0] sm:$0xf0]
        %v2330 = vld [vmem:[%s1970 + $0xb8] sm:$0xf]
        %v2331 = vld [vmem:[%s1970 + $0xc0] sm:$0xf0]
        %v2332 = vld [vmem:[%s1970 + $0xc8] sm:$0xf]
        %v2333 = vld [vmem:[%s1970 + $0xd0] sm:$0xf0]
        %v2334 = vld [vmem:[%s1970 + $0xd8] sm:$0xf]
        %v2335 = vld [vmem:[%s1970 + $0xe0] sm:$0xf0]
        %v2336 = vld [vmem:[%s1970 + $0xe8] sm:$0xf]
        %v2337 = vld [vmem:[%s1970 + $0xf0] sm:$0xf0]
        %v2338 = vld [vmem:[%s1970 + $0xf8] sm:$0xf]
        %v2371 = vrot.slane %v2307, 4
        %v2372 = vrot.slane %v2308, 4
        %v2373 = vsel %vm736, %v2371, %v2372
        %v2374 = vrot.slane %v2309, 4
        %v2375 = vrot.slane %v2310, 4
        %v2376 = vsel %vm736, %v2374, %v2375
        %v2377 = vrot.slane %v2311, 4
        %v2378 = vrot.slane %v2312, 4
        %v2379 = vsel %vm736, %v2377, %v2378
        %v2380 = vrot.slane %v2313, 4
        %v2381 = vrot.slane %v2314, 4
        %v2382 = vsel %vm736, %v2380, %v2381
        %v2383 = vrot.slane %v2315, 4
        %v2384 = vrot.slane %v2316, 4
        %v2385 = vsel %vm736, %v2383, %v2384
        %v2386 = vrot.slane %v2317, 4
        %v2387 = vrot.slane %v2318, 4
        %v2388 = vsel %vm736, %v2386, %v2387
        %v2389 = vrot.slane %v2319, 4
        %v2390 = vrot.slane %v2320, 4
        %v2391 = vsel %vm736, %v2389, %v2390
        %v2392 = vrot.slane %v2321, 4
        %v2393 = vrot.slane %v2322, 4
        %v2394 = vsel %vm736, %v2392, %v2393
        %v2395 = vrot.slane %v2323, 4
        %v2396 = vrot.slane %v2324, 4
        %v2397 = vsel %vm736, %v2395, %v2396
        %v2398 = vrot.slane %v2325, 4
        %v2399 = vrot.slane %v2326, 4
        %v2400 = vsel %vm736, %v2398, %v2399
        %v2401 = vrot.slane %v2327, 4
        %v2402 = vrot.slane %v2328, 4
        %v2403 = vsel %vm736, %v2401, %v2402
        %v2404 = vrot.slane %v2329, 4
        %v2405 = vrot.slane %v2330, 4
        %v2406 = vsel %vm736, %v2404, %v2405
        %v2407 = vrot.slane %v2331, 4
        %v2408 = vrot.slane %v2332, 4
        %v2409 = vsel %vm736, %v2407, %v2408
        %v2410 = vrot.slane %v2333, 4
        %v2411 = vrot.slane %v2334, 4
        %v2412 = vsel %vm736, %v2410, %v2411
        %v2413 = vrot.slane %v2335, 4
        %v2414 = vrot.slane %v2336, 4
        %v2415 = vsel %vm736, %v2413, %v2414
        %v2416 = vrot.slane %v2337, 4
        %v2417 = vrot.slane %v2338, 4
        %v2418 = vsel %vm736, %v2416, %v2417
        %2435 = vst [vmem:[#allocation4 + $0x38] sm:$0xff] %v2373
        %2436 = vst [vmem:[#allocation4 + $0x80] sm:$0xff] %v2376
        %2437 = vst [vmem:[#allocation4 + $0xc8] sm:$0xff] %v2379
        %2438 = vst [vmem:[#allocation4 + $0x110] sm:$0xff] %v2382
        %2439 = vst [vmem:[#allocation4 + $0x158] sm:$0xff] %v2385
        %2440 = vst [vmem:[#allocation4 + $0x1a0] sm:$0xff] %v2388
        %2441 = vst [vmem:[#allocation4 + $0x1e8] sm:$0xff] %v2391
        %2442 = vst [vmem:[#allocation4 + $0x230] sm:$0xff] %v2394
        %2443 = vst [vmem:[#allocation4 + $0x278] sm:$0xff] %v2397
        %2444 = vst [vmem:[#allocation4 + $0x2c0] sm:$0xff] %v2400
        %2445 = vst [vmem:[#allocation4 + $0x308] sm:$0xff] %v2403
        %2446 = vst [vmem:[#allocation4 + $0x350] sm:$0xff] %v2406
        %2447 = vst [vmem:[#allocation4 + $0x398] sm:$0xff] %v2409
        %2448 = vst [vmem:[#allocation4 + $0x3e0] sm:$0xff] %v2412
        %2449 = vst [vmem:[#allocation4 + $0x428] sm:$0xff] %v2415
        %2450 = vst [vmem:[#allocation4 + $0x470] sm:$0xff] %v2418
        %v2451 = vld [vmem:[%s1970] sm:$0xf0]
        %v2452 = vld [vmem:[%s1970 + $0x8] sm:$0x1f]
        %v2453 = vld [vmem:[%s1970 + $0x10] sm:$0xf0]
        %v2454 = vld [vmem:[%s1970 + $0x18] sm:$0x1f]
        %v2455 = vld [vmem:[%s1970 + $0x20] sm:$0xf0]
        %v2456 = vld [vmem:[%s1970 + $0x28] sm:$0x1f]
        %v2457 = vld [vmem:[%s1970 + $0x30] sm:$0xf0]
        %v2458 = vld [vmem:[%s1970 + $0x38] sm:$0x1f]
        %v2459 = vld [vmem:[%s1970 + $0x40] sm:$0xf0]
        %v2460 = vld [vmem:[%s1970 + $0x48] sm:$0x1f]
        %v2461 = vld [vmem:[%s1970 + $0x50] sm:$0xf0]
        %v2462 = vld [vmem:[%s1970 + $0x58] sm:$0x1f]
        %v2463 = vld [vmem:[%s1970 + $0x60] sm:$0xf0]
        %v2464 = vld [vmem:[%s1970 + $0x68] sm:$0x1f]
        %v2465 = vld [vmem:[%s1970 + $0x70] sm:$0xf0]
        %v2466 = vld [vmem:[%s1970 + $0x78] sm:$0x1f]
        %v2467 = vld [vmem:[%s1970 + $0x80] sm:$0xf0]
        %v2468 = vld [vmem:[%s1970 + $0x88] sm:$0x1f]
        %v2469 = vld [vmem:[%s1970 + $0x90] sm:$0xf0]
        %v2470 = vld [vmem:[%s1970 + $0x98] sm:$0x1f]
        %v2471 = vld [vmem:[%s1970 + $0xa0] sm:$0xf0]
        %v2472 = vld [vmem:[%s1970 + $0xa8] sm:$0x1f]
        %v2473 = vld [vmem:[%s1970 + $0xb0] sm:$0xf0]
        %v2474 = vld [vmem:[%s1970 + $0xb8] sm:$0x1f]
        %v2475 = vld [vmem:[%s1970 + $0xc0] sm:$0xf0]
        %v2476 = vld [vmem:[%s1970 + $0xc8] sm:$0x1f]
        %v2477 = vld [vmem:[%s1970 + $0xd0] sm:$0xf0]
        %v2478 = vld [vmem:[%s1970 + $0xd8] sm:$0x1f]
        %v2479 = vld [vmem:[%s1970 + $0xe0] sm:$0xf0]
        %v2480 = vld [vmem:[%s1970 + $0xe8] sm:$0x1f]
        %v2481 = vld [vmem:[%s1970 + $0xf0] sm:$0xf0]
        %v2482 = vld [vmem:[%s1970 + $0xf8] sm:$0x1f]
        %v2484 = vshrl.u32 %v2451, 16
        %v2486 = vrot.slane %v2484, 4
        %v2487 = vshll.u32 %v2451, 16
        %v2489 = vrot.slane %v2487, 5
        %v2490 = vor.u32 %v2486, %v2489
        %v2492 = vshrl.u32 %v2452, 16
        %v2494 = vrot.slane %v2492, 4
        %v2495 = vshll.u32 %v2452, 16
        %v2497 = vrot.slane %v2495, 5
        %v2498 = vor.u32 %v2494, %v2497
        %v2499 = vsel %vm849, %v2490, %v2498
        %v2501 = vshrl.u32 %v2453, 16
        %v2503 = vrot.slane %v2501, 4
        %v2504 = vshll.u32 %v2453, 16
        %v2506 = vrot.slane %v2504, 5
        %v2507 = vor.u32 %v2503, %v2506
        %v2509 = vshrl.u32 %v2454, 16
        %v2511 = vrot.slane %v2509, 4
        %v2512 = vshll.u32 %v2454, 16
        %v2514 = vrot.slane %v2512, 5
        %v2515 = vor.u32 %v2511, %v2514
        %v2516 = vsel %vm849, %v2507, %v2515
        %v2518 = vshrl.u32 %v2455, 16
        %v2520 = vrot.slane %v2518, 4
        %v2521 = vshll.u32 %v2455, 16
        %v2523 = vrot.slane %v2521, 5
        %v2524 = vor.u32 %v2520, %v2523
        %v2526 = vshrl.u32 %v2456, 16
        %v2528 = vrot.slane %v2526, 4
        %v2529 = vshll.u32 %v2456, 16
        %v2531 = vrot.slane %v2529, 5
        %v2532 = vor.u32 %v2528, %v2531
        %v2533 = vsel %vm849, %v2524, %v2532
        %v2535 = vshrl.u32 %v2457, 16
        %v2537 = vrot.slane %v2535, 4
        %v2538 = vshll.u32 %v2457, 16
        %v2540 = vrot.slane %v2538, 5
        %v2541 = vor.u32 %v2537, %v2540
        %v2543 = vshrl.u32 %v2458, 16
        %v2545 = vrot.slane %v2543, 4
        %v2546 = vshll.u32 %v2458, 16
        %v2548 = vrot.slane %v2546, 5
        %v2549 = vor.u32 %v2545, %v2548
        %v2550 = vsel %vm849, %v2541, %v2549
        %v2552 = vshrl.u32 %v2459, 16
        %v2554 = vrot.slane %v2552, 4
        %v2555 = vshll.u32 %v2459, 16
        %v2557 = vrot.slane %v2555, 5
        %v2558 = vor.u32 %v2554, %v2557
        %v2560 = vshrl.u32 %v2460, 16
        %v2562 = vrot.slane %v2560, 4
        %v2563 = vshll.u32 %v2460, 16
        %v2565 = vrot.slane %v2563, 5
        %v2566 = vor.u32 %v2562, %v2565
        %v2567 = vsel %vm849, %v2558, %v2566
        %v2569 = vshrl.u32 %v2461, 16
        %v2571 = vrot.slane %v2569, 4
        %v2572 = vshll.u32 %v2461, 16
        %v2574 = vrot.slane %v2572, 5
        %v2575 = vor.u32 %v2571, %v2574
        %v2577 = vshrl.u32 %v2462, 16
        %v2579 = vrot.slane %v2577, 4
        %v2580 = vshll.u32 %v2462, 16
        %v2582 = vrot.slane %v2580, 5
        %v2583 = vor.u32 %v2579, %v2582
        %v2584 = vsel %vm849, %v2575, %v2583
        %v2586 = vshrl.u32 %v2463, 16
        %v2588 = vrot.slane %v2586, 4
        %v2589 = vshll.u32 %v2463, 16
        %v2591 = vrot.slane %v2589, 5
        %v2592 = vor.u32 %v2588, %v2591
        %v2594 = vshrl.u32 %v2464, 16
        %v2596 = vrot.slane %v2594, 4
        %v2597 = vshll.u32 %v2464, 16
        %v2599 = vrot.slane %v2597, 5
        %v2600 = vor.u32 %v2596, %v2599
        %v2601 = vsel %vm849, %v2592, %v2600
        %v2603 = vshrl.u32 %v2465, 16
        %v2605 = vrot.slane %v2603, 4
        %v2606 = vshll.u32 %v2465, 16
        %v2608 = vrot.slane %v2606, 5
        %v2609 = vor.u32 %v2605, %v2608
        %v2611 = vshrl.u32 %v2466, 16
        %v2613 = vrot.slane %v2611, 4
        %v2614 = vshll.u32 %v2466, 16
        %v2616 = vrot.slane %v2614, 5
        %v2617 = vor.u32 %v2613, %v2616
        %v2618 = vsel %vm849, %v2609, %v2617
        %v2620 = vshrl.u32 %v2467, 16
        %v2622 = vrot.slane %v2620, 4
        %v2623 = vshll.u32 %v2467, 16
        %v2625 = vrot.slane %v2623, 5
        %v2626 = vor.u32 %v2622, %v2625
        %v2628 = vshrl.u32 %v2468, 16
        %v2630 = vrot.slane %v2628, 4
        %v2631 = vshll.u32 %v2468, 16
        %v2633 = vrot.slane %v2631, 5
        %v2634 = vor.u32 %v2630, %v2633
        %v2635 = vsel %vm849, %v2626, %v2634
        %v2637 = vshrl.u32 %v2469, 16
        %v2639 = vrot.slane %v2637, 4
        %v2640 = vshll.u32 %v2469, 16
        %v2642 = vrot.slane %v2640, 5
        %v2643 = vor.u32 %v2639, %v2642
        %v2645 = vshrl.u32 %v2470, 16
        %v2647 = vrot.slane %v2645, 4
        %v2648 = vshll.u32 %v2470, 16
        %v2650 = vrot.slane %v2648, 5
        %v2651 = vor.u32 %v2647, %v2650
        %v2652 = vsel %vm849, %v2643, %v2651
        %v2654 = vshrl.u32 %v2471, 16
        %v2656 = vrot.slane %v2654, 4
        %v2657 = vshll.u32 %v2471, 16
        %v2659 = vrot.slane %v2657, 5
        %v2660 = vor.u32 %v2656, %v2659
        %v2662 = vshrl.u32 %v2472, 16
        %v2664 = vrot.slane %v2662, 4
        %v2665 = vshll.u32 %v2472, 16
        %v2667 = vrot.slane %v2665, 5
        %v2668 = vor.u32 %v2664, %v2667
        %v2669 = vsel %vm849, %v2660, %v2668
        %v2671 = vshrl.u32 %v2473, 16
        %v2673 = vrot.slane %v2671, 4
        %v2674 = vshll.u32 %v2473, 16
        %v2676 = vrot.slane %v2674, 5
        %v2677 = vor.u32 %v2673, %v2676
        %v2679 = vshrl.u32 %v2474, 16
        %v2681 = vrot.slane %v2679, 4
        %v2682 = vshll.u32 %v2474, 16
        %v2684 = vrot.slane %v2682, 5
        %v2685 = vor.u32 %v2681, %v2684
        %v2686 = vsel %vm849, %v2677, %v2685
        %v2688 = vshrl.u32 %v2475, 16
        %v2690 = vrot.slane %v2688, 4
        %v2691 = vshll.u32 %v2475, 16
        %v2693 = vrot.slane %v2691, 5
        %v2694 = vor.u32 %v2690, %v2693
        %v2696 = vshrl.u32 %v2476, 16
        %v2698 = vrot.slane %v2696, 4
        %v2699 = vshll.u32 %v2476, 16
        %v2701 = vrot.slane %v2699, 5
        %v2702 = vor.u32 %v2698, %v2701
        %v2703 = vsel %vm849, %v2694, %v2702
        %v2705 = vshrl.u32 %v2477, 16
        %v2707 = vrot.slane %v2705, 4
        %v2708 = vshll.u32 %v2477, 16
        %v2710 = vrot.slane %v2708, 5
        %v2711 = vor.u32 %v2707, %v2710
        %v2713 = vshrl.u32 %v2478, 16
        %v2715 = vrot.slane %v2713, 4
        %v2716 = vshll.u32 %v2478, 16
        %v2718 = vrot.slane %v2716, 5
        %v2719 = vor.u32 %v2715, %v2718
        %v2720 = vsel %vm849, %v2711, %v2719
        %v2722 = vshrl.u32 %v2479, 16
        %v2724 = vrot.slane %v2722, 4
        %v2725 = vshll.u32 %v2479, 16
        %v2727 = vrot.slane %v2725, 5
        %v2728 = vor.u32 %v2724, %v2727
        %v2730 = vshrl.u32 %v2480, 16
        %v2732 = vrot.slane %v2730, 4
        %v2733 = vshll.u32 %v2480, 16
        %v2735 = vrot.slane %v2733, 5
        %v2736 = vor.u32 %v2732, %v2735
        %v2737 = vsel %vm849, %v2728, %v2736
        %v2739 = vshrl.u32 %v2481, 16
        %v2741 = vrot.slane %v2739, 4
        %v2742 = vshll.u32 %v2481, 16
        %v2744 = vrot.slane %v2742, 5
        %v2745 = vor.u32 %v2741, %v2744
        %v2747 = vshrl.u32 %v2482, 16
        %v2749 = vrot.slane %v2747, 4
        %v2750 = vshll.u32 %v2482, 16
        %v2752 = vrot.slane %v2750, 5
        %v2753 = vor.u32 %v2749, %v2752
        %v2754 = vsel %vm849, %v2745, %v2753
        %2771 = vst [vmem:[#allocation4 + $0x40] sm:$0xff] %v2499
        %2772 = vst [vmem:[#allocation4 + $0x88] sm:$0xff] %v2516
        %2773 = vst [vmem:[#allocation4 + $0xd0] sm:$0xff] %v2533
        %2774 = vst [vmem:[#allocation4 + $0x118] sm:$0xff] %v2550
        %2775 = vst [vmem:[#allocation4 + $0x160] sm:$0xff] %v2567
        %2776 = vst [vmem:[#allocation4 + $0x1a8] sm:$0xff] %v2584
        %2777 = vst [vmem:[#allocation4 + $0x1f0] sm:$0xff] %v2601
        %2778 = vst [vmem:[#allocation4 + $0x238] sm:$0xff] %v2618
        %2779 = vst [vmem:[#allocation4 + $0x280] sm:$0xff] %v2635
        %2780 = vst [vmem:[#allocation4 + $0x2c8] sm:$0xff] %v2652
        %2781 = vst [vmem:[#allocation4 + $0x310] sm:$0xff] %v2669
        %2782 = vst [vmem:[#allocation4 + $0x358] sm:$0xff] %v2686
        %2783 = vst [vmem:[#allocation4 + $0x3a0] sm:$0xff] %v2703
        %2784 = vst [vmem:[#allocation4 + $0x3e8] sm:$0xff] %v2720
        %2785 = vst [vmem:[#allocation4 + $0x430] sm:$0xff] %v2737
        %2786 = vst [vmem:[#allocation4 + $0x478] sm:$0xff] %v2754
        %v2787 = vld [vmem:[#allocation4] sm:$0xff]
        %v2788 = vld [vmem:[#allocation4 + $0x8] sm:$0xff]
        %v2789 = vld [vmem:[#allocation4 + $0x10] sm:$0xff]
        %v2790 = vld [vmem:[#allocation4 + $0x18] sm:$0xff]
        %v2791 = vld [vmem:[#allocation4 + $0x20] sm:$0xff]
        %v2792 = vld [vmem:[#allocation4 + $0x28] sm:$0xff]
        %v2793 = vld [vmem:[#allocation4 + $0x30] sm:$0xff]
        %v2794 = vld [vmem:[#allocation4 + $0x38] sm:$0xff]
        %v2795 = vld [vmem:[#allocation4 + $0x40] sm:$0xff]
        %v2796 = vld [vmem:[#allocation4 + $0x48] sm:$0xff]
        %v2797 = vld [vmem:[#allocation4 + $0x50] sm:$0xff]
        %v2798 = vld [vmem:[#allocation4 + $0x58] sm:$0xff]
        %v2799 = vld [vmem:[#allocation4 + $0x60] sm:$0xff]
        %v2800 = vld [vmem:[#allocation4 + $0x68] sm:$0xff]
        %v2801 = vld [vmem:[#allocation4 + $0x70] sm:$0xff]
        %v2802 = vld [vmem:[#allocation4 + $0x78] sm:$0xff]
        %v2803 = vld [vmem:[#allocation4 + $0x80] sm:$0xff]
        %v2804 = vld [vmem:[#allocation4 + $0x88] sm:$0xff]
        %v2805 = vld [vmem:[#allocation4 + $0x90] sm:$0xff]
        %v2806 = vld [vmem:[#allocation4 + $0x98] sm:$0xff]
        %v2807 = vld [vmem:[#allocation4 + $0xa0] sm:$0xff]
        %v2808 = vld [vmem:[#allocation4 + $0xa8] sm:$0xff]
        %v2809 = vld [vmem:[#allocation4 + $0xb0] sm:$0xff]
        %v2810 = vld [vmem:[#allocation4 + $0xb8] sm:$0xff]
        %v2811 = vld [vmem:[#allocation4 + $0xc0] sm:$0xff]
        %v2812 = vld [vmem:[#allocation4 + $0xc8] sm:$0xff]
        %v2813 = vld [vmem:[#allocation4 + $0xd0] sm:$0xff]
        %v2814 = vld [vmem:[#allocation4 + $0xd8] sm:$0xff]
        %v2815 = vld [vmem:[#allocation4 + $0xe0] sm:$0xff]
        %v2816 = vld [vmem:[#allocation4 + $0xe8] sm:$0xff]
        %v2817 = vld [vmem:[#allocation4 + $0xf0] sm:$0xff]
        %v2818 = vld [vmem:[#allocation4 + $0xf8] sm:$0xff]
        %v2819 = vld [vmem:[#allocation4 + $0x100] sm:$0xff]
        %v2820 = vld [vmem:[#allocation4 + $0x108] sm:$0xff]
        %v2821 = vld [vmem:[#allocation4 + $0x110] sm:$0xff]
        %v2822 = vld [vmem:[#allocation4 + $0x118] sm:$0xff]
        %v2823 = vld [vmem:[#allocation4 + $0x120] sm:$0xff]
        %v2824 = vld [vmem:[#allocation4 + $0x128] sm:$0xff]
        %v2825 = vld [vmem:[#allocation4 + $0x130] sm:$0xff]
        %v2826 = vld [vmem:[#allocation4 + $0x138] sm:$0xff]
        %v2827 = vld [vmem:[#allocation4 + $0x140] sm:$0xff]
        %v2828 = vld [vmem:[#allocation4 + $0x148] sm:$0xff]
        %v2829 = vld [vmem:[#allocation4 + $0x150] sm:$0xff]
        %v2830 = vld [vmem:[#allocation4 + $0x158] sm:$0xff]
        %v2831 = vld [vmem:[#allocation4 + $0x160] sm:$0xff]
        %v2832 = vld [vmem:[#allocation4 + $0x168] sm:$0xff]
        %v2833 = vld [vmem:[#allocation4 + $0x170] sm:$0xff]
        %v2834 = vld [vmem:[#allocation4 + $0x178] sm:$0xff]
        %v2835 = vld [vmem:[#allocation4 + $0x180] sm:$0xff]
        %v2836 = vld [vmem:[#allocation4 + $0x188] sm:$0xff]
        %v2837 = vld [vmem:[#allocation4 + $0x190] sm:$0xff]
        %v2838 = vld [vmem:[#allocation4 + $0x198] sm:$0xff]
        %v2839 = vld [vmem:[#allocation4 + $0x1a0] sm:$0xff]
        %v2840 = vld [vmem:[#allocation4 + $0x1a8] sm:$0xff]
        %v2841 = vld [vmem:[#allocation4 + $0x1b0] sm:$0xff]
        %v2842 = vld [vmem:[#allocation4 + $0x1b8] sm:$0xff]
        %v2843 = vld [vmem:[#allocation4 + $0x1c0] sm:$0xff]
        %v2844 = vld [vmem:[#allocation4 + $0x1c8] sm:$0xff]
        %v2845 = vld [vmem:[#allocation4 + $0x1d0] sm:$0xff]
        %v2846 = vld [vmem:[#allocation4 + $0x1d8] sm:$0xff]
        %v2847 = vld [vmem:[#allocation4 + $0x1e0] sm:$0xff]
        %v2848 = vld [vmem:[#allocation4 + $0x1e8] sm:$0xff]
        %v2849 = vld [vmem:[#allocation4 + $0x1f0] sm:$0xff]
        %v2850 = vld [vmem:[#allocation4 + $0x1f8] sm:$0xff]
        %v2851 = vld [vmem:[#allocation4 + $0x200] sm:$0xff]
        %v2852 = vld [vmem:[#allocation4 + $0x208] sm:$0xff]
        %v2853 = vld [vmem:[#allocation4 + $0x210] sm:$0xff]
        %v2854 = vld [vmem:[#allocation4 + $0x218] sm:$0xff]
        %v2855 = vld [vmem:[#allocation4 + $0x220] sm:$0xff]
        %v2856 = vld [vmem:[#allocation4 + $0x228] sm:$0xff]
        %v2857 = vld [vmem:[#allocation4 + $0x230] sm:$0xff]
        %v2858 = vld [vmem:[#allocation4 + $0x238] sm:$0xff]
        %v2859 = vld [vmem:[#allocation4 + $0x240] sm:$0xff]
        %v2860 = vld [vmem:[#allocation4 + $0x248] sm:$0xff]
        %v2861 = vld [vmem:[#allocation4 + $0x250] sm:$0xff]
        %v2862 = vld [vmem:[#allocation4 + $0x258] sm:$0xff]
        %v2863 = vld [vmem:[#allocation4 + $0x260] sm:$0xff]
        %v2864 = vld [vmem:[#allocation4 + $0x268] sm:$0xff]
        %v2865 = vld [vmem:[#allocation4 + $0x270] sm:$0xff]
        %v2866 = vld [vmem:[#allocation4 + $0x278] sm:$0xff]
        %v2867 = vld [vmem:[#allocation4 + $0x280] sm:$0xff]
        %v2868 = vld [vmem:[#allocation4 + $0x288] sm:$0xff]
        %v2869 = vld [vmem:[#allocation4 + $0x290] sm:$0xff]
        %v2870 = vld [vmem:[#allocation4 + $0x298] sm:$0xff]
        %v2871 = vld [vmem:[#allocation4 + $0x2a0] sm:$0xff]
        %v2872 = vld [vmem:[#allocation4 + $0x2a8] sm:$0xff]
        %v2873 = vld [vmem:[#allocation4 + $0x2b0] sm:$0xff]
        %v2874 = vld [vmem:[#allocation4 + $0x2b8] sm:$0xff]
        %v2875 = vld [vmem:[#allocation4 + $0x2c0] sm:$0xff]
        %v2876 = vld [vmem:[#allocation4 + $0x2c8] sm:$0xff]
        %v2877 = vld [vmem:[#allocation4 + $0x2d0] sm:$0xff]
        %v2878 = vld [vmem:[#allocation4 + $0x2d8] sm:$0xff]
        %v2879 = vld [vmem:[#allocation4 + $0x2e0] sm:$0xff]
        %v2880 = vld [vmem:[#allocation4 + $0x2e8] sm:$0xff]
        %v2881 = vld [vmem:[#allocation4 + $0x2f0] sm:$0xff]
        %v2882 = vld [vmem:[#allocation4 + $0x2f8] sm:$0xff]
        %v2883 = vld [vmem:[#allocation4 + $0x300] sm:$0xff]
        %v2884 = vld [vmem:[#allocation4 + $0x308] sm:$0xff]
        %v2885 = vld [vmem:[#allocation4 + $0x310] sm:$0xff]
        %v2886 = vld [vmem:[#allocation4 + $0x318] sm:$0xff]
        %v2887 = vld [vmem:[#allocation4 + $0x320] sm:$0xff]
        %v2888 = vld [vmem:[#allocation4 + $0x328] sm:$0xff]
        %v2889 = vld [vmem:[#allocation4 + $0x330] sm:$0xff]
        %v2890 = vld [vmem:[#allocation4 + $0x338] sm:$0xff]
        %v2891 = vld [vmem:[#allocation4 + $0x340] sm:$0xff]
        %v2892 = vld [vmem:[#allocation4 + $0x348] sm:$0xff]
        %v2893 = vld [vmem:[#allocation4 + $0x350] sm:$0xff]
        %v2894 = vld [vmem:[#allocation4 + $0x358] sm:$0xff]
        %v2895 = vld [vmem:[#allocation4 + $0x360] sm:$0xff]
        %v2896 = vld [vmem:[#allocation4 + $0x368] sm:$0xff]
        %v2897 = vld [vmem:[#allocation4 + $0x370] sm:$0xff]
        %v2898 = vld [vmem:[#allocation4 + $0x378] sm:$0xff]
        %v2899 = vld [vmem:[#allocation4 + $0x380] sm:$0xff]
        %v2900 = vld [vmem:[#allocation4 + $0x388] sm:$0xff]
        %v2901 = vld [vmem:[#allocation4 + $0x390] sm:$0xff]
        %v2902 = vld [vmem:[#allocation4 + $0x398] sm:$0xff]
        %v2903 = vld [vmem:[#allocation4 + $0x3a0] sm:$0xff]
        %v2904 = vld [vmem:[#allocation4 + $0x3a8] sm:$0xff]
        %v2905 = vld [vmem:[#allocation4 + $0x3b0] sm:$0xff]
        %v2906 = vld [vmem:[#allocation4 + $0x3b8] sm:$0xff]
        %v2907 = vld [vmem:[#allocation4 + $0x3c0] sm:$0xff]
        %v2908 = vld [vmem:[#allocation4 + $0x3c8] sm:$0xff]
        %v2909 = vld [vmem:[#allocation4 + $0x3d0] sm:$0xff]
        %v2910 = vld [vmem:[#allocation4 + $0x3d8] sm:$0xff]
        %v2911 = vld [vmem:[#allocation4 + $0x3e0] sm:$0xff]
        %v2912 = vld [vmem:[#allocation4 + $0x3e8] sm:$0xff]
        %v2913 = vld [vmem:[#allocation4 + $0x3f0] sm:$0xff]
        %v2914 = vld [vmem:[#allocation4 + $0x3f8] sm:$0xff]
        %v2915 = vld [vmem:[#allocation4 + $0x400] sm:$0xff]
        %v2916 = vld [vmem:[#allocation4 + $0x408] sm:$0xff]
        %v2917 = vld [vmem:[#allocation4 + $0x410] sm:$0xff]
        %v2918 = vld [vmem:[#allocation4 + $0x418] sm:$0xff]
        %v2919 = vld [vmem:[#allocation4 + $0x420] sm:$0xff]
        %v2920 = vld [vmem:[#allocation4 + $0x428] sm:$0xff]
        %v2921 = vld [vmem:[#allocation4 + $0x430] sm:$0xff]
        %v2922 = vld [vmem:[#allocation4 + $0x438] sm:$0xff]
        %v2923 = vld [vmem:[#allocation4 + $0x440] sm:$0xff]
        %v2924 = vld [vmem:[#allocation4 + $0x448] sm:$0xff]
        %v2925 = vld [vmem:[#allocation4 + $0x450] sm:$0xff]
        %v2926 = vld [vmem:[#allocation4 + $0x458] sm:$0xff]
        %v2927 = vld [vmem:[#allocation4 + $0x460] sm:$0xff]
        %v2928 = vld [vmem:[#allocation4 + $0x468] sm:$0xff]
        %v2929 = vld [vmem:[#allocation4 + $0x470] sm:$0xff]
        %v2930 = vld [vmem:[#allocation4 + $0x478] sm:$0xff]
        %v2931 = vld [vmem:[%s1] sm:$0xf]
        %v2932 = vld [vmem:[%s1 + $0x4] sm:$0xf]
        %v2933 = vld [vmem:[%s1 + $0x8] sm:$0xf]
        %v2934 = vld [vmem:[%s1 + $0xc] sm:$0xf]
        %v2935 = vld [vmem:[%s1 + $0x10] sm:$0xf]
        %v2936 = vld [vmem:[%s1 + $0x14] sm:$0xf]
        %v2937 = vld [vmem:[%s1 + $0x18] sm:$0xf]
        %v2938 = vld [vmem:[%s1 + $0x1c] sm:$0xf]
        %v2939 = vld [vmem:[%s1 + $0x20] sm:$0xf]
        %v2940 = vld [vmem:[%s1 + $0x24] sm:$0xf]
        %v2941 = vld [vmem:[%s1 + $0x28] sm:$0xf]
        %v2942 = vld [vmem:[%s1 + $0x2c] sm:$0xf]
        %v2943 = vld [vmem:[%s1 + $0x30] sm:$0xf]
        %v2944 = vld [vmem:[%s1 + $0x34] sm:$0xf]
        %v2945 = vld [vmem:[%s1 + $0x38] sm:$0xf]
        %v2946 = vld [vmem:[%s1 + $0x3c] sm:$0xf]
        %v2947 = vld [vmem:[%s1 + $0x40] sm:$0xf]
        %v2948 = vld [vmem:[%s1 + $0x44] sm:$0xf]
        %v2949 = vld [vmem:[%s1 + $0x48] sm:$0xf]
        %v2950 = vld [vmem:[%s1 + $0x4c] sm:$0xf]
        %v2951 = vld [vmem:[%s1 + $0x50] sm:$0xf]
        %v2952 = vld [vmem:[%s1 + $0x54] sm:$0xf]
        %v2953 = vld [vmem:[%s1 + $0x58] sm:$0xf]
        %v2954 = vld [vmem:[%s1 + $0x5c] sm:$0xf]
        %v2955 = vld [vmem:[%s1 + $0x60] sm:$0xf]
        %v2956 = vld [vmem:[%s1 + $0x64] sm:$0xf]
        %v2957 = vld [vmem:[%s1 + $0x68] sm:$0xf]
        %v2958 = vld [vmem:[%s1 + $0x6c] sm:$0xf]
        %v2959 = vld [vmem:[%s1 + $0x70] sm:$0xf]
        %v2960 = vld [vmem:[%s1 + $0x74] sm:$0xf]
        %v2961 = vld [vmem:[%s1 + $0x78] sm:$0xf]
        %v2962 = vld [vmem:[%s1 + $0x7c] sm:$0xf]
        %v2963 = vld [vmem:[%s1 + $0x80] sm:$0xf]
        %v2964 = vld [vmem:[%s1 + $0x84] sm:$0xf]
        %v2965 = vld [vmem:[%s1 + $0x88] sm:$0xf]
        %v2966 = vld [vmem:[%s1 + $0x8c] sm:$0xf]
        %v2967 = vld [vmem:[%s1 + $0x90] sm:$0xf]
        %v2968 = vld [vmem:[%s1 + $0x94] sm:$0xf]
        %v2969 = vld [vmem:[%s1 + $0x98] sm:$0xf]
        %v2970 = vld [vmem:[%s1 + $0x9c] sm:$0xf]
        %v2971 = vld [vmem:[%s1 + $0xa0] sm:$0xf]
        %v2972 = vld [vmem:[%s1 + $0xa4] sm:$0xf]
        %v2973 = vld [vmem:[%s1 + $0xa8] sm:$0xf]
        %v2974 = vld [vmem:[%s1 + $0xac] sm:$0xf]
        %v2975 = vld [vmem:[%s1 + $0xb0] sm:$0xf]
        %v2976 = vld [vmem:[%s1 + $0xb4] sm:$0xf]
        %v2977 = vld [vmem:[%s1 + $0xb8] sm:$0xf]
        %v2978 = vld [vmem:[%s1 + $0xbc] sm:$0xf]
        %v2979 = vld [vmem:[%s1 + $0xc0] sm:$0xf]
        %v2980 = vld [vmem:[%s1 + $0xc4] sm:$0xf]
        %v2981 = vld [vmem:[%s1 + $0xc8] sm:$0xf]
        %v2982 = vld [vmem:[%s1 + $0xcc] sm:$0xf]
        %v2983 = vld [vmem:[%s1 + $0xd0] sm:$0xf]
        %v2984 = vld [vmem:[%s1 + $0xd4] sm:$0xf]
        %v2985 = vld [vmem:[%s1 + $0xd8] sm:$0xf]
        %v2986 = vld [vmem:[%s1 + $0xdc] sm:$0xf]
        %v2987 = vld [vmem:[%s1 + $0xe0] sm:$0xf]
        %v2988 = vld [vmem:[%s1 + $0xe4] sm:$0xf]
        %v2989 = vld [vmem:[%s1 + $0xe8] sm:$0xf]
        %v2990 = vld [vmem:[%s1 + $0xec] sm:$0xf]
        %v2991 = vld [vmem:[%s1 + $0xf0] sm:$0xf]
        %v2992 = vld [vmem:[%s1 + $0xf4] sm:$0xf]
        %v2993 = vld [vmem:[%s1 + $0xf8] sm:$0xf]
        %v2994 = vld [vmem:[%s1 + $0xfc] sm:$0xf]
        %v2995 = vld [vmem:[%s1 + $0x100] sm:$0xf]
        %v2996 = vld [vmem:[%s1 + $0x104] sm:$0xf]
        %v2997 = vld [vmem:[%s1 + $0x108] sm:$0xf]
        %v2998 = vld [vmem:[%s1 + $0x10c] sm:$0xf]
        %v2999 = vld [vmem:[%s1 + $0x110] sm:$0xf]
        %v3000 = vld [vmem:[%s1 + $0x114] sm:$0xf]
        %v3001 = vld [vmem:[%s1 + $0x118] sm:$0xf]
        %v3002 = vld [vmem:[%s1 + $0x11c] sm:$0xf]
        %v3003 = vld [vmem:[%s1 + $0x120] sm:$0xf]
        %v3004 = vld [vmem:[%s1 + $0x124] sm:$0xf]
        %v3005 = vld [vmem:[%s1 + $0x128] sm:$0xf]
        %v3006 = vld [vmem:[%s1 + $0x12c] sm:$0xf]
        %v3007 = vld [vmem:[%s1 + $0x130] sm:$0xf]
        %v3008 = vld [vmem:[%s1 + $0x134] sm:$0xf]
        %v3009 = vld [vmem:[%s1 + $0x138] sm:$0xf]
        %v3010 = vld [vmem:[%s1 + $0x13c] sm:$0xf]
        %v3011 = vld [vmem:[%s1 + $0x140] sm:$0xf]
        %v3012 = vld [vmem:[%s1 + $0x144] sm:$0xf]
        %v3013 = vld [vmem:[%s1 + $0x148] sm:$0xf]
        %v3014 = vld [vmem:[%s1 + $0x14c] sm:$0xf]
        %v3015 = vld [vmem:[%s1 + $0x150] sm:$0xf]
        %v3016 = vld [vmem:[%s1 + $0x154] sm:$0xf]
        %v3017 = vld [vmem:[%s1 + $0x158] sm:$0xf]
        %v3018 = vld [vmem:[%s1 + $0x15c] sm:$0xf]
        %v3019 = vld [vmem:[%s1 + $0x160] sm:$0xf]
        %v3020 = vld [vmem:[%s1 + $0x164] sm:$0xf]
        %v3021 = vld [vmem:[%s1 + $0x168] sm:$0xf]
        %v3022 = vld [vmem:[%s1 + $0x16c] sm:$0xf]
        %v3023 = vld [vmem:[%s1 + $0x170] sm:$0xf]
        %v3024 = vld [vmem:[%s1 + $0x174] sm:$0xf]
        %v3025 = vld [vmem:[%s1 + $0x178] sm:$0xf]
        %v3026 = vld [vmem:[%s1 + $0x17c] sm:$0xf]
        %v3027 = vld [vmem:[%s1 + $0x180] sm:$0xf]
        %v3028 = vld [vmem:[%s1 + $0x184] sm:$0xf]
        %v3029 = vld [vmem:[%s1 + $0x188] sm:$0xf]
        %v3030 = vld [vmem:[%s1 + $0x18c] sm:$0xf]
        %v3031 = vld [vmem:[%s1 + $0x190] sm:$0xf]
        %v3032 = vld [vmem:[%s1 + $0x194] sm:$0xf]
        %v3033 = vld [vmem:[%s1 + $0x198] sm:$0xf]
        %v3034 = vld [vmem:[%s1 + $0x19c] sm:$0xf]
        %v3035 = vld [vmem:[%s1 + $0x1a0] sm:$0xf]
        %v3036 = vld [vmem:[%s1 + $0x1a4] sm:$0xf]
        %v3037 = vld [vmem:[%s1 + $0x1a8] sm:$0xf]
        %v3038 = vld [vmem:[%s1 + $0x1ac] sm:$0xf]
        %v3039 = vld [vmem:[%s1 + $0x1b0] sm:$0xf]
        %v3040 = vld [vmem:[%s1 + $0x1b4] sm:$0xf]
        %v3041 = vld [vmem:[%s1 + $0x1b8] sm:$0xf]
        %v3042 = vld [vmem:[%s1 + $0x1bc] sm:$0xf]
        %v3043 = vld [vmem:[%s1 + $0x1c0] sm:$0xf]
        %v3044 = vld [vmem:[%s1 + $0x1c4] sm:$0xf]
        %v3045 = vld [vmem:[%s1 + $0x1c8] sm:$0xf]
        %v3046 = vld [vmem:[%s1 + $0x1cc] sm:$0xf]
        %v3047 = vld [vmem:[%s1 + $0x1d0] sm:$0xf]
        %v3048 = vld [vmem:[%s1 + $0x1d4] sm:$0xf]
        %v3049 = vld [vmem:[%s1 + $0x1d8] sm:$0xf]
        %v3050 = vld [vmem:[%s1 + $0x1dc] sm:$0xf]
        %v3051 = vld [vmem:[%s1 + $0x1e0] sm:$0xf]
        %v3052 = vld [vmem:[%s1 + $0x1e4] sm:$0xf]
        %v3053 = vld [vmem:[%s1 + $0x1e8] sm:$0xf]
        %v3054 = vld [vmem:[%s1 + $0x1ec] sm:$0xf]
        %v3055 = vld [vmem:[%s1 + $0x1f0] sm:$0xf]
        %v3056 = vld [vmem:[%s1 + $0x1f4] sm:$0xf]
        %v3057 = vld [vmem:[%s1 + $0x1f8] sm:$0xf]
        %v3058 = vld [vmem:[%s1 + $0x1fc] sm:$0xf]
        %v3059 = vld [vmem:[%s1 + $0x200] sm:$0xf]
        %v3060 = vld [vmem:[%s1 + $0x204] sm:$0xf]
        %v3061 = vld [vmem:[%s1 + $0x208] sm:$0xf]
        %v3062 = vld [vmem:[%s1 + $0x20c] sm:$0xf]
        %v3063 = vld [vmem:[%s1 + $0x210] sm:$0xf]
        %v3064 = vld [vmem:[%s1 + $0x214] sm:$0xf]
        %v3065 = vld [vmem:[%s1 + $0x218] sm:$0xf]
        %v3066 = vld [vmem:[%s1 + $0x21c] sm:$0xf]
        %v3067 = vld [vmem:[%s1 + $0x220] sm:$0xf]
        %v3068 = vld [vmem:[%s1 + $0x224] sm:$0xf]
        %v3069 = vld [vmem:[%s1 + $0x228] sm:$0xf]
        %v3070 = vld [vmem:[%s1 + $0x22c] sm:$0xf]
        %v3071 = vld [vmem:[%s1 + $0x230] sm:$0xf]
        %v3072 = vld [vmem:[%s1 + $0x234] sm:$0xf]
        %v3073 = vld [vmem:[%s1 + $0x238] sm:$0xf]
        %v3074 = vld [vmem:[%s1 + $0x23c] sm:$0xf]
        %v3219 = vunpack.c.l.b16 %v2931
        %v3220 = vunpack.c.l.b16 %v2932
        %v3221 = vunpack.c.l.b16 %v2933
        %v3222 = vunpack.c.l.b16 %v2934
        %v3223 = vunpack.c.l.b16 %v2935
        %v3224 = vunpack.c.l.b16 %v2936
        %v3225 = vunpack.c.l.b16 %v2937
        %v3226 = vunpack.c.l.b16 %v2938
        %v3227 = vunpack.c.l.b16 %v2939
        %v3228 = vunpack.c.l.b16 %v2940
        %v3229 = vunpack.c.l.b16 %v2941
        %v3230 = vunpack.c.l.b16 %v2942
        %v3231 = vunpack.c.l.b16 %v2943
        %v3232 = vunpack.c.l.b16 %v2944
        %v3233 = vunpack.c.l.b16 %v2945
        %v3234 = vunpack.c.l.b16 %v2946
        %v3235 = vunpack.c.l.b16 %v2947
        %v3236 = vunpack.c.l.b16 %v2948
        %v3237 = vunpack.c.l.b16 %v2949
        %v3238 = vunpack.c.l.b16 %v2950
        %v3239 = vunpack.c.l.b16 %v2951
        %v3240 = vunpack.c.l.b16 %v2952
        %v3241 = vunpack.c.l.b16 %v2953
        %v3242 = vunpack.c.l.b16 %v2954
        %v3243 = vunpack.c.l.b16 %v2955
        %v3244 = vunpack.c.l.b16 %v2956
        %v3245 = vunpack.c.l.b16 %v2957
        %v3246 = vunpack.c.l.b16 %v2958
        %v3247 = vunpack.c.l.b16 %v2959
        %v3248 = vunpack.c.l.b16 %v2960
        %v3249 = vunpack.c.l.b16 %v2961
        %v3250 = vunpack.c.l.b16 %v2962
        %v3251 = vunpack.c.l.b16 %v2963
        %v3252 = vunpack.c.l.b16 %v2964
        %v3253 = vunpack.c.l.b16 %v2965
        %v3254 = vunpack.c.l.b16 %v2966
        %v3255 = vunpack.c.l.b16 %v2967
        %v3256 = vunpack.c.l.b16 %v2968
        %v3257 = vunpack.c.l.b16 %v2969
        %v3258 = vunpack.c.l.b16 %v2970
        %v3259 = vunpack.c.l.b16 %v2971
        %v3260 = vunpack.c.l.b16 %v2972
        %v3261 = vunpack.c.l.b16 %v2973
        %v3262 = vunpack.c.l.b16 %v2974
        %v3263 = vunpack.c.l.b16 %v2975
        %v3264 = vunpack.c.l.b16 %v2976
        %v3265 = vunpack.c.l.b16 %v2977
        %v3266 = vunpack.c.l.b16 %v2978
        %v3267 = vunpack.c.l.b16 %v2979
        %v3268 = vunpack.c.l.b16 %v2980
        %v3269 = vunpack.c.l.b16 %v2981
        %v3270 = vunpack.c.l.b16 %v2982
        %v3271 = vunpack.c.l.b16 %v2983
        %v3272 = vunpack.c.l.b16 %v2984
        %v3273 = vunpack.c.l.b16 %v2985
        %v3274 = vunpack.c.l.b16 %v2986
        %v3275 = vunpack.c.l.b16 %v2987
        %v3276 = vunpack.c.l.b16 %v2988
        %v3277 = vunpack.c.l.b16 %v2989
        %v3278 = vunpack.c.l.b16 %v2990
        %v3279 = vunpack.c.l.b16 %v2991
        %v3280 = vunpack.c.l.b16 %v2992
        %v3281 = vunpack.c.l.b16 %v2993
        %v3282 = vunpack.c.l.b16 %v2994
        %v3283 = vunpack.c.l.b16 %v2995
        %v3284 = vunpack.c.l.b16 %v2996
        %v3285 = vunpack.c.l.b16 %v2997
        %v3286 = vunpack.c.l.b16 %v2998
        %v3287 = vunpack.c.l.b16 %v2999
        %v3288 = vunpack.c.l.b16 %v3000
        %v3289 = vunpack.c.l.b16 %v3001
        %v3290 = vunpack.c.l.b16 %v3002
        %v3291 = vunpack.c.l.b16 %v3003
        %v3292 = vunpack.c.l.b16 %v3004
        %v3293 = vunpack.c.l.b16 %v3005
        %v3294 = vunpack.c.l.b16 %v3006
        %v3295 = vunpack.c.l.b16 %v3007
        %v3296 = vunpack.c.l.b16 %v3008
        %v3297 = vunpack.c.l.b16 %v3009
        %v3298 = vunpack.c.l.b16 %v3010
        %v3299 = vunpack.c.l.b16 %v3011
        %v3300 = vunpack.c.l.b16 %v3012
        %v3301 = vunpack.c.l.b16 %v3013
        %v3302 = vunpack.c.l.b16 %v3014
        %v3303 = vunpack.c.l.b16 %v3015
        %v3304 = vunpack.c.l.b16 %v3016
        %v3305 = vunpack.c.l.b16 %v3017
        %v3306 = vunpack.c.l.b16 %v3018
        %v3307 = vunpack.c.l.b16 %v3019
        %v3308 = vunpack.c.l.b16 %v3020
        %v3309 = vunpack.c.l.b16 %v3021
        %v3310 = vunpack.c.l.b16 %v3022
        %v3311 = vunpack.c.l.b16 %v3023
        %v3312 = vunpack.c.l.b16 %v3024
        %v3313 = vunpack.c.l.b16 %v3025
        %v3314 = vunpack.c.l.b16 %v3026
        %v3315 = vunpack.c.l.b16 %v3027
        %v3316 = vunpack.c.l.b16 %v3028
        %v3317 = vunpack.c.l.b16 %v3029
        %v3318 = vunpack.c.l.b16 %v3030
        %v3319 = vunpack.c.l.b16 %v3031
        %v3320 = vunpack.c.l.b16 %v3032
        %v3321 = vunpack.c.l.b16 %v3033
        %v3322 = vunpack.c.l.b16 %v3034
        %v3323 = vunpack.c.l.b16 %v3035
        %v3324 = vunpack.c.l.b16 %v3036
        %v3325 = vunpack.c.l.b16 %v3037
        %v3326 = vunpack.c.l.b16 %v3038
        %v3327 = vunpack.c.l.b16 %v3039
        %v3328 = vunpack.c.l.b16 %v3040
        %v3329 = vunpack.c.l.b16 %v3041
        %v3330 = vunpack.c.l.b16 %v3042
        %v3331 = vunpack.c.l.b16 %v3043
        %v3332 = vunpack.c.l.b16 %v3044
        %v3333 = vunpack.c.l.b16 %v3045
        %v3334 = vunpack.c.l.b16 %v3046
        %v3335 = vunpack.c.l.b16 %v3047
        %v3336 = vunpack.c.l.b16 %v3048
        %v3337 = vunpack.c.l.b16 %v3049
        %v3338 = vunpack.c.l.b16 %v3050
        %v3339 = vunpack.c.l.b16 %v3051
        %v3340 = vunpack.c.l.b16 %v3052
        %v3341 = vunpack.c.l.b16 %v3053
        %v3342 = vunpack.c.l.b16 %v3054
        %v3343 = vunpack.c.l.b16 %v3055
        %v3344 = vunpack.c.l.b16 %v3056
        %v3345 = vunpack.c.l.b16 %v3057
        %v3346 = vunpack.c.l.b16 %v3058
        %v3347 = vunpack.c.l.b16 %v3059
        %v3348 = vunpack.c.l.b16 %v3060
        %v3349 = vunpack.c.l.b16 %v3061
        %v3350 = vunpack.c.l.b16 %v3062
        %v3351 = vunpack.c.l.b16 %v3063
        %v3352 = vunpack.c.l.b16 %v3064
        %v3353 = vunpack.c.l.b16 %v3065
        %v3354 = vunpack.c.l.b16 %v3066
        %v3355 = vunpack.c.l.b16 %v3067
        %v3356 = vunpack.c.l.b16 %v3068
        %v3357 = vunpack.c.l.b16 %v3069
        %v3358 = vunpack.c.l.b16 %v3070
        %v3359 = vunpack.c.l.b16 %v3071
        %v3360 = vunpack.c.l.b16 %v3072
        %v3361 = vunpack.c.l.b16 %v3073
        %v3362 = vunpack.c.l.b16 %v3074
        %v3363 = vpack.c.b16 %v3220, %v3219
        %v3364 = vpack.c.b16 %v3222, %v3221
        %v3365 = vpack.c.b16 %v3224, %v3223
        %v3366 = vpack.c.b16 %v3226, %v3225
        %v3367 = vpack.c.b16 %v3228, %v3227
        %v3368 = vpack.c.b16 %v3230, %v3229
        %v3369 = vpack.c.b16 %v3232, %v3231
        %v3370 = vpack.c.b16 %v3234, %v3233
        %v3371 = vpack.c.b16 %v3236, %v3235
        %v3372 = vpack.c.b16 %v3238, %v3237
        %v3373 = vpack.c.b16 %v3240, %v3239
        %v3374 = vpack.c.b16 %v3242, %v3241
        %v3375 = vpack.c.b16 %v3244, %v3243
        %v3376 = vpack.c.b16 %v3246, %v3245
        %v3377 = vpack.c.b16 %v3248, %v3247
        %v3378 = vpack.c.b16 %v3250, %v3249
        %v3379 = vpack.c.b16 %v3252, %v3251
        %v3380 = vpack.c.b16 %v3254, %v3253
        %v3381 = vpack.c.b16 %v3256, %v3255
        %v3382 = vpack.c.b16 %v3258, %v3257
        %v3383 = vpack.c.b16 %v3260, %v3259
        %v3384 = vpack.c.b16 %v3262, %v3261
        %v3385 = vpack.c.b16 %v3264, %v3263
        %v3386 = vpack.c.b16 %v3266, %v3265
        %v3387 = vpack.c.b16 %v3268, %v3267
        %v3388 = vpack.c.b16 %v3270, %v3269
        %v3389 = vpack.c.b16 %v3272, %v3271
        %v3390 = vpack.c.b16 %v3274, %v3273
        %v3391 = vpack.c.b16 %v3276, %v3275
        %v3392 = vpack.c.b16 %v3278, %v3277
        %v3393 = vpack.c.b16 %v3280, %v3279
        %v3394 = vpack.c.b16 %v3282, %v3281
        %v3395 = vpack.c.b16 %v3284, %v3283
        %v3396 = vpack.c.b16 %v3286, %v3285
        %v3397 = vpack.c.b16 %v3288, %v3287
        %v3398 = vpack.c.b16 %v3290, %v3289
        %v3399 = vpack.c.b16 %v3292, %v3291
        %v3400 = vpack.c.b16 %v3294, %v3293
        %v3401 = vpack.c.b16 %v3296, %v3295
        %v3402 = vpack.c.b16 %v3298, %v3297
        %v3403 = vpack.c.b16 %v3300, %v3299
        %v3404 = vpack.c.b16 %v3302, %v3301
        %v3405 = vpack.c.b16 %v3304, %v3303
        %v3406 = vpack.c.b16 %v3306, %v3305
        %v3407 = vpack.c.b16 %v3308, %v3307
        %v3408 = vpack.c.b16 %v3310, %v3309
        %v3409 = vpack.c.b16 %v3312, %v3311
        %v3410 = vpack.c.b16 %v3314, %v3313
        %v3411 = vpack.c.b16 %v3316, %v3315
        %v3412 = vpack.c.b16 %v3318, %v3317
        %v3413 = vpack.c.b16 %v3320, %v3319
        %v3414 = vpack.c.b16 %v3322, %v3321
        %v3415 = vpack.c.b16 %v3324, %v3323
        %v3416 = vpack.c.b16 %v3326, %v3325
        %v3417 = vpack.c.b16 %v3328, %v3327
        %v3418 = vpack.c.b16 %v3330, %v3329
        %v3419 = vpack.c.b16 %v3332, %v3331
        %v3420 = vpack.c.b16 %v3334, %v3333
        %v3421 = vpack.c.b16 %v3336, %v3335
        %v3422 = vpack.c.b16 %v3338, %v3337
        %v3423 = vpack.c.b16 %v3340, %v3339
        %v3424 = vpack.c.b16 %v3342, %v3341
        %v3425 = vpack.c.b16 %v3344, %v3343
        %v3426 = vpack.c.b16 %v3346, %v3345
        %v3427 = vpack.c.b16 %v3348, %v3347
        %v3428 = vpack.c.b16 %v3350, %v3349
        %v3429 = vpack.c.b16 %v3352, %v3351
        %v3430 = vpack.c.b16 %v3354, %v3353
        %v3431 = vpack.c.b16 %v3356, %v3355
        %v3432 = vpack.c.b16 %v3358, %v3357
        %v3433 = vpack.c.b16 %v3360, %v3359
        %v3434 = vpack.c.b16 %v3362, %v3361
        %3507 = vmatprep.subr.bf16.mxu0 0
        %3508 = vmatpush1.bf16.msra.mxu0 %v3363
        %3509 = vmatprep.subr.bf16.mxu0 0
        %3510 = vmatpush1.bf16.msra.mxu0 %v3364
        %3511 = vmatprep.subr.bf16.mxu0 0
        %3512 = vmatpush1.bf16.msra.mxu0 %v3365
        %3513 = vmatprep.subr.bf16.mxu0 0
        %3514 = vmatpush1.bf16.msra.mxu0 %v3366
        %3515 = vmatprep.subr.bf16.mxu0 0
        %3516 = vmatpush1.bf16.msra.mxu0 %v3367
        %3517 = vmatprep.subr.bf16.mxu0 0
        %3518 = vmatpush1.bf16.msra.mxu0 %v3368
        %3519 = vmatprep.subr.bf16.mxu0 0
        %3520 = vmatpush1.bf16.msra.mxu0 %v3369
        %3521 = vmatprep.subr.bf16.mxu0 0
        %3522 = vmatpush1.bf16.msra.mxu0 %v3370
        %3523 = vmatprep.subr.bf16.mxu0 0
        %3524 = vmatpush1.bf16.msra.mxu0 %v3371
        %3525 = vmatprep.subr.bf16.mxu0 0
        %3526 = vmatpush1.bf16.msra.mxu0 %v3372
        %3527 = vmatprep.subr.bf16.mxu0 0
        %3528 = vmatpush1.bf16.msra.mxu0 %v3373
        %3529 = vmatprep.subr.bf16.mxu0 0
        %3530 = vmatpush1.bf16.msra.mxu0 %v3374
        %3531 = vmatprep.subr.bf16.mxu0 0
        %3532 = vmatpush1.bf16.msra.mxu0 %v3375
        %3533 = vmatprep.subr.bf16.mxu0 0
        %3534 = vmatpush1.bf16.msra.mxu0 %v3376
        %3535 = vmatprep.subr.bf16.mxu0 0
        %3536 = vmatpush1.bf16.msra.mxu0 %v3377
        %3537 = vmatprep.subr.bf16.mxu0 0
        %3538 = vmatpush1.bf16.msra.mxu0 %v3378
        %3539 = vmatprep.mubr.bf16.mxu0 %v2788
        %3540 = vmatmul.mubr.bf16.gmra.mrb[0].mxu0 %v2787
        %v3541 = vpop.f32.mrb[0].mxu0
        %v3542 = vadd.f32 0.0, %v3541
        %v3543 = vpop.f32.mrb[0].mxu0
        %v3544 = vpop.f32.mrb[0].mxu0
        %v3545 = vadd.f32 0.0, %v3544
        %v3546 = vpop.f32.mrb[0].mxu0
        %3547 = vmatprep.mubr.bf16.mxu0 %v2797
        %3548 = vmatmul.mubr.bf16.gmra.mrb[0].mxu0 %v2796
        %v3549 = vpop.f32.mrb[0].mxu0
        %v3550 = vadd.f32 0.0, %v3549
        %v3551 = vpop.f32.mrb[0].mxu0
        %v3552 = vpop.f32.mrb[0].mxu0
        %v3553 = vadd.f32 0.0, %v3552
        %v3554 = vpop.f32.mrb[0].mxu0
        %3555 = vmatprep.mubr.bf16.mxu0 %v2806
        %3556 = vmatmul.mubr.bf16.gmra.mrb[0].mxu0 %v2805
        %v3557 = vpop.f32.mrb[0].mxu0
        %v3558 = vadd.f32 0.0, %v3557
        %v3559 = vpop.f32.mrb[0].mxu0
        %v3560 = vpop.f32.mrb[0].mxu0
        %v3561 = vadd.f32 0.0, %v3560
        %v3562 = vpop.f32.mrb[0].mxu0
        %3563 = vmatprep.mubr.bf16.mxu0 %v2815
        %3564 = vmatmul.mubr.bf16.gmra.mrb[0].mxu0 %v2814
        %v3565 = vpop.f32.mrb[0].mxu0
        %v3566 = vadd.f32 0.0, %v3565
        %v3567 = vpop.f32.mrb[0].mxu0
        %v3568 = vpop.f32.mrb[0].mxu0
        %v3569 = vadd.f32 0.0, %v3568
        %v3570 = vpop.f32.mrb[0].mxu0
        %3571 = vmatprep.mubr.bf16.mxu0 %v2824
        %3572 = vmatmul.mubr.bf16.gmra.mrb[0].mxu0 %v2823
        %v3573 = vpop.f32.mrb[0].mxu0
        %v3574 = vadd.f32 0.0, %v3573
        %v3575 = vpop.f32.mrb[0].mxu0
        %v3576 = vpop.f32.mrb[0].mxu0
        %v3577 = vadd.f32 0.0, %v3576
        %v3578 = vpop.f32.mrb[0].mxu0
        %3579 = vmatprep.mubr.bf16.mxu0 %v2833
        %3580 = vmatmul.mubr.bf16.gmra.mrb[0].mxu0 %v2832
        %v3581 = vpop.f32.mrb[0].mxu0
        %v3582 = vadd.f32 0.0, %v3581
        %v3583 = vpop.f32.mrb[0].mxu0
        %v3584 = vpop.f32.mrb[0].mxu0
        %v3585 = vadd.f32 0.0, %v3584
        %v3586 = vpop.f32.mrb[0].mxu0
        %3587 = vmatprep.mubr.bf16.mxu0 %v2842
        %3588 = vmatmul.mubr.bf16.gmra.mrb[0].mxu0 %v2841
        %v3589 = vpop.f32.mrb[0].mxu0
        %v3590 = vadd.f32 0.0, %v3589
        %v3591 = vpop.f32.mrb[0].mxu0
        %v3592 = vpop.f32.mrb[0].mxu0
        %v3593 = vadd.f32 0.0, %v3592
        %v3594 = vpop.f32.mrb[0].mxu0
        %3595 = vmatprep.mubr.bf16.mxu0 %v2851
        %3596 = vmatmul.mubr.bf16.gmra.mrb[0].mxu0 %v2850
        %v3597 = vpop.f32.mrb[0].mxu0
        %v3598 = vadd.f32 0.0, %v3597
        %v3599 = vpop.f32.mrb[0].mxu0
        %v3600 = vpop.f32.mrb[0].mxu0
        %v3601 = vadd.f32 0.0, %v3600
        %v3602 = vpop.f32.mrb[0].mxu0
        %3603 = vmatprep.mubr.bf16.mxu0 %v2860
        %3604 = vmatmul.mubr.bf16.gmra.mrb[0].mxu0 %v2859
        %v3605 = vpop.f32.mrb[0].mxu0
        %v3606 = vadd.f32 0.0, %v3605
        %v3607 = vpop.f32.mrb[0].mxu0
        %v3608 = vpop.f32.mrb[0].mxu0
        %v3609 = vadd.f32 0.0, %v3608
        %v3610 = vpop.f32.mrb[0].mxu0
        %3611 = vmatprep.mubr.bf16.mxu0 %v2869
        %3612 = vmatmul.mubr.bf16.gmra.mrb[0].mxu0 %v2868
        %v3613 = vpop.f32.mrb[0].mxu0
        %v3614 = vadd.f32 0.0, %v3613
        %v3615 = vpop.f32.mrb[0].mxu0
        %v3616 = vpop.f32.mrb[0].mxu0
        %v3617 = vadd.f32 0.0, %v3616
        %v3618 = vpop.f32.mrb[0].mxu0
        %3619 = vmatprep.mubr.bf16.mxu0 %v2878
        %3620 = vmatmul.mubr.bf16.gmra.mrb[0].mxu0 %v2877
        %v3621 = vpop.f32.mrb[0].mxu0
        %v3622 = vadd.f32 0.0, %v3621
        %v3623 = vpop.f32.mrb[0].mxu0
        %v3624 = vpop.f32.mrb[0].mxu0
        %v3625 = vadd.f32 0.0, %v3624
        %v3626 = vpop.f32.mrb[0].mxu0
        %3627 = vmatprep.mubr.bf16.mxu0 %v2887
        %3628 = vmatmul.mubr.bf16.gmra.mrb[0].mxu0 %v2886
        %v3629 = vpop.f32.mrb[0].mxu0
        %v3630 = vadd.f32 0.0, %v3629
        %v3631 = vpop.f32.mrb[0].mxu0
        %v3632 = vpop.f32.mrb[0].mxu0
        %v3633 = vadd.f32 0.0, %v3632
        %v3634 = vpop.f32.mrb[0].mxu0
        %3635 = vmatprep.mubr.bf16.mxu0 %v2896
        %3636 = vmatmul.mubr.bf16.gmra.mrb[0].mxu0 %v2895
        %v3637 = vpop.f32.mrb[0].mxu0
        %v3638 = vadd.f32 0.0, %v3637
        %v3639 = vpop.f32.mrb[0].mxu0
        %v3640 = vpop.f32.mrb[0].mxu0
        %v3641 = vadd.f32 0.0, %v3640
        %v3642 = vpop.f32.mrb[0].mxu0
        %3643 = vmatprep.mubr.bf16.mxu0 %v2905
        %3644 = vmatmul.mubr.bf16.gmra.mrb[0].mxu0 %v2904
        %v3645 = vpop.f32.mrb[0].mxu0
        %v3646 = vadd.f32 0.0, %v3645
        %v3647 = vpop.f32.mrb[0].mxu0
        %v3648 = vpop.f32.mrb[0].mxu0
        %v3649 = vadd.f32 0.0, %v3648
        %v3650 = vpop.f32.mrb[0].mxu0
        %3651 = vmatprep.mubr.bf16.mxu0 %v2914
        %3652 = vmatmul.mubr.bf16.gmra.mrb[0].mxu0 %v2913
        %v3653 = vpop.f32.mrb[0].mxu0
        %v3654 = vadd.f32 0.0, %v3653
        %v3655 = vpop.f32.mrb[0].mxu0
        %v3656 = vpop.f32.mrb[0].mxu0
        %v3657 = vadd.f32 0.0, %v3656
        %v3658 = vpop.f32.mrb[0].mxu0
        %3659 = vmatprep.mubr.bf16.mxu0 %v2923
        %3660 = vmatmul.mubr.bf16.gmra.mrb[0].mxu0 %v2922
        %v3661 = vpop.f32.mrb[0].mxu0
        %v3662 = vadd.f32 0.0, %v3661
        %v3663 = vpop.f32.mrb[0].mxu0
        %v3664 = vpop.f32.mrb[0].mxu0
        %v3665 = vadd.f32 0.0, %v3664
        %v3666 = vpop.f32.mrb[0].mxu0
        %3667 = vdwg.mxu0
        %3668 = vmatprep.subr.bf16.mxu0 0
        %3669 = vmatpush1.bf16.msra.mxu0 %v3379
        %3670 = vmatprep.subr.bf16.mxu0 0
        %3671 = vmatpush1.bf16.msra.mxu0 %v3380
        %3672 = vmatprep.subr.bf16.mxu0 0
        %3673 = vmatpush1.bf16.msra.mxu0 %v3381
        %3674 = vmatprep.subr.bf16.mxu0 0
        %3675 = vmatpush1.bf16.msra.mxu0 %v3382
        %3676 = vmatprep.subr.bf16.mxu0 0
        %3677 = vmatpush1.bf16.msra.mxu0 %v3383
        %3678 = vmatprep.subr.bf16.mxu0 0
        %3679 = vmatpush1.bf16.msra.mxu0 %v3384
        %3680 = vmatprep.subr.bf16.mxu0 0
        %3681 = vmatpush1.bf16.msra.mxu0 %v3385
        %3682 = vmatprep.subr.bf16.mxu0 0
        %3683 = vmatpush1.bf16.msra.mxu0 %v3386
        %3684 = vmatprep.subr.bf16.mxu0 0
        %3685 = vmatpush1.bf16.msra.mxu0 %v3387
        %3686 = vmatprep.subr.bf16.mxu0 0
        %3687 = vmatpush1.bf16.msra.mxu0 %v3388
        %3688 = vmatprep.subr.bf16.mxu0 0
        %3689 = vmatpush1.bf16.msra.mxu0 %v3389
        %3690 = vmatprep.subr.bf16.mxu0 0
        %3691 = vmatpush1.bf16.msra.mxu0 %v3390
        %3692 = vmatprep.subr.bf16.mxu0 0
        %3693 = vmatpush1.bf16.msra.mxu0 %v3391
        %3694 = vmatprep.subr.bf16.mxu0 0
        %3695 = vmatpush1.bf16.msra.mxu0 %v3392
        %3696 = vmatprep.subr.bf16.mxu0 0
        %3697 = vmatpush1.bf16.msra.mxu0 %v3393
        %3698 = vmatprep.subr.bf16.mxu0 0
        %3699 = vmatpush1.bf16.msra.mxu0 %v3394
        %3700 = vmatprep.mubr.bf16.mxu0 %v2790
        %3701 = vmatmul.mubr.bf16.gmra.mrb[0].mxu0 %v2789
        %v3702 = vpop.f32.mrb[0].mxu0
        %v3703 = vadd.f32 %v3542, %v3702
        %v3704 = vpop.f32.mrb[0].mxu0
        %v3705 = vpop.f32.mrb[0].mxu0
        %v3706 = vadd.f32 %v3545, %v3705
        %v3707 = vpop.f32.mrb[0].mxu0
        %3708 = vmatprep.mubr.bf16.mxu0 %v2799
        %3709 = vmatmul.mubr.bf16.gmra.mrb[0].mxu0 %v2798
        %v3710 = vpop.f32.mrb[0].mxu0
        %v3711 = vadd.f32 %v3550, %v3710
        %v3712 = vpop.f32.mrb[0].mxu0
        %v3713 = vpop.f32.mrb[0].mxu0
        %v3714 = vadd.f32 %v3553, %v3713
        %v3715 = vpop.f32.mrb[0].mxu0
        %3716 = vmatprep.mubr.bf16.mxu0 %v2808
        %3717 = vmatmul.mubr.bf16.gmra.mrb[0].mxu0 %v2807
        %v3718 = vpop.f32.mrb[0].mxu0
        %v3719 = vadd.f32 %v3558, %v3718
        %v3720 = vpop.f32.mrb[0].mxu0
        %v3721 = vpop.f32.mrb[0].mxu0
        %v3722 = vadd.f32 %v3561, %v3721
        %v3723 = vpop.f32.mrb[0].mxu0
        %3724 = vmatprep.mubr.bf16.mxu0 %v2817
        %3725 = vmatmul.mubr.bf16.gmra.mrb[0].mxu0 %v2816
        %v3726 = vpop.f32.mrb[0].mxu0
        %v3727 = vadd.f32 %v3566, %v3726
        %v3728 = vpop.f32.mrb[0].mxu0
        %v3729 = vpop.f32.mrb[0].mxu0
        %v3730 = vadd.f32 %v3569, %v3729
        %v3731 = vpop.f32.mrb[0].mxu0
        %3732 = vmatprep.mubr.bf16.mxu0 %v2826
        %3733 = vmatmul.mubr.bf16.gmra.mrb[0].mxu0 %v2825
        %v3734 = vpop.f32.mrb[0].mxu0
        %v3735 = vadd.f32 %v3574, %v3734
        %v3736 = vpop.f32.mrb[0].mxu0
        %v3737 = vpop.f32.mrb[0].mxu0
        %v3738 = vadd.f32 %v3577, %v3737
        %v3739 = vpop.f32.mrb[0].mxu0
        %3740 = vmatprep.mubr.bf16.mxu0 %v2835
        %3741 = vmatmul.mubr.bf16.gmra.mrb[0].mxu0 %v2834
        %v3742 = vpop.f32.mrb[0].mxu0
        %v3743 = vadd.f32 %v3582, %v3742
        %v3744 = vpop.f32.mrb[0].mxu0
        %v3745 = vpop.f32.mrb[0].mxu0
        %v3746 = vadd.f32 %v3585, %v3745
        %v3747 = vpop.f32.mrb[0].mxu0
        %3748 = vmatprep.mubr.bf16.mxu0 %v2844
        %3749 = vmatmul.mubr.bf16.gmra.mrb[0].mxu0 %v2843
        %v3750 = vpop.f32.mrb[0].mxu0
        %v3751 = vadd.f32 %v3590, %v3750
        %v3752 = vpop.f32.mrb[0].mxu0
        %v3753 = vpop.f32.mrb[0].mxu0
        %v3754 = vadd.f32 %v3593, %v3753
        %v3755 = vpop.f32.mrb[0].mxu0
        %3756 = vmatprep.mubr.bf16.mxu0 %v2853
        %3757 = vmatmul.mubr.bf16.gmra.mrb[0].mxu0 %v2852
        %v3758 = vpop.f32.mrb[0].mxu0
        %v3759 = vadd.f32 %v3598, %v3758
        %v3760 = vpop.f32.mrb[0].mxu0
        %v3761 = vpop.f32.mrb[0].mxu0
        %v3762 = vadd.f32 %v3601, %v3761
        %v3763 = vpop.f32.mrb[0].mxu0
        %3764 = vmatprep.mubr.bf16.mxu0 %v2862
        %3765 = vmatmul.mubr.bf16.gmra.mrb[0].mxu0 %v2861
        %v3766 = vpop.f32.mrb[0].mxu0
        %v3767 = vadd.f32 %v3606, %v3766
        %v3768 = vpop.f32.mrb[0].mxu0
        %v3769 = vpop.f32.mrb[0].mxu0
        %v3770 = vadd.f32 %v3609, %v3769
        %v3771 = vpop.f32.mrb[0].mxu0
        %3772 = vmatprep.mubr.bf16.mxu0 %v2871
        %3773 = vmatmul.mubr.bf16.gmra.mrb[0].mxu0 %v2870
        %v3774 = vpop.f32.mrb[0].mxu0
        %v3775 = vadd.f32 %v3614, %v3774
        %v3776 = vpop.f32.mrb[0].mxu0
        %v3777 = vpop.f32.mrb[0].mxu0
        %v3778 = vadd.f32 %v3617, %v3777
        %v3779 = vpop.f32.mrb[0].mxu0
        %3780 = vmatprep.mubr.bf16.mxu0 %v2880
        %3781 = vmatmul.mubr.bf16.gmra.mrb[0].mxu0 %v2879
        %v3782 = vpop.f32.mrb[0].mxu0
        %v3783 = vadd.f32 %v3622, %v3782
        %v3784 = vpop.f32.mrb[0].mxu0
        %v3785 = vpop.f32.mrb[0].mxu0
        %v3786 = vadd.f32 %v3625, %v3785
        %v3787 = vpop.f32.mrb[0].mxu0
        %3788 = vmatprep.mubr.bf16.mxu0 %v2889
        %3789 = vmatmul.mubr.bf16.gmra.mrb[0].mxu0 %v2888
        %v3790 = vpop.f32.mrb[0].mxu0
        %v3791 = vadd.f32 %v3630, %v3790
        %v3792 = vpop.f32.mrb[0].mxu0
        %v3793 = vpop.f32.mrb[0].mxu0
        %v3794 = vadd.f32 %v3633, %v3793
        %v3795 = vpop.f32.mrb[0].mxu0
        %3796 = vmatprep.mubr.bf16.mxu0 %v2898
        %3797 = vmatmul.mubr.bf16.gmra.mrb[0].mxu0 %v2897
        %v3798 = vpop.f32.mrb[0].mxu0
        %v3799 = vadd.f32 %v3638, %v3798
        %v3800 = vpop.f32.mrb[0].mxu0
        %v3801 = vpop.f32.mrb[0].mxu0
        %v3802 = vadd.f32 %v3641, %v3801
        %v3803 = vpop.f32.mrb[0].mxu0
        %3804 = vmatprep.mubr.bf16.mxu0 %v2907
        %3805 = vmatmul.mubr.bf16.gmra.mrb[0].mxu0 %v2906
        %v3806 = vpop.f32.mrb[0].mxu0
        %v3807 = vadd.f32 %v3646, %v3806
        %v3808 = vpop.f32.mrb[0].mxu0
        %v3809 = vpop.f32.mrb[0].mxu0
        %v3810 = vadd.f32 %v3649, %v3809
        %v3811 = vpop.f32.mrb[0].mxu0
        %3812 = vmatprep.mubr.bf16.mxu0 %v2916
        %3813 = vmatmul.mubr.bf16.gmra.mrb[0].mxu0 %v2915
        %v3814 = vpop.f32.mrb[0].mxu0
        %v3815 = vadd.f32 %v3654, %v3814
        %v3816 = vpop.f32.mrb[0].mxu0
        %v3817 = vpop.f32.mrb[0].mxu0
        %v3818 = vadd.f32 %v3657, %v3817
        %v3819 = vpop.f32.mrb[0].mxu0
        %3820 = vmatprep.mubr.bf16.mxu0 %v2925
        %3821 = vmatmul.mubr.bf16.gmra.mrb[0].mxu0 %v2924
        %v3822 = vpop.f32.mrb[0].mxu0
        %v3823 = vadd.f32 %v3662, %v3822
        %v3824 = vpop.f32.mrb[0].mxu0
        %v3825 = vpop.f32.mrb[0].mxu0
        %v3826 = vadd.f32 %v3665, %v3825
        %v3827 = vpop.f32.mrb[0].mxu0
        %3828 = vdwg.mxu0
        %3829 = vmatprep.subr.bf16.mxu0 0
        %3830 = vmatpush1.bf16.msra.mxu0 %v3395
        %3831 = vmatprep.subr.bf16.mxu0 0
        %3832 = vmatpush1.bf16.msra.mxu0 %v3396
        %3833 = vmatprep.subr.bf16.mxu0 0
        %3834 = vmatpush1.bf16.msra.mxu0 %v3397
        %3835 = vmatprep.subr.bf16.mxu0 0
        %3836 = vmatpush1.bf16.msra.mxu0 %v3398
        %3837 = vmatprep.subr.bf16.mxu0 0
        %3838 = vmatpush1.bf16.msra.mxu0 %v3399
        %3839 = vmatprep.subr.bf16.mxu0 0
        %3840 = vmatpush1.bf16.msra.mxu0 %v3400
        %3841 = vmatprep.subr.bf16.mxu0 0
        %3842 = vmatpush1.bf16.msra.mxu0 %v3401
        %3843 = vmatprep.subr.bf16.mxu0 0
        %3844 = vmatpush1.bf16.msra.mxu0 %v3402
        %3845 = vmatprep.subr.bf16.mxu0 0
        %3846 = vmatpush1.bf16.msra.mxu0 %v3403
        %3847 = vmatprep.subr.bf16.mxu0 0
        %3848 = vmatpush1.bf16.msra.mxu0 %v3404
        %3849 = vmatprep.subr.bf16.mxu0 0
        %3850 = vmatpush1.bf16.msra.mxu0 %v3405
        %3851 = vmatprep.subr.bf16.mxu0 0
        %3852 = vmatpush1.bf16.msra.mxu0 %v3406
        %3853 = vmatprep.subr.bf16.mxu0 0
        %3854 = vmatpush1.bf16.msra.mxu0 %v3407
        %3855 = vmatprep.subr.bf16.mxu0 0
        %3856 = vmatpush1.bf16.msra.mxu0 %v3408
        %3857 = vmatprep.subr.bf16.mxu0 0
        %3858 = vmatpush1.bf16.msra.mxu0 %v3409
        %3859 = vmatprep.subr.bf16.mxu0 0
        %3860 = vmatpush1.bf16.msra.mxu0 %v3410
        %3861 = vmatprep.mubr.bf16.mxu0 %v2792
        %3862 = vmatmul.mubr.bf16.gmra.mrb[0].mxu0 %v2791
        %v3863 = vpop.f32.mrb[0].mxu0
        %v3864 = vadd.f32 %v3703, %v3863
        %v3865 = vpop.f32.mrb[0].mxu0
        %v3866 = vpop.f32.mrb[0].mxu0
        %v3867 = vadd.f32 %v3706, %v3866
        %v3868 = vpop.f32.mrb[0].mxu0
        %3869 = vmatprep.mubr.bf16.mxu0 %v2801
        %3870 = vmatmul.mubr.bf16.gmra.mrb[0].mxu0 %v2800
        %v3871 = vpop.f32.mrb[0].mxu0
        %v3872 = vadd.f32 %v3711, %v3871
        %v3873 = vpop.f32.mrb[0].mxu0
        %v3874 = vpop.f32.mrb[0].mxu0
        %v3875 = vadd.f32 %v3714, %v3874
        %v3876 = vpop.f32.mrb[0].mxu0
        %3877 = vmatprep.mubr.bf16.mxu0 %v2810
        %3878 = vmatmul.mubr.bf16.gmra.mrb[0].mxu0 %v2809
        %v3879 = vpop.f32.mrb[0].mxu0
        %v3880 = vadd.f32 %v3719, %v3879
        %v3881 = vpop.f32.mrb[0].mxu0
        %v3882 = vpop.f32.mrb[0].mxu0
        %v3883 = vadd.f32 %v3722, %v3882
        %v3884 = vpop.f32.mrb[0].mxu0
        %3885 = vmatprep.mubr.bf16.mxu0 %v2819
        %3886 = vmatmul.mubr.bf16.gmra.mrb[0].mxu0 %v2818
        %v3887 = vpop.f32.mrb[0].mxu0
        %v3888 = vadd.f32 %v3727, %v3887
        %v3889 = vpop.f32.mrb[0].mxu0
        %v3890 = vpop.f32.mrb[0].mxu0
        %v3891 = vadd.f32 %v3730, %v3890
        %v3892 = vpop.f32.mrb[0].mxu0
        %3893 = vmatprep.mubr.bf16.mxu0 %v2828
        %3894 = vmatmul.mubr.bf16.gmra.mrb[0].mxu0 %v2827
        %v3895 = vpop.f32.mrb[0].mxu0
        %v3896 = vadd.f32 %v3735, %v3895
        %v3897 = vpop.f32.mrb[0].mxu0
        %v3898 = vpop.f32.mrb[0].mxu0
        %v3899 = vadd.f32 %v3738, %v3898
        %v3900 = vpop.f32.mrb[0].mxu0
        %3901 = vmatprep.mubr.bf16.mxu0 %v2837
        %3902 = vmatmul.mubr.bf16.gmra.mrb[0].mxu0 %v2836
        %v3903 = vpop.f32.mrb[0].mxu0
        %v3904 = vadd.f32 %v3743, %v3903
        %v3905 = vpop.f32.mrb[0].mxu0
        %v3906 = vpop.f32.mrb[0].mxu0
        %v3907 = vadd.f32 %v3746, %v3906
        %v3908 = vpop.f32.mrb[0].mxu0
        %3909 = vmatprep.mubr.bf16.mxu0 %v2846
        %3910 = vmatmul.mubr.bf16.gmra.mrb[0].mxu0 %v2845
        %v3911 = vpop.f32.mrb[0].mxu0
        %v3912 = vadd.f32 %v3751, %v3911
        %v3913 = vpop.f32.mrb[0].mxu0
        %v3914 = vpop.f32.mrb[0].mxu0
        %v3915 = vadd.f32 %v3754, %v3914
        %v3916 = vpop.f32.mrb[0].mxu0
        %3917 = vmatprep.mubr.bf16.mxu0 %v2855
        %3918 = vmatmul.mubr.bf16.gmra.mrb[0].mxu0 %v2854
        %v3919 = vpop.f32.mrb[0].mxu0
        %v3920 = vadd.f32 %v3759, %v3919
        %v3921 = vpop.f32.mrb[0].mxu0
        %v3922 = vpop.f32.mrb[0].mxu0
        %v3923 = vadd.f32 %v3762, %v3922
        %v3924 = vpop.f32.mrb[0].mxu0
        %3925 = vmatprep.mubr.bf16.mxu0 %v2864
        %3926 = vmatmul.mubr.bf16.gmra.mrb[0].mxu0 %v2863
        %v3927 = vpop.f32.mrb[0].mxu0
        %v3928 = vadd.f32 %v3767, %v3927
        %v3929 = vpop.f32.mrb[0].mxu0
        %v3930 = vpop.f32.mrb[0].mxu0
        %v3931 = vadd.f32 %v3770, %v3930
        %v3932 = vpop.f32.mrb[0].mxu0
        %3933 = vmatprep.mubr.bf16.mxu0 %v2873
        %3934 = vmatmul.mubr.bf16.gmra.mrb[0].mxu0 %v2872
        %v3935 = vpop.f32.mrb[0].mxu0
        %v3936 = vadd.f32 %v3775, %v3935
        %v3937 = vpop.f32.mrb[0].mxu0
        %v3938 = vpop.f32.mrb[0].mxu0
        %v3939 = vadd.f32 %v3778, %v3938
        %v3940 = vpop.f32.mrb[0].mxu0
        %3941 = vmatprep.mubr.bf16.mxu0 %v2882
        %3942 = vmatmul.mubr.bf16.gmra.mrb[0].mxu0 %v2881
        %v3943 = vpop.f32.mrb[0].mxu0
        %v3944 = vadd.f32 %v3783, %v3943
        %v3945 = vpop.f32.mrb[0].mxu0
        %v3946 = vpop.f32.mrb[0].mxu0
        %v3947 = vadd.f32 %v3786, %v3946
        %v3948 = vpop.f32.mrb[0].mxu0
        %3949 = vmatprep.mubr.bf16.mxu0 %v2891
        %3950 = vmatmul.mubr.bf16.gmra.mrb[0].mxu0 %v2890
        %v3951 = vpop.f32.mrb[0].mxu0
        %v3952 = vadd.f32 %v3791, %v3951
        %v3953 = vpop.f32.mrb[0].mxu0
        %v3954 = vpop.f32.mrb[0].mxu0
        %v3955 = vadd.f32 %v3794, %v3954
        %v3956 = vpop.f32.mrb[0].mxu0
        %3957 = vmatprep.mubr.bf16.mxu0 %v2900
        %3958 = vmatmul.mubr.bf16.gmra.mrb[0].mxu0 %v2899
        %v3959 = vpop.f32.mrb[0].mxu0
        %v3960 = vadd.f32 %v3799, %v3959
        %v3961 = vpop.f32.mrb[0].mxu0
        %v3962 = vpop.f32.mrb[0].mxu0
        %v3963 = vadd.f32 %v3802, %v3962
        %v3964 = vpop.f32.mrb[0].mxu0
        %3965 = vmatprep.mubr.bf16.mxu0 %v2909
        %3966 = vmatmul.mubr.bf16.gmra.mrb[0].mxu0 %v2908
        %v3967 = vpop.f32.mrb[0].mxu0
        %v3968 = vadd.f32 %v3807, %v3967
        %v3969 = vpop.f32.mrb[0].mxu0
        %v3970 = vpop.f32.mrb[0].mxu0
        %v3971 = vadd.f32 %v3810, %v3970
        %v3972 = vpop.f32.mrb[0].mxu0
        %3973 = vmatprep.mubr.bf16.mxu0 %v2918
        %3974 = vmatmul.mubr.bf16.gmra.mrb[0].mxu0 %v2917
        %v3975 = vpop.f32.mrb[0].mxu0
        %v3976 = vadd.f32 %v3815, %v3975
        %v3977 = vpop.f32.mrb[0].mxu0
        %v3978 = vpop.f32.mrb[0].mxu0
        %v3979 = vadd.f32 %v3818, %v3978
        %v3980 = vpop.f32.mrb[0].mxu0
        %3981 = vmatprep.mubr.bf16.mxu0 %v2927
        %3982 = vmatmul.mubr.bf16.gmra.mrb[0].mxu0 %v2926
        %v3983 = vpop.f32.mrb[0].mxu0
        %v3984 = vadd.f32 %v3823, %v3983
        %v3985 = vpop.f32.mrb[0].mxu0
        %v3986 = vpop.f32.mrb[0].mxu0
        %v3987 = vadd.f32 %v3826, %v3986
        %v3988 = vpop.f32.mrb[0].mxu0
        %3989 = vdwg.mxu0
        %3990 = vmatprep.subr.bf16.mxu0 0
        %3991 = vmatpush1.bf16.msra.mxu0 %v3411
        %3992 = vmatprep.subr.bf16.mxu0 0
        %3993 = vmatpush1.bf16.msra.mxu0 %v3412
        %3994 = vmatprep.subr.bf16.mxu0 0
        %3995 = vmatpush1.bf16.msra.mxu0 %v3413
        %3996 = vmatprep.subr.bf16.mxu0 0
        %3997 = vmatpush1.bf16.msra.mxu0 %v3414
        %3998 = vmatprep.subr.bf16.mxu0 0
        %3999 = vmatpush1.bf16.msra.mxu0 %v3415
        %4000 = vmatprep.subr.bf16.mxu0 0
        %4001 = vmatpush1.bf16.msra.mxu0 %v3416
        %4002 = vmatprep.subr.bf16.mxu0 0
        %4003 = vmatpush1.bf16.msra.mxu0 %v3417
        %4004 = vmatprep.subr.bf16.mxu0 0
        %4005 = vmatpush1.bf16.msra.mxu0 %v3418
        %4006 = vmatprep.subr.bf16.mxu0 0
        %4007 = vmatpush1.bf16.msra.mxu0 %v3419
        %4008 = vmatprep.subr.bf16.mxu0 0
        %4009 = vmatpush1.bf16.msra.mxu0 %v3420
        %4010 = vmatprep.subr.bf16.mxu0 0
        %4011 = vmatpush1.bf16.msra.mxu0 %v3421
        %4012 = vmatprep.subr.bf16.mxu0 0
        %4013 = vmatpush1.bf16.msra.mxu0 %v3422
        %4014 = vmatprep.subr.bf16.mxu0 0
        %4015 = vmatpush1.bf16.msra.mxu0 %v3423
        %4016 = vmatprep.subr.bf16.mxu0 0
        %4017 = vmatpush1.bf16.msra.mxu0 %v3424
        %4018 = vmatprep.subr.bf16.mxu0 0
        %4019 = vmatpush1.bf16.msra.mxu0 %v3425
        %4020 = vmatprep.subr.bf16.mxu0 0
        %4021 = vmatpush1.bf16.msra.mxu0 %v3426
        %4022 = vmatprep.mubr.bf16.mxu0 %v2794
        %4023 = vmatmul.mubr.bf16.gmra.mrb[0].mxu0 %v2793
        %v4024 = vpop.f32.mrb[0].mxu0
        %v4025 = vadd.f32 %v3864, %v4024
        %v4026 = vpop.f32.mrb[0].mxu0
        %v4027 = vpop.f32.mrb[0].mxu0
        %v4028 = vadd.f32 %v3867, %v4027
        %v4029 = vpop.f32.mrb[0].mxu0
        %4030 = vmatprep.mubr.bf16.mxu0 %v2803
        %4031 = vmatmul.mubr.bf16.gmra.mrb[0].mxu0 %v2802
        %v4032 = vpop.f32.mrb[0].mxu0
        %v4033 = vadd.f32 %v3872, %v4032
        %v4034 = vpop.f32.mrb[0].mxu0
        %v4035 = vpop.f32.mrb[0].mxu0
        %v4036 = vadd.f32 %v3875, %v4035
        %v4037 = vpop.f32.mrb[0].mxu0
        %4038 = vmatprep.mubr.bf16.mxu0 %v2812
        %4039 = vmatmul.mubr.bf16.gmra.mrb[0].mxu0 %v2811
        %v4040 = vpop.f32.mrb[0].mxu0
        %v4041 = vadd.f32 %v3880, %v4040
        %v4042 = vpop.f32.mrb[0].mxu0
        %v4043 = vpop.f32.mrb[0].mxu0
        %v4044 = vadd.f32 %v3883, %v4043
        %v4045 = vpop.f32.mrb[0].mxu0
        %4046 = vmatprep.mubr.bf16.mxu0 %v2821
        %4047 = vmatmul.mubr.bf16.gmra.mrb[0].mxu0 %v2820
        %v4048 = vpop.f32.mrb[0].mxu0
        %v4049 = vadd.f32 %v3888, %v4048
        %v4050 = vpop.f32.mrb[0].mxu0
        %v4051 = vpop.f32.mrb[0].mxu0
        %v4052 = vadd.f32 %v3891, %v4051
        %v4053 = vpop.f32.mrb[0].mxu0
        %4054 = vmatprep.mubr.bf16.mxu0 %v2830
        %4055 = vmatmul.mubr.bf16.gmra.mrb[0].mxu0 %v2829
        %v4056 = vpop.f32.mrb[0].mxu0
        %v4057 = vadd.f32 %v3896, %v4056
        %v4058 = vpop.f32.mrb[0].mxu0
        %v4059 = vpop.f32.mrb[0].mxu0
        %v4060 = vadd.f32 %v3899, %v4059
        %v4061 = vpop.f32.mrb[0].mxu0
        %4062 = vmatprep.mubr.bf16.mxu0 %v2839
        %4063 = vmatmul.mubr.bf16.gmra.mrb[0].mxu0 %v2838
        %v4064 = vpop.f32.mrb[0].mxu0
        %v4065 = vadd.f32 %v3904, %v4064
        %v4066 = vpop.f32.mrb[0].mxu0
        %v4067 = vpop.f32.mrb[0].mxu0
        %v4068 = vadd.f32 %v3907, %v4067
        %v4069 = vpop.f32.mrb[0].mxu0
        %4070 = vmatprep.mubr.bf16.mxu0 %v2848
        %4071 = vmatmul.mubr.bf16.gmra.mrb[0].mxu0 %v2847
        %v4072 = vpop.f32.mrb[0].mxu0
        %v4073 = vadd.f32 %v3912, %v4072
        %v4074 = vpop.f32.mrb[0].mxu0
        %v4075 = vpop.f32.mrb[0].mxu0
        %v4076 = vadd.f32 %v3915, %v4075
        %v4077 = vpop.f32.mrb[0].mxu0
        %4078 = vmatprep.mubr.bf16.mxu0 %v2857
        %4079 = vmatmul.mubr.bf16.gmra.mrb[0].mxu0 %v2856
        %v4080 = vpop.f32.mrb[0].mxu0
        %v4081 = vadd.f32 %v3920, %v4080
        %v4082 = vpop.f32.mrb[0].mxu0
        %v4083 = vpop.f32.mrb[0].mxu0
        %v4084 = vadd.f32 %v3923, %v4083
        %v4085 = vpop.f32.mrb[0].mxu0
        %4086 = vmatprep.mubr.bf16.mxu0 %v2866
        %4087 = vmatmul.mubr.bf16.gmra.mrb[0].mxu0 %v2865
        %v4088 = vpop.f32.mrb[0].mxu0
        %v4089 = vadd.f32 %v3928, %v4088
        %v4090 = vpop.f32.mrb[0].mxu0
        %v4091 = vpop.f32.mrb[0].mxu0
        %v4092 = vadd.f32 %v3931, %v4091
        %v4093 = vpop.f32.mrb[0].mxu0
        %4094 = vmatprep.mubr.bf16.mxu0 %v2875
        %4095 = vmatmul.mubr.bf16.gmra.mrb[0].mxu0 %v2874
        %v4096 = vpop.f32.mrb[0].mxu0
        %v4097 = vadd.f32 %v3936, %v4096
        %v4098 = vpop.f32.mrb[0].mxu0
        %v4099 = vpop.f32.mrb[0].mxu0
        %v4100 = vadd.f32 %v3939, %v4099
        %v4101 = vpop.f32.mrb[0].mxu0
        %4102 = vmatprep.mubr.bf16.mxu0 %v2884
        %4103 = vmatmul.mubr.bf16.gmra.mrb[0].mxu0 %v2883
        %v4104 = vpop.f32.mrb[0].mxu0
        %v4105 = vadd.f32 %v3944, %v4104
        %v4106 = vpop.f32.mrb[0].mxu0
        %v4107 = vpop.f32.mrb[0].mxu0
        %v4108 = vadd.f32 %v3947, %v4107
        %v4109 = vpop.f32.mrb[0].mxu0
        %4110 = vmatprep.mubr.bf16.mxu0 %v2893
        %4111 = vmatmul.mubr.bf16.gmra.mrb[0].mxu0 %v2892
        %v4112 = vpop.f32.mrb[0].mxu0
        %v4113 = vadd.f32 %v3952, %v4112
        %v4114 = vpop.f32.mrb[0].mxu0
        %v4115 = vpop.f32.mrb[0].mxu0
        %v4116 = vadd.f32 %v3955, %v4115
        %v4117 = vpop.f32.mrb[0].mxu0
        %4118 = vmatprep.mubr.bf16.mxu0 %v2902
        %4119 = vmatmul.mubr.bf16.gmra.mrb[0].mxu0 %v2901
        %v4120 = vpop.f32.mrb[0].mxu0
        %v4121 = vadd.f32 %v3960, %v4120
        %v4122 = vpop.f32.mrb[0].mxu0
        %v4123 = vpop.f32.mrb[0].mxu0
        %v4124 = vadd.f32 %v3963, %v4123
        %v4125 = vpop.f32.mrb[0].mxu0
        %4126 = vmatprep.mubr.bf16.mxu0 %v2911
        %4127 = vmatmul.mubr.bf16.gmra.mrb[0].mxu0 %v2910
        %v4128 = vpop.f32.mrb[0].mxu0
        %v4129 = vadd.f32 %v3968, %v4128
        %v4130 = vpop.f32.mrb[0].mxu0
        %v4131 = vpop.f32.mrb[0].mxu0
        %v4132 = vadd.f32 %v3971, %v4131
        %v4133 = vpop.f32.mrb[0].mxu0
        %4134 = vmatprep.mubr.bf16.mxu0 %v2920
        %4135 = vmatmul.mubr.bf16.gmra.mrb[0].mxu0 %v2919
        %v4136 = vpop.f32.mrb[0].mxu0
        %v4137 = vadd.f32 %v3976, %v4136
        %v4138 = vpop.f32.mrb[0].mxu0
        %v4139 = vpop.f32.mrb[0].mxu0
        %v4140 = vadd.f32 %v3979, %v4139
        %v4141 = vpop.f32.mrb[0].mxu0
        %4142 = vmatprep.mubr.bf16.mxu0 %v2929
        %4143 = vmatmul.mubr.bf16.gmra.mrb[0].mxu0 %v2928
        %v4144 = vpop.f32.mrb[0].mxu0
        %v4145 = vadd.f32 %v3984, %v4144
        %v4146 = vpop.f32.mrb[0].mxu0
        %v4147 = vpop.f32.mrb[0].mxu0
        %v4148 = vadd.f32 %v3987, %v4147
        %v4149 = vpop.f32.mrb[0].mxu0
        %4150 = vdwg.mxu0
        %4151 = vmatprep.subr.bf16.mxu0 0
        %4152 = vmatpush1.bf16.msra.mxu0 %v3427
        %4153 = vmatprep.subr.bf16.mxu0 0
        %4154 = vmatpush1.bf16.msra.mxu0 %v3428
        %4155 = vmatprep.subr.bf16.mxu0 0
        %4156 = vmatpush1.bf16.msra.mxu0 %v3429
        %4157 = vmatprep.subr.bf16.mxu0 0
        %4158 = vmatpush1.bf16.msra.mxu0 %v3430
        %4159 = vmatprep.subr.bf16.mxu0 0
        %4160 = vmatpush1.bf16.msra.mxu0 %v3431
        %4161 = vmatprep.subr.bf16.mxu0 0
        %4162 = vmatpush1.bf16.msra.mxu0 %v3432
        %4163 = vmatprep.subr.bf16.mxu0 0
        %4164 = vmatpush1.bf16.msra.mxu0 %v3433
        %4165 = vmatprep.subr.bf16.mxu0 0
        %4166 = vmatpush1.bf16.msra.mxu0 %v3434
        %4167 = vmatprep.subr.bf16.mxu0 0
        %4168 = vmatpush1.bf16.msra.mxu0 0
        %4169 = vmatprep.subr.bf16.mxu0 0
        %4170 = vmatpush1.bf16.msra.mxu0 0
        %4171 = vmatprep.subr.bf16.mxu0 0
        %4172 = vmatpush1.bf16.msra.mxu0 0
        %4173 = vmatprep.subr.bf16.mxu0 0
        %4174 = vmatpush1.bf16.msra.mxu0 0
        %4175 = vmatprep.subr.bf16.mxu0 0
        %4176 = vmatpush1.bf16.msra.mxu0 0
        %4177 = vmatprep.subr.bf16.mxu0 0
        %4178 = vmatpush1.bf16.msra.mxu0 0
        %4179 = vmatprep.subr.bf16.mxu0 0
        %4180 = vmatpush1.bf16.msra.mxu0 0
        %4181 = vmatprep.subr.bf16.mxu0 0
        %4182 = vmatpush1.bf16.msra.mxu0 0
        %4183 = vmatprep.mubr.bf16.mxu0 0
        %4184 = vmatmul.mubr.bf16.gmra.mrb[0].mxu0 %v2795
        %v4185 = vpop.f32.mrb[0].mxu0
        %v4186 = vadd.f32 %v4025, %v4185
        %v4187 = vpop.f32.mrb[0].mxu0
        %v4188 = vpop.f32.mrb[0].mxu0
        %v4189 = vadd.f32 %v4028, %v4188
        %v4190 = vpop.f32.mrb[0].mxu0
        %4191 = vmatprep.mubr.bf16.mxu0 0
        %4192 = vmatmul.mubr.bf16.gmra.mrb[0].mxu0 %v2804
        %v4193 = vpop.f32.mrb[0].mxu0
        %v4194 = vadd.f32 %v4033, %v4193
        %v4195 = vpop.f32.mrb[0].mxu0
        %v4196 = vpop.f32.mrb[0].mxu0
        %v4197 = vadd.f32 %v4036, %v4196
        %v4198 = vpop.f32.mrb[0].mxu0
        %4199 = vmatprep.mubr.bf16.mxu0 0
        %4200 = vmatmul.mubr.bf16.gmra.mrb[0].mxu0 %v2813
        %v4201 = vpop.f32.mrb[0].mxu0
        %v4202 = vadd.f32 %v4041, %v4201
        %v4203 = vpop.f32.mrb[0].mxu0
        %v4204 = vpop.f32.mrb[0].mxu0
        %v4205 = vadd.f32 %v4044, %v4204
        %v4206 = vpop.f32.mrb[0].mxu0
        %4207 = vmatprep.mubr.bf16.mxu0 0
        %4208 = vmatmul.mubr.bf16.gmra.mrb[0].mxu0 %v2822
        %v4209 = vpop.f32.mrb[0].mxu0
        %v4210 = vadd.f32 %v4049, %v4209
        %v4211 = vpop.f32.mrb[0].mxu0
        %v4212 = vpop.f32.mrb[0].mxu0
        %v4213 = vadd.f32 %v4052, %v4212
        %v4214 = vpop.f32.mrb[0].mxu0
        %4215 = vmatprep.mubr.bf16.mxu0 0
        %4216 = vmatmul.mubr.bf16.gmra.mrb[0].mxu0 %v2831
        %v4217 = vpop.f32.mrb[0].mxu0
        %v4218 = vadd.f32 %v4057, %v4217
        %v4219 = vpop.f32.mrb[0].mxu0
        %v4220 = vpop.f32.mrb[0].mxu0
        %v4221 = vadd.f32 %v4060, %v4220
        %v4222 = vpop.f32.mrb[0].mxu0
        %4223 = vmatprep.mubr.bf16.mxu0 0
        %4224 = vmatmul.mubr.bf16.gmra.mrb[0].mxu0 %v2840
        %v4225 = vpop.f32.mrb[0].mxu0
        %v4226 = vadd.f32 %v4065, %v4225
        %v4227 = vpop.f32.mrb[0].mxu0
        %v4228 = vpop.f32.mrb[0].mxu0
        %v4229 = vadd.f32 %v4068, %v4228
        %v4230 = vpop.f32.mrb[0].mxu0
        %4231 = vmatprep.mubr.bf16.mxu0 0
        %4232 = vmatmul.mubr.bf16.gmra.mrb[0].mxu0 %v2849
        %v4233 = vpop.f32.mrb[0].mxu0
        %v4234 = vadd.f32 %v4073, %v4233
        %v4235 = vpop.f32.mrb[0].mxu0
        %v4236 = vpop.f32.mrb[0].mxu0
        %v4237 = vadd.f32 %v4076, %v4236
        %v4238 = vpop.f32.mrb[0].mxu0
        %4239 = vmatprep.mubr.bf16.mxu0 0
        %4240 = vmatmul.mubr.bf16.gmra.mrb[0].mxu0 %v2858
        %v4241 = vpop.f32.mrb[0].mxu0
        %v4242 = vadd.f32 %v4081, %v4241
        %v4243 = vpop.f32.mrb[0].mxu0
        %v4244 = vpop.f32.mrb[0].mxu0
        %v4245 = vadd.f32 %v4084, %v4244
        %v4246 = vpop.f32.mrb[0].mxu0
        %4247 = vmatprep.mubr.bf16.mxu0 0
        %4248 = vmatmul.mubr.bf16.gmra.mrb[0].mxu0 %v2867
        %v4249 = vpop.f32.mrb[0].mxu0
        %v4250 = vadd.f32 %v4089, %v4249
        %v4251 = vpop.f32.mrb[0].mxu0
        %v4252 = vpop.f32.mrb[0].mxu0
        %v4253 = vadd.f32 %v4092, %v4252
        %v4254 = vpop.f32.mrb[0].mxu0
        %4255 = vmatprep.mubr.bf16.mxu0 0
        %4256 = vmatmul.mubr.bf16.gmra.mrb[0].mxu0 %v2876
        %v4257 = vpop.f32.mrb[0].mxu0
        %v4258 = vadd.f32 %v4097, %v4257
        %v4259 = vpop.f32.mrb[0].mxu0
        %v4260 = vpop.f32.mrb[0].mxu0
        %v4261 = vadd.f32 %v4100, %v4260
        %v4262 = vpop.f32.mrb[0].mxu0
        %4263 = vmatprep.mubr.bf16.mxu0 0
        %4264 = vmatmul.mubr.bf16.gmra.mrb[0].mxu0 %v2885
        %v4265 = vpop.f32.mrb[0].mxu0
        %v4266 = vadd.f32 %v4105, %v4265
        %v4267 = vpop.f32.mrb[0].mxu0
        %v4268 = vpop.f32.mrb[0].mxu0
        %v4269 = vadd.f32 %v4108, %v4268
        %v4270 = vpop.f32.mrb[0].mxu0
        %4271 = vmatprep.mubr.bf16.mxu0 0
        %4272 = vmatmul.mubr.bf16.gmra.mrb[0].mxu0 %v2894
        %v4273 = vpop.f32.mrb[0].mxu0
        %v4274 = vadd.f32 %v4113, %v4273
        %v4275 = vpop.f32.mrb[0].mxu0
        %v4276 = vpop.f32.mrb[0].mxu0
        %v4277 = vadd.f32 %v4116, %v4276
        %v4278 = vpop.f32.mrb[0].mxu0
        %4279 = vmatprep.mubr.bf16.mxu0 0
        %4280 = vmatmul.mubr.bf16.gmra.mrb[0].mxu0 %v2903
        %v4281 = vpop.f32.mrb[0].mxu0
        %v4282 = vadd.f32 %v4121, %v4281
        %v4283 = vpop.f32.mrb[0].mxu0
        %v4284 = vpop.f32.mrb[0].mxu0
        %v4285 = vadd.f32 %v4124, %v4284
        %v4286 = vpop.f32.mrb[0].mxu0
        %4287 = vmatprep.mubr.bf16.mxu0 0
        %4288 = vmatmul.mubr.bf16.gmra.mrb[0].mxu0 %v2912
        %v4289 = vpop.f32.mrb[0].mxu0
        %v4290 = vadd.f32 %v4129, %v4289
        %v4291 = vpop.f32.mrb[0].mxu0
        %v4292 = vpop.f32.mrb[0].mxu0
        %v4293 = vadd.f32 %v4132, %v4292
        %v4294 = vpop.f32.mrb[0].mxu0
        %4295 = vmatprep.mubr.bf16.mxu0 0
        %4296 = vmatmul.mubr.bf16.gmra.mrb[0].mxu0 %v2921
        %v4297 = vpop.f32.mrb[0].mxu0
        %v4298 = vadd.f32 %v4137, %v4297
        %v4299 = vpop.f32.mrb[0].mxu0
        %v4300 = vpop.f32.mrb[0].mxu0
        %v4301 = vadd.f32 %v4140, %v4300
        %v4302 = vpop.f32.mrb[0].mxu0
        %4303 = vmatprep.mubr.bf16.mxu0 0
        %4304 = vmatmul.mubr.bf16.gmra.mrb[0].mxu0 %v2930
        %v4305 = vpop.f32.mrb[0].mxu0
        %v4306 = vadd.f32 %v4145, %v4305
        %v4307 = vpop.f32.mrb[0].mxu0
        %v4308 = vpop.f32.mrb[0].mxu0
        %v4309 = vadd.f32 %v4148, %v4308
        %v4310 = vpop.f32.mrb[0].mxu0
        %4311 = vdwg.mxu0
        %v4312 = vmax.f32 %v4186, 0.0
        %v4313 = vmax.f32 %v4189, 0.0
        %v4314 = vmax.f32 %v4194, 0.0
        %v4315 = vmax.f32 %v4197, 0.0
        %v4316 = vmax.f32 %v4202, 0.0
        %v4317 = vmax.f32 %v4205, 0.0
        %v4318 = vmax.f32 %v4210, 0.0
        %v4319 = vmax.f32 %v4213, 0.0
        %v4320 = vmax.f32 %v4218, 0.0
        %v4321 = vmax.f32 %v4221, 0.0
        %v4322 = vmax.f32 %v4226, 0.0
        %v4323 = vmax.f32 %v4229, 0.0
        %v4324 = vmax.f32 %v4234, 0.0
        %v4325 = vmax.f32 %v4237, 0.0
        %v4326 = vmax.f32 %v4242, 0.0
        %v4327 = vmax.f32 %v4245, 0.0
        %v4328 = vmax.f32 %v4250, 0.0
        %v4329 = vmax.f32 %v4253, 0.0
        %v4330 = vmax.f32 %v4258, 0.0
        %v4331 = vmax.f32 %v4261, 0.0
        %v4332 = vmax.f32 %v4266, 0.0
        %v4333 = vmax.f32 %v4269, 0.0
        %v4334 = vmax.f32 %v4274, 0.0
        %v4335 = vmax.f32 %v4277, 0.0
        %v4336 = vmax.f32 %v4282, 0.0
        %v4337 = vmax.f32 %v4285, 0.0
        %v4338 = vmax.f32 %v4290, 0.0
        %v4339 = vmax.f32 %v4293, 0.0
        %v4340 = vmax.f32 %v4298, 0.0
        %v4341 = vmax.f32 %v4301, 0.0
        %v4342 = vmax.f32 %v4306, 0.0
        %v4343 = vmax.f32 %v4309, 0.0
        %4344 = vst [vmem:[#allocation3] sm:$0xff] 0
        %4345 = vst [vmem:[#allocation3 + $0x8] sm:$0xff] 0
        %4346 = vst [vmem:[#allocation3 + $0x10] sm:$0xff] 0
        %4347 = vst [vmem:[#allocation3 + $0x18] sm:$0xff] 0
        %4348 = vst [vmem:[#allocation3 + $0x20] sm:$0xff] 0
        %4349 = vst [vmem:[#allocation3 + $0x28] sm:$0xff] 0
        %4350 = vst [vmem:[#allocation3 + $0x30] sm:$0xff] 0
        %4351 = vst [vmem:[#allocation3 + $0x38] sm:$0xff] 0
        %4352 = vst [vmem:[#allocation3 + $0x40] sm:$0xff] 0
        %4353 = vst [vmem:[#allocation3 + $0x48] sm:$0xff] 0
        %4354 = vst [vmem:[#allocation3 + $0x50] sm:$0xff] 0
        %4355 = vst [vmem:[#allocation3 + $0x58] sm:$0xff] 0
        %4356 = vst [vmem:[#allocation3 + $0x60] sm:$0xff] 0
        %4357 = vst [vmem:[#allocation3 + $0x68] sm:$0xff] 0
        %4358 = vst [vmem:[#allocation3 + $0x70] sm:$0xff] 0
        %4359 = vst [vmem:[#allocation3 + $0x78] sm:$0xff] 0
        %4360 = vst [vmem:[#allocation3 + $0x80] sm:$0xff] 0
        %4361 = vst [vmem:[#allocation3 + $0x88] sm:$0xff] 0
        %4362 = vst [vmem:[#allocation3 + $0x90] sm:$0xff] 0
        %4363 = vst [vmem:[#allocation3 + $0x98] sm:$0xff] 0
        %4364 = vst [vmem:[#allocation3 + $0xa0] sm:$0xff] 0
        %4365 = vst [vmem:[#allocation3 + $0xa8] sm:$0xff] 0
        %4366 = vst [vmem:[#allocation3 + $0xb0] sm:$0xff] 0
        %4367 = vst [vmem:[#allocation3 + $0xb8] sm:$0xff] 0
        %4368 = vst [vmem:[#allocation3 + $0xc0] sm:$0xff] 0
        %4369 = vst [vmem:[#allocation3 + $0xc8] sm:$0xff] 0
        %4370 = vst [vmem:[#allocation3 + $0xd0] sm:$0xff] 0
        %4371 = vst [vmem:[#allocation3 + $0xd8] sm:$0xff] 0
        %4372 = vst [vmem:[#allocation3 + $0xe0] sm:$0xff] 0
        %4373 = vst [vmem:[#allocation3 + $0xe8] sm:$0xff] 0
        %4374 = vst [vmem:[#allocation3 + $0xf0] sm:$0xff] 0
        %4375 = vst [vmem:[#allocation3 + $0xf8] sm:$0xff] 0
        %4376 = vst [vmem:[#allocation3 + $0x100] sm:$0xff] 0
        %4377 = vst [vmem:[#allocation3 + $0x108] sm:$0xff] 0
        %4378 = vst [vmem:[#allocation3 + $0x110] sm:$0xff] 0
        %4379 = vst [vmem:[#allocation3 + $0x118] sm:$0xff] 0
        %v4380 = vpack.c.bf16 %v4313, %v4312
        %v4381 = vpack.c.bf16 %v4315, %v4314
        %v4382 = vpack.c.bf16 %v4317, %v4316
        %v4383 = vpack.c.bf16 %v4319, %v4318
        %v4384 = vpack.c.bf16 %v4321, %v4320
        %v4385 = vpack.c.bf16 %v4323, %v4322
        %v4386 = vpack.c.bf16 %v4325, %v4324
        %v4387 = vpack.c.bf16 %v4327, %v4326
        %v4388 = vpack.c.bf16 %v4329, %v4328
        %v4389 = vpack.c.bf16 %v4331, %v4330
        %v4390 = vpack.c.bf16 %v4333, %v4332
        %v4391 = vpack.c.bf16 %v4335, %v4334
        %v4392 = vpack.c.bf16 %v4337, %v4336
        %v4393 = vpack.c.bf16 %v4339, %v4338
        %v4394 = vpack.c.bf16 %v4341, %v4340
        %v4395 = vpack.c.bf16 %v4343, %v4342
        %v4412 = vrot.slane %v4380, 4
        %v4413 = vrot.slane %v4381, 4
        %v4414 = vrot.slane %v4382, 4
        %v4415 = vrot.slane %v4383, 4
        %v4416 = vrot.slane %v4384, 4
        %v4417 = vrot.slane %v4385, 4
        %v4418 = vrot.slane %v4386, 4
        %v4419 = vrot.slane %v4387, 4
        %v4420 = vrot.slane %v4388, 4
        %v4421 = vrot.slane %v4389, 4
        %v4422 = vrot.slane %v4390, 4
        %v4423 = vrot.slane %v4391, 4
        %v4424 = vrot.slane %v4392, 4
        %v4425 = vrot.slane %v4393, 4
        %v4426 = vrot.slane %v4394, 4
        %v4427 = vrot.slane %v4395, 4
        %s4444 = scalar_lea.vmem [#allocation3], 16
        %4445 = vst [vmem:[%s4444] sm:$0xf0] %v4412
        %4446 = vst [vmem:[%s4444 + $0x8] sm:$0xf] %v4412
        %4447 = vst [vmem:[%s4444 + $0x10] sm:$0xf0] %v4413
        %4448 = vst [vmem:[%s4444 + $0x18] sm:$0xf] %v4413
        %4449 = vst [vmem:[%s4444 + $0x20] sm:$0xf0] %v4414
        %4450 = vst [vmem:[%s4444 + $0x28] sm:$0xf] %v4414
        %4451 = vst [vmem:[%s4444 + $0x30] sm:$0xf0] %v4415
        %4452 = vst [vmem:[%s4444 + $0x38] sm:$0xf] %v4415
        %4453 = vst [vmem:[%s4444 + $0x40] sm:$0xf0] %v4416
        %4454 = vst [vmem:[%s4444 + $0x48] sm:$0xf] %v4416
        %4455 = vst [vmem:[%s4444 + $0x50] sm:$0xf0] %v4417
        %4456 = vst [vmem:[%s4444 + $0x58] sm:$0xf] %v4417
        %4457 = vst [vmem:[%s4444 + $0x60] sm:$0xf0] %v4418
        %4458 = vst [vmem:[%s4444 + $0x68] sm:$0xf] %v4418
        %4459 = vst [vmem:[%s4444 + $0x70] sm:$0xf0] %v4419
        %4460 = vst [vmem:[%s4444 + $0x78] sm:$0xf] %v4419
        %4461 = vst [vmem:[%s4444 + $0x80] sm:$0xf0] %v4420
        %4462 = vst [vmem:[%s4444 + $0x88] sm:$0xf] %v4420
        %4463 = vst [vmem:[%s4444 + $0x90] sm:$0xf0] %v4421
        %4464 = vst [vmem:[%s4444 + $0x98] sm:$0xf] %v4421
        %4465 = vst [vmem:[%s4444 + $0xa0] sm:$0xf0] %v4422
        %4466 = vst [vmem:[%s4444 + $0xa8] sm:$0xf] %v4422
        %4467 = vst [vmem:[%s4444 + $0xb0] sm:$0xf0] %v4423
        %4468 = vst [vmem:[%s4444 + $0xb8] sm:$0xf] %v4423
        %4469 = vst [vmem:[%s4444 + $0xc0] sm:$0xf0] %v4424
        %4470 = vst [vmem:[%s4444 + $0xc8] sm:$0xf] %v4424
        %4471 = vst [vmem:[%s4444 + $0xd0] sm:$0xf0] %v4425
        %4472 = vst [vmem:[%s4444 + $0xd8] sm:$0xf] %v4425
        %4473 = vst [vmem:[%s4444 + $0xe0] sm:$0xf0] %v4426
        %4474 = vst [vmem:[%s4444 + $0xe8] sm:$0xf] %v4426
        %4475 = vst [vmem:[%s4444 + $0xf0] sm:$0xf0] %v4427
        %4476 = vst [vmem:[%s4444 + $0xf8] sm:$0xf] %v4427
        %v4477 = vld [vmem:[#allocation3] sm:$0xf8]
        %v4478 = vld [vmem:[#allocation3 + $0x8] sm:$0xf]
        %v4479 = vld [vmem:[#allocation3 + $0x10] sm:$0xf8]
        %v4480 = vld [vmem:[#allocation3 + $0x18] sm:$0xf]
        %v4481 = vld [vmem:[#allocation3 + $0x20] sm:$0xf8]
        %v4482 = vld [vmem:[#allocation3 + $0x28] sm:$0xf]
        %v4483 = vld [vmem:[#allocation3 + $0x30] sm:$0xf8]
        %v4484 = vld [vmem:[#allocation3 + $0x38] sm:$0xf]
        %v4485 = vld [vmem:[#allocation3 + $0x40] sm:$0xf8]
        %v4486 = vld [vmem:[#allocation3 + $0x48] sm:$0xf]
        %v4487 = vld [vmem:[#allocation3 + $0x50] sm:$0xf8]
        %v4488 = vld [vmem:[#allocation3 + $0x58] sm:$0xf]
        %v4489 = vld [vmem:[#allocation3 + $0x60] sm:$0xf8]
        %v4490 = vld [vmem:[#allocation3 + $0x68] sm:$0xf]
        %v4491 = vld [vmem:[#allocation3 + $0x70] sm:$0xf8]
        %v4492 = vld [vmem:[#allocation3 + $0x78] sm:$0xf]
        %v4493 = vld [vmem:[#allocation3 + $0x80] sm:$0xf8]
        %v4494 = vld [vmem:[#allocation3 + $0x88] sm:$0xf]
        %v4495 = vld [vmem:[#allocation3 + $0x90] sm:$0xf8]
        %v4496 = vld [vmem:[#allocation3 + $0x98] sm:$0xf]
        %v4497 = vld [vmem:[#allocation3 + $0xa0] sm:$0xf8]
        %v4498 = vld [vmem:[#allocation3 + $0xa8] sm:$0xf]
        %v4499 = vld [vmem:[#allocation3 + $0xb0] sm:$0xf8]
        %v4500 = vld [vmem:[#allocation3 + $0xb8] sm:$0xf]
        %v4501 = vld [vmem:[#allocation3 + $0xc0] sm:$0xf8]
        %v4502 = vld [vmem:[#allocation3 + $0xc8] sm:$0xf]
        %v4503 = vld [vmem:[#allocation3 + $0xd0] sm:$0xf8]
        %v4504 = vld [vmem:[#allocation3 + $0xd8] sm:$0xf]
        %v4505 = vld [vmem:[#allocation3 + $0xe0] sm:$0xf8]
        %v4506 = vld [vmem:[#allocation3 + $0xe8] sm:$0xf]
        %v4507 = vld [vmem:[#allocation3 + $0xf0] sm:$0xf8]
        %v4508 = vld [vmem:[#allocation3 + $0xf8] sm:$0xf]
        %v4510 = vshrl.u32 %v4477, 16
        %v4512 = vrot.slane %v4510, 3
        %v4513 = vshll.u32 %v4477, 16
        %v4515 = vrot.slane %v4513, 4
        %v4516 = vor.u32 %v4512, %v4515
        %v4518 = vshrl.u32 %v4478, 16
        %v4520 = vrot.slane %v4518, 3
        %v4521 = vshll.u32 %v4478, 16
        %v4523 = vrot.slane %v4521, 4
        %v4524 = vor.u32 %v4520, %v4523
        %v4525 = vsel %vm367, %v4516, %v4524
        %v4527 = vshrl.u32 %v4479, 16
        %v4529 = vrot.slane %v4527, 3
        %v4530 = vshll.u32 %v4479, 16
        %v4532 = vrot.slane %v4530, 4
        %v4533 = vor.u32 %v4529, %v4532
        %v4535 = vshrl.u32 %v4480, 16
        %v4537 = vrot.slane %v4535, 3
        %v4538 = vshll.u32 %v4480, 16
        %v4540 = vrot.slane %v4538, 4
        %v4541 = vor.u32 %v4537, %v4540
        %v4542 = vsel %vm367, %v4533, %v4541
        %v4544 = vshrl.u32 %v4481, 16
        %v4546 = vrot.slane %v4544, 3
        %v4547 = vshll.u32 %v4481, 16
        %v4549 = vrot.slane %v4547, 4
        %v4550 = vor.u32 %v4546, %v4549
        %v4552 = vshrl.u32 %v4482, 16
        %v4554 = vrot.slane %v4552, 3
        %v4555 = vshll.u32 %v4482, 16
        %v4557 = vrot.slane %v4555, 4
        %v4558 = vor.u32 %v4554, %v4557
        %v4559 = vsel %vm367, %v4550, %v4558
        %v4561 = vshrl.u32 %v4483, 16
        %v4563 = vrot.slane %v4561, 3
        %v4564 = vshll.u32 %v4483, 16
        %v4566 = vrot.slane %v4564, 4
        %v4567 = vor.u32 %v4563, %v4566
        %v4569 = vshrl.u32 %v4484, 16
        %v4571 = vrot.slane %v4569, 3
        %v4572 = vshll.u32 %v4484, 16
        %v4574 = vrot.slane %v4572, 4
        %v4575 = vor.u32 %v4571, %v4574
        %v4576 = vsel %vm367, %v4567, %v4575
        %v4578 = vshrl.u32 %v4485, 16
        %v4580 = vrot.slane %v4578, 3
        %v4581 = vshll.u32 %v4485, 16
        %v4583 = vrot.slane %v4581, 4
        %v4584 = vor.u32 %v4580, %v4583
        %v4586 = vshrl.u32 %v4486, 16
        %v4588 = vrot.slane %v4586, 3
        %v4589 = vshll.u32 %v4486, 16
        %v4591 = vrot.slane %v4589, 4
        %v4592 = vor.u32 %v4588, %v4591
        %v4593 = vsel %vm367, %v4584, %v4592
        %v4595 = vshrl.u32 %v4487, 16
        %v4597 = vrot.slane %v4595, 3
        %v4598 = vshll.u32 %v4487, 16
        %v4600 = vrot.slane %v4598, 4
        %v4601 = vor.u32 %v4597, %v4600
        %v4603 = vshrl.u32 %v4488, 16
        %v4605 = vrot.slane %v4603, 3
        %v4606 = vshll.u32 %v4488, 16
        %v4608 = vrot.slane %v4606, 4
        %v4609 = vor.u32 %v4605, %v4608
        %v4610 = vsel %vm367, %v4601, %v4609
        %v4612 = vshrl.u32 %v4489, 16
        %v4614 = vrot.slane %v4612, 3
        %v4615 = vshll.u32 %v4489, 16
        %v4617 = vrot.slane %v4615, 4
        %v4618 = vor.u32 %v4614, %v4617
        %v4620 = vshrl.u32 %v4490, 16
        %v4622 = vrot.slane %v4620, 3
        %v4623 = vshll.u32 %v4490, 16
        %v4625 = vrot.slane %v4623, 4
        %v4626 = vor.u32 %v4622, %v4625
        %v4627 = vsel %vm367, %v4618, %v4626
        %v4629 = vshrl.u32 %v4491, 16
        %v4631 = vrot.slane %v4629, 3
        %v4632 = vshll.u32 %v4491, 16
        %v4634 = vrot.slane %v4632, 4
        %v4635 = vor.u32 %v4631, %v4634
        %v4637 = vshrl.u32 %v4492, 16
        %v4639 = vrot.slane %v4637, 3
        %v4640 = vshll.u32 %v4492, 16
        %v4642 = vrot.slane %v4640, 4
        %v4643 = vor.u32 %v4639, %v4642
        %v4644 = vsel %vm367, %v4635, %v4643
        %v4646 = vshrl.u32 %v4493, 16
        %v4648 = vrot.slane %v4646, 3
        %v4649 = vshll.u32 %v4493, 16
        %v4651 = vrot.slane %v4649, 4
        %v4652 = vor.u32 %v4648, %v4651
        %v4654 = vshrl.u32 %v4494, 16
        %v4656 = vrot.slane %v4654, 3
        %v4657 = vshll.u32 %v4494, 16
        %v4659 = vrot.slane %v4657, 4
        %v4660 = vor.u32 %v4656, %v4659
        %v4661 = vsel %vm367, %v4652, %v4660
        %v4663 = vshrl.u32 %v4495, 16
        %v4665 = vrot.slane %v4663, 3
        %v4666 = vshll.u32 %v4495, 16
        %v4668 = vrot.slane %v4666, 4
        %v4669 = vor.u32 %v4665, %v4668
        %v4671 = vshrl.u32 %v4496, 16
        %v4673 = vrot.slane %v4671, 3
        %v4674 = vshll.u32 %v4496, 16
        %v4676 = vrot.slane %v4674, 4
        %v4677 = vor.u32 %v4673, %v4676
        %v4678 = vsel %vm367, %v4669, %v4677
        %v4680 = vshrl.u32 %v4497, 16
        %v4682 = vrot.slane %v4680, 3
        %v4683 = vshll.u32 %v4497, 16
        %v4685 = vrot.slane %v4683, 4
        %v4686 = vor.u32 %v4682, %v4685
        %v4688 = vshrl.u32 %v4498, 16
        %v4690 = vrot.slane %v4688, 3
        %v4691 = vshll.u32 %v4498, 16
        %v4693 = vrot.slane %v4691, 4
        %v4694 = vor.u32 %v4690, %v4693
        %v4695 = vsel %vm367, %v4686, %v4694
        %v4697 = vshrl.u32 %v4499, 16
        %v4699 = vrot.slane %v4697, 3
        %v4700 = vshll.u32 %v4499, 16
        %v4702 = vrot.slane %v4700, 4
        %v4703 = vor.u32 %v4699, %v4702
        %v4705 = vshrl.u32 %v4500, 16
        %v4707 = vrot.slane %v4705, 3
        %v4708 = vshll.u32 %v4500, 16
        %v4710 = vrot.slane %v4708, 4
        %v4711 = vor.u32 %v4707, %v4710
        %v4712 = vsel %vm367, %v4703, %v4711
        %v4714 = vshrl.u32 %v4501, 16
        %v4716 = vrot.slane %v4714, 3
        %v4717 = vshll.u32 %v4501, 16
        %v4719 = vrot.slane %v4717, 4
        %v4720 = vor.u32 %v4716, %v4719
        %v4722 = vshrl.u32 %v4502, 16
        %v4724 = vrot.slane %v4722, 3
        %v4725 = vshll.u32 %v4502, 16
        %v4727 = vrot.slane %v4725, 4
        %v4728 = vor.u32 %v4724, %v4727
        %v4729 = vsel %vm367, %v4720, %v4728
        %v4731 = vshrl.u32 %v4503, 16
        %v4733 = vrot.slane %v4731, 3
        %v4734 = vshll.u32 %v4503, 16
        %v4736 = vrot.slane %v4734, 4
        %v4737 = vor.u32 %v4733, %v4736
        %v4739 = vshrl.u32 %v4504, 16
        %v4741 = vrot.slane %v4739, 3
        %v4742 = vshll.u32 %v4504, 16
        %v4744 = vrot.slane %v4742, 4
        %v4745 = vor.u32 %v4741, %v4744
        %v4746 = vsel %vm367, %v4737, %v4745
        %v4748 = vshrl.u32 %v4505, 16
        %v4750 = vrot.slane %v4748, 3
        %v4751 = vshll.u32 %v4505, 16
        %v4753 = vrot.slane %v4751, 4
        %v4754 = vor.u32 %v4750, %v4753
        %v4756 = vshrl.u32 %v4506, 16
        %v4758 = vrot.slane %v4756, 3
        %v4759 = vshll.u32 %v4506, 16
        %v4761 = vrot.slane %v4759, 4
        %v4762 = vor.u32 %v4758, %v4761
        %v4763 = vsel %vm367, %v4754, %v4762
        %v4765 = vshrl.u32 %v4507, 16
        %v4767 = vrot.slane %v4765, 3
        %v4768 = vshll.u32 %v4507, 16
        %v4770 = vrot.slane %v4768, 4
        %v4771 = vor.u32 %v4767, %v4770
        %v4773 = vshrl.u32 %v4508, 16
        %v4775 = vrot.slane %v4773, 3
        %v4776 = vshll.u32 %v4508, 16
        %v4778 = vrot.slane %v4776, 4
        %v4779 = vor.u32 %v4775, %v4778
        %v4780 = vsel %vm367, %v4771, %v4779
        %4797 = vst [vmem:[#allocation4] sm:$0xff] %v4525
        %4798 = vst [vmem:[#allocation4 + $0x48] sm:$0xff] %v4542
        %4799 = vst [vmem:[#allocation4 + $0x90] sm:$0xff] %v4559
        %4800 = vst [vmem:[#allocation4 + $0xd8] sm:$0xff] %v4576
        %4801 = vst [vmem:[#allocation4 + $0x120] sm:$0xff] %v4593
        %4802 = vst [vmem:[#allocation4 + $0x168] sm:$0xff] %v4610
        %4803 = vst [vmem:[#allocation4 + $0x1b0] sm:$0xff] %v4627
        %4804 = vst [vmem:[#allocation4 + $0x1f8] sm:$0xff] %v4644
        %4805 = vst [vmem:[#allocation4 + $0x240] sm:$0xff] %v4661
        %4806 = vst [vmem:[#allocation4 + $0x288] sm:$0xff] %v4678
        %4807 = vst [vmem:[#allocation4 + $0x2d0] sm:$0xff] %v4695
        %4808 = vst [vmem:[#allocation4 + $0x318] sm:$0xff] %v4712
        %4809 = vst [vmem:[#allocation4 + $0x360] sm:$0xff] %v4729
        %4810 = vst [vmem:[#allocation4 + $0x3a8] sm:$0xff] %v4746
        %4811 = vst [vmem:[#allocation4 + $0x3f0] sm:$0xff] %v4763
        %4812 = vst [vmem:[#allocation4 + $0x438] sm:$0xff] %v4780
        %v4813 = vld [vmem:[#allocation3] sm:$0xf0]
        %v4814 = vld [vmem:[#allocation3 + $0x8] sm:$0xf]
        %v4815 = vld [vmem:[#allocation3 + $0x10] sm:$0xf0]
        %v4816 = vld [vmem:[#allocation3 + $0x18] sm:$0xf]
        %v4817 = vld [vmem:[#allocation3 + $0x20] sm:$0xf0]
        %v4818 = vld [vmem:[#allocation3 + $0x28] sm:$0xf]
        %v4819 = vld [vmem:[#allocation3 + $0x30] sm:$0xf0]
        %v4820 = vld [vmem:[#allocation3 + $0x38] sm:$0xf]
        %v4821 = vld [vmem:[#allocation3 + $0x40] sm:$0xf0]
        %v4822 = vld [vmem:[#allocation3 + $0x48] sm:$0xf]
        %v4823 = vld [vmem:[#allocation3 + $0x50] sm:$0xf0]
        %v4824 = vld [vmem:[#allocation3 + $0x58] sm:$0xf]
        %v4825 = vld [vmem:[#allocation3 + $0x60] sm:$0xf0]
        %v4826 = vld [vmem:[#allocation3 + $0x68] sm:$0xf]
        %v4827 = vld [vmem:[#allocation3 + $0x70] sm:$0xf0]
        %v4828 = vld [vmem:[#allocation3 + $0x78] sm:$0xf]
        %v4829 = vld [vmem:[#allocation3 + $0x80] sm:$0xf0]
        %v4830 = vld [vmem:[#allocation3 + $0x88] sm:$0xf]
        %v4831 = vld [vmem:[#allocation3 + $0x90] sm:$0xf0]
        %v4832 = vld [vmem:[#allocation3 + $0x98] sm:$0xf]
        %v4833 = vld [vmem:[#allocation3 + $0xa0] sm:$0xf0]
        %v4834 = vld [vmem:[#allocation3 + $0xa8] sm:$0xf]
        %v4835 = vld [vmem:[#allocation3 + $0xb0] sm:$0xf0]
        %v4836 = vld [vmem:[#allocation3 + $0xb8] sm:$0xf]
        %v4837 = vld [vmem:[#allocation3 + $0xc0] sm:$0xf0]
        %v4838 = vld [vmem:[#allocation3 + $0xc8] sm:$0xf]
        %v4839 = vld [vmem:[#allocation3 + $0xd0] sm:$0xf0]
        %v4840 = vld [vmem:[#allocation3 + $0xd8] sm:$0xf]
        %v4841 = vld [vmem:[#allocation3 + $0xe0] sm:$0xf0]
        %v4842 = vld [vmem:[#allocation3 + $0xe8] sm:$0xf]
        %v4843 = vld [vmem:[#allocation3 + $0xf0] sm:$0xf0]
        %v4844 = vld [vmem:[#allocation3 + $0xf8] sm:$0xf]
        %v4877 = vrot.slane %v4813, 4
        %v4878 = vrot.slane %v4814, 4
        %v4879 = vsel %vm736, %v4877, %v4878
        %v4880 = vrot.slane %v4815, 4
        %v4881 = vrot.slane %v4816, 4
        %v4882 = vsel %vm736, %v4880, %v4881
        %v4883 = vrot.slane %v4817, 4
        %v4884 = vrot.slane %v4818, 4
        %v4885 = vsel %vm736, %v4883, %v4884
        %v4886 = vrot.slane %v4819, 4
        %v4887 = vrot.slane %v4820, 4
        %v4888 = vsel %vm736, %v4886, %v4887
        %v4889 = vrot.slane %v4821, 4
        %v4890 = vrot.slane %v4822, 4
        %v4891 = vsel %vm736, %v4889, %v4890
        %v4892 = vrot.slane %v4823, 4
        %v4893 = vrot.slane %v4824, 4
        %v4894 = vsel %vm736, %v4892, %v4893
        %v4895 = vrot.slane %v4825, 4
        %v4896 = vrot.slane %v4826, 4
        %v4897 = vsel %vm736, %v4895, %v4896
        %v4898 = vrot.slane %v4827, 4
        %v4899 = vrot.slane %v4828, 4
        %v4900 = vsel %vm736, %v4898, %v4899
        %v4901 = vrot.slane %v4829, 4
        %v4902 = vrot.slane %v4830, 4
        %v4903 = vsel %vm736, %v4901, %v4902
        %v4904 = vrot.slane %v4831, 4
        %v4905 = vrot.slane %v4832, 4
        %v4906 = vsel %vm736, %v4904, %v4905
        %v4907 = vrot.slane %v4833, 4
        %v4908 = vrot.slane %v4834, 4
        %v4909 = vsel %vm736, %v4907, %v4908
        %v4910 = vrot.slane %v4835, 4
        %v4911 = vrot.slane %v4836, 4
        %v4912 = vsel %vm736, %v4910, %v4911
        %v4913 = vrot.slane %v4837, 4
        %v4914 = vrot.slane %v4838, 4
        %v4915 = vsel %vm736, %v4913, %v4914
        %v4916 = vrot.slane %v4839, 4
        %v4917 = vrot.slane %v4840, 4
        %v4918 = vsel %vm736, %v4916, %v4917
        %v4919 = vrot.slane %v4841, 4
        %v4920 = vrot.slane %v4842, 4
        %v4921 = vsel %vm736, %v4919, %v4920
        %v4922 = vrot.slane %v4843, 4
        %v4923 = vrot.slane %v4844, 4
        %v4924 = vsel %vm736, %v4922, %v4923
        %4941 = vst [vmem:[#allocation4 + $0x8] sm:$0xff] %v4879
        %4942 = vst [vmem:[#allocation4 + $0x50] sm:$0xff] %v4882
        %4943 = vst [vmem:[#allocation4 + $0x98] sm:$0xff] %v4885
        %4944 = vst [vmem:[#allocation4 + $0xe0] sm:$0xff] %v4888
        %4945 = vst [vmem:[#allocation4 + $0x128] sm:$0xff] %v4891
        %4946 = vst [vmem:[#allocation4 + $0x170] sm:$0xff] %v4894
        %4947 = vst [vmem:[#allocation4 + $0x1b8] sm:$0xff] %v4897
        %4948 = vst [vmem:[#allocation4 + $0x200] sm:$0xff] %v4900
        %4949 = vst [vmem:[#allocation4 + $0x248] sm:$0xff] %v4903
        %4950 = vst [vmem:[#allocation4 + $0x290] sm:$0xff] %v4906
        %4951 = vst [vmem:[#allocation4 + $0x2d8] sm:$0xff] %v4909
        %4952 = vst [vmem:[#allocation4 + $0x320] sm:$0xff] %v4912
        %4953 = vst [vmem:[#allocation4 + $0x368] sm:$0xff] %v4915
        %4954 = vst [vmem:[#allocation4 + $0x3b0] sm:$0xff] %v4918
        %4955 = vst [vmem:[#allocation4 + $0x3f8] sm:$0xff] %v4921
        %4956 = vst [vmem:[#allocation4 + $0x440] sm:$0xff] %v4924
        %v4957 = vld [vmem:[#allocation3] sm:$0xf0]
        %v4958 = vld [vmem:[#allocation3 + $0x8] sm:$0x1f]
        %v4959 = vld [vmem:[#allocation3 + $0x10] sm:$0xf0]
        %v4960 = vld [vmem:[#allocation3 + $0x18] sm:$0x1f]
        %v4961 = vld [vmem:[#allocation3 + $0x20] sm:$0xf0]
        %v4962 = vld [vmem:[#allocation3 + $0x28] sm:$0x1f]
        %v4963 = vld [vmem:[#allocation3 + $0x30] sm:$0xf0]
        %v4964 = vld [vmem:[#allocation3 + $0x38] sm:$0x1f]
        %v4965 = vld [vmem:[#allocation3 + $0x40] sm:$0xf0]
        %v4966 = vld [vmem:[#allocation3 + $0x48] sm:$0x1f]
        %v4967 = vld [vmem:[#allocation3 + $0x50] sm:$0xf0]
        %v4968 = vld [vmem:[#allocation3 + $0x58] sm:$0x1f]
        %v4969 = vld [vmem:[#allocation3 + $0x60] sm:$0xf0]
        %v4970 = vld [vmem:[#allocation3 + $0x68] sm:$0x1f]
        %v4971 = vld [vmem:[#allocation3 + $0x70] sm:$0xf0]
        %v4972 = vld [vmem:[#allocation3 + $0x78] sm:$0x1f]
        %v4973 = vld [vmem:[#allocation3 + $0x80] sm:$0xf0]
        %v4974 = vld [vmem:[#allocation3 + $0x88] sm:$0x1f]
        %v4975 = vld [vmem:[#allocation3 + $0x90] sm:$0xf0]
        %v4976 = vld [vmem:[#allocation3 + $0x98] sm:$0x1f]
        %v4977 = vld [vmem:[#allocation3 + $0xa0] sm:$0xf0]
        %v4978 = vld [vmem:[#allocation3 + $0xa8] sm:$0x1f]
        %v4979 = vld [vmem:[#allocation3 + $0xb0] sm:$0xf0]
        %v4980 = vld [vmem:[#allocation3 + $0xb8] sm:$0x1f]
        %v4981 = vld [vmem:[#allocation3 + $0xc0] sm:$0xf0]
        %v4982 = vld [vmem:[#allocation3 + $0xc8] sm:$0x1f]
        %v4983 = vld [vmem:[#allocation3 + $0xd0] sm:$0xf0]
        %v4984 = vld [vmem:[#allocation3 + $0xd8] sm:$0x1f]
        %v4985 = vld [vmem:[#allocation3 + $0xe0] sm:$0xf0]
        %v4986 = vld [vmem:[#allocation3 + $0xe8] sm:$0x1f]
        %v4987 = vld [vmem:[#allocation3 + $0xf0] sm:$0xf0]
        %v4988 = vld [vmem:[#allocation3 + $0xf8] sm:$0x1f]
        %v4990 = vshrl.u32 %v4957, 16
        %v4992 = vrot.slane %v4990, 4
        %v4993 = vshll.u32 %v4957, 16
        %v4995 = vrot.slane %v4993, 5
        %v4996 = vor.u32 %v4992, %v4995
        %v4998 = vshrl.u32 %v4958, 16
        %v5000 = vrot.slane %v4998, 4
        %v5001 = vshll.u32 %v4958, 16
        %v5003 = vrot.slane %v5001, 5
        %v5004 = vor.u32 %v5000, %v5003
        %v5005 = vsel %vm849, %v4996, %v5004
        %v5007 = vshrl.u32 %v4959, 16
        %v5009 = vrot.slane %v5007, 4
        %v5010 = vshll.u32 %v4959, 16
        %v5012 = vrot.slane %v5010, 5
        %v5013 = vor.u32 %v5009, %v5012
        %v5015 = vshrl.u32 %v4960, 16
        %v5017 = vrot.slane %v5015, 4
        %v5018 = vshll.u32 %v4960, 16
        %v5020 = vrot.slane %v5018, 5
        %v5021 = vor.u32 %v5017, %v5020
        %v5022 = vsel %vm849, %v5013, %v5021
        %v5024 = vshrl.u32 %v4961, 16
        %v5026 = vrot.slane %v5024, 4
        %v5027 = vshll.u32 %v4961, 16
        %v5029 = vrot.slane %v5027, 5
        %v5030 = vor.u32 %v5026, %v5029
        %v5032 = vshrl.u32 %v4962, 16
        %v5034 = vrot.slane %v5032, 4
        %v5035 = vshll.u32 %v4962, 16
        %v5037 = vrot.slane %v5035, 5
        %v5038 = vor.u32 %v5034, %v5037
        %v5039 = vsel %vm849, %v5030, %v5038
        %v5041 = vshrl.u32 %v4963, 16
        %v5043 = vrot.slane %v5041, 4
        %v5044 = vshll.u32 %v4963, 16
        %v5046 = vrot.slane %v5044, 5
        %v5047 = vor.u32 %v5043, %v5046
        %v5049 = vshrl.u32 %v4964, 16
        %v5051 = vrot.slane %v5049, 4
        %v5052 = vshll.u32 %v4964, 16
        %v5054 = vrot.slane %v5052, 5
        %v5055 = vor.u32 %v5051, %v5054
        %v5056 = vsel %vm849, %v5047, %v5055
        %v5058 = vshrl.u32 %v4965, 16
        %v5060 = vrot.slane %v5058, 4
        %v5061 = vshll.u32 %v4965, 16
        %v5063 = vrot.slane %v5061, 5
        %v5064 = vor.u32 %v5060, %v5063
        %v5066 = vshrl.u32 %v4966, 16
        %v5068 = vrot.slane %v5066, 4
        %v5069 = vshll.u32 %v4966, 16
        %v5071 = vrot.slane %v5069, 5
        %v5072 = vor.u32 %v5068, %v5071
        %v5073 = vsel %vm849, %v5064, %v5072
        %v5075 = vshrl.u32 %v4967, 16
        %v5077 = vrot.slane %v5075, 4
        %v5078 = vshll.u32 %v4967, 16
        %v5080 = vrot.slane %v5078, 5
        %v5081 = vor.u32 %v5077, %v5080
        %v5083 = vshrl.u32 %v4968, 16
        %v5085 = vrot.slane %v5083, 4
        %v5086 = vshll.u32 %v4968, 16
        %v5088 = vrot.slane %v5086, 5
        %v5089 = vor.u32 %v5085, %v5088
        %v5090 = vsel %vm849, %v5081, %v5089
        %v5092 = vshrl.u32 %v4969, 16
        %v5094 = vrot.slane %v5092, 4
        %v5095 = vshll.u32 %v4969, 16
        %v5097 = vrot.slane %v5095, 5
        %v5098 = vor.u32 %v5094, %v5097
        %v5100 = vshrl.u32 %v4970, 16
        %v5102 = vrot.slane %v5100, 4
        %v5103 = vshll.u32 %v4970, 16
        %v5105 = vrot.slane %v5103, 5
        %v5106 = vor.u32 %v5102, %v5105
        %v5107 = vsel %vm849, %v5098, %v5106
        %v5109 = vshrl.u32 %v4971, 16
        %v5111 = vrot.slane %v5109, 4
        %v5112 = vshll.u32 %v4971, 16
        %v5114 = vrot.slane %v5112, 5
        %v5115 = vor.u32 %v5111, %v5114
        %v5117 = vshrl.u32 %v4972, 16
        %v5119 = vrot.slane %v5117, 4
        %v5120 = vshll.u32 %v4972, 16
        %v5122 = vrot.slane %v5120, 5
        %v5123 = vor.u32 %v5119, %v5122
        %v5124 = vsel %vm849, %v5115, %v5123
        %v5126 = vshrl.u32 %v4973, 16
        %v5128 = vrot.slane %v5126, 4
        %v5129 = vshll.u32 %v4973, 16
        %v5131 = vrot.slane %v5129, 5
        %v5132 = vor.u32 %v5128, %v5131
        %v5134 = vshrl.u32 %v4974, 16
        %v5136 = vrot.slane %v5134, 4
        %v5137 = vshll.u32 %v4974, 16
        %v5139 = vrot.slane %v5137, 5
        %v5140 = vor.u32 %v5136, %v5139
        %v5141 = vsel %vm849, %v5132, %v5140
        %v5143 = vshrl.u32 %v4975, 16
        %v5145 = vrot.slane %v5143, 4
        %v5146 = vshll.u32 %v4975, 16
        %v5148 = vrot.slane %v5146, 5
        %v5149 = vor.u32 %v5145, %v5148
        %v5151 = vshrl.u32 %v4976, 16
        %v5153 = vrot.slane %v5151, 4
        %v5154 = vshll.u32 %v4976, 16
        %v5156 = vrot.slane %v5154, 5
        %v5157 = vor.u32 %v5153, %v5156
        %v5158 = vsel %vm849, %v5149, %v5157
        %v5160 = vshrl.u32 %v4977, 16
        %v5162 = vrot.slane %v5160, 4
        %v5163 = vshll.u32 %v4977, 16
        %v5165 = vrot.slane %v5163, 5
        %v5166 = vor.u32 %v5162, %v5165
        %v5168 = vshrl.u32 %v4978, 16
        %v5170 = vrot.slane %v5168, 4
        %v5171 = vshll.u32 %v4978, 16
        %v5173 = vrot.slane %v5171, 5
        %v5174 = vor.u32 %v5170, %v5173
        %v5175 = vsel %vm849, %v5166, %v5174
        %v5177 = vshrl.u32 %v4979, 16
        %v5179 = vrot.slane %v5177, 4
        %v5180 = vshll.u32 %v4979, 16
        %v5182 = vrot.slane %v5180, 5
        %v5183 = vor.u32 %v5179, %v5182
        %v5185 = vshrl.u32 %v4980, 16
        %v5187 = vrot.slane %v5185, 4
        %v5188 = vshll.u32 %v4980, 16
        %v5190 = vrot.slane %v5188, 5
        %v5191 = vor.u32 %v5187, %v5190
        %v5192 = vsel %vm849, %v5183, %v5191
        %v5194 = vshrl.u32 %v4981, 16
        %v5196 = vrot.slane %v5194, 4
        %v5197 = vshll.u32 %v4981, 16
        %v5199 = vrot.slane %v5197, 5
        %v5200 = vor.u32 %v5196, %v5199
        %v5202 = vshrl.u32 %v4982, 16
        %v5204 = vrot.slane %v5202, 4
        %v5205 = vshll.u32 %v4982, 16
        %v5207 = vrot.slane %v5205, 5
        %v5208 = vor.u32 %v5204, %v5207
        %v5209 = vsel %vm849, %v5200, %v5208
        %v5211 = vshrl.u32 %v4983, 16
        %v5213 = vrot.slane %v5211, 4
        %v5214 = vshll.u32 %v4983, 16
        %v5216 = vrot.slane %v5214, 5
        %v5217 = vor.u32 %v5213, %v5216
        %v5219 = vshrl.u32 %v4984, 16
        %v5221 = vrot.slane %v5219, 4
        %v5222 = vshll.u32 %v4984, 16
        %v5224 = vrot.slane %v5222, 5
        %v5225 = vor.u32 %v5221, %v5224
        %v5226 = vsel %vm849, %v5217, %v5225
        %v5228 = vshrl.u32 %v4985, 16
        %v5230 = vrot.slane %v5228, 4
        %v5231 = vshll.u32 %v4985, 16
        %v5233 = vrot.slane %v5231, 5
        %v5234 = vor.u32 %v5230, %v5233
        %v5236 = vshrl.u32 %v4986, 16
        %v5238 = vrot.slane %v5236, 4
        %v5239 = vshll.u32 %v4986, 16
        %v5241 = vrot.slane %v5239, 5
        %v5242 = vor.u32 %v5238, %v5241
        %v5243 = vsel %vm849, %v5234, %v5242
        %v5245 = vshrl.u32 %v4987, 16
        %v5247 = vrot.slane %v5245, 4
        %v5248 = vshll.u32 %v4987, 16
        %v5250 = vrot.slane %v5248, 5
        %v5251 = vor.u32 %v5247, %v5250
        %v5253 = vshrl.u32 %v4988, 16
        %v5255 = vrot.slane %v5253, 4
        %v5256 = vshll.u32 %v4988, 16
        %v5258 = vrot.slane %v5256, 5
        %v5259 = vor.u32 %v5255, %v5258
        %v5260 = vsel %vm849, %v5251, %v5259
        %5277 = vst [vmem:[#allocation4 + $0x10] sm:$0xff] %v5005
        %5278 = vst [vmem:[#allocation4 + $0x58] sm:$0xff] %v5022
        %5279 = vst [vmem:[#allocation4 + $0xa0] sm:$0xff] %v5039
        %5280 = vst [vmem:[#allocation4 + $0xe8] sm:$0xff] %v5056
        %5281 = vst [vmem:[#allocation4 + $0x130] sm:$0xff] %v5073
        %5282 = vst [vmem:[#allocation4 + $0x178] sm:$0xff] %v5090
        %5283 = vst [vmem:[#allocation4 + $0x1c0] sm:$0xff] %v5107
        %5284 = vst [vmem:[#allocation4 + $0x208] sm:$0xff] %v5124
        %5285 = vst [vmem:[#allocation4 + $0x250] sm:$0xff] %v5141
        %5286 = vst [vmem:[#allocation4 + $0x298] sm:$0xff] %v5158
        %5287 = vst [vmem:[#allocation4 + $0x2e0] sm:$0xff] %v5175
        %5288 = vst [vmem:[#allocation4 + $0x328] sm:$0xff] %v5192
        %5289 = vst [vmem:[#allocation4 + $0x370] sm:$0xff] %v5209
        %5290 = vst [vmem:[#allocation4 + $0x3b8] sm:$0xff] %v5226
        %5291 = vst [vmem:[#allocation4 + $0x400] sm:$0xff] %v5243
        %5292 = vst [vmem:[#allocation4 + $0x448] sm:$0xff] %v5260
        %v5293 = vld [vmem:[%s4444] sm:$0xf8]
        %v5294 = vld [vmem:[%s4444 + $0x8] sm:$0xf]
        %v5295 = vld [vmem:[%s4444 + $0x10] sm:$0xf8]
        %v5296 = vld [vmem:[%s4444 + $0x18] sm:$0xf]
        %v5297 = vld [vmem:[%s4444 + $0x20] sm:$0xf8]
        %v5298 = vld [vmem:[%s4444 + $0x28] sm:$0xf]
        %v5299 = vld [vmem:[%s4444 + $0x30] sm:$0xf8]
        %v5300 = vld [vmem:[%s4444 + $0x38] sm:$0xf]
        %v5301 = vld [vmem:[%s4444 + $0x40] sm:$0xf8]
        %v5302 = vld [vmem:[%s4444 + $0x48] sm:$0xf]
        %v5303 = vld [vmem:[%s4444 + $0x50] sm:$0xf8]
        %v5304 = vld [vmem:[%s4444 + $0x58] sm:$0xf]
        %v5305 = vld [vmem:[%s4444 + $0x60] sm:$0xf8]
        %v5306 = vld [vmem:[%s4444 + $0x68] sm:$0xf]
        %v5307 = vld [vmem:[%s4444 + $0x70] sm:$0xf8]
        %v5308 = vld [vmem:[%s4444 + $0x78] sm:$0xf]
        %v5309 = vld [vmem:[%s4444 + $0x80] sm:$0xf8]
        %v5310 = vld [vmem:[%s4444 + $0x88] sm:$0xf]
        %v5311 = vld [vmem:[%s4444 + $0x90] sm:$0xf8]
        %v5312 = vld [vmem:[%s4444 + $0x98] sm:$0xf]
        %v5313 = vld [vmem:[%s4444 + $0xa0] sm:$0xf8]
        %v5314 = vld [vmem:[%s4444 + $0xa8] sm:$0xf]
        %v5315 = vld [vmem:[%s4444 + $0xb0] sm:$0xf8]
        %v5316 = vld [vmem:[%s4444 + $0xb8] sm:$0xf]
        %v5317 = vld [vmem:[%s4444 + $0xc0] sm:$0xf8]
        %v5318 = vld [vmem:[%s4444 + $0xc8] sm:$0xf]
        %v5319 = vld [vmem:[%s4444 + $0xd0] sm:$0xf8]
        %v5320 = vld [vmem:[%s4444 + $0xd8] sm:$0xf]
        %v5321 = vld [vmem:[%s4444 + $0xe0] sm:$0xf8]
        %v5322 = vld [vmem:[%s4444 + $0xe8] sm:$0xf]
        %v5323 = vld [vmem:[%s4444 + $0xf0] sm:$0xf8]
        %v5324 = vld [vmem:[%s4444 + $0xf8] sm:$0xf]
        %v5326 = vshrl.u32 %v5293, 16
        %v5328 = vrot.slane %v5326, 3
        %v5329 = vshll.u32 %v5293, 16
        %v5331 = vrot.slane %v5329, 4
        %v5332 = vor.u32 %v5328, %v5331
        %v5334 = vshrl.u32 %v5294, 16
        %v5336 = vrot.slane %v5334, 3
        %v5337 = vshll.u32 %v5294, 16
        %v5339 = vrot.slane %v5337, 4
        %v5340 = vor.u32 %v5336, %v5339
        %v5341 = vsel %vm367, %v5332, %v5340
        %v5343 = vshrl.u32 %v5295, 16
        %v5345 = vrot.slane %v5343, 3
        %v5346 = vshll.u32 %v5295, 16
        %v5348 = vrot.slane %v5346, 4
        %v5349 = vor.u32 %v5345, %v5348
        %v5351 = vshrl.u32 %v5296, 16
        %v5353 = vrot.slane %v5351, 3
        %v5354 = vshll.u32 %v5296, 16
        %v5356 = vrot.slane %v5354, 4
        %v5357 = vor.u32 %v5353, %v5356
        %v5358 = vsel %vm367, %v5349, %v5357
        %v5360 = vshrl.u32 %v5297, 16
        %v5362 = vrot.slane %v5360, 3
        %v5363 = vshll.u32 %v5297, 16
        %v5365 = vrot.slane %v5363, 4
        %v5366 = vor.u32 %v5362, %v5365
        %v5368 = vshrl.u32 %v5298, 16
        %v5370 = vrot.slane %v5368, 3
        %v5371 = vshll.u32 %v5298, 16
        %v5373 = vrot.slane %v5371, 4
        %v5374 = vor.u32 %v5370, %v5373
        %v5375 = vsel %vm367, %v5366, %v5374
        %v5377 = vshrl.u32 %v5299, 16
        %v5379 = vrot.slane %v5377, 3
        %v5380 = vshll.u32 %v5299, 16
        %v5382 = vrot.slane %v5380, 4
        %v5383 = vor.u32 %v5379, %v5382
        %v5385 = vshrl.u32 %v5300, 16
        %v5387 = vrot.slane %v5385, 3
        %v5388 = vshll.u32 %v5300, 16
        %v5390 = vrot.slane %v5388, 4
        %v5391 = vor.u32 %v5387, %v5390
        %v5392 = vsel %vm367, %v5383, %v5391
        %v5394 = vshrl.u32 %v5301, 16
        %v5396 = vrot.slane %v5394, 3
        %v5397 = vshll.u32 %v5301, 16
        %v5399 = vrot.slane %v5397, 4
        %v5400 = vor.u32 %v5396, %v5399
        %v5402 = vshrl.u32 %v5302, 16
        %v5404 = vrot.slane %v5402, 3
        %v5405 = vshll.u32 %v5302, 16
        %v5407 = vrot.slane %v5405, 4
        %v5408 = vor.u32 %v5404, %v5407
        %v5409 = vsel %vm367, %v5400, %v5408
        %v5411 = vshrl.u32 %v5303, 16
        %v5413 = vrot.slane %v5411, 3
        %v5414 = vshll.u32 %v5303, 16
        %v5416 = vrot.slane %v5414, 4
        %v5417 = vor.u32 %v5413, %v5416
        %v5419 = vshrl.u32 %v5304, 16
        %v5421 = vrot.slane %v5419, 3
        %v5422 = vshll.u32 %v5304, 16
        %v5424 = vrot.slane %v5422, 4
        %v5425 = vor.u32 %v5421, %v5424
        %v5426 = vsel %vm367, %v5417, %v5425
        %v5428 = vshrl.u32 %v5305, 16
        %v5430 = vrot.slane %v5428, 3
        %v5431 = vshll.u32 %v5305, 16
        %v5433 = vrot.slane %v5431, 4
        %v5434 = vor.u32 %v5430, %v5433
        %v5436 = vshrl.u32 %v5306, 16
        %v5438 = vrot.slane %v5436, 3
        %v5439 = vshll.u32 %v5306, 16
        %v5441 = vrot.slane %v5439, 4
        %v5442 = vor.u32 %v5438, %v5441
        %v5443 = vsel %vm367, %v5434, %v5442
        %v5445 = vshrl.u32 %v5307, 16
        %v5447 = vrot.slane %v5445, 3
        %v5448 = vshll.u32 %v5307, 16
        %v5450 = vrot.slane %v5448, 4
        %v5451 = vor.u32 %v5447, %v5450
        %v5453 = vshrl.u32 %v5308, 16
        %v5455 = vrot.slane %v5453, 3
        %v5456 = vshll.u32 %v5308, 16
        %v5458 = vrot.slane %v5456, 4
        %v5459 = vor.u32 %v5455, %v5458
        %v5460 = vsel %vm367, %v5451, %v5459
        %v5462 = vshrl.u32 %v5309, 16
        %v5464 = vrot.slane %v5462, 3
        %v5465 = vshll.u32 %v5309, 16
        %v5467 = vrot.slane %v5465, 4
        %v5468 = vor.u32 %v5464, %v5467
        %v5470 = vshrl.u32 %v5310, 16
        %v5472 = vrot.slane %v5470, 3
        %v5473 = vshll.u32 %v5310, 16
        %v5475 = vrot.slane %v5473, 4
        %v5476 = vor.u32 %v5472, %v5475
        %v5477 = vsel %vm367, %v5468, %v5476
        %v5479 = vshrl.u32 %v5311, 16
        %v5481 = vrot.slane %v5479, 3
        %v5482 = vshll.u32 %v5311, 16
        %v5484 = vrot.slane %v5482, 4
        %v5485 = vor.u32 %v5481, %v5484
        %v5487 = vshrl.u32 %v5312, 16
        %v5489 = vrot.slane %v5487, 3
        %v5490 = vshll.u32 %v5312, 16
        %v5492 = vrot.slane %v5490, 4
        %v5493 = vor.u32 %v5489, %v5492
        %v5494 = vsel %vm367, %v5485, %v5493
        %v5496 = vshrl.u32 %v5313, 16
        %v5498 = vrot.slane %v5496, 3
        %v5499 = vshll.u32 %v5313, 16
        %v5501 = vrot.slane %v5499, 4
        %v5502 = vor.u32 %v5498, %v5501
        %v5504 = vshrl.u32 %v5314, 16
        %v5506 = vrot.slane %v5504, 3
        %v5507 = vshll.u32 %v5314, 16
        %v5509 = vrot.slane %v5507, 4
        %v5510 = vor.u32 %v5506, %v5509
        %v5511 = vsel %vm367, %v5502, %v5510
        %v5513 = vshrl.u32 %v5315, 16
        %v5515 = vrot.slane %v5513, 3
        %v5516 = vshll.u32 %v5315, 16
        %v5518 = vrot.slane %v5516, 4
        %v5519 = vor.u32 %v5515, %v5518
        %v5521 = vshrl.u32 %v5316, 16
        %v5523 = vrot.slane %v5521, 3
        %v5524 = vshll.u32 %v5316, 16
        %v5526 = vrot.slane %v5524, 4
        %v5527 = vor.u32 %v5523, %v5526
        %v5528 = vsel %vm367, %v5519, %v5527
        %v5530 = vshrl.u32 %v5317, 16
        %v5532 = vrot.slane %v5530, 3
        %v5533 = vshll.u32 %v5317, 16
        %v5535 = vrot.slane %v5533, 4
        %v5536 = vor.u32 %v5532, %v5535
        %v5538 = vshrl.u32 %v5318, 16
        %v5540 = vrot.slane %v5538, 3
        %v5541 = vshll.u32 %v5318, 16
        %v5543 = vrot.slane %v5541, 4
        %v5544 = vor.u32 %v5540, %v5543
        %v5545 = vsel %vm367, %v5536, %v5544
        %v5547 = vshrl.u32 %v5319, 16
        %v5549 = vrot.slane %v5547, 3
        %v5550 = vshll.u32 %v5319, 16
        %v5552 = vrot.slane %v5550, 4
        %v5553 = vor.u32 %v5549, %v5552
        %v5555 = vshrl.u32 %v5320, 16
        %v5557 = vrot.slane %v5555, 3
        %v5558 = vshll.u32 %v5320, 16
        %v5560 = vrot.slane %v5558, 4
        %v5561 = vor.u32 %v5557, %v5560
        %v5562 = vsel %vm367, %v5553, %v5561
        %v5564 = vshrl.u32 %v5321, 16
        %v5566 = vrot.slane %v5564, 3
        %v5567 = vshll.u32 %v5321, 16
        %v5569 = vrot.slane %v5567, 4
        %v5570 = vor.u32 %v5566, %v5569
        %v5572 = vshrl.u32 %v5322, 16
        %v5574 = vrot.slane %v5572, 3
        %v5575 = vshll.u32 %v5322, 16
        %v5577 = vrot.slane %v5575, 4
        %v5578 = vor.u32 %v5574, %v5577
        %v5579 = vsel %vm367, %v5570, %v5578
        %v5581 = vshrl.u32 %v5323, 16
        %v5583 = vrot.slane %v5581, 3
        %v5584 = vshll.u32 %v5323, 16
        %v5586 = vrot.slane %v5584, 4
        %v5587 = vor.u32 %v5583, %v5586
        %v5589 = vshrl.u32 %v5324, 16
        %v5591 = vrot.slane %v5589, 3
        %v5592 = vshll.u32 %v5324, 16
        %v5594 = vrot.slane %v5592, 4
        %v5595 = vor.u32 %v5591, %v5594
        %v5596 = vsel %vm367, %v5587, %v5595
        %5613 = vst [vmem:[#allocation4 + $0x18] sm:$0xff] %v5341
        %5614 = vst [vmem:[#allocation4 + $0x60] sm:$0xff] %v5358
        %5615 = vst [vmem:[#allocation4 + $0xa8] sm:$0xff] %v5375
        %5616 = vst [vmem:[#allocation4 + $0xf0] sm:$0xff] %v5392
        %5617 = vst [vmem:[#allocation4 + $0x138] sm:$0xff] %v5409
        %5618 = vst [vmem:[#allocation4 + $0x180] sm:$0xff] %v5426
        %5619 = vst [vmem:[#allocation4 + $0x1c8] sm:$0xff] %v5443
        %5620 = vst [vmem:[#allocation4 + $0x210] sm:$0xff] %v5460
        %5621 = vst [vmem:[#allocation4 + $0x258] sm:$0xff] %v5477
        %5622 = vst [vmem:[#allocation4 + $0x2a0] sm:$0xff] %v5494
        %5623 = vst [vmem:[#allocation4 + $0x2e8] sm:$0xff] %v5511
        %5624 = vst [vmem:[#allocation4 + $0x330] sm:$0xff] %v5528
        %5625 = vst [vmem:[#allocation4 + $0x378] sm:$0xff] %v5545
        %5626 = vst [vmem:[#allocation4 + $0x3c0] sm:$0xff] %v5562
        %5627 = vst [vmem:[#allocation4 + $0x408] sm:$0xff] %v5579
        %5628 = vst [vmem:[#allocation4 + $0x450] sm:$0xff] %v5596
        %v5629 = vld [vmem:[%s4444] sm:$0xf0]
        %v5630 = vld [vmem:[%s4444 + $0x8] sm:$0xf]
        %v5631 = vld [vmem:[%s4444 + $0x10] sm:$0xf0]
        %v5632 = vld [vmem:[%s4444 + $0x18] sm:$0xf]
        %v5633 = vld [vmem:[%s4444 + $0x20] sm:$0xf0]
        %v5634 = vld [vmem:[%s4444 + $0x28] sm:$0xf]
        %v5635 = vld [vmem:[%s4444 + $0x30] sm:$0xf0]
        %v5636 = vld [vmem:[%s4444 + $0x38] sm:$0xf]
        %v5637 = vld [vmem:[%s4444 + $0x40] sm:$0xf0]
        %v5638 = vld [vmem:[%s4444 + $0x48] sm:$0xf]
        %v5639 = vld [vmem:[%s4444 + $0x50] sm:$0xf0]
        %v5640 = vld [vmem:[%s4444 + $0x58] sm:$0xf]
        %v5641 = vld [vmem:[%s4444 + $0x60] sm:$0xf0]
        %v5642 = vld [vmem:[%s4444 + $0x68] sm:$0xf]
        %v5643 = vld [vmem:[%s4444 + $0x70] sm:$0xf0]
        %v5644 = vld [vmem:[%s4444 + $0x78] sm:$0xf]
        %v5645 = vld [vmem:[%s4444 + $0x80] sm:$0xf0]
        %v5646 = vld [vmem:[%s4444 + $0x88] sm:$0xf]
        %v5647 = vld [vmem:[%s4444 + $0x90] sm:$0xf0]
        %v5648 = vld [vmem:[%s4444 + $0x98] sm:$0xf]
        %v5649 = vld [vmem:[%s4444 + $0xa0] sm:$0xf0]
        %v5650 = vld [vmem:[%s4444 + $0xa8] sm:$0xf]
        %v5651 = vld [vmem:[%s4444 + $0xb0] sm:$0xf0]
        %v5652 = vld [vmem:[%s4444 + $0xb8] sm:$0xf]
        %v5653 = vld [vmem:[%s4444 + $0xc0] sm:$0xf0]
        %v5654 = vld [vmem:[%s4444 + $0xc8] sm:$0xf]
        %v5655 = vld [vmem:[%s4444 + $0xd0] sm:$0xf0]
        %v5656 = vld [vmem:[%s4444 + $0xd8] sm:$0xf]
        %v5657 = vld [vmem:[%s4444 + $0xe0] sm:$0xf0]
        %v5658 = vld [vmem:[%s4444 + $0xe8] sm:$0xf]
        %v5659 = vld [vmem:[%s4444 + $0xf0] sm:$0xf0]
        %v5660 = vld [vmem:[%s4444 + $0xf8] sm:$0xf]
        %v5693 = vrot.slane %v5629, 4
        %v5694 = vrot.slane %v5630, 4
        %v5695 = vsel %vm736, %v5693, %v5694
        %v5696 = vrot.slane %v5631, 4
        %v5697 = vrot.slane %v5632, 4
        %v5698 = vsel %vm736, %v5696, %v5697
        %v5699 = vrot.slane %v5633, 4
        %v5700 = vrot.slane %v5634, 4
        %v5701 = vsel %vm736, %v5699, %v5700
        %v5702 = vrot.slane %v5635, 4
        %v5703 = vrot.slane %v5636, 4
        %v5704 = vsel %vm736, %v5702, %v5703
        %v5705 = vrot.slane %v5637, 4
        %v5706 = vrot.slane %v5638, 4
        %v5707 = vsel %vm736, %v5705, %v5706
        %v5708 = vrot.slane %v5639, 4
        %v5709 = vrot.slane %v5640, 4
        %v5710 = vsel %vm736, %v5708, %v5709
        %v5711 = vrot.slane %v5641, 4
        %v5712 = vrot.slane %v5642, 4
        %v5713 = vsel %vm736, %v5711, %v5712
        %v5714 = vrot.slane %v5643, 4
        %v5715 = vrot.slane %v5644, 4
        %v5716 = vsel %vm736, %v5714, %v5715
        %v5717 = vrot.slane %v5645, 4
        %v5718 = vrot.slane %v5646, 4
        %v5719 = vsel %vm736, %v5717, %v5718
        %v5720 = vrot.slane %v5647, 4
        %v5721 = vrot.slane %v5648, 4
        %v5722 = vsel %vm736, %v5720, %v5721
        %v5723 = vrot.slane %v5649, 4
        %v5724 = vrot.slane %v5650, 4
        %v5725 = vsel %vm736, %v5723, %v5724
        %v5726 = vrot.slane %v5651, 4
        %v5727 = vrot.slane %v5652, 4
        %v5728 = vsel %vm736, %v5726, %v5727
        %v5729 = vrot.slane %v5653, 4
        %v5730 = vrot.slane %v5654, 4
        %v5731 = vsel %vm736, %v5729, %v5730
        %v5732 = vrot.slane %v5655, 4
        %v5733 = vrot.slane %v5656, 4
        %v5734 = vsel %vm736, %v5732, %v5733
        %v5735 = vrot.slane %v5657, 4
        %v5736 = vrot.slane %v5658, 4
        %v5737 = vsel %vm736, %v5735, %v5736
        %v5738 = vrot.slane %v5659, 4
        %v5739 = vrot.slane %v5660, 4
        %v5740 = vsel %vm736, %v5738, %v5739
        %5757 = vst [vmem:[#allocation4 + $0x20] sm:$0xff] %v5695
        %5758 = vst [vmem:[#allocation4 + $0x68] sm:$0xff] %v5698
        %5759 = vst [vmem:[#allocation4 + $0xb0] sm:$0xff] %v5701
        %5760 = vst [vmem:[#allocation4 + $0xf8] sm:$0xff] %v5704
        %5761 = vst [vmem:[#allocation4 + $0x140] sm:$0xff] %v5707
        %5762 = vst [vmem:[#allocation4 + $0x188] sm:$0xff] %v5710
        %5763 = vst [vmem:[#allocation4 + $0x1d0] sm:$0xff] %v5713
        %5764 = vst [vmem:[#allocation4 + $0x218] sm:$0xff] %v5716
        %5765 = vst [vmem:[#allocation4 + $0x260] sm:$0xff] %v5719
        %5766 = vst [vmem:[#allocation4 + $0x2a8] sm:$0xff] %v5722
        %5767 = vst [vmem:[#allocation4 + $0x2f0] sm:$0xff] %v5725
        %5768 = vst [vmem:[#allocation4 + $0x338] sm:$0xff] %v5728
        %5769 = vst [vmem:[#allocation4 + $0x380] sm:$0xff] %v5731
        %5770 = vst [vmem:[#allocation4 + $0x3c8] sm:$0xff] %v5734
        %5771 = vst [vmem:[#allocation4 + $0x410] sm:$0xff] %v5737
        %5772 = vst [vmem:[#allocation4 + $0x458] sm:$0xff] %v5740
        %v5773 = vld [vmem:[%s4444] sm:$0xf0]
        %v5774 = vld [vmem:[%s4444 + $0x8] sm:$0x1f]
        %v5775 = vld [vmem:[%s4444 + $0x10] sm:$0xf0]
        %v5776 = vld [vmem:[%s4444 + $0x18] sm:$0x1f]
        %v5777 = vld [vmem:[%s4444 + $0x20] sm:$0xf0]
        %v5778 = vld [vmem:[%s4444 + $0x28] sm:$0x1f]
        %v5779 = vld [vmem:[%s4444 + $0x30] sm:$0xf0]
        %v5780 = vld [vmem:[%s4444 + $0x38] sm:$0x1f]
        %v5781 = vld [vmem:[%s4444 + $0x40] sm:$0xf0]
        %v5782 = vld [vmem:[%s4444 + $0x48] sm:$0x1f]
        %v5783 = vld [vmem:[%s4444 + $0x50] sm:$0xf0]
        %v5784 = vld [vmem:[%s4444 + $0x58] sm:$0x1f]
        %v5785 = vld [vmem:[%s4444 + $0x60] sm:$0xf0]
        %v5786 = vld [vmem:[%s4444 + $0x68] sm:$0x1f]
        %v5787 = vld [vmem:[%s4444 + $0x70] sm:$0xf0]
        %v5788 = vld [vmem:[%s4444 + $0x78] sm:$0x1f]
        %v5789 = vld [vmem:[%s4444 + $0x80] sm:$0xf0]
        %v5790 = vld [vmem:[%s4444 + $0x88] sm:$0x1f]
        %v5791 = vld [vmem:[%s4444 + $0x90] sm:$0xf0]
        %v5792 = vld [vmem:[%s4444 + $0x98] sm:$0x1f]
        %v5793 = vld [vmem:[%s4444 + $0xa0] sm:$0xf0]
        %v5794 = vld [vmem:[%s4444 + $0xa8] sm:$0x1f]
        %v5795 = vld [vmem:[%s4444 + $0xb0] sm:$0xf0]
        %v5796 = vld [vmem:[%s4444 + $0xb8] sm:$0x1f]
        %v5797 = vld [vmem:[%s4444 + $0xc0] sm:$0xf0]
        %v5798 = vld [vmem:[%s4444 + $0xc8] sm:$0x1f]
        %v5799 = vld [vmem:[%s4444 + $0xd0] sm:$0xf0]
        %v5800 = vld [vmem:[%s4444 + $0xd8] sm:$0x1f]
        %v5801 = vld [vmem:[%s4444 + $0xe0] sm:$0xf0]
        %v5802 = vld [vmem:[%s4444 + $0xe8] sm:$0x1f]
        %v5803 = vld [vmem:[%s4444 + $0xf0] sm:$0xf0]
        %v5804 = vld [vmem:[%s4444 + $0xf8] sm:$0x1f]
        %v5806 = vshrl.u32 %v5773, 16
        %v5808 = vrot.slane %v5806, 4
        %v5809 = vshll.u32 %v5773, 16
        %v5811 = vrot.slane %v5809, 5
        %v5812 = vor.u32 %v5808, %v5811
        %v5814 = vshrl.u32 %v5774, 16
        %v5816 = vrot.slane %v5814, 4
        %v5817 = vshll.u32 %v5774, 16
        %v5819 = vrot.slane %v5817, 5
        %v5820 = vor.u32 %v5816, %v5819
        %v5821 = vsel %vm849, %v5812, %v5820
        %v5823 = vshrl.u32 %v5775, 16
        %v5825 = vrot.slane %v5823, 4
        %v5826 = vshll.u32 %v5775, 16
        %v5828 = vrot.slane %v5826, 5
        %v5829 = vor.u32 %v5825, %v5828
        %v5831 = vshrl.u32 %v5776, 16
        %v5833 = vrot.slane %v5831, 4
        %v5834 = vshll.u32 %v5776, 16
        %v5836 = vrot.slane %v5834, 5
        %v5837 = vor.u32 %v5833, %v5836
        %v5838 = vsel %vm849, %v5829, %v5837
        %v5840 = vshrl.u32 %v5777, 16
        %v5842 = vrot.slane %v5840, 4
        %v5843 = vshll.u32 %v5777, 16
        %v5845 = vrot.slane %v5843, 5
        %v5846 = vor.u32 %v5842, %v5845
        %v5848 = vshrl.u32 %v5778, 16
        %v5850 = vrot.slane %v5848, 4
        %v5851 = vshll.u32 %v5778, 16
        %v5853 = vrot.slane %v5851, 5
        %v5854 = vor.u32 %v5850, %v5853
        %v5855 = vsel %vm849, %v5846, %v5854
        %v5857 = vshrl.u32 %v5779, 16
        %v5859 = vrot.slane %v5857, 4
        %v5860 = vshll.u32 %v5779, 16
        %v5862 = vrot.slane %v5860, 5
        %v5863 = vor.u32 %v5859, %v5862
        %v5865 = vshrl.u32 %v5780, 16
        %v5867 = vrot.slane %v5865, 4
        %v5868 = vshll.u32 %v5780, 16
        %v5870 = vrot.slane %v5868, 5
        %v5871 = vor.u32 %v5867, %v5870
        %v5872 = vsel %vm849, %v5863, %v5871
        %v5874 = vshrl.u32 %v5781, 16
        %v5876 = vrot.slane %v5874, 4
        %v5877 = vshll.u32 %v5781, 16
        %v5879 = vrot.slane %v5877, 5
        %v5880 = vor.u32 %v5876, %v5879
        %v5882 = vshrl.u32 %v5782, 16
        %v5884 = vrot.slane %v5882, 4
        %v5885 = vshll.u32 %v5782, 16
        %v5887 = vrot.slane %v5885, 5
        %v5888 = vor.u32 %v5884, %v5887
        %v5889 = vsel %vm849, %v5880, %v5888
        %v5891 = vshrl.u32 %v5783, 16
        %v5893 = vrot.slane %v5891, 4
        %v5894 = vshll.u32 %v5783, 16
        %v5896 = vrot.slane %v5894, 5
        %v5897 = vor.u32 %v5893, %v5896
        %v5899 = vshrl.u32 %v5784, 16
        %v5901 = vrot.slane %v5899, 4
        %v5902 = vshll.u32 %v5784, 16
        %v5904 = vrot.slane %v5902, 5
        %v5905 = vor.u32 %v5901, %v5904
        %v5906 = vsel %vm849, %v5897, %v5905
        %v5908 = vshrl.u32 %v5785, 16
        %v5910 = vrot.slane %v5908, 4
        %v5911 = vshll.u32 %v5785, 16
        %v5913 = vrot.slane %v5911, 5
        %v5914 = vor.u32 %v5910, %v5913
        %v5916 = vshrl.u32 %v5786, 16
        %v5918 = vrot.slane %v5916, 4
        %v5919 = vshll.u32 %v5786, 16
        %v5921 = vrot.slane %v5919, 5
        %v5922 = vor.u32 %v5918, %v5921
        %v5923 = vsel %vm849, %v5914, %v5922
        %v5925 = vshrl.u32 %v5787, 16
        %v5927 = vrot.slane %v5925, 4
        %v5928 = vshll.u32 %v5787, 16
        %v5930 = vrot.slane %v5928, 5
        %v5931 = vor.u32 %v5927, %v5930
        %v5933 = vshrl.u32 %v5788, 16
        %v5935 = vrot.slane %v5933, 4
        %v5936 = vshll.u32 %v5788, 16
        %v5938 = vrot.slane %v5936, 5
        %v5939 = vor.u32 %v5935, %v5938
        %v5940 = vsel %vm849, %v5931, %v5939
        %v5942 = vshrl.u32 %v5789, 16
        %v5944 = vrot.slane %v5942, 4
        %v5945 = vshll.u32 %v5789, 16
        %v5947 = vrot.slane %v5945, 5
        %v5948 = vor.u32 %v5944, %v5947
        %v5950 = vshrl.u32 %v5790, 16
        %v5952 = vrot.slane %v5950, 4
        %v5953 = vshll.u32 %v5790, 16
        %v5955 = vrot.slane %v5953, 5
        %v5956 = vor.u32 %v5952, %v5955
        %v5957 = vsel %vm849, %v5948, %v5956
        %v5959 = vshrl.u32 %v5791, 16
        %v5961 = vrot.slane %v5959, 4
        %v5962 = vshll.u32 %v5791, 16
        %v5964 = vrot.slane %v5962, 5
        %v5965 = vor.u32 %v5961, %v5964
        %v5967 = vshrl.u32 %v5792, 16
        %v5969 = vrot.slane %v5967, 4
        %v5970 = vshll.u32 %v5792, 16
        %v5972 = vrot.slane %v5970, 5
        %v5973 = vor.u32 %v5969, %v5972
        %v5974 = vsel %vm849, %v5965, %v5973
        %v5976 = vshrl.u32 %v5793, 16
        %v5978 = vrot.slane %v5976, 4
        %v5979 = vshll.u32 %v5793, 16
        %v5981 = vrot.slane %v5979, 5
        %v5982 = vor.u32 %v5978, %v5981
        %v5984 = vshrl.u32 %v5794, 16
        %v5986 = vrot.slane %v5984, 4
        %v5987 = vshll.u32 %v5794, 16
        %v5989 = vrot.slane %v5987, 5
        %v5990 = vor.u32 %v5986, %v5989
        %v5991 = vsel %vm849, %v5982, %v5990
        %v5993 = vshrl.u32 %v5795, 16
        %v5995 = vrot.slane %v5993, 4
        %v5996 = vshll.u32 %v5795, 16
        %v5998 = vrot.slane %v5996, 5
        %v5999 = vor.u32 %v5995, %v5998
        %v6001 = vshrl.u32 %v5796, 16
        %v6003 = vrot.slane %v6001, 4
        %v6004 = vshll.u32 %v5796, 16
        %v6006 = vrot.slane %v6004, 5
        %v6007 = vor.u32 %v6003, %v6006
        %v6008 = vsel %vm849, %v5999, %v6007
        %v6010 = vshrl.u32 %v5797, 16
        %v6012 = vrot.slane %v6010, 4
        %v6013 = vshll.u32 %v5797, 16
        %v6015 = vrot.slane %v6013, 5
        %v6016 = vor.u32 %v6012, %v6015
        %v6018 = vshrl.u32 %v5798, 16
        %v6020 = vrot.slane %v6018, 4
        %v6021 = vshll.u32 %v5798, 16
        %v6023 = vrot.slane %v6021, 5
        %v6024 = vor.u32 %v6020, %v6023
        %v6025 = vsel %vm849, %v6016, %v6024
        %v6027 = vshrl.u32 %v5799, 16
        %v6029 = vrot.slane %v6027, 4
        %v6030 = vshll.u32 %v5799, 16
        %v6032 = vrot.slane %v6030, 5
        %v6033 = vor.u32 %v6029, %v6032
        %v6035 = vshrl.u32 %v5800, 16
        %v6037 = vrot.slane %v6035, 4
        %v6038 = vshll.u32 %v5800, 16
        %v6040 = vrot.slane %v6038, 5
        %v6041 = vor.u32 %v6037, %v6040
        %v6042 = vsel %vm849, %v6033, %v6041
        %v6044 = vshrl.u32 %v5801, 16
        %v6046 = vrot.slane %v6044, 4
        %v6047 = vshll.u32 %v5801, 16
        %v6049 = vrot.slane %v6047, 5
        %v6050 = vor.u32 %v6046, %v6049
        %v6052 = vshrl.u32 %v5802, 16
        %v6054 = vrot.slane %v6052, 4
        %v6055 = vshll.u32 %v5802, 16
        %v6057 = vrot.slane %v6055, 5
        %v6058 = vor.u32 %v6054, %v6057
        %v6059 = vsel %vm849, %v6050, %v6058
        %v6061 = vshrl.u32 %v5803, 16
        %v6063 = vrot.slane %v6061, 4
        %v6064 = vshll.u32 %v5803, 16
        %v6066 = vrot.slane %v6064, 5
        %v6067 = vor.u32 %v6063, %v6066
        %v6069 = vshrl.u32 %v5804, 16
        %v6071 = vrot.slane %v6069, 4
        %v6072 = vshll.u32 %v5804, 16
        %v6074 = vrot.slane %v6072, 5
        %v6075 = vor.u32 %v6071, %v6074
        %v6076 = vsel %vm849, %v6067, %v6075
        %6093 = vst [vmem:[#allocation4 + $0x28] sm:$0xff] %v5821
        %6094 = vst [vmem:[#allocation4 + $0x70] sm:$0xff] %v5838
        %6095 = vst [vmem:[#allocation4 + $0xb8] sm:$0xff] %v5855
        %6096 = vst [vmem:[#allocation4 + $0x100] sm:$0xff] %v5872
        %6097 = vst [vmem:[#allocation4 + $0x148] sm:$0xff] %v5889
        %6098 = vst [vmem:[#allocation4 + $0x190] sm:$0xff] %v5906
        %6099 = vst [vmem:[#allocation4 + $0x1d8] sm:$0xff] %v5923
        %6100 = vst [vmem:[#allocation4 + $0x220] sm:$0xff] %v5940
        %6101 = vst [vmem:[#allocation4 + $0x268] sm:$0xff] %v5957
        %6102 = vst [vmem:[#allocation4 + $0x2b0] sm:$0xff] %v5974
        %6103 = vst [vmem:[#allocation4 + $0x2f8] sm:$0xff] %v5991
        %6104 = vst [vmem:[#allocation4 + $0x340] sm:$0xff] %v6008
        %6105 = vst [vmem:[#allocation4 + $0x388] sm:$0xff] %v6025
        %6106 = vst [vmem:[#allocation4 + $0x3d0] sm:$0xff] %v6042
        %6107 = vst [vmem:[#allocation4 + $0x418] sm:$0xff] %v6059
        %6108 = vst [vmem:[#allocation4 + $0x460] sm:$0xff] %v6076
        %s6109 = scalar_lea.vmem [#allocation3], 32
        %v6110 = vld [vmem:[%s6109] sm:$0xf8]
        %v6111 = vld [vmem:[%s6109 + $0x8] sm:$0xf]
        %v6112 = vld [vmem:[%s6109 + $0x10] sm:$0xf8]
        %v6113 = vld [vmem:[%s6109 + $0x18] sm:$0xf]
        %v6114 = vld [vmem:[%s6109 + $0x20] sm:$0xf8]
        %v6115 = vld [vmem:[%s6109 + $0x28] sm:$0xf]
        %v6116 = vld [vmem:[%s6109 + $0x30] sm:$0xf8]
        %v6117 = vld [vmem:[%s6109 + $0x38] sm:$0xf]
        %v6118 = vld [vmem:[%s6109 + $0x40] sm:$0xf8]
        %v6119 = vld [vmem:[%s6109 + $0x48] sm:$0xf]
        %v6120 = vld [vmem:[%s6109 + $0x50] sm:$0xf8]
        %v6121 = vld [vmem:[%s6109 + $0x58] sm:$0xf]
        %v6122 = vld [vmem:[%s6109 + $0x60] sm:$0xf8]
        %v6123 = vld [vmem:[%s6109 + $0x68] sm:$0xf]
        %v6124 = vld [vmem:[%s6109 + $0x70] sm:$0xf8]
        %v6125 = vld [vmem:[%s6109 + $0x78] sm:$0xf]
        %v6126 = vld [vmem:[%s6109 + $0x80] sm:$0xf8]
        %v6127 = vld [vmem:[%s6109 + $0x88] sm:$0xf]
        %v6128 = vld [vmem:[%s6109 + $0x90] sm:$0xf8]
        %v6129 = vld [vmem:[%s6109 + $0x98] sm:$0xf]
        %v6130 = vld [vmem:[%s6109 + $0xa0] sm:$0xf8]
        %v6131 = vld [vmem:[%s6109 + $0xa8] sm:$0xf]
        %v6132 = vld [vmem:[%s6109 + $0xb0] sm:$0xf8]
        %v6133 = vld [vmem:[%s6109 + $0xb8] sm:$0xf]
        %v6134 = vld [vmem:[%s6109 + $0xc0] sm:$0xf8]
        %v6135 = vld [vmem:[%s6109 + $0xc8] sm:$0xf]
        %v6136 = vld [vmem:[%s6109 + $0xd0] sm:$0xf8]
        %v6137 = vld [vmem:[%s6109 + $0xd8] sm:$0xf]
        %v6138 = vld [vmem:[%s6109 + $0xe0] sm:$0xf8]
        %v6139 = vld [vmem:[%s6109 + $0xe8] sm:$0xf]
        %v6140 = vld [vmem:[%s6109 + $0xf0] sm:$0xf8]
        %v6141 = vld [vmem:[%s6109 + $0xf8] sm:$0xf]
        %v6143 = vshrl.u32 %v6110, 16
        %v6145 = vrot.slane %v6143, 3
        %v6146 = vshll.u32 %v6110, 16
        %v6148 = vrot.slane %v6146, 4
        %v6149 = vor.u32 %v6145, %v6148
        %v6151 = vshrl.u32 %v6111, 16
        %v6153 = vrot.slane %v6151, 3
        %v6154 = vshll.u32 %v6111, 16
        %v6156 = vrot.slane %v6154, 4
        %v6157 = vor.u32 %v6153, %v6156
        %v6158 = vsel %vm367, %v6149, %v6157
        %v6160 = vshrl.u32 %v6112, 16
        %v6162 = vrot.slane %v6160, 3
        %v6163 = vshll.u32 %v6112, 16
        %v6165 = vrot.slane %v6163, 4
        %v6166 = vor.u32 %v6162, %v6165
        %v6168 = vshrl.u32 %v6113, 16
        %v6170 = vrot.slane %v6168, 3
        %v6171 = vshll.u32 %v6113, 16
        %v6173 = vrot.slane %v6171, 4
        %v6174 = vor.u32 %v6170, %v6173
        %v6175 = vsel %vm367, %v6166, %v6174
        %v6177 = vshrl.u32 %v6114, 16
        %v6179 = vrot.slane %v6177, 3
        %v6180 = vshll.u32 %v6114, 16
        %v6182 = vrot.slane %v6180, 4
        %v6183 = vor.u32 %v6179, %v6182
        %v6185 = vshrl.u32 %v6115, 16
        %v6187 = vrot.slane %v6185, 3
        %v6188 = vshll.u32 %v6115, 16
        %v6190 = vrot.slane %v6188, 4
        %v6191 = vor.u32 %v6187, %v6190
        %v6192 = vsel %vm367, %v6183, %v6191
        %v6194 = vshrl.u32 %v6116, 16
        %v6196 = vrot.slane %v6194, 3
        %v6197 = vshll.u32 %v6116, 16
        %v6199 = vrot.slane %v6197, 4
        %v6200 = vor.u32 %v6196, %v6199
        %v6202 = vshrl.u32 %v6117, 16
        %v6204 = vrot.slane %v6202, 3
        %v6205 = vshll.u32 %v6117, 16
        %v6207 = vrot.slane %v6205, 4
        %v6208 = vor.u32 %v6204, %v6207
        %v6209 = vsel %vm367, %v6200, %v6208
        %v6211 = vshrl.u32 %v6118, 16
        %v6213 = vrot.slane %v6211, 3
        %v6214 = vshll.u32 %v6118, 16
        %v6216 = vrot.slane %v6214, 4
        %v6217 = vor.u32 %v6213, %v6216
        %v6219 = vshrl.u32 %v6119, 16
        %v6221 = vrot.slane %v6219, 3
        %v6222 = vshll.u32 %v6119, 16
        %v6224 = vrot.slane %v6222, 4
        %v6225 = vor.u32 %v6221, %v6224
        %v6226 = vsel %vm367, %v6217, %v6225
        %v6228 = vshrl.u32 %v6120, 16
        %v6230 = vrot.slane %v6228, 3
        %v6231 = vshll.u32 %v6120, 16
        %v6233 = vrot.slane %v6231, 4
        %v6234 = vor.u32 %v6230, %v6233
        %v6236 = vshrl.u32 %v6121, 16
        %v6238 = vrot.slane %v6236, 3
        %v6239 = vshll.u32 %v6121, 16
        %v6241 = vrot.slane %v6239, 4
        %v6242 = vor.u32 %v6238, %v6241
        %v6243 = vsel %vm367, %v6234, %v6242
        %v6245 = vshrl.u32 %v6122, 16
        %v6247 = vrot.slane %v6245, 3
        %v6248 = vshll.u32 %v6122, 16
        %v6250 = vrot.slane %v6248, 4
        %v6251 = vor.u32 %v6247, %v6250
        %v6253 = vshrl.u32 %v6123, 16
        %v6255 = vrot.slane %v6253, 3
        %v6256 = vshll.u32 %v6123, 16
        %v6258 = vrot.slane %v6256, 4
        %v6259 = vor.u32 %v6255, %v6258
        %v6260 = vsel %vm367, %v6251, %v6259
        %v6262 = vshrl.u32 %v6124, 16
        %v6264 = vrot.slane %v6262, 3
        %v6265 = vshll.u32 %v6124, 16
        %v6267 = vrot.slane %v6265, 4
        %v6268 = vor.u32 %v6264, %v6267
        %v6270 = vshrl.u32 %v6125, 16
        %v6272 = vrot.slane %v6270, 3
        %v6273 = vshll.u32 %v6125, 16
        %v6275 = vrot.slane %v6273, 4
        %v6276 = vor.u32 %v6272, %v6275
        %v6277 = vsel %vm367, %v6268, %v6276
        %v6279 = vshrl.u32 %v6126, 16
        %v6281 = vrot.slane %v6279, 3
        %v6282 = vshll.u32 %v6126, 16
        %v6284 = vrot.slane %v6282, 4
        %v6285 = vor.u32 %v6281, %v6284
        %v6287 = vshrl.u32 %v6127, 16
        %v6289 = vrot.slane %v6287, 3
        %v6290 = vshll.u32 %v6127, 16
        %v6292 = vrot.slane %v6290, 4
        %v6293 = vor.u32 %v6289, %v6292
        %v6294 = vsel %vm367, %v6285, %v6293
        %v6296 = vshrl.u32 %v6128, 16
        %v6298 = vrot.slane %v6296, 3
        %v6299 = vshll.u32 %v6128, 16
        %v6301 = vrot.slane %v6299, 4
        %v6302 = vor.u32 %v6298, %v6301
        %v6304 = vshrl.u32 %v6129, 16
        %v6306 = vrot.slane %v6304, 3
        %v6307 = vshll.u32 %v6129, 16
        %v6309 = vrot.slane %v6307, 4
        %v6310 = vor.u32 %v6306, %v6309
        %v6311 = vsel %vm367, %v6302, %v6310
        %v6313 = vshrl.u32 %v6130, 16
        %v6315 = vrot.slane %v6313, 3
        %v6316 = vshll.u32 %v6130, 16
        %v6318 = vrot.slane %v6316, 4
        %v6319 = vor.u32 %v6315, %v6318
        %v6321 = vshrl.u32 %v6131, 16
        %v6323 = vrot.slane %v6321, 3
        %v6324 = vshll.u32 %v6131, 16
        %v6326 = vrot.slane %v6324, 4
        %v6327 = vor.u32 %v6323, %v6326
        %v6328 = vsel %vm367, %v6319, %v6327
        %v6330 = vshrl.u32 %v6132, 16
        %v6332 = vrot.slane %v6330, 3
        %v6333 = vshll.u32 %v6132, 16
        %v6335 = vrot.slane %v6333, 4
        %v6336 = vor.u32 %v6332, %v6335
        %v6338 = vshrl.u32 %v6133, 16
        %v6340 = vrot.slane %v6338, 3
        %v6341 = vshll.u32 %v6133, 16
        %v6343 = vrot.slane %v6341, 4
        %v6344 = vor.u32 %v6340, %v6343
        %v6345 = vsel %vm367, %v6336, %v6344
        %v6347 = vshrl.u32 %v6134, 16
        %v6349 = vrot.slane %v6347, 3
        %v6350 = vshll.u32 %v6134, 16
        %v6352 = vrot.slane %v6350, 4
        %v6353 = vor.u32 %v6349, %v6352
        %v6355 = vshrl.u32 %v6135, 16
        %v6357 = vrot.slane %v6355, 3
        %v6358 = vshll.u32 %v6135, 16
        %v6360 = vrot.slane %v6358, 4
        %v6361 = vor.u32 %v6357, %v6360
        %v6362 = vsel %vm367, %v6353, %v6361
        %v6364 = vshrl.u32 %v6136, 16
        %v6366 = vrot.slane %v6364, 3
        %v6367 = vshll.u32 %v6136, 16
        %v6369 = vrot.slane %v6367, 4
        %v6370 = vor.u32 %v6366, %v6369
        %v6372 = vshrl.u32 %v6137, 16
        %v6374 = vrot.slane %v6372, 3
        %v6375 = vshll.u32 %v6137, 16
        %v6377 = vrot.slane %v6375, 4
        %v6378 = vor.u32 %v6374, %v6377
        %v6379 = vsel %vm367, %v6370, %v6378
        %v6381 = vshrl.u32 %v6138, 16
        %v6383 = vrot.slane %v6381, 3
        %v6384 = vshll.u32 %v6138, 16
        %v6386 = vrot.slane %v6384, 4
        %v6387 = vor.u32 %v6383, %v6386
        %v6389 = vshrl.u32 %v6139, 16
        %v6391 = vrot.slane %v6389, 3
        %v6392 = vshll.u32 %v6139, 16
        %v6394 = vrot.slane %v6392, 4
        %v6395 = vor.u32 %v6391, %v6394
        %v6396 = vsel %vm367, %v6387, %v6395
        %v6398 = vshrl.u32 %v6140, 16
        %v6400 = vrot.slane %v6398, 3
        %v6401 = vshll.u32 %v6140, 16
        %v6403 = vrot.slane %v6401, 4
        %v6404 = vor.u32 %v6400, %v6403
        %v6406 = vshrl.u32 %v6141, 16
        %v6408 = vrot.slane %v6406, 3
        %v6409 = vshll.u32 %v6141, 16
        %v6411 = vrot.slane %v6409, 4
        %v6412 = vor.u32 %v6408, %v6411
        %v6413 = vsel %vm367, %v6404, %v6412
        %6430 = vst [vmem:[#allocation4 + $0x30] sm:$0xff] %v6158
        %6431 = vst [vmem:[#allocation4 + $0x78] sm:$0xff] %v6175
        %6432 = vst [vmem:[#allocation4 + $0xc0] sm:$0xff] %v6192
        %6433 = vst [vmem:[#allocation4 + $0x108] sm:$0xff] %v6209
        %6434 = vst [vmem:[#allocation4 + $0x150] sm:$0xff] %v6226
        %6435 = vst [vmem:[#allocation4 + $0x198] sm:$0xff] %v6243
        %6436 = vst [vmem:[#allocation4 + $0x1e0] sm:$0xff] %v6260
        %6437 = vst [vmem:[#allocation4 + $0x228] sm:$0xff] %v6277
        %6438 = vst [vmem:[#allocation4 + $0x270] sm:$0xff] %v6294
        %6439 = vst [vmem:[#allocation4 + $0x2b8] sm:$0xff] %v6311
        %6440 = vst [vmem:[#allocation4 + $0x300] sm:$0xff] %v6328
        %6441 = vst [vmem:[#allocation4 + $0x348] sm:$0xff] %v6345
        %6442 = vst [vmem:[#allocation4 + $0x390] sm:$0xff] %v6362
        %6443 = vst [vmem:[#allocation4 + $0x3d8] sm:$0xff] %v6379
        %6444 = vst [vmem:[#allocation4 + $0x420] sm:$0xff] %v6396
        %6445 = vst [vmem:[#allocation4 + $0x468] sm:$0xff] %v6413
        %v6446 = vld [vmem:[%s6109] sm:$0xf0]
        %v6447 = vld [vmem:[%s6109 + $0x8] sm:$0xf]
        %v6448 = vld [vmem:[%s6109 + $0x10] sm:$0xf0]
        %v6449 = vld [vmem:[%s6109 + $0x18] sm:$0xf]
        %v6450 = vld [vmem:[%s6109 + $0x20] sm:$0xf0]
        %v6451 = vld [vmem:[%s6109 + $0x28] sm:$0xf]
        %v6452 = vld [vmem:[%s6109 + $0x30] sm:$0xf0]
        %v6453 = vld [vmem:[%s6109 + $0x38] sm:$0xf]
        %v6454 = vld [vmem:[%s6109 + $0x40] sm:$0xf0]
        %v6455 = vld [vmem:[%s6109 + $0x48] sm:$0xf]
        %v6456 = vld [vmem:[%s6109 + $0x50] sm:$0xf0]
        %v6457 = vld [vmem:[%s6109 + $0x58] sm:$0xf]
        %v6458 = vld [vmem:[%s6109 + $0x60] sm:$0xf0]
        %v6459 = vld [vmem:[%s6109 + $0x68] sm:$0xf]
        %v6460 = vld [vmem:[%s6109 + $0x70] sm:$0xf0]
        %v6461 = vld [vmem:[%s6109 + $0x78] sm:$0xf]
        %v6462 = vld [vmem:[%s6109 + $0x80] sm:$0xf0]
        %v6463 = vld [vmem:[%s6109 + $0x88] sm:$0xf]
        %v6464 = vld [vmem:[%s6109 + $0x90] sm:$0xf0]
        %v6465 = vld [vmem:[%s6109 + $0x98] sm:$0xf]
        %v6466 = vld [vmem:[%s6109 + $0xa0] sm:$0xf0]
        %v6467 = vld [vmem:[%s6109 + $0xa8] sm:$0xf]
        %v6468 = vld [vmem:[%s6109 + $0xb0] sm:$0xf0]
        %v6469 = vld [vmem:[%s6109 + $0xb8] sm:$0xf]
        %v6470 = vld [vmem:[%s6109 + $0xc0] sm:$0xf0]
        %v6471 = vld [vmem:[%s6109 + $0xc8] sm:$0xf]
        %v6472 = vld [vmem:[%s6109 + $0xd0] sm:$0xf0]
        %v6473 = vld [vmem:[%s6109 + $0xd8] sm:$0xf]
        %v6474 = vld [vmem:[%s6109 + $0xe0] sm:$0xf0]
        %v6475 = vld [vmem:[%s6109 + $0xe8] sm:$0xf]
        %v6476 = vld [vmem:[%s6109 + $0xf0] sm:$0xf0]
        %v6477 = vld [vmem:[%s6109 + $0xf8] sm:$0xf]
        %v6510 = vrot.slane %v6446, 4
        %v6511 = vrot.slane %v6447, 4
        %v6512 = vsel %vm736, %v6510, %v6511
        %v6513 = vrot.slane %v6448, 4
        %v6514 = vrot.slane %v6449, 4
        %v6515 = vsel %vm736, %v6513, %v6514
        %v6516 = vrot.slane %v6450, 4
        %v6517 = vrot.slane %v6451, 4
        %v6518 = vsel %vm736, %v6516, %v6517
        %v6519 = vrot.slane %v6452, 4
        %v6520 = vrot.slane %v6453, 4
        %v6521 = vsel %vm736, %v6519, %v6520
        %v6522 = vrot.slane %v6454, 4
        %v6523 = vrot.slane %v6455, 4
        %v6524 = vsel %vm736, %v6522, %v6523
        %v6525 = vrot.slane %v6456, 4
        %v6526 = vrot.slane %v6457, 4
        %v6527 = vsel %vm736, %v6525, %v6526
        %v6528 = vrot.slane %v6458, 4
        %v6529 = vrot.slane %v6459, 4
        %v6530 = vsel %vm736, %v6528, %v6529
        %v6531 = vrot.slane %v6460, 4
        %v6532 = vrot.slane %v6461, 4
        %v6533 = vsel %vm736, %v6531, %v6532
        %v6534 = vrot.slane %v6462, 4
        %v6535 = vrot.slane %v6463, 4
        %v6536 = vsel %vm736, %v6534, %v6535
        %v6537 = vrot.slane %v6464, 4
        %v6538 = vrot.slane %v6465, 4
        %v6539 = vsel %vm736, %v6537, %v6538
        %v6540 = vrot.slane %v6466, 4
        %v6541 = vrot.slane %v6467, 4
        %v6542 = vsel %vm736, %v6540, %v6541
        %v6543 = vrot.slane %v6468, 4
        %v6544 = vrot.slane %v6469, 4
        %v6545 = vsel %vm736, %v6543, %v6544
        %v6546 = vrot.slane %v6470, 4
        %v6547 = vrot.slane %v6471, 4
        %v6548 = vsel %vm736, %v6546, %v6547
        %v6549 = vrot.slane %v6472, 4
        %v6550 = vrot.slane %v6473, 4
        %v6551 = vsel %vm736, %v6549, %v6550
        %v6552 = vrot.slane %v6474, 4
        %v6553 = vrot.slane %v6475, 4
        %v6554 = vsel %vm736, %v6552, %v6553
        %v6555 = vrot.slane %v6476, 4
        %v6556 = vrot.slane %v6477, 4
        %v6557 = vsel %vm736, %v6555, %v6556
        %6574 = vst [vmem:[#allocation4 + $0x38] sm:$0xff] %v6512
        %6575 = vst [vmem:[#allocation4 + $0x80] sm:$0xff] %v6515
        %6576 = vst [vmem:[#allocation4 + $0xc8] sm:$0xff] %v6518
        %6577 = vst [vmem:[#allocation4 + $0x110] sm:$0xff] %v6521
        %6578 = vst [vmem:[#allocation4 + $0x158] sm:$0xff] %v6524
        %6579 = vst [vmem:[#allocation4 + $0x1a0] sm:$0xff] %v6527
        %6580 = vst [vmem:[#allocation4 + $0x1e8] sm:$0xff] %v6530
        %6581 = vst [vmem:[#allocation4 + $0x230] sm:$0xff] %v6533
        %6582 = vst [vmem:[#allocation4 + $0x278] sm:$0xff] %v6536
        %6583 = vst [vmem:[#allocation4 + $0x2c0] sm:$0xff] %v6539
        %6584 = vst [vmem:[#allocation4 + $0x308] sm:$0xff] %v6542
        %6585 = vst [vmem:[#allocation4 + $0x350] sm:$0xff] %v6545
        %6586 = vst [vmem:[#allocation4 + $0x398] sm:$0xff] %v6548
        %6587 = vst [vmem:[#allocation4 + $0x3e0] sm:$0xff] %v6551
        %6588 = vst [vmem:[#allocation4 + $0x428] sm:$0xff] %v6554
        %6589 = vst [vmem:[#allocation4 + $0x470] sm:$0xff] %v6557
        %v6590 = vld [vmem:[%s6109] sm:$0xf0]
        %v6591 = vld [vmem:[%s6109 + $0x8] sm:$0x1f]
        %v6592 = vld [vmem:[%s6109 + $0x10] sm:$0xf0]
        %v6593 = vld [vmem:[%s6109 + $0x18] sm:$0x1f]
        %v6594 = vld [vmem:[%s6109 + $0x20] sm:$0xf0]
        %v6595 = vld [vmem:[%s6109 + $0x28] sm:$0x1f]
        %v6596 = vld [vmem:[%s6109 + $0x30] sm:$0xf0]
        %v6597 = vld [vmem:[%s6109 + $0x38] sm:$0x1f]
        %v6598 = vld [vmem:[%s6109 + $0x40] sm:$0xf0]
        %v6599 = vld [vmem:[%s6109 + $0x48] sm:$0x1f]
        %v6600 = vld [vmem:[%s6109 + $0x50] sm:$0xf0]
        %v6601 = vld [vmem:[%s6109 + $0x58] sm:$0x1f]
        %v6602 = vld [vmem:[%s6109 + $0x60] sm:$0xf0]
        %v6603 = vld [vmem:[%s6109 + $0x68] sm:$0x1f]
        %v6604 = vld [vmem:[%s6109 + $0x70] sm:$0xf0]
        %v6605 = vld [vmem:[%s6109 + $0x78] sm:$0x1f]
        %v6606 = vld [vmem:[%s6109 + $0x80] sm:$0xf0]
        %v6607 = vld [vmem:[%s6109 + $0x88] sm:$0x1f]
        %v6608 = vld [vmem:[%s6109 + $0x90] sm:$0xf0]
        %v6609 = vld [vmem:[%s6109 + $0x98] sm:$0x1f]
        %v6610 = vld [vmem:[%s6109 + $0xa0] sm:$0xf0]
        %v6611 = vld [vmem:[%s6109 + $0xa8] sm:$0x1f]
        %v6612 = vld [vmem:[%s6109 + $0xb0] sm:$0xf0]
        %v6613 = vld [vmem:[%s6109 + $0xb8] sm:$0x1f]
        %v6614 = vld [vmem:[%s6109 + $0xc0] sm:$0xf0]
        %v6615 = vld [vmem:[%s6109 + $0xc8] sm:$0x1f]
        %v6616 = vld [vmem:[%s6109 + $0xd0] sm:$0xf0]
        %v6617 = vld [vmem:[%s6109 + $0xd8] sm:$0x1f]
        %v6618 = vld [vmem:[%s6109 + $0xe0] sm:$0xf0]
        %v6619 = vld [vmem:[%s6109 + $0xe8] sm:$0x1f]
        %v6620 = vld [vmem:[%s6109 + $0xf0] sm:$0xf0]
        %v6621 = vld [vmem:[%s6109 + $0xf8] sm:$0x1f]
        %v6623 = vshrl.u32 %v6590, 16
        %v6625 = vrot.slane %v6623, 4
        %v6626 = vshll.u32 %v6590, 16
        %v6628 = vrot.slane %v6626, 5
        %v6629 = vor.u32 %v6625, %v6628
        %v6631 = vshrl.u32 %v6591, 16
        %v6633 = vrot.slane %v6631, 4
        %v6634 = vshll.u32 %v6591, 16
        %v6636 = vrot.slane %v6634, 5
        %v6637 = vor.u32 %v6633, %v6636
        %v6638 = vsel %vm849, %v6629, %v6637
        %v6640 = vshrl.u32 %v6592, 16
        %v6642 = vrot.slane %v6640, 4
        %v6643 = vshll.u32 %v6592, 16
        %v6645 = vrot.slane %v6643, 5
        %v6646 = vor.u32 %v6642, %v6645
        %v6648 = vshrl.u32 %v6593, 16
        %v6650 = vrot.slane %v6648, 4
        %v6651 = vshll.u32 %v6593, 16
        %v6653 = vrot.slane %v6651, 5
        %v6654 = vor.u32 %v6650, %v6653
        %v6655 = vsel %vm849, %v6646, %v6654
        %v6657 = vshrl.u32 %v6594, 16
        %v6659 = vrot.slane %v6657, 4
        %v6660 = vshll.u32 %v6594, 16
        %v6662 = vrot.slane %v6660, 5
        %v6663 = vor.u32 %v6659, %v6662
        %v6665 = vshrl.u32 %v6595, 16
        %v6667 = vrot.slane %v6665, 4
        %v6668 = vshll.u32 %v6595, 16
        %v6670 = vrot.slane %v6668, 5
        %v6671 = vor.u32 %v6667, %v6670
        %v6672 = vsel %vm849, %v6663, %v6671
        %v6674 = vshrl.u32 %v6596, 16
        %v6676 = vrot.slane %v6674, 4
        %v6677 = vshll.u32 %v6596, 16
        %v6679 = vrot.slane %v6677, 5
        %v6680 = vor.u32 %v6676, %v6679
        %v6682 = vshrl.u32 %v6597, 16
        %v6684 = vrot.slane %v6682, 4
        %v6685 = vshll.u32 %v6597, 16
        %v6687 = vrot.slane %v6685, 5
        %v6688 = vor.u32 %v6684, %v6687
        %v6689 = vsel %vm849, %v6680, %v6688
        %v6691 = vshrl.u32 %v6598, 16
        %v6693 = vrot.slane %v6691, 4
        %v6694 = vshll.u32 %v6598, 16
        %v6696 = vrot.slane %v6694, 5
        %v6697 = vor.u32 %v6693, %v6696
        %v6699 = vshrl.u32 %v6599, 16
        %v6701 = vrot.slane %v6699, 4
        %v6702 = vshll.u32 %v6599, 16
        %v6704 = vrot.slane %v6702, 5
        %v6705 = vor.u32 %v6701, %v6704
        %v6706 = vsel %vm849, %v6697, %v6705
        %v6708 = vshrl.u32 %v6600, 16
        %v6710 = vrot.slane %v6708, 4
        %v6711 = vshll.u32 %v6600, 16
        %v6713 = vrot.slane %v6711, 5
        %v6714 = vor.u32 %v6710, %v6713
        %v6716 = vshrl.u32 %v6601, 16
        %v6718 = vrot.slane %v6716, 4
        %v6719 = vshll.u32 %v6601, 16
        %v6721 = vrot.slane %v6719, 5
        %v6722 = vor.u32 %v6718, %v6721
        %v6723 = vsel %vm849, %v6714, %v6722
        %v6725 = vshrl.u32 %v6602, 16
        %v6727 = vrot.slane %v6725, 4
        %v6728 = vshll.u32 %v6602, 16
        %v6730 = vrot.slane %v6728, 5
        %v6731 = vor.u32 %v6727, %v6730
        %v6733 = vshrl.u32 %v6603, 16
        %v6735 = vrot.slane %v6733, 4
        %v6736 = vshll.u32 %v6603, 16
        %v6738 = vrot.slane %v6736, 5
        %v6739 = vor.u32 %v6735, %v6738
        %v6740 = vsel %vm849, %v6731, %v6739
        %v6742 = vshrl.u32 %v6604, 16
        %v6744 = vrot.slane %v6742, 4
        %v6745 = vshll.u32 %v6604, 16
        %v6747 = vrot.slane %v6745, 5
        %v6748 = vor.u32 %v6744, %v6747
        %v6750 = vshrl.u32 %v6605, 16
        %v6752 = vrot.slane %v6750, 4
        %v6753 = vshll.u32 %v6605, 16
        %v6755 = vrot.slane %v6753, 5
        %v6756 = vor.u32 %v6752, %v6755
        %v6757 = vsel %vm849, %v6748, %v6756
        %v6759 = vshrl.u32 %v6606, 16
        %v6761 = vrot.slane %v6759, 4
        %v6762 = vshll.u32 %v6606, 16
        %v6764 = vrot.slane %v6762, 5
        %v6765 = vor.u32 %v6761, %v6764
        %v6767 = vshrl.u32 %v6607, 16
        %v6769 = vrot.slane %v6767, 4
        %v6770 = vshll.u32 %v6607, 16
        %v6772 = vrot.slane %v6770, 5
        %v6773 = vor.u32 %v6769, %v6772
        %v6774 = vsel %vm849, %v6765, %v6773
        %v6776 = vshrl.u32 %v6608, 16
        %v6778 = vrot.slane %v6776, 4
        %v6779 = vshll.u32 %v6608, 16
        %v6781 = vrot.slane %v6779, 5
        %v6782 = vor.u32 %v6778, %v6781
        %v6784 = vshrl.u32 %v6609, 16
        %v6786 = vrot.slane %v6784, 4
        %v6787 = vshll.u32 %v6609, 16
        %v6789 = vrot.slane %v6787, 5
        %v6790 = vor.u32 %v6786, %v6789
        %v6791 = vsel %vm849, %v6782, %v6790
        %v6793 = vshrl.u32 %v6610, 16
        %v6795 = vrot.slane %v6793, 4
        %v6796 = vshll.u32 %v6610, 16
        %v6798 = vrot.slane %v6796, 5
        %v6799 = vor.u32 %v6795, %v6798
        %v6801 = vshrl.u32 %v6611, 16
        %v6803 = vrot.slane %v6801, 4
        %v6804 = vshll.u32 %v6611, 16
        %v6806 = vrot.slane %v6804, 5
        %v6807 = vor.u32 %v6803, %v6806
        %v6808 = vsel %vm849, %v6799, %v6807
        %v6810 = vshrl.u32 %v6612, 16
        %v6812 = vrot.slane %v6810, 4
        %v6813 = vshll.u32 %v6612, 16
        %v6815 = vrot.slane %v6813, 5
        %v6816 = vor.u32 %v6812, %v6815
        %v6818 = vshrl.u32 %v6613, 16
        %v6820 = vrot.slane %v6818, 4
        %v6821 = vshll.u32 %v6613, 16
        %v6823 = vrot.slane %v6821, 5
        %v6824 = vor.u32 %v6820, %v6823
        %v6825 = vsel %vm849, %v6816, %v6824
        %v6827 = vshrl.u32 %v6614, 16
        %v6829 = vrot.slane %v6827, 4
        %v6830 = vshll.u32 %v6614, 16
        %v6832 = vrot.slane %v6830, 5
        %v6833 = vor.u32 %v6829, %v6832
        %v6835 = vshrl.u32 %v6615, 16
        %v6837 = vrot.slane %v6835, 4
        %v6838 = vshll.u32 %v6615, 16
        %v6840 = vrot.slane %v6838, 5
        %v6841 = vor.u32 %v6837, %v6840
        %v6842 = vsel %vm849, %v6833, %v6841
        %v6844 = vshrl.u32 %v6616, 16
        %v6846 = vrot.slane %v6844, 4
        %v6847 = vshll.u32 %v6616, 16
        %v6849 = vrot.slane %v6847, 5
        %v6850 = vor.u32 %v6846, %v6849
        %v6852 = vshrl.u32 %v6617, 16
        %v6854 = vrot.slane %v6852, 4
        %v6855 = vshll.u32 %v6617, 16
        %v6857 = vrot.slane %v6855, 5
        %v6858 = vor.u32 %v6854, %v6857
        %v6859 = vsel %vm849, %v6850, %v6858
        %v6861 = vshrl.u32 %v6618, 16
        %v6863 = vrot.slane %v6861, 4
        %v6864 = vshll.u32 %v6618, 16
        %v6866 = vrot.slane %v6864, 5
        %v6867 = vor.u32 %v6863, %v6866
        %v6869 = vshrl.u32 %v6619, 16
        %v6871 = vrot.slane %v6869, 4
        %v6872 = vshll.u32 %v6619, 16
        %v6874 = vrot.slane %v6872, 5
        %v6875 = vor.u32 %v6871, %v6874
        %v6876 = vsel %vm849, %v6867, %v6875
        %v6878 = vshrl.u32 %v6620, 16
        %v6880 = vrot.slane %v6878, 4
        %v6881 = vshll.u32 %v6620, 16
        %v6883 = vrot.slane %v6881, 5
        %v6884 = vor.u32 %v6880, %v6883
        %v6886 = vshrl.u32 %v6621, 16
        %v6888 = vrot.slane %v6886, 4
        %v6889 = vshll.u32 %v6621, 16
        %v6891 = vrot.slane %v6889, 5
        %v6892 = vor.u32 %v6888, %v6891
        %v6893 = vsel %vm849, %v6884, %v6892
        %6910 = vst [vmem:[#allocation4 + $0x40] sm:$0xff] %v6638
        %6911 = vst [vmem:[#allocation4 + $0x88] sm:$0xff] %v6655
        %6912 = vst [vmem:[#allocation4 + $0xd0] sm:$0xff] %v6672
        %6913 = vst [vmem:[#allocation4 + $0x118] sm:$0xff] %v6689
        %6914 = vst [vmem:[#allocation4 + $0x160] sm:$0xff] %v6706
        %6915 = vst [vmem:[#allocation4 + $0x1a8] sm:$0xff] %v6723
        %6916 = vst [vmem:[#allocation4 + $0x1f0] sm:$0xff] %v6740
        %6917 = vst [vmem:[#allocation4 + $0x238] sm:$0xff] %v6757
        %6918 = vst [vmem:[#allocation4 + $0x280] sm:$0xff] %v6774
        %6919 = vst [vmem:[#allocation4 + $0x2c8] sm:$0xff] %v6791
        %6920 = vst [vmem:[#allocation4 + $0x310] sm:$0xff] %v6808
        %6921 = vst [vmem:[#allocation4 + $0x358] sm:$0xff] %v6825
        %6922 = vst [vmem:[#allocation4 + $0x3a0] sm:$0xff] %v6842
        %6923 = vst [vmem:[#allocation4 + $0x3e8] sm:$0xff] %v6859
        %6924 = vst [vmem:[#allocation4 + $0x430] sm:$0xff] %v6876
        %6925 = vst [vmem:[#allocation4 + $0x478] sm:$0xff] %v6893
        %v6926 = vld [vmem:[#allocation4] sm:$0xff]
        %v6927 = vld [vmem:[#allocation4 + $0x8] sm:$0xff]
        %v6928 = vld [vmem:[#allocation4 + $0x10] sm:$0xff]
        %v6929 = vld [vmem:[#allocation4 + $0x18] sm:$0xff]
        %v6930 = vld [vmem:[#allocation4 + $0x20] sm:$0xff]
        %v6931 = vld [vmem:[#allocation4 + $0x28] sm:$0xff]
        %v6932 = vld [vmem:[#allocation4 + $0x30] sm:$0xff]
        %v6933 = vld [vmem:[#allocation4 + $0x38] sm:$0xff]
        %v6934 = vld [vmem:[#allocation4 + $0x40] sm:$0xff]
        %v6935 = vld [vmem:[#allocation4 + $0x48] sm:$0xff]
        %v6936 = vld [vmem:[#allocation4 + $0x50] sm:$0xff]
        %v6937 = vld [vmem:[#allocation4 + $0x58] sm:$0xff]
        %v6938 = vld [vmem:[#allocation4 + $0x60] sm:$0xff]
        %v6939 = vld [vmem:[#allocation4 + $0x68] sm:$0xff]
        %v6940 = vld [vmem:[#allocation4 + $0x70] sm:$0xff]
        %v6941 = vld [vmem:[#allocation4 + $0x78] sm:$0xff]
        %v6942 = vld [vmem:[#allocation4 + $0x80] sm:$0xff]
        %v6943 = vld [vmem:[#allocation4 + $0x88] sm:$0xff]
        %v6944 = vld [vmem:[#allocation4 + $0x90] sm:$0xff]
        %v6945 = vld [vmem:[#allocation4 + $0x98] sm:$0xff]
        %v6946 = vld [vmem:[#allocation4 + $0xa0] sm:$0xff]
        %v6947 = vld [vmem:[#allocation4 + $0xa8] sm:$0xff]
        %v6948 = vld [vmem:[#allocation4 + $0xb0] sm:$0xff]
        %v6949 = vld [vmem:[#allocation4 + $0xb8] sm:$0xff]
        %v6950 = vld [vmem:[#allocation4 + $0xc0] sm:$0xff]
        %v6951 = vld [vmem:[#allocation4 + $0xc8] sm:$0xff]
        %v6952 = vld [vmem:[#allocation4 + $0xd0] sm:$0xff]
        %v6953 = vld [vmem:[#allocation4 + $0xd8] sm:$0xff]
        %v6954 = vld [vmem:[#allocation4 + $0xe0] sm:$0xff]
        %v6955 = vld [vmem:[#allocation4 + $0xe8] sm:$0xff]
        %v6956 = vld [vmem:[#allocation4 + $0xf0] sm:$0xff]
        %v6957 = vld [vmem:[#allocation4 + $0xf8] sm:$0xff]
        %v6958 = vld [vmem:[#allocation4 + $0x100] sm:$0xff]
        %v6959 = vld [vmem:[#allocation4 + $0x108] sm:$0xff]
        %v6960 = vld [vmem:[#allocation4 + $0x110] sm:$0xff]
        %v6961 = vld [vmem:[#allocation4 + $0x118] sm:$0xff]
        %v6962 = vld [vmem:[#allocation4 + $0x120] sm:$0xff]
        %v6963 = vld [vmem:[#allocation4 + $0x128] sm:$0xff]
        %v6964 = vld [vmem:[#allocation4 + $0x130] sm:$0xff]
        %v6965 = vld [vmem:[#allocation4 + $0x138] sm:$0xff]
        %v6966 = vld [vmem:[#allocation4 + $0x140] sm:$0xff]
        %v6967 = vld [vmem:[#allocation4 + $0x148] sm:$0xff]
        %v6968 = vld [vmem:[#allocation4 + $0x150] sm:$0xff]
        %v6969 = vld [vmem:[#allocation4 + $0x158] sm:$0xff]
        %v6970 = vld [vmem:[#allocation4 + $0x160] sm:$0xff]
        %v6971 = vld [vmem:[#allocation4 + $0x168] sm:$0xff]
        %v6972 = vld [vmem:[#allocation4 + $0x170] sm:$0xff]
        %v6973 = vld [vmem:[#allocation4 + $0x178] sm:$0xff]
        %v6974 = vld [vmem:[#allocation4 + $0x180] sm:$0xff]
        %v6975 = vld [vmem:[#allocation4 + $0x188] sm:$0xff]
        %v6976 = vld [vmem:[#allocation4 + $0x190] sm:$0xff]
        %v6977 = vld [vmem:[#allocation4 + $0x198] sm:$0xff]
        %v6978 = vld [vmem:[#allocation4 + $0x1a0] sm:$0xff]
        %v6979 = vld [vmem:[#allocation4 + $0x1a8] sm:$0xff]
        %v6980 = vld [vmem:[#allocation4 + $0x1b0] sm:$0xff]
        %v6981 = vld [vmem:[#allocation4 + $0x1b8] sm:$0xff]
        %v6982 = vld [vmem:[#allocation4 + $0x1c0] sm:$0xff]
        %v6983 = vld [vmem:[#allocation4 + $0x1c8] sm:$0xff]
        %v6984 = vld [vmem:[#allocation4 + $0x1d0] sm:$0xff]
        %v6985 = vld [vmem:[#allocation4 + $0x1d8] sm:$0xff]
        %v6986 = vld [vmem:[#allocation4 + $0x1e0] sm:$0xff]
        %v6987 = vld [vmem:[#allocation4 + $0x1e8] sm:$0xff]
        %v6988 = vld [vmem:[#allocation4 + $0x1f0] sm:$0xff]
        %v6989 = vld [vmem:[#allocation4 + $0x1f8] sm:$0xff]
        %v6990 = vld [vmem:[#allocation4 + $0x200] sm:$0xff]
        %v6991 = vld [vmem:[#allocation4 + $0x208] sm:$0xff]
        %v6992 = vld [vmem:[#allocation4 + $0x210] sm:$0xff]
        %v6993 = vld [vmem:[#allocation4 + $0x218] sm:$0xff]
        %v6994 = vld [vmem:[#allocation4 + $0x220] sm:$0xff]
        %v6995 = vld [vmem:[#allocation4 + $0x228] sm:$0xff]
        %v6996 = vld [vmem:[#allocation4 + $0x230] sm:$0xff]
        %v6997 = vld [vmem:[#allocation4 + $0x238] sm:$0xff]
        %v6998 = vld [vmem:[#allocation4 + $0x240] sm:$0xff]
        %v6999 = vld [vmem:[#allocation4 + $0x248] sm:$0xff]
        %v7000 = vld [vmem:[#allocation4 + $0x250] sm:$0xff]
        %v7001 = vld [vmem:[#allocation4 + $0x258] sm:$0xff]
        %v7002 = vld [vmem:[#allocation4 + $0x260] sm:$0xff]
        %v7003 = vld [vmem:[#allocation4 + $0x268] sm:$0xff]
        %v7004 = vld [vmem:[#allocation4 + $0x270] sm:$0xff]
        %v7005 = vld [vmem:[#allocation4 + $0x278] sm:$0xff]
        %v7006 = vld [vmem:[#allocation4 + $0x280] sm:$0xff]
        %v7007 = vld [vmem:[#allocation4 + $0x288] sm:$0xff]
        %v7008 = vld [vmem:[#allocation4 + $0x290] sm:$0xff]
        %v7009 = vld [vmem:[#allocation4 + $0x298] sm:$0xff]
        %v7010 = vld [vmem:[#allocation4 + $0x2a0] sm:$0xff]
        %v7011 = vld [vmem:[#allocation4 + $0x2a8] sm:$0xff]
        %v7012 = vld [vmem:[#allocation4 + $0x2b0] sm:$0xff]
        %v7013 = vld [vmem:[#allocation4 + $0x2b8] sm:$0xff]
        %v7014 = vld [vmem:[#allocation4 + $0x2c0] sm:$0xff]
        %v7015 = vld [vmem:[#allocation4 + $0x2c8] sm:$0xff]
        %v7016 = vld [vmem:[#allocation4 + $0x2d0] sm:$0xff]
        %v7017 = vld [vmem:[#allocation4 + $0x2d8] sm:$0xff]
        %v7018 = vld [vmem:[#allocation4 + $0x2e0] sm:$0xff]
        %v7019 = vld [vmem:[#allocation4 + $0x2e8] sm:$0xff]
        %v7020 = vld [vmem:[#allocation4 + $0x2f0] sm:$0xff]
        %v7021 = vld [vmem:[#allocation4 + $0x2f8] sm:$0xff]
        %v7022 = vld [vmem:[#allocation4 + $0x300] sm:$0xff]
        %v7023 = vld [vmem:[#allocation4 + $0x308] sm:$0xff]
        %v7024 = vld [vmem:[#allocation4 + $0x310] sm:$0xff]
        %v7025 = vld [vmem:[#allocation4 + $0x318] sm:$0xff]
        %v7026 = vld [vmem:[#allocation4 + $0x320] sm:$0xff]
        %v7027 = vld [vmem:[#allocation4 + $0x328] sm:$0xff]
        %v7028 = vld [vmem:[#allocation4 + $0x330] sm:$0xff]
        %v7029 = vld [vmem:[#allocation4 + $0x338] sm:$0xff]
        %v7030 = vld [vmem:[#allocation4 + $0x340] sm:$0xff]
        %v7031 = vld [vmem:[#allocation4 + $0x348] sm:$0xff]
        %v7032 = vld [vmem:[#allocation4 + $0x350] sm:$0xff]
        %v7033 = vld [vmem:[#allocation4 + $0x358] sm:$0xff]
        %v7034 = vld [vmem:[#allocation4 + $0x360] sm:$0xff]
        %v7035 = vld [vmem:[#allocation4 + $0x368] sm:$0xff]
        %v7036 = vld [vmem:[#allocation4 + $0x370] sm:$0xff]
        %v7037 = vld [vmem:[#allocation4 + $0x378] sm:$0xff]
        %v7038 = vld [vmem:[#allocation4 + $0x380] sm:$0xff]
        %v7039 = vld [vmem:[#allocation4 + $0x388] sm:$0xff]
        %v7040 = vld [vmem:[#allocation4 + $0x390] sm:$0xff]
        %v7041 = vld [vmem:[#allocation4 + $0x398] sm:$0xff]
        %v7042 = vld [vmem:[#allocation4 + $0x3a0] sm:$0xff]
        %v7043 = vld [vmem:[#allocation4 + $0x3a8] sm:$0xff]
        %v7044 = vld [vmem:[#allocation4 + $0x3b0] sm:$0xff]
        %v7045 = vld [vmem:[#allocation4 + $0x3b8] sm:$0xff]
        %v7046 = vld [vmem:[#allocation4 + $0x3c0] sm:$0xff]
        %v7047 = vld [vmem:[#allocation4 + $0x3c8] sm:$0xff]
        %v7048 = vld [vmem:[#allocation4 + $0x3d0] sm:$0xff]
        %v7049 = vld [vmem:[#allocation4 + $0x3d8] sm:$0xff]
        %v7050 = vld [vmem:[#allocation4 + $0x3e0] sm:$0xff]
        %v7051 = vld [vmem:[#allocation4 + $0x3e8] sm:$0xff]
        %v7052 = vld [vmem:[#allocation4 + $0x3f0] sm:$0xff]
        %v7053 = vld [vmem:[#allocation4 + $0x3f8] sm:$0xff]
        %v7054 = vld [vmem:[#allocation4 + $0x400] sm:$0xff]
        %v7055 = vld [vmem:[#allocation4 + $0x408] sm:$0xff]
        %v7056 = vld [vmem:[#allocation4 + $0x410] sm:$0xff]
        %v7057 = vld [vmem:[#allocation4 + $0x418] sm:$0xff]
        %v7058 = vld [vmem:[#allocation4 + $0x420] sm:$0xff]
        %v7059 = vld [vmem:[#allocation4 + $0x428] sm:$0xff]
        %v7060 = vld [vmem:[#allocation4 + $0x430] sm:$0xff]
        %v7061 = vld [vmem:[#allocation4 + $0x438] sm:$0xff]
        %v7062 = vld [vmem:[#allocation4 + $0x440] sm:$0xff]
        %v7063 = vld [vmem:[#allocation4 + $0x448] sm:$0xff]
        %v7064 = vld [vmem:[#allocation4 + $0x450] sm:$0xff]
        %v7065 = vld [vmem:[#allocation4 + $0x458] sm:$0xff]
        %v7066 = vld [vmem:[#allocation4 + $0x460] sm:$0xff]
        %v7067 = vld [vmem:[#allocation4 + $0x468] sm:$0xff]
        %v7068 = vld [vmem:[#allocation4 + $0x470] sm:$0xff]
        %v7069 = vld [vmem:[#allocation4 + $0x478] sm:$0xff]
        %v7070 = vld [vmem:[%s2] sm:$0xf]
        %v7071 = vld [vmem:[%s2 + $0x4] sm:$0xf]
        %v7072 = vld [vmem:[%s2 + $0x8] sm:$0xf]
        %v7073 = vld [vmem:[%s2 + $0xc] sm:$0xf]
        %v7074 = vld [vmem:[%s2 + $0x10] sm:$0xf]
        %v7075 = vld [vmem:[%s2 + $0x14] sm:$0xf]
        %v7076 = vld [vmem:[%s2 + $0x18] sm:$0xf]
        %v7077 = vld [vmem:[%s2 + $0x1c] sm:$0xf]
        %v7078 = vld [vmem:[%s2 + $0x20] sm:$0xf]
        %v7079 = vld [vmem:[%s2 + $0x24] sm:$0xf]
        %v7080 = vld [vmem:[%s2 + $0x28] sm:$0xf]
        %v7081 = vld [vmem:[%s2 + $0x2c] sm:$0xf]
        %v7082 = vld [vmem:[%s2 + $0x30] sm:$0xf]
        %v7083 = vld [vmem:[%s2 + $0x34] sm:$0xf]
        %v7084 = vld [vmem:[%s2 + $0x38] sm:$0xf]
        %v7085 = vld [vmem:[%s2 + $0x3c] sm:$0xf]
        %v7086 = vld [vmem:[%s2 + $0x40] sm:$0xf]
        %v7087 = vld [vmem:[%s2 + $0x44] sm:$0xf]
        %v7088 = vld [vmem:[%s2 + $0x48] sm:$0xf]
        %v7089 = vld [vmem:[%s2 + $0x4c] sm:$0xf]
        %v7090 = vld [vmem:[%s2 + $0x50] sm:$0xf]
        %v7091 = vld [vmem:[%s2 + $0x54] sm:$0xf]
        %v7092 = vld [vmem:[%s2 + $0x58] sm:$0xf]
        %v7093 = vld [vmem:[%s2 + $0x5c] sm:$0xf]
        %v7094 = vld [vmem:[%s2 + $0x60] sm:$0xf]
        %v7095 = vld [vmem:[%s2 + $0x64] sm:$0xf]
        %v7096 = vld [vmem:[%s2 + $0x68] sm:$0xf]
        %v7097 = vld [vmem:[%s2 + $0x6c] sm:$0xf]
        %v7098 = vld [vmem:[%s2 + $0x70] sm:$0xf]
        %v7099 = vld [vmem:[%s2 + $0x74] sm:$0xf]
        %v7100 = vld [vmem:[%s2 + $0x78] sm:$0xf]
        %v7101 = vld [vmem:[%s2 + $0x7c] sm:$0xf]
        %v7102 = vld [vmem:[%s2 + $0x80] sm:$0xf]
        %v7103 = vld [vmem:[%s2 + $0x84] sm:$0xf]
        %v7104 = vld [vmem:[%s2 + $0x88] sm:$0xf]
        %v7105 = vld [vmem:[%s2 + $0x8c] sm:$0xf]
        %v7106 = vld [vmem:[%s2 + $0x90] sm:$0xf]
        %v7107 = vld [vmem:[%s2 + $0x94] sm:$0xf]
        %v7108 = vld [vmem:[%s2 + $0x98] sm:$0xf]
        %v7109 = vld [vmem:[%s2 + $0x9c] sm:$0xf]
        %v7110 = vld [vmem:[%s2 + $0xa0] sm:$0xf]
        %v7111 = vld [vmem:[%s2 + $0xa4] sm:$0xf]
        %v7112 = vld [vmem:[%s2 + $0xa8] sm:$0xf]
        %v7113 = vld [vmem:[%s2 + $0xac] sm:$0xf]
        %v7114 = vld [vmem:[%s2 + $0xb0] sm:$0xf]
        %v7115 = vld [vmem:[%s2 + $0xb4] sm:$0xf]
        %v7116 = vld [vmem:[%s2 + $0xb8] sm:$0xf]
        %v7117 = vld [vmem:[%s2 + $0xbc] sm:$0xf]
        %v7118 = vld [vmem:[%s2 + $0xc0] sm:$0xf]
        %v7119 = vld [vmem:[%s2 + $0xc4] sm:$0xf]
        %v7120 = vld [vmem:[%s2 + $0xc8] sm:$0xf]
        %v7121 = vld [vmem:[%s2 + $0xcc] sm:$0xf]
        %v7122 = vld [vmem:[%s2 + $0xd0] sm:$0xf]
        %v7123 = vld [vmem:[%s2 + $0xd4] sm:$0xf]
        %v7124 = vld [vmem:[%s2 + $0xd8] sm:$0xf]
        %v7125 = vld [vmem:[%s2 + $0xdc] sm:$0xf]
        %v7126 = vld [vmem:[%s2 + $0xe0] sm:$0xf]
        %v7127 = vld [vmem:[%s2 + $0xe4] sm:$0xf]
        %v7128 = vld [vmem:[%s2 + $0xe8] sm:$0xf]
        %v7129 = vld [vmem:[%s2 + $0xec] sm:$0xf]
        %v7130 = vld [vmem:[%s2 + $0xf0] sm:$0xf]
        %v7131 = vld [vmem:[%s2 + $0xf4] sm:$0xf]
        %v7132 = vld [vmem:[%s2 + $0xf8] sm:$0xf]
        %v7133 = vld [vmem:[%s2 + $0xfc] sm:$0xf]
        %v7134 = vld [vmem:[%s2 + $0x100] sm:$0xf]
        %v7135 = vld [vmem:[%s2 + $0x104] sm:$0xf]
        %v7136 = vld [vmem:[%s2 + $0x108] sm:$0xf]
        %v7137 = vld [vmem:[%s2 + $0x10c] sm:$0xf]
        %v7138 = vld [vmem:[%s2 + $0x110] sm:$0xf]
        %v7139 = vld [vmem:[%s2 + $0x114] sm:$0xf]
        %v7140 = vld [vmem:[%s2 + $0x118] sm:$0xf]
        %v7141 = vld [vmem:[%s2 + $0x11c] sm:$0xf]
        %v7142 = vld [vmem:[%s2 + $0x120] sm:$0xf]
        %v7143 = vld [vmem:[%s2 + $0x124] sm:$0xf]
        %v7144 = vld [vmem:[%s2 + $0x128] sm:$0xf]
        %v7145 = vld [vmem:[%s2 + $0x12c] sm:$0xf]
        %v7146 = vld [vmem:[%s2 + $0x130] sm:$0xf]
        %v7147 = vld [vmem:[%s2 + $0x134] sm:$0xf]
        %v7148 = vld [vmem:[%s2 + $0x138] sm:$0xf]
        %v7149 = vld [vmem:[%s2 + $0x13c] sm:$0xf]
        %v7150 = vld [vmem:[%s2 + $0x140] sm:$0xf]
        %v7151 = vld [vmem:[%s2 + $0x144] sm:$0xf]
        %v7152 = vld [vmem:[%s2 + $0x148] sm:$0xf]
        %v7153 = vld [vmem:[%s2 + $0x14c] sm:$0xf]
        %v7154 = vld [vmem:[%s2 + $0x150] sm:$0xf]
        %v7155 = vld [vmem:[%s2 + $0x154] sm:$0xf]
        %v7156 = vld [vmem:[%s2 + $0x158] sm:$0xf]
        %v7157 = vld [vmem:[%s2 + $0x15c] sm:$0xf]
        %v7158 = vld [vmem:[%s2 + $0x160] sm:$0xf]
        %v7159 = vld [vmem:[%s2 + $0x164] sm:$0xf]
        %v7160 = vld [vmem:[%s2 + $0x168] sm:$0xf]
        %v7161 = vld [vmem:[%s2 + $0x16c] sm:$0xf]
        %v7162 = vld [vmem:[%s2 + $0x170] sm:$0xf]
        %v7163 = vld [vmem:[%s2 + $0x174] sm:$0xf]
        %v7164 = vld [vmem:[%s2 + $0x178] sm:$0xf]
        %v7165 = vld [vmem:[%s2 + $0x17c] sm:$0xf]
        %v7166 = vld [vmem:[%s2 + $0x180] sm:$0xf]
        %v7167 = vld [vmem:[%s2 + $0x184] sm:$0xf]
        %v7168 = vld [vmem:[%s2 + $0x188] sm:$0xf]
        %v7169 = vld [vmem:[%s2 + $0x18c] sm:$0xf]
        %v7170 = vld [vmem:[%s2 + $0x190] sm:$0xf]
        %v7171 = vld [vmem:[%s2 + $0x194] sm:$0xf]
        %v7172 = vld [vmem:[%s2 + $0x198] sm:$0xf]
        %v7173 = vld [vmem:[%s2 + $0x19c] sm:$0xf]
        %v7174 = vld [vmem:[%s2 + $0x1a0] sm:$0xf]
        %v7175 = vld [vmem:[%s2 + $0x1a4] sm:$0xf]
        %v7176 = vld [vmem:[%s2 + $0x1a8] sm:$0xf]
        %v7177 = vld [vmem:[%s2 + $0x1ac] sm:$0xf]
        %v7178 = vld [vmem:[%s2 + $0x1b0] sm:$0xf]
        %v7179 = vld [vmem:[%s2 + $0x1b4] sm:$0xf]
        %v7180 = vld [vmem:[%s2 + $0x1b8] sm:$0xf]
        %v7181 = vld [vmem:[%s2 + $0x1bc] sm:$0xf]
        %v7182 = vld [vmem:[%s2 + $0x1c0] sm:$0xf]
        %v7183 = vld [vmem:[%s2 + $0x1c4] sm:$0xf]
        %v7184 = vld [vmem:[%s2 + $0x1c8] sm:$0xf]
        %v7185 = vld [vmem:[%s2 + $0x1cc] sm:$0xf]
        %v7186 = vld [vmem:[%s2 + $0x1d0] sm:$0xf]
        %v7187 = vld [vmem:[%s2 + $0x1d4] sm:$0xf]
        %v7188 = vld [vmem:[%s2 + $0x1d8] sm:$0xf]
        %v7189 = vld [vmem:[%s2 + $0x1dc] sm:$0xf]
        %v7190 = vld [vmem:[%s2 + $0x1e0] sm:$0xf]
        %v7191 = vld [vmem:[%s2 + $0x1e4] sm:$0xf]
        %v7192 = vld [vmem:[%s2 + $0x1e8] sm:$0xf]
        %v7193 = vld [vmem:[%s2 + $0x1ec] sm:$0xf]
        %v7194 = vld [vmem:[%s2 + $0x1f0] sm:$0xf]
        %v7195 = vld [vmem:[%s2 + $0x1f4] sm:$0xf]
        %v7196 = vld [vmem:[%s2 + $0x1f8] sm:$0xf]
        %v7197 = vld [vmem:[%s2 + $0x1fc] sm:$0xf]
        %v7198 = vld [vmem:[%s2 + $0x200] sm:$0xf]
        %v7199 = vld [vmem:[%s2 + $0x204] sm:$0xf]
        %v7200 = vld [vmem:[%s2 + $0x208] sm:$0xf]
        %v7201 = vld [vmem:[%s2 + $0x20c] sm:$0xf]
        %v7202 = vld [vmem:[%s2 + $0x210] sm:$0xf]
        %v7203 = vld [vmem:[%s2 + $0x214] sm:$0xf]
        %v7204 = vld [vmem:[%s2 + $0x218] sm:$0xf]
        %v7205 = vld [vmem:[%s2 + $0x21c] sm:$0xf]
        %v7206 = vld [vmem:[%s2 + $0x220] sm:$0xf]
        %v7207 = vld [vmem:[%s2 + $0x224] sm:$0xf]
        %v7208 = vld [vmem:[%s2 + $0x228] sm:$0xf]
        %v7209 = vld [vmem:[%s2 + $0x22c] sm:$0xf]
        %v7210 = vld [vmem:[%s2 + $0x230] sm:$0xf]
        %v7211 = vld [vmem:[%s2 + $0x234] sm:$0xf]
        %v7212 = vld [vmem:[%s2 + $0x238] sm:$0xf]
        %v7213 = vld [vmem:[%s2 + $0x23c] sm:$0xf]
        %v7358 = vunpack.c.l.b16 %v7070
        %v7359 = vunpack.c.l.b16 %v7071
        %v7360 = vunpack.c.l.b16 %v7072
        %v7361 = vunpack.c.l.b16 %v7073
        %v7362 = vunpack.c.l.b16 %v7074
        %v7363 = vunpack.c.l.b16 %v7075
        %v7364 = vunpack.c.l.b16 %v7076
        %v7365 = vunpack.c.l.b16 %v7077
        %v7366 = vunpack.c.l.b16 %v7078
        %v7367 = vunpack.c.l.b16 %v7079
        %v7368 = vunpack.c.l.b16 %v7080
        %v7369 = vunpack.c.l.b16 %v7081
        %v7370 = vunpack.c.l.b16 %v7082
        %v7371 = vunpack.c.l.b16 %v7083
        %v7372 = vunpack.c.l.b16 %v7084
        %v7373 = vunpack.c.l.b16 %v7085
        %v7374 = vunpack.c.l.b16 %v7086
        %v7375 = vunpack.c.l.b16 %v7087
        %v7376 = vunpack.c.l.b16 %v7088
        %v7377 = vunpack.c.l.b16 %v7089
        %v7378 = vunpack.c.l.b16 %v7090
        %v7379 = vunpack.c.l.b16 %v7091
        %v7380 = vunpack.c.l.b16 %v7092
        %v7381 = vunpack.c.l.b16 %v7093
        %v7382 = vunpack.c.l.b16 %v7094
        %v7383 = vunpack.c.l.b16 %v7095
        %v7384 = vunpack.c.l.b16 %v7096
        %v7385 = vunpack.c.l.b16 %v7097
        %v7386 = vunpack.c.l.b16 %v7098
        %v7387 = vunpack.c.l.b16 %v7099
        %v7388 = vunpack.c.l.b16 %v7100
        %v7389 = vunpack.c.l.b16 %v7101
        %v7390 = vunpack.c.l.b16 %v7102
        %v7391 = vunpack.c.l.b16 %v7103
        %v7392 = vunpack.c.l.b16 %v7104
        %v7393 = vunpack.c.l.b16 %v7105
        %v7394 = vunpack.c.l.b16 %v7106
        %v7395 = vunpack.c.l.b16 %v7107
        %v7396 = vunpack.c.l.b16 %v7108
        %v7397 = vunpack.c.l.b16 %v7109
        %v7398 = vunpack.c.l.b16 %v7110
        %v7399 = vunpack.c.l.b16 %v7111
        %v7400 = vunpack.c.l.b16 %v7112
        %v7401 = vunpack.c.l.b16 %v7113
        %v7402 = vunpack.c.l.b16 %v7114
        %v7403 = vunpack.c.l.b16 %v7115
        %v7404 = vunpack.c.l.b16 %v7116
        %v7405 = vunpack.c.l.b16 %v7117
        %v7406 = vunpack.c.l.b16 %v7118
        %v7407 = vunpack.c.l.b16 %v7119
        %v7408 = vunpack.c.l.b16 %v7120
        %v7409 = vunpack.c.l.b16 %v7121
        %v7410 = vunpack.c.l.b16 %v7122
        %v7411 = vunpack.c.l.b16 %v7123
        %v7412 = vunpack.c.l.b16 %v7124
        %v7413 = vunpack.c.l.b16 %v7125
        %v7414 = vunpack.c.l.b16 %v7126
        %v7415 = vunpack.c.l.b16 %v7127
        %v7416 = vunpack.c.l.b16 %v7128
        %v7417 = vunpack.c.l.b16 %v7129
        %v7418 = vunpack.c.l.b16 %v7130
        %v7419 = vunpack.c.l.b16 %v7131
        %v7420 = vunpack.c.l.b16 %v7132
        %v7421 = vunpack.c.l.b16 %v7133
        %v7422 = vunpack.c.l.b16 %v7134
        %v7423 = vunpack.c.l.b16 %v7135
        %v7424 = vunpack.c.l.b16 %v7136
        %v7425 = vunpack.c.l.b16 %v7137
        %v7426 = vunpack.c.l.b16 %v7138
        %v7427 = vunpack.c.l.b16 %v7139
        %v7428 = vunpack.c.l.b16 %v7140
        %v7429 = vunpack.c.l.b16 %v7141
        %v7430 = vunpack.c.l.b16 %v7142
        %v7431 = vunpack.c.l.b16 %v7143
        %v7432 = vunpack.c.l.b16 %v7144
        %v7433 = vunpack.c.l.b16 %v7145
        %v7434 = vunpack.c.l.b16 %v7146
        %v7435 = vunpack.c.l.b16 %v7147
        %v7436 = vunpack.c.l.b16 %v7148
        %v7437 = vunpack.c.l.b16 %v7149
        %v7438 = vunpack.c.l.b16 %v7150
        %v7439 = vunpack.c.l.b16 %v7151
        %v7440 = vunpack.c.l.b16 %v7152
        %v7441 = vunpack.c.l.b16 %v7153
        %v7442 = vunpack.c.l.b16 %v7154
        %v7443 = vunpack.c.l.b16 %v7155
        %v7444 = vunpack.c.l.b16 %v7156
        %v7445 = vunpack.c.l.b16 %v7157
        %v7446 = vunpack.c.l.b16 %v7158
        %v7447 = vunpack.c.l.b16 %v7159
        %v7448 = vunpack.c.l.b16 %v7160
        %v7449 = vunpack.c.l.b16 %v7161
        %v7450 = vunpack.c.l.b16 %v7162
        %v7451 = vunpack.c.l.b16 %v7163
        %v7452 = vunpack.c.l.b16 %v7164
        %v7453 = vunpack.c.l.b16 %v7165
        %v7454 = vunpack.c.l.b16 %v7166
        %v7455 = vunpack.c.l.b16 %v7167
        %v7456 = vunpack.c.l.b16 %v7168
        %v7457 = vunpack.c.l.b16 %v7169
        %v7458 = vunpack.c.l.b16 %v7170
        %v7459 = vunpack.c.l.b16 %v7171
        %v7460 = vunpack.c.l.b16 %v7172
        %v7461 = vunpack.c.l.b16 %v7173
        %v7462 = vunpack.c.l.b16 %v7174
        %v7463 = vunpack.c.l.b16 %v7175
        %v7464 = vunpack.c.l.b16 %v7176
        %v7465 = vunpack.c.l.b16 %v7177
        %v7466 = vunpack.c.l.b16 %v7178
        %v7467 = vunpack.c.l.b16 %v7179
        %v7468 = vunpack.c.l.b16 %v7180
        %v7469 = vunpack.c.l.b16 %v7181
        %v7470 = vunpack.c.l.b16 %v7182
        %v7471 = vunpack.c.l.b16 %v7183
        %v7472 = vunpack.c.l.b16 %v7184
        %v7473 = vunpack.c.l.b16 %v7185
        %v7474 = vunpack.c.l.b16 %v7186
        %v7475 = vunpack.c.l.b16 %v7187
        %v7476 = vunpack.c.l.b16 %v7188
        %v7477 = vunpack.c.l.b16 %v7189
        %v7478 = vunpack.c.l.b16 %v7190
        %v7479 = vunpack.c.l.b16 %v7191
        %v7480 = vunpack.c.l.b16 %v7192
        %v7481 = vunpack.c.l.b16 %v7193
        %v7482 = vunpack.c.l.b16 %v7194
        %v7483 = vunpack.c.l.b16 %v7195
        %v7484 = vunpack.c.l.b16 %v7196
        %v7485 = vunpack.c.l.b16 %v7197
        %v7486 = vunpack.c.l.b16 %v7198
        %v7487 = vunpack.c.l.b16 %v7199
        %v7488 = vunpack.c.l.b16 %v7200
        %v7489 = vunpack.c.l.b16 %v7201
        %v7490 = vunpack.c.l.b16 %v7202
        %v7491 = vunpack.c.l.b16 %v7203
        %v7492 = vunpack.c.l.b16 %v7204
        %v7493 = vunpack.c.l.b16 %v7205
        %v7494 = vunpack.c.l.b16 %v7206
        %v7495 = vunpack.c.l.b16 %v7207
        %v7496 = vunpack.c.l.b16 %v7208
        %v7497 = vunpack.c.l.b16 %v7209
        %v7498 = vunpack.c.l.b16 %v7210
        %v7499 = vunpack.c.l.b16 %v7211
        %v7500 = vunpack.c.l.b16 %v7212
        %v7501 = vunpack.c.l.b16 %v7213
        %v7502 = vpack.c.b16 %v7359, %v7358
        %v7503 = vpack.c.b16 %v7361, %v7360
        %v7504 = vpack.c.b16 %v7363, %v7362
        %v7505 = vpack.c.b16 %v7365, %v7364
        %v7506 = vpack.c.b16 %v7367, %v7366
        %v7507 = vpack.c.b16 %v7369, %v7368
        %v7508 = vpack.c.b16 %v7371, %v7370
        %v7509 = vpack.c.b16 %v7373, %v7372
        %v7510 = vpack.c.b16 %v7375, %v7374
        %v7511 = vpack.c.b16 %v7377, %v7376
        %v7512 = vpack.c.b16 %v7379, %v7378
        %v7513 = vpack.c.b16 %v7381, %v7380
        %v7514 = vpack.c.b16 %v7383, %v7382
        %v7515 = vpack.c.b16 %v7385, %v7384
        %v7516 = vpack.c.b16 %v7387, %v7386
        %v7517 = vpack.c.b16 %v7389, %v7388
        %v7518 = vpack.c.b16 %v7391, %v7390
        %v7519 = vpack.c.b16 %v7393, %v7392
        %v7520 = vpack.c.b16 %v7395, %v7394
        %v7521 = vpack.c.b16 %v7397, %v7396
        %v7522 = vpack.c.b16 %v7399, %v7398
        %v7523 = vpack.c.b16 %v7401, %v7400
        %v7524 = vpack.c.b16 %v7403, %v7402
        %v7525 = vpack.c.b16 %v7405, %v7404
        %v7526 = vpack.c.b16 %v7407, %v7406
        %v7527 = vpack.c.b16 %v7409, %v7408
        %v7528 = vpack.c.b16 %v7411, %v7410
        %v7529 = vpack.c.b16 %v7413, %v7412
        %v7530 = vpack.c.b16 %v7415, %v7414
        %v7531 = vpack.c.b16 %v7417, %v7416
        %v7532 = vpack.c.b16 %v7419, %v7418
        %v7533 = vpack.c.b16 %v7421, %v7420
        %v7534 = vpack.c.b16 %v7423, %v7422
        %v7535 = vpack.c.b16 %v7425, %v7424
        %v7536 = vpack.c.b16 %v7427, %v7426
        %v7537 = vpack.c.b16 %v7429, %v7428
        %v7538 = vpack.c.b16 %v7431, %v7430
        %v7539 = vpack.c.b16 %v7433, %v7432
        %v7540 = vpack.c.b16 %v7435, %v7434
        %v7541 = vpack.c.b16 %v7437, %v7436
        %v7542 = vpack.c.b16 %v7439, %v7438
        %v7543 = vpack.c.b16 %v7441, %v7440
        %v7544 = vpack.c.b16 %v7443, %v7442
        %v7545 = vpack.c.b16 %v7445, %v7444
        %v7546 = vpack.c.b16 %v7447, %v7446
        %v7547 = vpack.c.b16 %v7449, %v7448
        %v7548 = vpack.c.b16 %v7451, %v7450
        %v7549 = vpack.c.b16 %v7453, %v7452
        %v7550 = vpack.c.b16 %v7455, %v7454
        %v7551 = vpack.c.b16 %v7457, %v7456
        %v7552 = vpack.c.b16 %v7459, %v7458
        %v7553 = vpack.c.b16 %v7461, %v7460
        %v7554 = vpack.c.b16 %v7463, %v7462
        %v7555 = vpack.c.b16 %v7465, %v7464
        %v7556 = vpack.c.b16 %v7467, %v7466
        %v7557 = vpack.c.b16 %v7469, %v7468
        %v7558 = vpack.c.b16 %v7471, %v7470
        %v7559 = vpack.c.b16 %v7473, %v7472
        %v7560 = vpack.c.b16 %v7475, %v7474
        %v7561 = vpack.c.b16 %v7477, %v7476
        %v7562 = vpack.c.b16 %v7479, %v7478
        %v7563 = vpack.c.b16 %v7481, %v7480
        %v7564 = vpack.c.b16 %v7483, %v7482
        %v7565 = vpack.c.b16 %v7485, %v7484
        %v7566 = vpack.c.b16 %v7487, %v7486
        %v7567 = vpack.c.b16 %v7489, %v7488
        %v7568 = vpack.c.b16 %v7491, %v7490
        %v7569 = vpack.c.b16 %v7493, %v7492
        %v7570 = vpack.c.b16 %v7495, %v7494
        %v7571 = vpack.c.b16 %v7497, %v7496
        %v7572 = vpack.c.b16 %v7499, %v7498
        %v7573 = vpack.c.b16 %v7501, %v7500
        %7646 = vmatprep.subr.bf16.mxu0 0
        %7647 = vmatpush1.bf16.msra.mxu0 %v7502
        %7648 = vmatprep.subr.bf16.mxu0 0
        %7649 = vmatpush1.bf16.msra.mxu0 %v7503
        %7650 = vmatprep.subr.bf16.mxu0 0
        %7651 = vmatpush1.bf16.msra.mxu0 %v7504
        %7652 = vmatprep.subr.bf16.mxu0 0
        %7653 = vmatpush1.bf16.msra.mxu0 %v7505
        %7654 = vmatprep.subr.bf16.mxu0 0
        %7655 = vmatpush1.bf16.msra.mxu0 %v7506
        %7656 = vmatprep.subr.bf16.mxu0 0
        %7657 = vmatpush1.bf16.msra.mxu0 %v7507
        %7658 = vmatprep.subr.bf16.mxu0 0
        %7659 = vmatpush1.bf16.msra.mxu0 %v7508
        %7660 = vmatprep.subr.bf16.mxu0 0
        %7661 = vmatpush1.bf16.msra.mxu0 %v7509
        %7662 = vmatprep.subr.bf16.mxu0 0
        %7663 = vmatpush1.bf16.msra.mxu0 %v7510
        %7664 = vmatprep.subr.bf16.mxu0 0
        %7665 = vmatpush1.bf16.msra.mxu0 %v7511
        %7666 = vmatprep.subr.bf16.mxu0 0
        %7667 = vmatpush1.bf16.msra.mxu0 %v7512
        %7668 = vmatprep.subr.bf16.mxu0 0
        %7669 = vmatpush1.bf16.msra.mxu0 %v7513
        %7670 = vmatprep.subr.bf16.mxu0 0
        %7671 = vmatpush1.bf16.msra.mxu0 %v7514
        %7672 = vmatprep.subr.bf16.mxu0 0
        %7673 = vmatpush1.bf16.msra.mxu0 %v7515
        %7674 = vmatprep.subr.bf16.mxu0 0
        %7675 = vmatpush1.bf16.msra.mxu0 %v7516
        %7676 = vmatprep.subr.bf16.mxu0 0
        %7677 = vmatpush1.bf16.msra.mxu0 %v7517
        %7678 = vmatprep.mubr.bf16.mxu0 %v6927
        %7679 = vmatmul.mubr.bf16.gmra.mrb[0].mxu0 %v6926
        %v7680 = vpop.f32.mrb[0].mxu0
        %v7681 = vadd.f32 0.0, %v7680
        %v7682 = vpop.f32.mrb[0].mxu0
        %v7683 = vpop.f32.mrb[0].mxu0
        %v7684 = vadd.f32 0.0, %v7683
        %v7685 = vpop.f32.mrb[0].mxu0
        %7686 = vmatprep.mubr.bf16.mxu0 %v6936
        %7687 = vmatmul.mubr.bf16.gmra.mrb[0].mxu0 %v6935
        %v7688 = vpop.f32.mrb[0].mxu0
        %v7689 = vadd.f32 0.0, %v7688
        %v7690 = vpop.f32.mrb[0].mxu0
        %v7691 = vpop.f32.mrb[0].mxu0
        %v7692 = vadd.f32 0.0, %v7691
        %v7693 = vpop.f32.mrb[0].mxu0
        %7694 = vmatprep.mubr.bf16.mxu0 %v6945
        %7695 = vmatmul.mubr.bf16.gmra.mrb[0].mxu0 %v6944
        %v7696 = vpop.f32.mrb[0].mxu0
        %v7697 = vadd.f32 0.0, %v7696
        %v7698 = vpop.f32.mrb[0].mxu0
        %v7699 = vpop.f32.mrb[0].mxu0
        %v7700 = vadd.f32 0.0, %v7699
        %v7701 = vpop.f32.mrb[0].mxu0
        %7702 = vmatprep.mubr.bf16.mxu0 %v6954
        %7703 = vmatmul.mubr.bf16.gmra.mrb[0].mxu0 %v6953
        %v7704 = vpop.f32.mrb[0].mxu0
        %v7705 = vadd.f32 0.0, %v7704
        %v7706 = vpop.f32.mrb[0].mxu0
        %v7707 = vpop.f32.mrb[0].mxu0
        %v7708 = vadd.f32 0.0, %v7707
        %v7709 = vpop.f32.mrb[0].mxu0
        %7710 = vmatprep.mubr.bf16.mxu0 %v6963
        %7711 = vmatmul.mubr.bf16.gmra.mrb[0].mxu0 %v6962
        %v7712 = vpop.f32.mrb[0].mxu0
        %v7713 = vadd.f32 0.0, %v7712
        %v7714 = vpop.f32.mrb[0].mxu0
        %v7715 = vpop.f32.mrb[0].mxu0
        %v7716 = vadd.f32 0.0, %v7715
        %v7717 = vpop.f32.mrb[0].mxu0
        %7718 = vmatprep.mubr.bf16.mxu0 %v6972
        %7719 = vmatmul.mubr.bf16.gmra.mrb[0].mxu0 %v6971
        %v7720 = vpop.f32.mrb[0].mxu0
        %v7721 = vadd.f32 0.0, %v7720
        %v7722 = vpop.f32.mrb[0].mxu0
        %v7723 = vpop.f32.mrb[0].mxu0
        %v7724 = vadd.f32 0.0, %v7723
        %v7725 = vpop.f32.mrb[0].mxu0
        %7726 = vmatprep.mubr.bf16.mxu0 %v6981
        %7727 = vmatmul.mubr.bf16.gmra.mrb[0].mxu0 %v6980
        %v7728 = vpop.f32.mrb[0].mxu0
        %v7729 = vadd.f32 0.0, %v7728
        %v7730 = vpop.f32.mrb[0].mxu0
        %v7731 = vpop.f32.mrb[0].mxu0
        %v7732 = vadd.f32 0.0, %v7731
        %v7733 = vpop.f32.mrb[0].mxu0
        %7734 = vmatprep.mubr.bf16.mxu0 %v6990
        %7735 = vmatmul.mubr.bf16.gmra.mrb[0].mxu0 %v6989
        %v7736 = vpop.f32.mrb[0].mxu0
        %v7737 = vadd.f32 0.0, %v7736
        %v7738 = vpop.f32.mrb[0].mxu0
        %v7739 = vpop.f32.mrb[0].mxu0
        %v7740 = vadd.f32 0.0, %v7739
        %v7741 = vpop.f32.mrb[0].mxu0
        %7742 = vmatprep.mubr.bf16.mxu0 %v6999
        %7743 = vmatmul.mubr.bf16.gmra.mrb[0].mxu0 %v6998
        %v7744 = vpop.f32.mrb[0].mxu0
        %v7745 = vadd.f32 0.0, %v7744
        %v7746 = vpop.f32.mrb[0].mxu0
        %v7747 = vpop.f32.mrb[0].mxu0
        %v7748 = vadd.f32 0.0, %v7747
        %v7749 = vpop.f32.mrb[0].mxu0
        %7750 = vmatprep.mubr.bf16.mxu0 %v7008
        %7751 = vmatmul.mubr.bf16.gmra.mrb[0].mxu0 %v7007
        %v7752 = vpop.f32.mrb[0].mxu0
        %v7753 = vadd.f32 0.0, %v7752
        %v7754 = vpop.f32.mrb[0].mxu0
        %v7755 = vpop.f32.mrb[0].mxu0
        %v7756 = vadd.f32 0.0, %v7755
        %v7757 = vpop.f32.mrb[0].mxu0
        %7758 = vmatprep.mubr.bf16.mxu0 %v7017
        %7759 = vmatmul.mubr.bf16.gmra.mrb[0].mxu0 %v7016
        %v7760 = vpop.f32.mrb[0].mxu0
        %v7761 = vadd.f32 0.0, %v7760
        %v7762 = vpop.f32.mrb[0].mxu0
        %v7763 = vpop.f32.mrb[0].mxu0
        %v7764 = vadd.f32 0.0, %v7763
        %v7765 = vpop.f32.mrb[0].mxu0
        %7766 = vmatprep.mubr.bf16.mxu0 %v7026
        %7767 = vmatmul.mubr.bf16.gmra.mrb[0].mxu0 %v7025
        %v7768 = vpop.f32.mrb[0].mxu0
        %v7769 = vadd.f32 0.0, %v7768
        %v7770 = vpop.f32.mrb[0].mxu0
        %v7771 = vpop.f32.mrb[0].mxu0
        %v7772 = vadd.f32 0.0, %v7771
        %v7773 = vpop.f32.mrb[0].mxu0
        %7774 = vmatprep.mubr.bf16.mxu0 %v7035
        %7775 = vmatmul.mubr.bf16.gmra.mrb[0].mxu0 %v7034
        %v7776 = vpop.f32.mrb[0].mxu0
        %v7777 = vadd.f32 0.0, %v7776
        %v7778 = vpop.f32.mrb[0].mxu0
        %v7779 = vpop.f32.mrb[0].mxu0
        %v7780 = vadd.f32 0.0, %v7779
        %v7781 = vpop.f32.mrb[0].mxu0
        %7782 = vmatprep.mubr.bf16.mxu0 %v7044
        %7783 = vmatmul.mubr.bf16.gmra.mrb[0].mxu0 %v7043
        %v7784 = vpop.f32.mrb[0].mxu0
        %v7785 = vadd.f32 0.0, %v7784
        %v7786 = vpop.f32.mrb[0].mxu0
        %v7787 = vpop.f32.mrb[0].mxu0
        %v7788 = vadd.f32 0.0, %v7787
        %v7789 = vpop.f32.mrb[0].mxu0
        %7790 = vmatprep.mubr.bf16.mxu0 %v7053
        %7791 = vmatmul.mubr.bf16.gmra.mrb[0].mxu0 %v7052
        %v7792 = vpop.f32.mrb[0].mxu0
        %v7793 = vadd.f32 0.0, %v7792
        %v7794 = vpop.f32.mrb[0].mxu0
        %v7795 = vpop.f32.mrb[0].mxu0
        %v7796 = vadd.f32 0.0, %v7795
        %v7797 = vpop.f32.mrb[0].mxu0
        %7798 = vmatprep.mubr.bf16.mxu0 %v7062
        %7799 = vmatmul.mubr.bf16.gmra.mrb[0].mxu0 %v7061
        %v7800 = vpop.f32.mrb[0].mxu0
        %v7801 = vadd.f32 0.0, %v7800
        %v7802 = vpop.f32.mrb[0].mxu0
        %v7803 = vpop.f32.mrb[0].mxu0
        %v7804 = vadd.f32 0.0, %v7803
        %v7805 = vpop.f32.mrb[0].mxu0
        %7806 = vdwg.mxu0
        %7807 = vmatprep.subr.bf16.mxu0 0
        %7808 = vmatpush1.bf16.msra.mxu0 %v7518
        %7809 = vmatprep.subr.bf16.mxu0 0
        %7810 = vmatpush1.bf16.msra.mxu0 %v7519
        %7811 = vmatprep.subr.bf16.mxu0 0
        %7812 = vmatpush1.bf16.msra.mxu0 %v7520
        %7813 = vmatprep.subr.bf16.mxu0 0
        %7814 = vmatpush1.bf16.msra.mxu0 %v7521
        %7815 = vmatprep.subr.bf16.mxu0 0
        %7816 = vmatpush1.bf16.msra.mxu0 %v7522
        %7817 = vmatprep.subr.bf16.mxu0 0
        %7818 = vmatpush1.bf16.msra.mxu0 %v7523
        %7819 = vmatprep.subr.bf16.mxu0 0
        %7820 = vmatpush1.bf16.msra.mxu0 %v7524
        %7821 = vmatprep.subr.bf16.mxu0 0
        %7822 = vmatpush1.bf16.msra.mxu0 %v7525
        %7823 = vmatprep.subr.bf16.mxu0 0
        %7824 = vmatpush1.bf16.msra.mxu0 %v7526
        %7825 = vmatprep.subr.bf16.mxu0 0
        %7826 = vmatpush1.bf16.msra.mxu0 %v7527
        %7827 = vmatprep.subr.bf16.mxu0 0
        %7828 = vmatpush1.bf16.msra.mxu0 %v7528
        %7829 = vmatprep.subr.bf16.mxu0 0
        %7830 = vmatpush1.bf16.msra.mxu0 %v7529
        %7831 = vmatprep.subr.bf16.mxu0 0
        %7832 = vmatpush1.bf16.msra.mxu0 %v7530
        %7833 = vmatprep.subr.bf16.mxu0 0
        %7834 = vmatpush1.bf16.msra.mxu0 %v7531
        %7835 = vmatprep.subr.bf16.mxu0 0
        %7836 = vmatpush1.bf16.msra.mxu0 %v7532
        %7837 = vmatprep.subr.bf16.mxu0 0
        %7838 = vmatpush1.bf16.msra.mxu0 %v7533
        %7839 = vmatprep.mubr.bf16.mxu0 %v6929
        %7840 = vmatmul.mubr.bf16.gmra.mrb[0].mxu0 %v6928
        %v7841 = vpop.f32.mrb[0].mxu0
        %v7842 = vadd.f32 %v7681, %v7841
        %v7843 = vpop.f32.mrb[0].mxu0
        %v7844 = vpop.f32.mrb[0].mxu0
        %v7845 = vadd.f32 %v7684, %v7844
        %v7846 = vpop.f32.mrb[0].mxu0
        %7847 = vmatprep.mubr.bf16.mxu0 %v6938
        %7848 = vmatmul.mubr.bf16.gmra.mrb[0].mxu0 %v6937
        %v7849 = vpop.f32.mrb[0].mxu0
        %v7850 = vadd.f32 %v7689, %v7849
        %v7851 = vpop.f32.mrb[0].mxu0
        %v7852 = vpop.f32.mrb[0].mxu0
        %v7853 = vadd.f32 %v7692, %v7852
        %v7854 = vpop.f32.mrb[0].mxu0
        %7855 = vmatprep.mubr.bf16.mxu0 %v6947
        %7856 = vmatmul.mubr.bf16.gmra.mrb[0].mxu0 %v6946
        %v7857 = vpop.f32.mrb[0].mxu0
        %v7858 = vadd.f32 %v7697, %v7857
        %v7859 = vpop.f32.mrb[0].mxu0
        %v7860 = vpop.f32.mrb[0].mxu0
        %v7861 = vadd.f32 %v7700, %v7860
        %v7862 = vpop.f32.mrb[0].mxu0
        %7863 = vmatprep.mubr.bf16.mxu0 %v6956
        %7864 = vmatmul.mubr.bf16.gmra.mrb[0].mxu0 %v6955
        %v7865 = vpop.f32.mrb[0].mxu0
        %v7866 = vadd.f32 %v7705, %v7865
        %v7867 = vpop.f32.mrb[0].mxu0
        %v7868 = vpop.f32.mrb[0].mxu0
        %v7869 = vadd.f32 %v7708, %v7868
        %v7870 = vpop.f32.mrb[0].mxu0
        %7871 = vmatprep.mubr.bf16.mxu0 %v6965
        %7872 = vmatmul.mubr.bf16.gmra.mrb[0].mxu0 %v6964
        %v7873 = vpop.f32.mrb[0].mxu0
        %v7874 = vadd.f32 %v7713, %v7873
        %v7875 = vpop.f32.mrb[0].mxu0
        %v7876 = vpop.f32.mrb[0].mxu0
        %v7877 = vadd.f32 %v7716, %v7876
        %v7878 = vpop.f32.mrb[0].mxu0
        %7879 = vmatprep.mubr.bf16.mxu0 %v6974
        %7880 = vmatmul.mubr.bf16.gmra.mrb[0].mxu0 %v6973
        %v7881 = vpop.f32.mrb[0].mxu0
        %v7882 = vadd.f32 %v7721, %v7881
        %v7883 = vpop.f32.mrb[0].mxu0
        %v7884 = vpop.f32.mrb[0].mxu0
        %v7885 = vadd.f32 %v7724, %v7884
        %v7886 = vpop.f32.mrb[0].mxu0
        %7887 = vmatprep.mubr.bf16.mxu0 %v6983
        %7888 = vmatmul.mubr.bf16.gmra.mrb[0].mxu0 %v6982
        %v7889 = vpop.f32.mrb[0].mxu0
        %v7890 = vadd.f32 %v7729, %v7889
        %v7891 = vpop.f32.mrb[0].mxu0
        %v7892 = vpop.f32.mrb[0].mxu0
        %v7893 = vadd.f32 %v7732, %v7892
        %v7894 = vpop.f32.mrb[0].mxu0
        %7895 = vmatprep.mubr.bf16.mxu0 %v6992
        %7896 = vmatmul.mubr.bf16.gmra.mrb[0].mxu0 %v6991
        %v7897 = vpop.f32.mrb[0].mxu0
        %v7898 = vadd.f32 %v7737, %v7897
        %v7899 = vpop.f32.mrb[0].mxu0
        %v7900 = vpop.f32.mrb[0].mxu0
        %v7901 = vadd.f32 %v7740, %v7900
        %v7902 = vpop.f32.mrb[0].mxu0
        %7903 = vmatprep.mubr.bf16.mxu0 %v7001
        %7904 = vmatmul.mubr.bf16.gmra.mrb[0].mxu0 %v7000
        %v7905 = vpop.f32.mrb[0].mxu0
        %v7906 = vadd.f32 %v7745, %v7905
        %v7907 = vpop.f32.mrb[0].mxu0
        %v7908 = vpop.f32.mrb[0].mxu0
        %v7909 = vadd.f32 %v7748, %v7908
        %v7910 = vpop.f32.mrb[0].mxu0
        %7911 = vmatprep.mubr.bf16.mxu0 %v7010
        %7912 = vmatmul.mubr.bf16.gmra.mrb[0].mxu0 %v7009
        %v7913 = vpop.f32.mrb[0].mxu0
        %v7914 = vadd.f32 %v7753, %v7913
        %v7915 = vpop.f32.mrb[0].mxu0
        %v7916 = vpop.f32.mrb[0].mxu0
        %v7917 = vadd.f32 %v7756, %v7916
        %v7918 = vpop.f32.mrb[0].mxu0
        %7919 = vmatprep.mubr.bf16.mxu0 %v7019
        %7920 = vmatmul.mubr.bf16.gmra.mrb[0].mxu0 %v7018
        %v7921 = vpop.f32.mrb[0].mxu0
        %v7922 = vadd.f32 %v7761, %v7921
        %v7923 = vpop.f32.mrb[0].mxu0
        %v7924 = vpop.f32.mrb[0].mxu0
        %v7925 = vadd.f32 %v7764, %v7924
        %v7926 = vpop.f32.mrb[0].mxu0
        %7927 = vmatprep.mubr.bf16.mxu0 %v7028
        %7928 = vmatmul.mubr.bf16.gmra.mrb[0].mxu0 %v7027
        %v7929 = vpop.f32.mrb[0].mxu0
        %v7930 = vadd.f32 %v7769, %v7929
        %v7931 = vpop.f32.mrb[0].mxu0
        %v7932 = vpop.f32.mrb[0].mxu0
        %v7933 = vadd.f32 %v7772, %v7932
        %v7934 = vpop.f32.mrb[0].mxu0
        %7935 = vmatprep.mubr.bf16.mxu0 %v7037
        %7936 = vmatmul.mubr.bf16.gmra.mrb[0].mxu0 %v7036
        %v7937 = vpop.f32.mrb[0].mxu0
        %v7938 = vadd.f32 %v7777, %v7937
        %v7939 = vpop.f32.mrb[0].mxu0
        %v7940 = vpop.f32.mrb[0].mxu0
        %v7941 = vadd.f32 %v7780, %v7940
        %v7942 = vpop.f32.mrb[0].mxu0
        %7943 = vmatprep.mubr.bf16.mxu0 %v7046
        %7944 = vmatmul.mubr.bf16.gmra.mrb[0].mxu0 %v7045
        %v7945 = vpop.f32.mrb[0].mxu0
        %v7946 = vadd.f32 %v7785, %v7945
        %v7947 = vpop.f32.mrb[0].mxu0
        %v7948 = vpop.f32.mrb[0].mxu0
        %v7949 = vadd.f32 %v7788, %v7948
        %v7950 = vpop.f32.mrb[0].mxu0
        %7951 = vmatprep.mubr.bf16.mxu0 %v7055
        %7952 = vmatmul.mubr.bf16.gmra.mrb[0].mxu0 %v7054
        %v7953 = vpop.f32.mrb[0].mxu0
        %v7954 = vadd.f32 %v7793, %v7953
        %v7955 = vpop.f32.mrb[0].mxu0
        %v7956 = vpop.f32.mrb[0].mxu0
        %v7957 = vadd.f32 %v7796, %v7956
        %v7958 = vpop.f32.mrb[0].mxu0
        %7959 = vmatprep.mubr.bf16.mxu0 %v7064
        %7960 = vmatmul.mubr.bf16.gmra.mrb[0].mxu0 %v7063
        %v7961 = vpop.f32.mrb[0].mxu0
        %v7962 = vadd.f32 %v7801, %v7961
        %v7963 = vpop.f32.mrb[0].mxu0
        %v7964 = vpop.f32.mrb[0].mxu0
        %v7965 = vadd.f32 %v7804, %v7964
        %v7966 = vpop.f32.mrb[0].mxu0
        %7967 = vdwg.mxu0
        %7968 = vmatprep.subr.bf16.mxu0 0
        %7969 = vmatpush1.bf16.msra.mxu0 %v7534
        %7970 = vmatprep.subr.bf16.mxu0 0
        %7971 = vmatpush1.bf16.msra.mxu0 %v7535
        %7972 = vmatprep.subr.bf16.mxu0 0
        %7973 = vmatpush1.bf16.msra.mxu0 %v7536
        %7974 = vmatprep.subr.bf16.mxu0 0
        %7975 = vmatpush1.bf16.msra.mxu0 %v7537
        %7976 = vmatprep.subr.bf16.mxu0 0
        %7977 = vmatpush1.bf16.msra.mxu0 %v7538
        %7978 = vmatprep.subr.bf16.mxu0 0
        %7979 = vmatpush1.bf16.msra.mxu0 %v7539
        %7980 = vmatprep.subr.bf16.mxu0 0
        %7981 = vmatpush1.bf16.msra.mxu0 %v7540
        %7982 = vmatprep.subr.bf16.mxu0 0
        %7983 = vmatpush1.bf16.msra.mxu0 %v7541
        %7984 = vmatprep.subr.bf16.mxu0 0
        %7985 = vmatpush1.bf16.msra.mxu0 %v7542
        %7986 = vmatprep.subr.bf16.mxu0 0
        %7987 = vmatpush1.bf16.msra.mxu0 %v7543
        %7988 = vmatprep.subr.bf16.mxu0 0
        %7989 = vmatpush1.bf16.msra.mxu0 %v7544
        %7990 = vmatprep.subr.bf16.mxu0 0
        %7991 = vmatpush1.bf16.msra.mxu0 %v7545
        %7992 = vmatprep.subr.bf16.mxu0 0
        %7993 = vmatpush1.bf16.msra.mxu0 %v7546
        %7994 = vmatprep.subr.bf16.mxu0 0
        %7995 = vmatpush1.bf16.msra.mxu0 %v7547
        %7996 = vmatprep.subr.bf16.mxu0 0
        %7997 = vmatpush1.bf16.msra.mxu0 %v7548
        %7998 = vmatprep.subr.bf16.mxu0 0
        %7999 = vmatpush1.bf16.msra.mxu0 %v7549
        %8000 = vmatprep.mubr.bf16.mxu0 %v6931
        %8001 = vmatmul.mubr.bf16.gmra.mrb[0].mxu0 %v6930
        %v8002 = vpop.f32.mrb[0].mxu0
        %v8003 = vadd.f32 %v7842, %v8002
        %v8004 = vpop.f32.mrb[0].mxu0
        %v8005 = vpop.f32.mrb[0].mxu0
        %v8006 = vadd.f32 %v7845, %v8005
        %v8007 = vpop.f32.mrb[0].mxu0
        %8008 = vmatprep.mubr.bf16.mxu0 %v6940
        %8009 = vmatmul.mubr.bf16.gmra.mrb[0].mxu0 %v6939
        %v8010 = vpop.f32.mrb[0].mxu0
        %v8011 = vadd.f32 %v7850, %v8010
        %v8012 = vpop.f32.mrb[0].mxu0
        %v8013 = vpop.f32.mrb[0].mxu0
        %v8014 = vadd.f32 %v7853, %v8013
        %v8015 = vpop.f32.mrb[0].mxu0
        %8016 = vmatprep.mubr.bf16.mxu0 %v6949
        %8017 = vmatmul.mubr.bf16.gmra.mrb[0].mxu0 %v6948
        %v8018 = vpop.f32.mrb[0].mxu0
        %v8019 = vadd.f32 %v7858, %v8018
        %v8020 = vpop.f32.mrb[0].mxu0
        %v8021 = vpop.f32.mrb[0].mxu0
        %v8022 = vadd.f32 %v7861, %v8021
        %v8023 = vpop.f32.mrb[0].mxu0
        %8024 = vmatprep.mubr.bf16.mxu0 %v6958
        %8025 = vmatmul.mubr.bf16.gmra.mrb[0].mxu0 %v6957
        %v8026 = vpop.f32.mrb[0].mxu0
        %v8027 = vadd.f32 %v7866, %v8026
        %v8028 = vpop.f32.mrb[0].mxu0
        %v8029 = vpop.f32.mrb[0].mxu0
        %v8030 = vadd.f32 %v7869, %v8029
        %v8031 = vpop.f32.mrb[0].mxu0
        %8032 = vmatprep.mubr.bf16.mxu0 %v6967
        %8033 = vmatmul.mubr.bf16.gmra.mrb[0].mxu0 %v6966
        %v8034 = vpop.f32.mrb[0].mxu0
        %v8035 = vadd.f32 %v7874, %v8034
        %v8036 = vpop.f32.mrb[0].mxu0
        %v8037 = vpop.f32.mrb[0].mxu0
        %v8038 = vadd.f32 %v7877, %v8037
        %v8039 = vpop.f32.mrb[0].mxu0
        %8040 = vmatprep.mubr.bf16.mxu0 %v6976
        %8041 = vmatmul.mubr.bf16.gmra.mrb[0].mxu0 %v6975
        %v8042 = vpop.f32.mrb[0].mxu0
        %v8043 = vadd.f32 %v7882, %v8042
        %v8044 = vpop.f32.mrb[0].mxu0
        %v8045 = vpop.f32.mrb[0].mxu0
        %v8046 = vadd.f32 %v7885, %v8045
        %v8047 = vpop.f32.mrb[0].mxu0
        %8048 = vmatprep.mubr.bf16.mxu0 %v6985
        %8049 = vmatmul.mubr.bf16.gmra.mrb[0].mxu0 %v6984
        %v8050 = vpop.f32.mrb[0].mxu0
        %v8051 = vadd.f32 %v7890, %v8050
        %v8052 = vpop.f32.mrb[0].mxu0
        %v8053 = vpop.f32.mrb[0].mxu0
        %v8054 = vadd.f32 %v7893, %v8053
        %v8055 = vpop.f32.mrb[0].mxu0
        %8056 = vmatprep.mubr.bf16.mxu0 %v6994
        %8057 = vmatmul.mubr.bf16.gmra.mrb[0].mxu0 %v6993
        %v8058 = vpop.f32.mrb[0].mxu0
        %v8059 = vadd.f32 %v7898, %v8058
        %v8060 = vpop.f32.mrb[0].mxu0
        %v8061 = vpop.f32.mrb[0].mxu0
        %v8062 = vadd.f32 %v7901, %v8061
        %v8063 = vpop.f32.mrb[0].mxu0
        %8064 = vmatprep.mubr.bf16.mxu0 %v7003
        %8065 = vmatmul.mubr.bf16.gmra.mrb[0].mxu0 %v7002
        %v8066 = vpop.f32.mrb[0].mxu0
        %v8067 = vadd.f32 %v7906, %v8066
        %v8068 = vpop.f32.mrb[0].mxu0
        %v8069 = vpop.f32.mrb[0].mxu0
        %v8070 = vadd.f32 %v7909, %v8069
        %v8071 = vpop.f32.mrb[0].mxu0
        %8072 = vmatprep.mubr.bf16.mxu0 %v7012
        %8073 = vmatmul.mubr.bf16.gmra.mrb[0].mxu0 %v7011
        %v8074 = vpop.f32.mrb[0].mxu0
        %v8075 = vadd.f32 %v7914, %v8074
        %v8076 = vpop.f32.mrb[0].mxu0
        %v8077 = vpop.f32.mrb[0].mxu0
        %v8078 = vadd.f32 %v7917, %v8077
        %v8079 = vpop.f32.mrb[0].mxu0
        %8080 = vmatprep.mubr.bf16.mxu0 %v7021
        %8081 = vmatmul.mubr.bf16.gmra.mrb[0].mxu0 %v7020
        %v8082 = vpop.f32.mrb[0].mxu0
        %v8083 = vadd.f32 %v7922, %v8082
        %v8084 = vpop.f32.mrb[0].mxu0
        %v8085 = vpop.f32.mrb[0].mxu0
        %v8086 = vadd.f32 %v7925, %v8085
        %v8087 = vpop.f32.mrb[0].mxu0
        %8088 = vmatprep.mubr.bf16.mxu0 %v7030
        %8089 = vmatmul.mubr.bf16.gmra.mrb[0].mxu0 %v7029
        %v8090 = vpop.f32.mrb[0].mxu0
        %v8091 = vadd.f32 %v7930, %v8090
        %v8092 = vpop.f32.mrb[0].mxu0
        %v8093 = vpop.f32.mrb[0].mxu0
        %v8094 = vadd.f32 %v7933, %v8093
        %v8095 = vpop.f32.mrb[0].mxu0
        %8096 = vmatprep.mubr.bf16.mxu0 %v7039
        %8097 = vmatmul.mubr.bf16.gmra.mrb[0].mxu0 %v7038
        %v8098 = vpop.f32.mrb[0].mxu0
        %v8099 = vadd.f32 %v7938, %v8098
        %v8100 = vpop.f32.mrb[0].mxu0
        %v8101 = vpop.f32.mrb[0].mxu0
        %v8102 = vadd.f32 %v7941, %v8101
        %v8103 = vpop.f32.mrb[0].mxu0
        %8104 = vmatprep.mubr.bf16.mxu0 %v7048
        %8105 = vmatmul.mubr.bf16.gmra.mrb[0].mxu0 %v7047
        %v8106 = vpop.f32.mrb[0].mxu0
        %v8107 = vadd.f32 %v7946, %v8106
        %v8108 = vpop.f32.mrb[0].mxu0
        %v8109 = vpop.f32.mrb[0].mxu0
        %v8110 = vadd.f32 %v7949, %v8109
        %v8111 = vpop.f32.mrb[0].mxu0
        %8112 = vmatprep.mubr.bf16.mxu0 %v7057
        %8113 = vmatmul.mubr.bf16.gmra.mrb[0].mxu0 %v7056
        %v8114 = vpop.f32.mrb[0].mxu0
        %v8115 = vadd.f32 %v7954, %v8114
        %v8116 = vpop.f32.mrb[0].mxu0
        %v8117 = vpop.f32.mrb[0].mxu0
        %v8118 = vadd.f32 %v7957, %v8117
        %v8119 = vpop.f32.mrb[0].mxu0
        %8120 = vmatprep.mubr.bf16.mxu0 %v7066
        %8121 = vmatmul.mubr.bf16.gmra.mrb[0].mxu0 %v7065
        %v8122 = vpop.f32.mrb[0].mxu0
        %v8123 = vadd.f32 %v7962, %v8122
        %v8124 = vpop.f32.mrb[0].mxu0
        %v8125 = vpop.f32.mrb[0].mxu0
        %v8126 = vadd.f32 %v7965, %v8125
        %v8127 = vpop.f32.mrb[0].mxu0
        %8128 = vdwg.mxu0
        %8129 = vmatprep.subr.bf16.mxu0 0
        %8130 = vmatpush1.bf16.msra.mxu0 %v7550
        %8131 = vmatprep.subr.bf16.mxu0 0
        %8132 = vmatpush1.bf16.msra.mxu0 %v7551
        %8133 = vmatprep.subr.bf16.mxu0 0
        %8134 = vmatpush1.bf16.msra.mxu0 %v7552
        %8135 = vmatprep.subr.bf16.mxu0 0
        %8136 = vmatpush1.bf16.msra.mxu0 %v7553
        %8137 = vmatprep.subr.bf16.mxu0 0
        %8138 = vmatpush1.bf16.msra.mxu0 %v7554
        %8139 = vmatprep.subr.bf16.mxu0 0
        %8140 = vmatpush1.bf16.msra.mxu0 %v7555
        %8141 = vmatprep.subr.bf16.mxu0 0
        %8142 = vmatpush1.bf16.msra.mxu0 %v7556
        %8143 = vmatprep.subr.bf16.mxu0 0
        %8144 = vmatpush1.bf16.msra.mxu0 %v7557
        %8145 = vmatprep.subr.bf16.mxu0 0
        %8146 = vmatpush1.bf16.msra.mxu0 %v7558
        %8147 = vmatprep.subr.bf16.mxu0 0
        %8148 = vmatpush1.bf16.msra.mxu0 %v7559
        %8149 = vmatprep.subr.bf16.mxu0 0
        %8150 = vmatpush1.bf16.msra.mxu0 %v7560
        %8151 = vmatprep.subr.bf16.mxu0 0
        %8152 = vmatpush1.bf16.msra.mxu0 %v7561
        %8153 = vmatprep.subr.bf16.mxu0 0
        %8154 = vmatpush1.bf16.msra.mxu0 %v7562
        %8155 = vmatprep.subr.bf16.mxu0 0
        %8156 = vmatpush1.bf16.msra.mxu0 %v7563
        %8157 = vmatprep.subr.bf16.mxu0 0
        %8158 = vmatpush1.bf16.msra.mxu0 %v7564
        %8159 = vmatprep.subr.bf16.mxu0 0
        %8160 = vmatpush1.bf16.msra.mxu0 %v7565
        %8161 = vmatprep.mubr.bf16.mxu0 %v6933
        %8162 = vmatmul.mubr.bf16.gmra.mrb[0].mxu0 %v6932
        %v8163 = vpop.f32.mrb[0].mxu0
        %v8164 = vadd.f32 %v8003, %v8163
        %v8165 = vpop.f32.mrb[0].mxu0
        %v8166 = vpop.f32.mrb[0].mxu0
        %v8167 = vadd.f32 %v8006, %v8166
        %v8168 = vpop.f32.mrb[0].mxu0
        %8169 = vmatprep.mubr.bf16.mxu0 %v6942
        %8170 = vmatmul.mubr.bf16.gmra.mrb[0].mxu0 %v6941
        %v8171 = vpop.f32.mrb[0].mxu0
        %v8172 = vadd.f32 %v8011, %v8171
        %v8173 = vpop.f32.mrb[0].mxu0
        %v8174 = vpop.f32.mrb[0].mxu0
        %v8175 = vadd.f32 %v8014, %v8174
        %v8176 = vpop.f32.mrb[0].mxu0
        %8177 = vmatprep.mubr.bf16.mxu0 %v6951
        %8178 = vmatmul.mubr.bf16.gmra.mrb[0].mxu0 %v6950
        %v8179 = vpop.f32.mrb[0].mxu0
        %v8180 = vadd.f32 %v8019, %v8179
        %v8181 = vpop.f32.mrb[0].mxu0
        %v8182 = vpop.f32.mrb[0].mxu0
        %v8183 = vadd.f32 %v8022, %v8182
        %v8184 = vpop.f32.mrb[0].mxu0
        %8185 = vmatprep.mubr.bf16.mxu0 %v6960
        %8186 = vmatmul.mubr.bf16.gmra.mrb[0].mxu0 %v6959
        %v8187 = vpop.f32.mrb[0].mxu0
        %v8188 = vadd.f32 %v8027, %v8187
        %v8189 = vpop.f32.mrb[0].mxu0
        %v8190 = vpop.f32.mrb[0].mxu0
        %v8191 = vadd.f32 %v8030, %v8190
        %v8192 = vpop.f32.mrb[0].mxu0
        %8193 = vmatprep.mubr.bf16.mxu0 %v6969
        %8194 = vmatmul.mubr.bf16.gmra.mrb[0].mxu0 %v6968
        %v8195 = vpop.f32.mrb[0].mxu0
        %v8196 = vadd.f32 %v8035, %v8195
        %v8197 = vpop.f32.mrb[0].mxu0
        %v8198 = vpop.f32.mrb[0].mxu0
        %v8199 = vadd.f32 %v8038, %v8198
        %v8200 = vpop.f32.mrb[0].mxu0
        %8201 = vmatprep.mubr.bf16.mxu0 %v6978
        %8202 = vmatmul.mubr.bf16.gmra.mrb[0].mxu0 %v6977
        %v8203 = vpop.f32.mrb[0].mxu0
        %v8204 = vadd.f32 %v8043, %v8203
        %v8205 = vpop.f32.mrb[0].mxu0
        %v8206 = vpop.f32.mrb[0].mxu0
        %v8207 = vadd.f32 %v8046, %v8206
        %v8208 = vpop.f32.mrb[0].mxu0
        %8209 = vmatprep.mubr.bf16.mxu0 %v6987
        %8210 = vmatmul.mubr.bf16.gmra.mrb[0].mxu0 %v6986
        %v8211 = vpop.f32.mrb[0].mxu0
        %v8212 = vadd.f32 %v8051, %v8211
        %v8213 = vpop.f32.mrb[0].mxu0
        %v8214 = vpop.f32.mrb[0].mxu0
        %v8215 = vadd.f32 %v8054, %v8214
        %v8216 = vpop.f32.mrb[0].mxu0
        %8217 = vmatprep.mubr.bf16.mxu0 %v6996
        %8218 = vmatmul.mubr.bf16.gmra.mrb[0].mxu0 %v6995
        %v8219 = vpop.f32.mrb[0].mxu0
        %v8220 = vadd.f32 %v8059, %v8219
        %v8221 = vpop.f32.mrb[0].mxu0
        %v8222 = vpop.f32.mrb[0].mxu0
        %v8223 = vadd.f32 %v8062, %v8222
        %v8224 = vpop.f32.mrb[0].mxu0
        %8225 = vmatprep.mubr.bf16.mxu0 %v7005
        %8226 = vmatmul.mubr.bf16.gmra.mrb[0].mxu0 %v7004
        %v8227 = vpop.f32.mrb[0].mxu0
        %v8228 = vadd.f32 %v8067, %v8227
        %v8229 = vpop.f32.mrb[0].mxu0
        %v8230 = vpop.f32.mrb[0].mxu0
        %v8231 = vadd.f32 %v8070, %v8230
        %v8232 = vpop.f32.mrb[0].mxu0
        %8233 = vmatprep.mubr.bf16.mxu0 %v7014
        %8234 = vmatmul.mubr.bf16.gmra.mrb[0].mxu0 %v7013
        %v8235 = vpop.f32.mrb[0].mxu0
        %v8236 = vadd.f32 %v8075, %v8235
        %v8237 = vpop.f32.mrb[0].mxu0
        %v8238 = vpop.f32.mrb[0].mxu0
        %v8239 = vadd.f32 %v8078, %v8238
        %v8240 = vpop.f32.mrb[0].mxu0
        %8241 = vmatprep.mubr.bf16.mxu0 %v7023
        %8242 = vmatmul.mubr.bf16.gmra.mrb[0].mxu0 %v7022
        %v8243 = vpop.f32.mrb[0].mxu0
        %v8244 = vadd.f32 %v8083, %v8243
        %v8245 = vpop.f32.mrb[0].mxu0
        %v8246 = vpop.f32.mrb[0].mxu0
        %v8247 = vadd.f32 %v8086, %v8246
        %v8248 = vpop.f32.mrb[0].mxu0
        %8249 = vmatprep.mubr.bf16.mxu0 %v7032
        %8250 = vmatmul.mubr.bf16.gmra.mrb[0].mxu0 %v7031
        %v8251 = vpop.f32.mrb[0].mxu0
        %v8252 = vadd.f32 %v8091, %v8251
        %v8253 = vpop.f32.mrb[0].mxu0
        %v8254 = vpop.f32.mrb[0].mxu0
        %v8255 = vadd.f32 %v8094, %v8254
        %v8256 = vpop.f32.mrb[0].mxu0
        %8257 = vmatprep.mubr.bf16.mxu0 %v7041
        %8258 = vmatmul.mubr.bf16.gmra.mrb[0].mxu0 %v7040
        %v8259 = vpop.f32.mrb[0].mxu0
        %v8260 = vadd.f32 %v8099, %v8259
        %v8261 = vpop.f32.mrb[0].mxu0
        %v8262 = vpop.f32.mrb[0].mxu0
        %v8263 = vadd.f32 %v8102, %v8262
        %v8264 = vpop.f32.mrb[0].mxu0
        %8265 = vmatprep.mubr.bf16.mxu0 %v7050
        %8266 = vmatmul.mubr.bf16.gmra.mrb[0].mxu0 %v7049
        %v8267 = vpop.f32.mrb[0].mxu0
        %v8268 = vadd.f32 %v8107, %v8267
        %v8269 = vpop.f32.mrb[0].mxu0
        %v8270 = vpop.f32.mrb[0].mxu0
        %v8271 = vadd.f32 %v8110, %v8270
        %v8272 = vpop.f32.mrb[0].mxu0
        %8273 = vmatprep.mubr.bf16.mxu0 %v7059
        %8274 = vmatmul.mubr.bf16.gmra.mrb[0].mxu0 %v7058
        %v8275 = vpop.f32.mrb[0].mxu0
        %v8276 = vadd.f32 %v8115, %v8275
        %v8277 = vpop.f32.mrb[0].mxu0
        %v8278 = vpop.f32.mrb[0].mxu0
        %v8279 = vadd.f32 %v8118, %v8278
        %v8280 = vpop.f32.mrb[0].mxu0
        %8281 = vmatprep.mubr.bf16.mxu0 %v7068
        %8282 = vmatmul.mubr.bf16.gmra.mrb[0].mxu0 %v7067
        %v8283 = vpop.f32.mrb[0].mxu0
        %v8284 = vadd.f32 %v8123, %v8283
        %v8285 = vpop.f32.mrb[0].mxu0
        %v8286 = vpop.f32.mrb[0].mxu0
        %v8287 = vadd.f32 %v8126, %v8286
        %v8288 = vpop.f32.mrb[0].mxu0
        %8289 = vdwg.mxu0
        %8290 = vmatprep.subr.bf16.mxu0 0
        %8291 = vmatpush1.bf16.msra.mxu0 %v7566
        %8292 = vmatprep.subr.bf16.mxu0 0
        %8293 = vmatpush1.bf16.msra.mxu0 %v7567
        %8294 = vmatprep.subr.bf16.mxu0 0
        %8295 = vmatpush1.bf16.msra.mxu0 %v7568
        %8296 = vmatprep.subr.bf16.mxu0 0
        %8297 = vmatpush1.bf16.msra.mxu0 %v7569
        %8298 = vmatprep.subr.bf16.mxu0 0
        %8299 = vmatpush1.bf16.msra.mxu0 %v7570
        %8300 = vmatprep.subr.bf16.mxu0 0
        %8301 = vmatpush1.bf16.msra.mxu0 %v7571
        %8302 = vmatprep.subr.bf16.mxu0 0
        %8303 = vmatpush1.bf16.msra.mxu0 %v7572
        %8304 = vmatprep.subr.bf16.mxu0 0
        %8305 = vmatpush1.bf16.msra.mxu0 %v7573
        %8306 = vmatprep.subr.bf16.mxu0 0
        %8307 = vmatpush1.bf16.msra.mxu0 0
        %8308 = vmatprep.subr.bf16.mxu0 0
        %8309 = vmatpush1.bf16.msra.mxu0 0
        %8310 = vmatprep.subr.bf16.mxu0 0
        %8311 = vmatpush1.bf16.msra.mxu0 0
        %8312 = vmatprep.subr.bf16.mxu0 0
        %8313 = vmatpush1.bf16.msra.mxu0 0
        %8314 = vmatprep.subr.bf16.mxu0 0
        %8315 = vmatpush1.bf16.msra.mxu0 0
        %8316 = vmatprep.subr.bf16.mxu0 0
        %8317 = vmatpush1.bf16.msra.mxu0 0
        %8318 = vmatprep.subr.bf16.mxu0 0
        %8319 = vmatpush1.bf16.msra.mxu0 0
        %8320 = vmatprep.subr.bf16.mxu0 0
        %8321 = vmatpush1.bf16.msra.mxu0 0
        %8322 = vmatprep.mubr.bf16.mxu0 0
        %8323 = vmatmul.mubr.bf16.gmra.mrb[0].mxu0 %v6934
        %v8324 = vpop.f32.mrb[0].mxu0
        %v8325 = vadd.f32 %v8164, %v8324
        %v8326 = vpop.f32.mrb[0].mxu0
        %v8327 = vpop.f32.mrb[0].mxu0
        %v8328 = vadd.f32 %v8167, %v8327
        %v8329 = vpop.f32.mrb[0].mxu0
        %8330 = vmatprep.mubr.bf16.mxu0 0
        %8331 = vmatmul.mubr.bf16.gmra.mrb[0].mxu0 %v6943
        %v8332 = vpop.f32.mrb[0].mxu0
        %v8333 = vadd.f32 %v8172, %v8332
        %v8334 = vpop.f32.mrb[0].mxu0
        %v8335 = vpop.f32.mrb[0].mxu0
        %v8336 = vadd.f32 %v8175, %v8335
        %v8337 = vpop.f32.mrb[0].mxu0
        %8338 = vmatprep.mubr.bf16.mxu0 0
        %8339 = vmatmul.mubr.bf16.gmra.mrb[0].mxu0 %v6952
        %v8340 = vpop.f32.mrb[0].mxu0
        %v8341 = vadd.f32 %v8180, %v8340
        %v8342 = vpop.f32.mrb[0].mxu0
        %v8343 = vpop.f32.mrb[0].mxu0
        %v8344 = vadd.f32 %v8183, %v8343
        %v8345 = vpop.f32.mrb[0].mxu0
        %8346 = vmatprep.mubr.bf16.mxu0 0
        %8347 = vmatmul.mubr.bf16.gmra.mrb[0].mxu0 %v6961
        %v8348 = vpop.f32.mrb[0].mxu0
        %v8349 = vadd.f32 %v8188, %v8348
        %v8350 = vpop.f32.mrb[0].mxu0
        %v8351 = vpop.f32.mrb[0].mxu0
        %v8352 = vadd.f32 %v8191, %v8351
        %v8353 = vpop.f32.mrb[0].mxu0
        %8354 = vmatprep.mubr.bf16.mxu0 0
        %8355 = vmatmul.mubr.bf16.gmra.mrb[0].mxu0 %v6970
        %v8356 = vpop.f32.mrb[0].mxu0
        %v8357 = vadd.f32 %v8196, %v8356
        %v8358 = vpop.f32.mrb[0].mxu0
        %v8359 = vpop.f32.mrb[0].mxu0
        %v8360 = vadd.f32 %v8199, %v8359
        %v8361 = vpop.f32.mrb[0].mxu0
        %8362 = vmatprep.mubr.bf16.mxu0 0
        %8363 = vmatmul.mubr.bf16.gmra.mrb[0].mxu0 %v6979
        %v8364 = vpop.f32.mrb[0].mxu0
        %v8365 = vadd.f32 %v8204, %v8364
        %v8366 = vpop.f32.mrb[0].mxu0
        %v8367 = vpop.f32.mrb[0].mxu0
        %v8368 = vadd.f32 %v8207, %v8367
        %v8369 = vpop.f32.mrb[0].mxu0
        %8370 = vmatprep.mubr.bf16.mxu0 0
        %8371 = vmatmul.mubr.bf16.gmra.mrb[0].mxu0 %v6988
        %v8372 = vpop.f32.mrb[0].mxu0
        %v8373 = vadd.f32 %v8212, %v8372
        %v8374 = vpop.f32.mrb[0].mxu0
        %v8375 = vpop.f32.mrb[0].mxu0
        %v8376 = vadd.f32 %v8215, %v8375
        %v8377 = vpop.f32.mrb[0].mxu0
        %8378 = vmatprep.mubr.bf16.mxu0 0
        %8379 = vmatmul.mubr.bf16.gmra.mrb[0].mxu0 %v6997
        %v8380 = vpop.f32.mrb[0].mxu0
        %v8381 = vadd.f32 %v8220, %v8380
        %v8382 = vpop.f32.mrb[0].mxu0
        %v8383 = vpop.f32.mrb[0].mxu0
        %v8384 = vadd.f32 %v8223, %v8383
        %v8385 = vpop.f32.mrb[0].mxu0
        %8386 = vmatprep.mubr.bf16.mxu0 0
        %8387 = vmatmul.mubr.bf16.gmra.mrb[0].mxu0 %v7006
        %v8388 = vpop.f32.mrb[0].mxu0
        %v8389 = vadd.f32 %v8228, %v8388
        %v8390 = vpop.f32.mrb[0].mxu0
        %v8391 = vpop.f32.mrb[0].mxu0
        %v8392 = vadd.f32 %v8231, %v8391
        %v8393 = vpop.f32.mrb[0].mxu0
        %8394 = vmatprep.mubr.bf16.mxu0 0
        %8395 = vmatmul.mubr.bf16.gmra.mrb[0].mxu0 %v7015
        %v8396 = vpop.f32.mrb[0].mxu0
        %v8397 = vadd.f32 %v8236, %v8396
        %v8398 = vpop.f32.mrb[0].mxu0
        %v8399 = vpop.f32.mrb[0].mxu0
        %v8400 = vadd.f32 %v8239, %v8399
        %v8401 = vpop.f32.mrb[0].mxu0
        %8402 = vmatprep.mubr.bf16.mxu0 0
        %8403 = vmatmul.mubr.bf16.gmra.mrb[0].mxu0 %v7024
        %v8404 = vpop.f32.mrb[0].mxu0
        %v8405 = vadd.f32 %v8244, %v8404
        %v8406 = vpop.f32.mrb[0].mxu0
        %v8407 = vpop.f32.mrb[0].mxu0
        %v8408 = vadd.f32 %v8247, %v8407
        %v8409 = vpop.f32.mrb[0].mxu0
        %8410 = vmatprep.mubr.bf16.mxu0 0
        %8411 = vmatmul.mubr.bf16.gmra.mrb[0].mxu0 %v7033
        %v8412 = vpop.f32.mrb[0].mxu0
        %v8413 = vadd.f32 %v8252, %v8412
        %v8414 = vpop.f32.mrb[0].mxu0
        %v8415 = vpop.f32.mrb[0].mxu0
        %v8416 = vadd.f32 %v8255, %v8415
        %v8417 = vpop.f32.mrb[0].mxu0
        %8418 = vmatprep.mubr.bf16.mxu0 0
        %8419 = vmatmul.mubr.bf16.gmra.mrb[0].mxu0 %v7042
        %v8420 = vpop.f32.mrb[0].mxu0
        %v8421 = vadd.f32 %v8260, %v8420
        %v8422 = vpop.f32.mrb[0].mxu0
        %v8423 = vpop.f32.mrb[0].mxu0
        %v8424 = vadd.f32 %v8263, %v8423
        %v8425 = vpop.f32.mrb[0].mxu0
        %8426 = vmatprep.mubr.bf16.mxu0 0
        %8427 = vmatmul.mubr.bf16.gmra.mrb[0].mxu0 %v7051
        %v8428 = vpop.f32.mrb[0].mxu0
        %v8429 = vadd.f32 %v8268, %v8428
        %v8430 = vpop.f32.mrb[0].mxu0
        %v8431 = vpop.f32.mrb[0].mxu0
        %v8432 = vadd.f32 %v8271, %v8431
        %v8433 = vpop.f32.mrb[0].mxu0
        %8434 = vmatprep.mubr.bf16.mxu0 0
        %8435 = vmatmul.mubr.bf16.gmra.mrb[0].mxu0 %v7060
        %v8436 = vpop.f32.mrb[0].mxu0
        %v8437 = vadd.f32 %v8276, %v8436
        %v8438 = vpop.f32.mrb[0].mxu0
        %v8439 = vpop.f32.mrb[0].mxu0
        %v8440 = vadd.f32 %v8279, %v8439
        %v8441 = vpop.f32.mrb[0].mxu0
        %8442 = vmatprep.mubr.bf16.mxu0 0
        %8443 = vmatmul.mubr.bf16.gmra.mrb[0].mxu0 %v7069
        %v8444 = vpop.f32.mrb[0].mxu0
        %v8445 = vadd.f32 %v8284, %v8444
        %v8446 = vpop.f32.mrb[0].mxu0
        %v8447 = vpop.f32.mrb[0].mxu0
        %v8448 = vadd.f32 %v8287, %v8447
        %v8449 = vpop.f32.mrb[0].mxu0
        %8450 = vdwg.mxu0
        %v8451 = vmul.f32 %v8325, 0.1
        %v8452 = vmul.f32 %v8328, 0.1
        %v8453 = vmul.f32 %v8333, 0.1
        %v8454 = vmul.f32 %v8336, 0.1
        %v8455 = vmul.f32 %v8341, 0.1
        %v8456 = vmul.f32 %v8344, 0.1
        %v8457 = vmul.f32 %v8349, 0.1
        %v8458 = vmul.f32 %v8352, 0.1
        %v8459 = vmul.f32 %v8357, 0.1
        %v8460 = vmul.f32 %v8360, 0.1
        %v8461 = vmul.f32 %v8365, 0.1
        %v8462 = vmul.f32 %v8368, 0.1
        %v8463 = vmul.f32 %v8373, 0.1
        %v8464 = vmul.f32 %v8376, 0.1
        %v8465 = vmul.f32 %v8381, 0.1
        %v8466 = vmul.f32 %v8384, 0.1
        %v8467 = vmul.f32 %v8389, 0.1
        %v8468 = vmul.f32 %v8392, 0.1
        %v8469 = vmul.f32 %v8397, 0.1
        %v8470 = vmul.f32 %v8400, 0.1
        %v8471 = vmul.f32 %v8405, 0.1
        %v8472 = vmul.f32 %v8408, 0.1
        %v8473 = vmul.f32 %v8413, 0.1
        %v8474 = vmul.f32 %v8416, 0.1
        %v8475 = vmul.f32 %v8421, 0.1
        %v8476 = vmul.f32 %v8424, 0.1
        %v8477 = vmul.f32 %v8429, 0.1
        %v8478 = vmul.f32 %v8432, 0.1
        %v8479 = vmul.f32 %v8437, 0.1
        %v8480 = vmul.f32 %v8440, 0.1
        %v8481 = vmul.f32 %v8445, 0.1
        %v8482 = vmul.f32 %v8448, 0.1
        %v8483 = vld [vmem:[%s168] sm:$0xff]
        %v8484 = vld [vmem:[%s168 + $0x8] sm:$0xff]
        %v8485 = vld [vmem:[%s168 + $0x10] sm:$0xff]
        %v8486 = vld [vmem:[%s168 + $0x18] sm:$0xff]
        %v8487 = vld [vmem:[%s168 + $0x20] sm:$0xff]
        %v8488 = vld [vmem:[%s168 + $0x28] sm:$0xff]
        %v8489 = vld [vmem:[%s168 + $0x30] sm:$0xff]
        %v8490 = vld [vmem:[%s168 + $0x38] sm:$0xff]
        %v8491 = vld [vmem:[%s168 + $0x40] sm:$0xff]
        %v8492 = vld [vmem:[%s168 + $0x48] sm:$0xff]
        %v8493 = vld [vmem:[%s168 + $0x50] sm:$0xff]
        %v8494 = vld [vmem:[%s168 + $0x58] sm:$0xff]
        %v8495 = vld [vmem:[%s168 + $0x60] sm:$0xff]
        %v8496 = vld [vmem:[%s168 + $0x68] sm:$0xff]
        %v8497 = vld [vmem:[%s168 + $0x70] sm:$0xff]
        %v8498 = vld [vmem:[%s168 + $0x78] sm:$0xff]
        %v8499 = vld [vmem:[%s168 + $0x80] sm:$0xff]
        %v8500 = vld [vmem:[%s168 + $0x88] sm:$0xff]
        %v8501 = vld [vmem:[%s168 + $0x90] sm:$0xff]
        %v8502 = vld [vmem:[%s168 + $0x98] sm:$0xff]
        %v8503 = vld [vmem:[%s168 + $0xa0] sm:$0xff]
        %v8504 = vld [vmem:[%s168 + $0xa8] sm:$0xff]
        %v8505 = vld [vmem:[%s168 + $0xb0] sm:$0xff]
        %v8506 = vld [vmem:[%s168 + $0xb8] sm:$0xff]
        %v8507 = vld [vmem:[%s168 + $0xc0] sm:$0xff]
        %v8508 = vld [vmem:[%s168 + $0xc8] sm:$0xff]
        %v8509 = vld [vmem:[%s168 + $0xd0] sm:$0xff]
        %v8510 = vld [vmem:[%s168 + $0xd8] sm:$0xff]
        %v8511 = vld [vmem:[%s168 + $0xe0] sm:$0xff]
        %v8512 = vld [vmem:[%s168 + $0xe8] sm:$0xff]
        %v8513 = vld [vmem:[%s168 + $0xf0] sm:$0xff]
        %v8514 = vld [vmem:[%s168 + $0xf8] sm:$0xff]
        %v8515 = vadd.f32 %v8451, %v8483
        %v8516 = vadd.f32 %v8452, %v8484
        %v8517 = vadd.f32 %v8453, %v8485
        %v8518 = vadd.f32 %v8454, %v8486
        %v8519 = vadd.f32 %v8455, %v8487
        %v8520 = vadd.f32 %v8456, %v8488
        %v8521 = vadd.f32 %v8457, %v8489
        %v8522 = vadd.f32 %v8458, %v8490
        %v8523 = vadd.f32 %v8459, %v8491
        %v8524 = vadd.f32 %v8460, %v8492
        %v8525 = vadd.f32 %v8461, %v8493
        %v8526 = vadd.f32 %v8462, %v8494
        %v8527 = vadd.f32 %v8463, %v8495
        %v8528 = vadd.f32 %v8464, %v8496
        %v8529 = vadd.f32 %v8465, %v8497
        %v8530 = vadd.f32 %v8466, %v8498
        %v8531 = vadd.f32 %v8467, %v8499
        %v8532 = vadd.f32 %v8468, %v8500
        %v8533 = vadd.f32 %v8469, %v8501
        %v8534 = vadd.f32 %v8470, %v8502
        %v8535 = vadd.f32 %v8471, %v8503
        %v8536 = vadd.f32 %v8472, %v8504
        %v8537 = vadd.f32 %v8473, %v8505
        %v8538 = vadd.f32 %v8474, %v8506
        %v8539 = vadd.f32 %v8475, %v8507
        %v8540 = vadd.f32 %v8476, %v8508
        %v8541 = vadd.f32 %v8477, %v8509
        %v8542 = vadd.f32 %v8478, %v8510
        %v8543 = vadd.f32 %v8479, %v8511
        %v8544 = vadd.f32 %v8480, %v8512
        %v8545 = vadd.f32 %v8481, %v8513
        %v8546 = vadd.f32 %v8482, %v8514
        %8547 = vst [vmem:[%s163] sm:$0xff] %v8515
        %8548 = vst [vmem:[%s163 + $0x8] sm:$0xff] %v8516
        %8549 = vst [vmem:[%s163 + $0x10] sm:$0xff] %v8517
        %8550 = vst [vmem:[%s163 + $0x18] sm:$0xff] %v8518
        %8551 = vst [vmem:[%s163 + $0x20] sm:$0xff] %v8519
        %8552 = vst [vmem:[%s163 + $0x28] sm:$0xff] %v8520
        %8553 = vst [vmem:[%s163 + $0x30] sm:$0xff] %v8521
        %8554 = vst [vmem:[%s163 + $0x38] sm:$0xff] %v8522
        %8555 = vst [vmem:[%s163 + $0x40] sm:$0xff] %v8523
        %8556 = vst [vmem:[%s163 + $0x48] sm:$0xff] %v8524
        %8557 = vst [vmem:[%s163 + $0x50] sm:$0xff] %v8525
        %8558 = vst [vmem:[%s163 + $0x58] sm:$0xff] %v8526
        %8559 = vst [vmem:[%s163 + $0x60] sm:$0xff] %v8527
        %8560 = vst [vmem:[%s163 + $0x68] sm:$0xff] %v8528
        %8561 = vst [vmem:[%s163 + $0x70] sm:$0xff] %v8529
        %8562 = vst [vmem:[%s163 + $0x78] sm:$0xff] %v8530
        %8563 = vst [vmem:[%s163 + $0x80] sm:$0xff] %v8531
        %8564 = vst [vmem:[%s163 + $0x88] sm:$0xff] %v8532
        %8565 = vst [vmem:[%s163 + $0x90] sm:$0xff] %v8533
        %8566 = vst [vmem:[%s163 + $0x98] sm:$0xff] %v8534
        %8567 = vst [vmem:[%s163 + $0xa0] sm:$0xff] %v8535
        %8568 = vst [vmem:[%s163 + $0xa8] sm:$0xff] %v8536
        %8569 = vst [vmem:[%s163 + $0xb0] sm:$0xff] %v8537
        %8570 = vst [vmem:[%s163 + $0xb8] sm:$0xff] %v8538
        %8571 = vst [vmem:[%s163 + $0xc0] sm:$0xff] %v8539
        %8572 = vst [vmem:[%s163 + $0xc8] sm:$0xff] %v8540
        %8573 = vst [vmem:[%s163 + $0xd0] sm:$0xff] %v8541
        %8574 = vst [vmem:[%s163 + $0xd8] sm:$0xff] %v8542
        %8575 = vst [vmem:[%s163 + $0xe0] sm:$0xff] %v8543
        %8576 = vst [vmem:[%s163 + $0xe8] sm:$0xff] %v8544
        %8577 = vst [vmem:[%s163 + $0xf0] sm:$0xff] %v8545
        %8578 = vst [vmem:[%s163 + $0xf8] sm:$0xff] %v8546
        %s8579 = sand.u32 %s93, 1
        %s8580 = scalar_lea.sflag [#allocation6], %s8579
        %s8581 = sand.u32 %s93, 1
        %s8582 = smul.addr %s8581, 256
        %s8583 = scalar_lea.vmem [#allocation5], %s8582
        // Predicated region
        $region33: #{residual_block_forward.1} parent=31 // pred_check
          %p8584 = pneg %p103
        $region34: #{residual_block_forward.1} parent=31 // pred_check_branch
          %8586 = sbr.rel (%p8584) target = $region36
        $region35: #{residual_block_forward.1} parent=31 // pred_region
          %s8588 = ssub.s32 4096, 4096
          %8589 = vsyncadd %s8580, %s8588
          %s8590 = smul.addr %s17, 32
          %s8591 = smul.addr %s8590, 128
          %s8592 = scalar_lea.hbm %s3, %s8591
          %s8593 = sshll.u32 %s8583, 4
          %s8594 = int_to_ptr.vmem [resolvable:$true] %s8593
          %8599 = dma.vmem_to_hbm [thread:$0]  %s8594, 4096, %s8592, %s8580, 128, 128, 8
        $region36: #{residual_block_forward.1} parent=31 // pred_fallthru
          _
      $region32: #{residual_block_forward.1} parent=5 // pred_fallthru
        _
      %p8600 = scmp.le.s32.totalorder 2, %s12
      // Predicated region
      $region37: #{residual_block_forward.1} parent=5 // pred_check
        %p8601 = pneg %p8600
      $region38: #{residual_block_forward.1} parent=5 // pred_check_branch
        %8603 = sbr.rel (%p8601) target = $region40
      $region39: #{residual_block_forward.1} parent=5 // pred_region
        %s8604 = ssub.s32 %s12, 2
        // Predicated region
        $region41: #{residual_block_forward.1} parent=39 // pred_check
          %p8605 = pneg %p109
        $region42: #{residual_block_forward.1} parent=39 // pred_check_branch
          %8607 = sbr.rel (%p8605) target = $region44
        $region43: #{residual_block_forward.1} parent=39 // pred_region
          %s8608 = sand.u32 %s94, 1
          %s8609 = scalar_lea.sflag [#allocation6], %s8608
          %s8610 = sand.u32 %s94, 1
          %s8611 = smul.addr %s8610, 256
          %s8612 = scalar_lea.vmem [#allocation5], %s8611
          %8613 = dma.done %s8609, 4096
        $region44: #{residual_block_forward.1} parent=39 // pred_fallthru
          _
      $region40: #{residual_block_forward.1} parent=5 // pred_fallthru
        _
    $region6: #{residual_block_forward.1} parent=1 // loop_footer
      %s16 = sadd.s32 1, %s12
    $region7: #{residual_block_forward.1} parent=1 // loop_footer_branch
      %11 = sbr.rel target = $region3
    $region8: #{residual_block_forward.1} parent=1 // loop_exit
      _
    %8614 = vsyncpa [#allocation6], 1
    %s8615 = scalar_lea.sflag [#allocation6], 1
    %8616 = vsyncpa %s8615, 1

</llo_original>
